<compile_context>
chip_gen: v7x
topology: tpu7x:2x2x1
jax: 0.10.0
libtpu: 0.0.40
codegen_flags: <defaults>
</compile_context>

<pallas_src>
import functools

import jax
import jax.numpy as jnp
from jax.experimental import pallas as pl
from jax.experimental.pallas import tpu as pltpu


def _round8(x):
    return ((x + 7) // 8) * 8


def _pool_selectors(H, W, Wr):
    """4 one-hot gather matrices implementing the 2x2/stride-2 max-pool taps.

    Row q = i*(W//2)+j of selector (dy,dx) has a single 1.0 at column
    (2i+dy)*Wr + (2j+dx) of the flat conv output (row stride Wr).
    """
    H2, W2 = H // 2, W // 2
    q = jnp.arange(H2 * W2)
    i, j = q // W2, q % W2
    cols = jnp.arange(H * Wr)[None, :]
    mats = []
    for dy in (0, 1):
        for dx in (0, 1):
            tap = (2 * i + dy) * Wr + (2 * j + dx)
            mats.append((cols == tap[:, None]).astype(jnp.float32))
    return jnp.stack(mats)  # (4, H2*W2, H*Wr)


# ----------------------------------------------------------------------------
# In-kernel helpers (traced inline; everything stays in VMEM / vregs).
# ----------------------------------------------------------------------------
def _conv_relu_pool(pad_ref, w_ref, b_ref, sel_ref, *, H, W, Wr):
    """3x3 conv (padding=1) + bias + ReLU + 2x2 max-pool on a flat padded image.

    pad_ref: ((H+3)*Wr, Cin) zero-initialised scratch, data at (h+1)*Wr+(w+1).
    Returns ((H//2)*(W//2), Cout) pooled activation in raster (h, w) order.
    """
    f32 = jnp.float32
    Cin, Cout = w_ref.shape[-2], w_ref.shape[-1]
    acc = jnp.zeros((H * Wr, Cout), f32)
    for kh in range(3):
        for kw in range(3):
            tap = pad_ref[pl.ds(kh * Wr + kw, H * Wr), :]   # (H*Wr, Cin)
            wk = w_ref[kh, kw]                               # (Cin, Cout)
            if Cin == 1:
                acc = acc + tap * wk                         # broadcast outer product
            else:
                acc = acc + jnp.dot(tap, wk, preferred_element_type=f32)
    y = jnp.maximum(acc + b_ref[...], 0.0)                   # bias + ReLU
    # Exact 2x2 max-pool: 4 one-hot gather matmuls + elementwise max.
    m = jnp.dot(sel_ref[0], y, preferred_element_type=f32)
    for t in range(1, 4):
        m = jnp.maximum(m, jnp.dot(sel_ref[t], y, preferred_element_type=f32))
    return m


def _scatter_image(pad_ref, flat, H, W, Wr):
    """Write a raster-order (H*W, C) activation into the interior of a padded
    flat scratch (row h -> flat rows (h+1)*Wr+1 .. (h+1)*Wr+W)."""
    for h in range(H):
        pad_ref[pl.ds((h + 1) * Wr + 1, W), :] = flat[h * W:(h + 1) * W, :]


# ----------------------------------------------------------------------------
# Fused whole-network kernel (one batch element per grid step).
# ----------------------------------------------------------------------------
def _mynet_kernel(x_ref, w1_ref, b1_ref, w2_ref, b2_ref, w3_ref, b3_ref,
                  fc1w_ref, fc1b_ref, fc2w_ref, fc2b_ref,
                  sel1_ref, sel2_ref, sel3_ref,
                  out_ref,
                  pad1, pad2, pad3,
                  *, H, W):
    f32 = jnp.float32
    H2, W2 = H // 2, W // 2
    H4, W4 = H2 // 2, W2 // 2
    H8, W8 = H4 // 2, W4 // 2
    Wr1, Wr2, Wr3 = _round8(W + 2), _round8(W2 + 2), _round8(W4 + 2)

    # Zero the padded scratches: border taps must read 0, and the slack rows
    # must be finite so the pooling matmuls can never see NaN garbage.
    pad1[...] = jnp.zeros_like(pad1)
    pad2[...] = jnp.zeros_like(pad2)
    pad3[...] = jnp.zeros_like(pad3)

    # ---- stage 1: (H, W, 1) -> (H2*W2, C1) ----
    for h in range(H):
        pad1[pl.ds((h + 1) * Wr1 + 1, W), :] = x_ref[0, h]   # (W, 1) row copy
    p1 = _conv_relu_pool(pad1, w1_ref, b1_ref, sel1_ref, H=H, W=W, Wr=Wr1)

    # ---- stage 2: (H2, W2, C1) -> (H4*W4, C2) ----
    _scatter_image(pad2, p1, H2, W2, Wr2)
    p2 = _conv_relu_pool(pad2, w2_ref, b2_ref, sel2_ref, H=H2, W=W2, Wr=Wr2)

    # ---- stage 3: (H4, W4, C2) -> (H8*W8, C2) ----
    _scatter_image(pad3, p2, H4, W4, Wr3)
    p3 = _conv_relu_pool(pad3, w3_ref, b3_ref, sel3_ref, H=H4, W=W4, Wr=Wr3)

    # ---- MLP head: fc1 (weights pre-permuted to [spatial, cin, out]) + ReLU + fc2 ----
    h1 = fc1b_ref[...]                                       # (1, n_hidden)
    for r in range(H8 * W8):
        h1 = h1 + jnp.dot(p3[r:r + 1, :], fc1w_ref[r], preferred_element_type=f32)
    h1 = jnp.maximum(h1, 0.0)
    out = jnp.dot(h1, fc2w_ref[...], preferred_element_type=f32) + fc2b_ref[...]
    out_ref[0] = out.astype(out_ref.dtype)


# ----------------------------------------------------------------------------
# Wrapper: one fused pallas_call for the whole forward pass.
# ----------------------------------------------------------------------------
def mynet_depth_forward(x_nchw, params):
    N, Cin, H, W = x_nchw.shape
    assert Cin == 1 and H % 8 == 0 and W % 8 == 0, "expects 1-channel, /8 spatial"
    C1 = params["b1"].shape[0]
    C2 = params["b2"].shape[0]
    H2, W2 = H // 2, W // 2
    H4, W4 = H2 // 2, W2 // 2
    H8, W8 = H4 // 2, W4 // 2
    Wr1, Wr2, Wr3 = _round8(W + 2), _round8(W2 + 2), _round8(W4 + 2)

    x = jnp.transpose(x_nchw, (0, 2, 3, 1))                  # NCHW -> NHWC (free, C=1)

    # Pooling tap selectors: trace-time constants, DMA'd to VMEM once
    # (constant index_map -> Pallas skips the re-copy on later grid steps).
    sel1 = _pool_selectors(H, W, Wr1)
    sel2 = _pool_selectors(H2, W2, Wr2)
    sel3 = _pool_selectors(H4, W4, Wr3)

    # Fold PyTorch's (C, H, W) flatten order into fc1's weights:
    # (c*H8*W8 + r, o) -> [r, c, o] so the kernel's native (spatial, channel)
    # layout feeds fc1 directly (no runtime transpose between conv3 and fc1).
    n_hidden = params["fc1_w"].shape[-1]
    fc1w_k = params["fc1_w"].reshape(C2, H8 * W8, n_hidden).transpose(1, 0, 2)

    b1 = params["b1"].reshape(1, C1)
    b2 = params["b2"].reshape(1, C2)
    b3 = params["b3"].reshape(1, C2)
    fc1b = params["fc1_b"].reshape(1, -1)
    fc2w = params["fc2_w"]
    fc2b = params["fc2_b"].reshape(1, -1)
    n_out = fc2w.shape[-1]

    def const(*idx):
        return lambda n: idx

    kernel = functools.partial(_mynet_kernel, H=H, W=W)
    out = pl.pallas_call(
        kernel,
        out_shape=jax.ShapeDtypeStruct((N, 1, n_out), jnp.float32),
        grid=(N,),
        in_specs=[
            pl.BlockSpec((1, H, W, 1), lambda n: (n, 0, 0, 0)),   # x (per image)
            pl.BlockSpec((3, 3, 1, C1), const(0, 0, 0, 0)),       # w1
            pl.BlockSpec((1, C1), const(0, 0)),                   # b1
            pl.BlockSpec((3, 3, C1, C2), const(0, 0, 0, 0)),      # w2
            pl.BlockSpec((1, C2), const(0, 0)),                   # b2
            pl.BlockSpec((3, 3, C2, C2), const(0, 0, 0, 0)),      # w3
            pl.BlockSpec((1, C2), const(0, 0)),                   # b3
            pl.BlockSpec((H8 * W8, C2, n_hidden), const(0, 0, 0)),  # fc1_w permuted
            pl.BlockSpec((1, n_hidden), const(0, 0)),             # fc1_b
            pl.BlockSpec((n_hidden, n_out), const(0, 0)),         # fc2_w
            pl.BlockSpec((1, n_out), const(0, 0)),                # fc2_b
            pl.BlockSpec(sel1.shape, const(0, 0, 0)),             # pool selectors 1
            pl.BlockSpec(sel2.shape, const(0, 0, 0)),             # pool selectors 2
            pl.BlockSpec(sel3.shape, const(0, 0, 0)),             # pool selectors 3
        ],
        out_specs=pl.BlockSpec((1, 1, n_out), lambda n: (n, 0, 0)),
        scratch_shapes=[
            pltpu.VMEM(((H + 3) * Wr1, 1), jnp.float32),          # padded stage-1 image
            pltpu.VMEM(((H2 + 3) * Wr2, C1), jnp.float32),        # padded stage-2 image
            pltpu.VMEM(((H4 + 3) * Wr3, C2), jnp.float32),        # padded stage-3 image
        ],
        compiler_params=pltpu.CompilerParams(
            dimension_semantics=("parallel",)),                   # megacore on v7x
    )(x, params["w1"], b1, params["w2"], b2, params["w3"], b3,
      fc1w_k, fc1b, fc2w, fc2b, sel1, sel2, sel3)
    return out.reshape(N, n_out)


# ----------------------------------------------------------------------------
# Params + pure-JAX reference for a correctness check.
# ----------------------------------------------------------------------------
def init_params(key, height, width, n_chans1=32):
    c2 = n_chans1 // 2
    h, w = height // 8, width // 8
    keys = jax.random.split(key, 10)

    def init(k, shape, scale):
        return scale * jax.random.normal(k, shape, jnp.float32)

    return dict(
        w1=init(keys[0], (3, 3, 1, n_chans1), 0.2),       # HWIO
        b1=init(keys[1], (n_chans1,), 0.1),
        w2=init(keys[2], (3, 3, n_chans1, c2), 0.1),
        b2=init(keys[3], (c2,), 0.1),
        w3=init(keys[4], (3, 3, c2, c2), 0.1),
        b3=init(keys[5], (c2,), 0.1),
        fc1_w=init(keys[6], (h * w * c2, 32), 0.1),       # (in [PyTorch CHW order], out)
        fc1_b=init(keys[7], (32,), 0.1),
        fc2_w=init(keys[8], (32, 10), 0.1),
        fc2_b=init(keys[9], (10,), 0.1),
    )


def reference_forward(x_nchw, params):
    x = jnp.transpose(x_nchw, (0, 2, 3, 1))

    def conv(x, w, b):
        y = jax.lax.conv_general_dilated(
            x, w, window_strides=(1, 1), padding="SAME",
            dimension_numbers=("NHWC", "HWIO", "NHWC"))
        return jax.nn.relu(y + b.reshape(1, 1, 1, -1))

    def pool(x):
        return jax.lax.reduce_window(x, -jnp.inf, jax.lax.max,
                                     (1, 2, 2, 1), (1, 2, 2, 1), "VALID")

    out = pool(conv(x, params["w1"], params["b1"]))
    out = pool(conv(out, params["w2"], params["b2"]))
    out = pool(conv(out, params["w3"], params["b3"]))
    out = jnp.transpose(out, (0, 3, 1, 2)).reshape(out.shape[0], -1)  # NCHW flatten
    h = jax.nn.relu(out @ params["fc1_w"] + params["fc1_b"])
    return h @ params["fc2_w"] + params["fc2_b"]


if __name__ == "__main__":
    key = jax.random.PRNGKey(0)
    k_x, k_p = jax.random.split(key)

    N, H, W = 2, 16, 16
    x = jax.random.normal(k_x, (N, 1, H, W), jnp.float32)   # NCHW like PyTorch
    params = init_params(k_p, H, W, n_chans1=32)

    fwd = jax.jit(mynet_depth_forward)
    out = jax.block_until_ready(fwd(x, params))
    assert out.shape == (N, 10) and out.dtype == jnp.float32

    ref = reference_forward(x, params)
    assert jnp.allclose(out, ref, atol=1e-3, rtol=1e-3), \
        f"max abs diff {float(jnp.max(jnp.abs(out - ref)))}"

    print("KERNEL_OK")
</pallas_src>

<mosaic_0001>
module attributes {stable_mosaic.version = 11 : i64} {
  func.func @_mynet_kernel(%arg0: i32, %arg1: memref<1x16x16x1xf32, #tpu.memory_space<vmem>>, %arg2: memref<3x3x1x32xf32, #tpu.memory_space<vmem>>, %arg3: memref<1x32xf32, #tpu.memory_space<vmem>>, %arg4: memref<3x3x32x16xf32, #tpu.memory_space<vmem>>, %arg5: memref<1x16xf32, #tpu.memory_space<vmem>>, %arg6: memref<3x3x16x16xf32, #tpu.memory_space<vmem>>, %arg7: memref<1x16xf32, #tpu.memory_space<vmem>>, %arg8: memref<4x16x32xf32, #tpu.memory_space<vmem>>, %arg9: memref<1x32xf32, #tpu.memory_space<vmem>>, %arg10: memref<32x10xf32, #tpu.memory_space<vmem>>, %arg11: memref<1x10xf32, #tpu.memory_space<vmem>>, %arg12: memref<4x64x384xf32, #tpu.memory_space<vmem>>, %arg13: memref<4x16x128xf32, #tpu.memory_space<vmem>>, %arg14: memref<4x4x32xf32, #tpu.memory_space<vmem>>, %arg15: memref<1x1x10xf32, #tpu.memory_space<vmem>>, %arg16: memref<456x1xf32, #tpu.memory_space<vmem>>, %arg17: memref<176x32xf32, #tpu.memory_space<vmem>>, %arg18: memref<56x16xf32, #tpu.memory_space<vmem>>) attributes {dimension_semantics = [#tpu.dimension_semantics<parallel>], iteration_bounds = array<i64: 2>, scalar_prefetch = 0 : i64, scratch_operands = 3 : i64, tpu.core_type = #tpu.core_type<tc>, window_params = [{transform_indices = @transform_0, window_bounds = array<i64: 1, 16, 16, 1>}, {pipeline_mode = #tpu.pipeline_mode<synchronous>, transform_indices = @transform_1, window_bounds = array<i64: 3, 3, 1, 32>}, {pipeline_mode = #tpu.pipeline_mode<synchronous>, transform_indices = @transform_2, window_bounds = array<i64: 1, 32>}, {pipeline_mode = #tpu.pipeline_mode<synchronous>, transform_indices = @transform_3, window_bounds = array<i64: 3, 3, 32, 16>}, {pipeline_mode = #tpu.pipeline_mode<synchronous>, transform_indices = @transform_4, window_bounds = array<i64: 1, 16>}, {pipeline_mode = #tpu.pipeline_mode<synchronous>, transform_indices = @transform_5, window_bounds = array<i64: 3, 3, 16, 16>}, {pipeline_mode = #tpu.pipeline_mode<synchronous>, transform_indices = @transform_6, window_bounds = array<i64: 1, 16>}, {pipeline_mode = #tpu.pipeline_mode<synchronous>, transform_indices = @transform_7, window_bounds = array<i64: 4, 16, 32>}, {pipeline_mode = #tpu.pipeline_mode<synchronous>, transform_indices = @transform_8, window_bounds = array<i64: 1, 32>}, {pipeline_mode = #tpu.pipeline_mode<synchronous>, transform_indices = @transform_9, window_bounds = array<i64: 32, 10>}, {pipeline_mode = #tpu.pipeline_mode<synchronous>, transform_indices = @transform_10, window_bounds = array<i64: 1, 10>}, {pipeline_mode = #tpu.pipeline_mode<synchronous>, transform_indices = @transform_11, window_bounds = array<i64: 4, 64, 384>}, {pipeline_mode = #tpu.pipeline_mode<synchronous>, transform_indices = @transform_12, window_bounds = array<i64: 4, 16, 128>}, {pipeline_mode = #tpu.pipeline_mode<synchronous>, transform_indices = @transform_13, window_bounds = array<i64: 4, 4, 32>}, {transform_indices = @transform_14, window_bounds = array<i64: 1, 1, 10>}]} {
    %cst = arith.constant 0.000000e+00 : f32
    %0 = vector.broadcast %cst : f32 to vector<456x1xf32>
    %c0 = arith.constant 0 : index
    %c0_0 = arith.constant 0 : index
    %1 = vector.load %arg16[%c0, %c0_0] : memref<456x1xf32, #tpu.memory_space<vmem>>, vector<456x1xf32>
    tpu.vector_store %arg16[%c0, %c0_0], %0 {strides = array<i32>} : memref<456x1xf32, #tpu.memory_space<vmem>>, vector<456x1xf32>,
    %cst_1 = arith.constant 0.000000e+00 : f32
    %2 = vector.broadcast %cst_1 : f32 to vector<176x32xf32>
    %c0_2 = arith.constant 0 : index
    %c0_3 = arith.constant 0 : index
    %3 = vector.load %arg17[%c0_2, %c0_3] : memref<176x32xf32, #tpu.memory_space<vmem>>, vector<176x32xf32>
    tpu.vector_store %arg17[%c0_2, %c0_3], %2 {strides = array<i32>} : memref<176x32xf32, #tpu.memory_space<vmem>>, vector<176x32xf32>,
    %cst_4 = arith.constant 0.000000e+00 : f32
    %4 = vector.broadcast %cst_4 : f32 to vector<56x16xf32>
    %c0_5 = arith.constant 0 : index
    %c0_6 = arith.constant 0 : index
    %5 = vector.load %arg18[%c0_5, %c0_6] : memref<56x16xf32, #tpu.memory_space<vmem>>, vector<56x16xf32>
    tpu.vector_store %arg18[%c0_5, %c0_6], %4 {strides = array<i32>} : memref<56x16xf32, #tpu.memory_space<vmem>>, vector<56x16xf32>,
    %c0_7 = arith.constant 0 : index
    %c0_8 = arith.constant 0 : index
    %c0_9 = arith.constant 0 : index
    %c0_10 = arith.constant 0 : index
    %6 = vector.load %arg1[%c0_7, %c0_8, %c0_9, %c0_10] : memref<1x16x16x1xf32, #tpu.memory_space<vmem>>, vector<1x1x16x1xf32>
    %7 = vector.shape_cast %6 : vector<1x1x16x1xf32> to vector<16x1xf32>
    %c25 = arith.constant 25 : index
    %c0_11 = arith.constant 0 : index
    %8 = vector.load %arg16[%c25, %c0_11] : memref<456x1xf32, #tpu.memory_space<vmem>>, vector<16x1xf32>
    tpu.vector_store %arg16[%c25, %c0_11], %7 {strides = array<i32>} : memref<456x1xf32, #tpu.memory_space<vmem>>, vector<16x1xf32>,
    %c0_12 = arith.constant 0 : index
    %c1 = arith.constant 1 : index
    %c0_13 = arith.constant 0 : index
    %c0_14 = arith.constant 0 : index
    %9 = vector.load %arg1[%c0_12, %c1, %c0_13, %c0_14] : memref<1x16x16x1xf32, #tpu.memory_space<vmem>>, vector<1x1x16x1xf32>
    %10 = vector.shape_cast %9 : vector<1x1x16x1xf32> to vector<16x1xf32>
    %c49 = arith.constant 49 : index
    %c0_15 = arith.constant 0 : index
    %11 = vector.load %arg16[%c49, %c0_15] : memref<456x1xf32, #tpu.memory_space<vmem>>, vector<16x1xf32>
    tpu.vector_store %arg16[%c49, %c0_15], %10 {strides = array<i32>} : memref<456x1xf32, #tpu.memory_space<vmem>>, vector<16x1xf32>,
    %c0_16 = arith.constant 0 : index
    %c2 = arith.constant 2 : index
    %c0_17 = arith.constant 0 : index
    %c0_18 = arith.constant 0 : index
    %12 = vector.load %arg1[%c0_16, %c2, %c0_17, %c0_18] : memref<1x16x16x1xf32, #tpu.memory_space<vmem>>, vector<1x1x16x1xf32>
    %13 = vector.shape_cast %12 : vector<1x1x16x1xf32> to vector<16x1xf32>
    %c73 = arith.constant 73 : index
    %c0_19 = arith.constant 0 : index
    %14 = vector.load %arg16[%c73, %c0_19] : memref<456x1xf32, #tpu.memory_space<vmem>>, vector<16x1xf32>
    tpu.vector_store %arg16[%c73, %c0_19], %13 {strides = array<i32>} : memref<456x1xf32, #tpu.memory_space<vmem>>, vector<16x1xf32>,
    %c0_20 = arith.constant 0 : index
    %c3 = arith.constant 3 : index
    %c0_21 = arith.constant 0 : index
    %c0_22 = arith.constant 0 : index
    %15 = vector.load %arg1[%c0_20, %c3, %c0_21, %c0_22] : memref<1x16x16x1xf32, #tpu.memory_space<vmem>>, vector<1x1x16x1xf32>
    %16 = vector.shape_cast %15 : vector<1x1x16x1xf32> to vector<16x1xf32>
    %c97 = arith.constant 97 : index
    %c0_23 = arith.constant 0 : index
    %17 = vector.load %arg16[%c97, %c0_23] : memref<456x1xf32, #tpu.memory_space<vmem>>, vector<16x1xf32>
    tpu.vector_store %arg16[%c97, %c0_23], %16 {strides = array<i32>} : memref<456x1xf32, #tpu.memory_space<vmem>>, vector<16x1xf32>,
    %c0_24 = arith.constant 0 : index
    %c4 = arith.constant 4 : index
    %c0_25 = arith.constant 0 : index
    %c0_26 = arith.constant 0 : index
    %18 = vector.load %arg1[%c0_24, %c4, %c0_25, %c0_26] : memref<1x16x16x1xf32, #tpu.memory_space<vmem>>, vector<1x1x16x1xf32>
    %19 = vector.shape_cast %18 : vector<1x1x16x1xf32> to vector<16x1xf32>
    %c121 = arith.constant 121 : index
    %c0_27 = arith.constant 0 : index
    %20 = vector.load %arg16[%c121, %c0_27] : memref<456x1xf32, #tpu.memory_space<vmem>>, vector<16x1xf32>
    tpu.vector_store %arg16[%c121, %c0_27], %19 {strides = array<i32>} : memref<456x1xf32, #tpu.memory_space<vmem>>, vector<16x1xf32>,
    %c0_28 = arith.constant 0 : index
    %c5 = arith.constant 5 : index
    %c0_29 = arith.constant 0 : index
    %c0_30 = arith.constant 0 : index
    %21 = vector.load %arg1[%c0_28, %c5, %c0_29, %c0_30] : memref<1x16x16x1xf32, #tpu.memory_space<vmem>>, vector<1x1x16x1xf32>
    %22 = vector.shape_cast %21 : vector<1x1x16x1xf32> to vector<16x1xf32>
    %c145 = arith.constant 145 : index
    %c0_31 = arith.constant 0 : index
    %23 = vector.load %arg16[%c145, %c0_31] : memref<456x1xf32, #tpu.memory_space<vmem>>, vector<16x1xf32>
    tpu.vector_store %arg16[%c145, %c0_31], %22 {strides = array<i32>} : memref<456x1xf32, #tpu.memory_space<vmem>>, vector<16x1xf32>,
    %c0_32 = arith.constant 0 : index
    %c6 = arith.constant 6 : index
    %c0_33 = arith.constant 0 : index
    %c0_34 = arith.constant 0 : index
    %24 = vector.load %arg1[%c0_32, %c6, %c0_33, %c0_34] : memref<1x16x16x1xf32, #tpu.memory_space<vmem>>, vector<1x1x16x1xf32>
    %25 = vector.shape_cast %24 : vector<1x1x16x1xf32> to vector<16x1xf32>
    %c169 = arith.constant 169 : index
    %c0_35 = arith.constant 0 : index
    %26 = vector.load %arg16[%c169, %c0_35] : memref<456x1xf32, #tpu.memory_space<vmem>>, vector<16x1xf32>
    tpu.vector_store %arg16[%c169, %c0_35], %25 {strides = array<i32>} : memref<456x1xf32, #tpu.memory_space<vmem>>, vector<16x1xf32>,
    %c0_36 = arith.constant 0 : index
    %c7 = arith.constant 7 : index
    %c0_37 = arith.constant 0 : index
    %c0_38 = arith.constant 0 : index
    %27 = vector.load %arg1[%c0_36, %c7, %c0_37, %c0_38] : memref<1x16x16x1xf32, #tpu.memory_space<vmem>>, vector<1x1x16x1xf32>
    %28 = vector.shape_cast %27 : vector<1x1x16x1xf32> to vector<16x1xf32>
    %c193 = arith.constant 193 : index
    %c0_39 = arith.constant 0 : index
    %29 = vector.load %arg16[%c193, %c0_39] : memref<456x1xf32, #tpu.memory_space<vmem>>, vector<16x1xf32>
    tpu.vector_store %arg16[%c193, %c0_39], %28 {strides = array<i32>} : memref<456x1xf32, #tpu.memory_space<vmem>>, vector<16x1xf32>,
    %c0_40 = arith.constant 0 : index
    %c8 = arith.constant 8 : index
    %c0_41 = arith.constant 0 : index
    %c0_42 = arith.constant 0 : index
    %30 = vector.load %arg1[%c0_40, %c8, %c0_41, %c0_42] : memref<1x16x16x1xf32, #tpu.memory_space<vmem>>, vector<1x1x16x1xf32>
    %31 = vector.shape_cast %30 : vector<1x1x16x1xf32> to vector<16x1xf32>
    %c217 = arith.constant 217 : index
    %c0_43 = arith.constant 0 : index
    %32 = vector.load %arg16[%c217, %c0_43] : memref<456x1xf32, #tpu.memory_space<vmem>>, vector<16x1xf32>
    tpu.vector_store %arg16[%c217, %c0_43], %31 {strides = array<i32>} : memref<456x1xf32, #tpu.memory_space<vmem>>, vector<16x1xf32>,
    %c0_44 = arith.constant 0 : index
    %c9 = arith.constant 9 : index
    %c0_45 = arith.constant 0 : index
    %c0_46 = arith.constant 0 : index
    %33 = vector.load %arg1[%c0_44, %c9, %c0_45, %c0_46] : memref<1x16x16x1xf32, #tpu.memory_space<vmem>>, vector<1x1x16x1xf32>
    %34 = vector.shape_cast %33 : vector<1x1x16x1xf32> to vector<16x1xf32>
    %c241 = arith.constant 241 : index
    %c0_47 = arith.constant 0 : index
    %35 = vector.load %arg16[%c241, %c0_47] : memref<456x1xf32, #tpu.memory_space<vmem>>, vector<16x1xf32>
    tpu.vector_store %arg16[%c241, %c0_47], %34 {strides = array<i32>} : memref<456x1xf32, #tpu.memory_space<vmem>>, vector<16x1xf32>,
    %c0_48 = arith.constant 0 : index
    %c10 = arith.constant 10 : index
    %c0_49 = arith.constant 0 : index
    %c0_50 = arith.constant 0 : index
    %36 = vector.load %arg1[%c0_48, %c10, %c0_49, %c0_50] : memref<1x16x16x1xf32, #tpu.memory_space<vmem>>, vector<1x1x16x1xf32>
    %37 = vector.shape_cast %36 : vector<1x1x16x1xf32> to vector<16x1xf32>
    %c265 = arith.constant 265 : index
    %c0_51 = arith.constant 0 : index
    %38 = vector.load %arg16[%c265, %c0_51] : memref<456x1xf32, #tpu.memory_space<vmem>>, vector<16x1xf32>
    tpu.vector_store %arg16[%c265, %c0_51], %37 {strides = array<i32>} : memref<456x1xf32, #tpu.memory_space<vmem>>, vector<16x1xf32>,
    %c0_52 = arith.constant 0 : index
    %c11 = arith.constant 11 : index
    %c0_53 = arith.constant 0 : index
    %c0_54 = arith.constant 0 : index
    %39 = vector.load %arg1[%c0_52, %c11, %c0_53, %c0_54] : memref<1x16x16x1xf32, #tpu.memory_space<vmem>>, vector<1x1x16x1xf32>
    %40 = vector.shape_cast %39 : vector<1x1x16x1xf32> to vector<16x1xf32>
    %c289 = arith.constant 289 : index
    %c0_55 = arith.constant 0 : index
    %41 = vector.load %arg16[%c289, %c0_55] : memref<456x1xf32, #tpu.memory_space<vmem>>, vector<16x1xf32>
    tpu.vector_store %arg16[%c289, %c0_55], %40 {strides = array<i32>} : memref<456x1xf32, #tpu.memory_space<vmem>>, vector<16x1xf32>,
    %c0_56 = arith.constant 0 : index
    %c12 = arith.constant 12 : index
    %c0_57 = arith.constant 0 : index
    %c0_58 = arith.constant 0 : index
    %42 = vector.load %arg1[%c0_56, %c12, %c0_57, %c0_58] : memref<1x16x16x1xf32, #tpu.memory_space<vmem>>, vector<1x1x16x1xf32>
    %43 = vector.shape_cast %42 : vector<1x1x16x1xf32> to vector<16x1xf32>
    %c313 = arith.constant 313 : index
    %c0_59 = arith.constant 0 : index
    %44 = vector.load %arg16[%c313, %c0_59] : memref<456x1xf32, #tpu.memory_space<vmem>>, vector<16x1xf32>
    tpu.vector_store %arg16[%c313, %c0_59], %43 {strides = array<i32>} : memref<456x1xf32, #tpu.memory_space<vmem>>, vector<16x1xf32>,
    %c0_60 = arith.constant 0 : index
    %c13 = arith.constant 13 : index
    %c0_61 = arith.constant 0 : index
    %c0_62 = arith.constant 0 : index
    %45 = vector.load %arg1[%c0_60, %c13, %c0_61, %c0_62] : memref<1x16x16x1xf32, #tpu.memory_space<vmem>>, vector<1x1x16x1xf32>
    %46 = vector.shape_cast %45 : vector<1x1x16x1xf32> to vector<16x1xf32>
    %c337 = arith.constant 337 : index
    %c0_63 = arith.constant 0 : index
    %47 = vector.load %arg16[%c337, %c0_63] : memref<456x1xf32, #tpu.memory_space<vmem>>, vector<16x1xf32>
    tpu.vector_store %arg16[%c337, %c0_63], %46 {strides = array<i32>} : memref<456x1xf32, #tpu.memory_space<vmem>>, vector<16x1xf32>,
    %c0_64 = arith.constant 0 : index
    %c14 = arith.constant 14 : index
    %c0_65 = arith.constant 0 : index
    %c0_66 = arith.constant 0 : index
    %48 = vector.load %arg1[%c0_64, %c14, %c0_65, %c0_66] : memref<1x16x16x1xf32, #tpu.memory_space<vmem>>, vector<1x1x16x1xf32>
    %49 = vector.shape_cast %48 : vector<1x1x16x1xf32> to vector<16x1xf32>
    %c361 = arith.constant 361 : index
    %c0_67 = arith.constant 0 : index
    %50 = vector.load %arg16[%c361, %c0_67] : memref<456x1xf32, #tpu.memory_space<vmem>>, vector<16x1xf32>
    tpu.vector_store %arg16[%c361, %c0_67], %49 {strides = array<i32>} : memref<456x1xf32, #tpu.memory_space<vmem>>, vector<16x1xf32>,
    %c0_68 = arith.constant 0 : index
    %c15 = arith.constant 15 : index
    %c0_69 = arith.constant 0 : index
    %c0_70 = arith.constant 0 : index
    %51 = vector.load %arg1[%c0_68, %c15, %c0_69, %c0_70] : memref<1x16x16x1xf32, #tpu.memory_space<vmem>>, vector<1x1x16x1xf32>
    %52 = vector.shape_cast %51 : vector<1x1x16x1xf32> to vector<16x1xf32>
    %c385 = arith.constant 385 : index
    %c0_71 = arith.constant 0 : index
    %53 = vector.load %arg16[%c385, %c0_71] : memref<456x1xf32, #tpu.memory_space<vmem>>, vector<16x1xf32>
    tpu.vector_store %arg16[%c385, %c0_71], %52 {strides = array<i32>} : memref<456x1xf32, #tpu.memory_space<vmem>>, vector<16x1xf32>,
    %cst_72 = arith.constant 0.000000e+00 : f32
    %54 = vector.broadcast %cst_72 : f32 to vector<384x32xf32>
    %c0_73 = arith.constant 0 : index
    %c0_74 = arith.constant 0 : index
    %55 = vector.load %arg16[%c0_73, %c0_74] : memref<456x1xf32, #tpu.memory_space<vmem>>, vector<384x1xf32>
    %c0_75 = arith.constant 0 : index
    %c0_76 = arith.constant 0 : index
    %c0_77 = arith.constant 0 : index
    %c0_78 = arith.constant 0 : index
    %56 = vector.load %arg2[%c0_75, %c0_76, %c0_77, %c0_78] : memref<3x3x1x32xf32, #tpu.memory_space<vmem>>, vector<1x1x1x32xf32>
    %57 = vector.shape_cast %56 : vector<1x1x1x32xf32> to vector<1x32xf32>
    %58 = vector.broadcast %55 : vector<384x1xf32> to vector<384x32xf32>
    %59 = vector.broadcast %57 : vector<1x32xf32> to vector<384x32xf32>
    %60 = arith.mulf %58, %59 : vector<384x32xf32>
    %61 = arith.addf %54, %60 : vector<384x32xf32>
    %c1_79 = arith.constant 1 : index
    %c0_80 = arith.constant 0 : index
    %62 = vector.load %arg16[%c1_79, %c0_80] : memref<456x1xf32, #tpu.memory_space<vmem>>, vector<384x1xf32>
    %c0_81 = arith.constant 0 : index
    %c1_82 = arith.constant 1 : index
    %c0_83 = arith.constant 0 : index
    %c0_84 = arith.constant 0 : index
    %63 = vector.load %arg2[%c0_81, %c1_82, %c0_83, %c0_84] : memref<3x3x1x32xf32, #tpu.memory_space<vmem>>, vector<1x1x1x32xf32>
    %64 = vector.shape_cast %63 : vector<1x1x1x32xf32> to vector<1x32xf32>
    %65 = vector.broadcast %62 : vector<384x1xf32> to vector<384x32xf32>
    %66 = vector.broadcast %64 : vector<1x32xf32> to vector<384x32xf32>
    %67 = arith.mulf %65, %66 : vector<384x32xf32>
    %68 = arith.addf %61, %67 : vector<384x32xf32>
    %c2_85 = arith.constant 2 : index
    %c0_86 = arith.constant 0 : index
    %69 = vector.load %arg16[%c2_85, %c0_86] : memref<456x1xf32, #tpu.memory_space<vmem>>, vector<384x1xf32>
    %c0_87 = arith.constant 0 : index
    %c2_88 = arith.constant 2 : index
    %c0_89 = arith.constant 0 : index
    %c0_90 = arith.constant 0 : index
    %70 = vector.load %arg2[%c0_87, %c2_88, %c0_89, %c0_90] : memref<3x3x1x32xf32, #tpu.memory_space<vmem>>, vector<1x1x1x32xf32>
    %71 = vector.shape_cast %70 : vector<1x1x1x32xf32> to vector<1x32xf32>
    %72 = vector.broadcast %69 : vector<384x1xf32> to vector<384x32xf32>
    %73 = vector.broadcast %71 : vector<1x32xf32> to vector<384x32xf32>
    %74 = arith.mulf %72, %73 : vector<384x32xf32>
    %75 = arith.addf %68, %74 : vector<384x32xf32>
    %c24 = arith.constant 24 : index
    %c0_91 = arith.constant 0 : index
    %76 = vector.load %arg16[%c24, %c0_91] : memref<456x1xf32, #tpu.memory_space<vmem>>, vector<384x1xf32>
    %c1_92 = arith.constant 1 : index
    %c0_93 = arith.constant 0 : index
    %c0_94 = arith.constant 0 : index
    %c0_95 = arith.constant 0 : index
    %77 = vector.load %arg2[%c1_92, %c0_93, %c0_94, %c0_95] : memref<3x3x1x32xf32, #tpu.memory_space<vmem>>, vector<1x1x1x32xf32>
    %78 = vector.shape_cast %77 : vector<1x1x1x32xf32> to vector<1x32xf32>
    %79 = vector.broadcast %76 : vector<384x1xf32> to vector<384x32xf32>
    %80 = vector.broadcast %78 : vector<1x32xf32> to vector<384x32xf32>
    %81 = arith.mulf %79, %80 : vector<384x32xf32>
    %82 = arith.addf %75, %81 : vector<384x32xf32>
    %c25_96 = arith.constant 25 : index
    %c0_97 = arith.constant 0 : index
    %83 = vector.load %arg16[%c25_96, %c0_97] : memref<456x1xf32, #tpu.memory_space<vmem>>, vector<384x1xf32>
    %c1_98 = arith.constant 1 : index
    %c1_99 = arith.constant 1 : index
    %c0_100 = arith.constant 0 : index
    %c0_101 = arith.constant 0 : index
    %84 = vector.load %arg2[%c1_98, %c1_99, %c0_100, %c0_101] : memref<3x3x1x32xf32, #tpu.memory_space<vmem>>, vector<1x1x1x32xf32>
    %85 = vector.shape_cast %84 : vector<1x1x1x32xf32> to vector<1x32xf32>
    %86 = vector.broadcast %83 : vector<384x1xf32> to vector<384x32xf32>
    %87 = vector.broadcast %85 : vector<1x32xf32> to vector<384x32xf32>
    %88 = arith.mulf %86, %87 : vector<384x32xf32>
    %89 = arith.addf %82, %88 : vector<384x32xf32>
    %c26 = arith.constant 26 : index
    %c0_102 = arith.constant 0 : index
    %90 = vector.load %arg16[%c26, %c0_102] : memref<456x1xf32, #tpu.memory_space<vmem>>, vector<384x1xf32>
    %c1_103 = arith.constant 1 : index
    %c2_104 = arith.constant 2 : index
    %c0_105 = arith.constant 0 : index
    %c0_106 = arith.constant 0 : index
    %91 = vector.load %arg2[%c1_103, %c2_104, %c0_105, %c0_106] : memref<3x3x1x32xf32, #tpu.memory_space<vmem>>, vector<1x1x1x32xf32>
    %92 = vector.shape_cast %91 : vector<1x1x1x32xf32> to vector<1x32xf32>
    %93 = vector.broadcast %90 : vector<384x1xf32> to vector<384x32xf32>
    %94 = vector.broadcast %92 : vector<1x32xf32> to vector<384x32xf32>
    %95 = arith.mulf %93, %94 : vector<384x32xf32>
    %96 = arith.addf %89, %95 : vector<384x32xf32>
    %c48 = arith.constant 48 : index
    %c0_107 = arith.constant 0 : index
    %97 = vector.load %arg16[%c48, %c0_107] : memref<456x1xf32, #tpu.memory_space<vmem>>, vector<384x1xf32>
    %c2_108 = arith.constant 2 : index
    %c0_109 = arith.constant 0 : index
    %c0_110 = arith.constant 0 : index
    %c0_111 = arith.constant 0 : index
    %98 = vector.load %arg2[%c2_108, %c0_109, %c0_110, %c0_111] : memref<3x3x1x32xf32, #tpu.memory_space<vmem>>, vector<1x1x1x32xf32>
    %99 = vector.shape_cast %98 : vector<1x1x1x32xf32> to vector<1x32xf32>
    %100 = vector.broadcast %97 : vector<384x1xf32> to vector<384x32xf32>
    %101 = vector.broadcast %99 : vector<1x32xf32> to vector<384x32xf32>
    %102 = arith.mulf %100, %101 : vector<384x32xf32>
    %103 = arith.addf %96, %102 : vector<384x32xf32>
    %c49_112 = arith.constant 49 : index
    %c0_113 = arith.constant 0 : index
    %104 = vector.load %arg16[%c49_112, %c0_113] : memref<456x1xf32, #tpu.memory_space<vmem>>, vector<384x1xf32>
    %c2_114 = arith.constant 2 : index
    %c1_115 = arith.constant 1 : index
    %c0_116 = arith.constant 0 : index
    %c0_117 = arith.constant 0 : index
    %105 = vector.load %arg2[%c2_114, %c1_115, %c0_116, %c0_117] : memref<3x3x1x32xf32, #tpu.memory_space<vmem>>, vector<1x1x1x32xf32>
    %106 = vector.shape_cast %105 : vector<1x1x1x32xf32> to vector<1x32xf32>
    %107 = vector.broadcast %104 : vector<384x1xf32> to vector<384x32xf32>
    %108 = vector.broadcast %106 : vector<1x32xf32> to vector<384x32xf32>
    %109 = arith.mulf %107, %108 : vector<384x32xf32>
    %110 = arith.addf %103, %109 : vector<384x32xf32>
    %c50 = arith.constant 50 : index
    %c0_118 = arith.constant 0 : index
    %111 = vector.load %arg16[%c50, %c0_118] : memref<456x1xf32, #tpu.memory_space<vmem>>, vector<384x1xf32>
    %c2_119 = arith.constant 2 : index
    %c2_120 = arith.constant 2 : index
    %c0_121 = arith.constant 0 : index
    %c0_122 = arith.constant 0 : index
    %112 = vector.load %arg2[%c2_119, %c2_120, %c0_121, %c0_122] : memref<3x3x1x32xf32, #tpu.memory_space<vmem>>, vector<1x1x1x32xf32>
    %113 = vector.shape_cast %112 : vector<1x1x1x32xf32> to vector<1x32xf32>
    %114 = vector.broadcast %111 : vector<384x1xf32> to vector<384x32xf32>
    %115 = vector.broadcast %113 : vector<1x32xf32> to vector<384x32xf32>
    %116 = arith.mulf %114, %115 : vector<384x32xf32>
    %117 = arith.addf %110, %116 : vector<384x32xf32>
    %c0_123 = arith.constant 0 : index
    %c0_124 = arith.constant 0 : index
    %118 = vector.load %arg3[%c0_123, %c0_124] : memref<1x32xf32, #tpu.memory_space<vmem>>, vector<1x32xf32>
    %119 = vector.broadcast %118 : vector<1x32xf32> to vector<384x32xf32>
    %120 = arith.addf %117, %119 : vector<384x32xf32>
    %cst_125 = arith.constant 0.000000e+00 : f32
    %121 = vector.broadcast %cst_125 : f32 to vector<384x32xf32>
    %122 = arith.maximumf %120, %121 : vector<384x32xf32>
    %c0_126 = arith.constant 0 : index
    %c0_127 = arith.constant 0 : index
    %c0_128 = arith.constant 0 : index
    %123 = vector.load %arg12[%c0_126, %c0_127, %c0_128] : memref<4x64x384xf32, #tpu.memory_space<vmem>>, vector<1x64x384xf32>
    %124 = vector.shape_cast %123 : vector<1x64x384xf32> to vector<64x384xf32>
    %cst_129 = arith.constant dense<0.000000e+00> : vector<64x32xf32>
    %125 = tpu.matmul %124, %122, %cst_129 {dimension_numbers = #tpu.dot_dimension_numbers<[1], [0], [0], [1], [0, 0, 1, 1], [], []>} : vector<64x384xf32>, vector<384x32xf32>, vector<64x32xf32> -> vector<64x32xf32>
    %c1_130 = arith.constant 1 : index
    %c0_131 = arith.constant 0 : index
    %c0_132 = arith.constant 0 : index
    %126 = vector.load %arg12[%c1_130, %c0_131, %c0_132] : memref<4x64x384xf32, #tpu.memory_space<vmem>>, vector<1x64x384xf32>
    %127 = vector.shape_cast %126 : vector<1x64x384xf32> to vector<64x384xf32>
    %cst_133 = arith.constant dense<0.000000e+00> : vector<64x32xf32>
    %128 = tpu.matmul %127, %122, %cst_133 {dimension_numbers = #tpu.dot_dimension_numbers<[1], [0], [0], [1], [0, 0, 1, 1], [], []>} : vector<64x384xf32>, vector<384x32xf32>, vector<64x32xf32> -> vector<64x32xf32>
    %129 = arith.maximumf %125, %128 : vector<64x32xf32>
    %c2_134 = arith.constant 2 : index
    %c0_135 = arith.constant 0 : index
    %c0_136 = arith.constant 0 : index
    %130 = vector.load %arg12[%c2_134, %c0_135, %c0_136] : memref<4x64x384xf32, #tpu.memory_space<vmem>>, vector<1x64x384xf32>
    %131 = vector.shape_cast %130 : vector<1x64x384xf32> to vector<64x384xf32>
    %cst_137 = arith.constant dense<0.000000e+00> : vector<64x32xf32>
    %132 = tpu.matmul %131, %122, %cst_137 {dimension_numbers = #tpu.dot_dimension_numbers<[1], [0], [0], [1], [0, 0, 1, 1], [], []>} : vector<64x384xf32>, vector<384x32xf32>, vector<64x32xf32> -> vector<64x32xf32>
    %133 = arith.maximumf %129, %132 : vector<64x32xf32>
    %c3_138 = arith.constant 3 : index
    %c0_139 = arith.constant 0 : index
    %c0_140 = arith.constant 0 : index
    %134 = vector.load %arg12[%c3_138, %c0_139, %c0_140] : memref<4x64x384xf32, #tpu.memory_space<vmem>>, vector<1x64x384xf32>
    %135 = vector.shape_cast %134 : vector<1x64x384xf32> to vector<64x384xf32>
    %cst_141 = arith.constant dense<0.000000e+00> : vector<64x32xf32>
    %136 = tpu.matmul %135, %122, %cst_141 {dimension_numbers = #tpu.dot_dimension_numbers<[1], [0], [0], [1], [0, 0, 1, 1], [], []>} : vector<64x384xf32>, vector<384x32xf32>, vector<64x32xf32> -> vector<64x32xf32>
    %137 = arith.maximumf %133, %136 : vector<64x32xf32>
    %138 = vector.extract_strided_slice %137 {offsets = [0, 0], sizes = [8, 32], strides = [1, 1]} : vector<64x32xf32> to vector<8x32xf32>
    %c17 = arith.constant 17 : index
    %c0_142 = arith.constant 0 : index
    %139 = vector.load %arg17[%c17, %c0_142] : memref<176x32xf32, #tpu.memory_space<vmem>>, vector<8x32xf32>
    tpu.vector_store %arg17[%c17, %c0_142], %138 {strides = array<i32>} : memref<176x32xf32, #tpu.memory_space<vmem>>, vector<8x32xf32>,
    %140 = vector.extract_strided_slice %137 {offsets = [8, 0], sizes = [8, 32], strides = [1, 1]} : vector<64x32xf32> to vector<8x32xf32>
    %c33 = arith.constant 33 : index
    %c0_143 = arith.constant 0 : index
    %141 = vector.load %arg17[%c33, %c0_143] : memref<176x32xf32, #tpu.memory_space<vmem>>, vector<8x32xf32>
    tpu.vector_store %arg17[%c33, %c0_143], %140 {strides = array<i32>} : memref<176x32xf32, #tpu.memory_space<vmem>>, vector<8x32xf32>,
    %142 = vector.extract_strided_slice %137 {offsets = [16, 0], sizes = [8, 32], strides = [1, 1]} : vector<64x32xf32> to vector<8x32xf32>
    %c49_144 = arith.constant 49 : index
    %c0_145 = arith.constant 0 : index
    %143 = vector.load %arg17[%c49_144, %c0_145] : memref<176x32xf32, #tpu.memory_space<vmem>>, vector<8x32xf32>
    tpu.vector_store %arg17[%c49_144, %c0_145], %142 {strides = array<i32>} : memref<176x32xf32, #tpu.memory_space<vmem>>, vector<8x32xf32>,
    %144 = vector.extract_strided_slice %137 {offsets = [24, 0], sizes = [8, 32], strides = [1, 1]} : vector<64x32xf32> to vector<8x32xf32>
    %c65 = arith.constant 65 : index
    %c0_146 = arith.constant 0 : index
    %145 = vector.load %arg17[%c65, %c0_146] : memref<176x32xf32, #tpu.memory_space<vmem>>, vector<8x32xf32>
    tpu.vector_store %arg17[%c65, %c0_146], %144 {strides = array<i32>} : memref<176x32xf32, #tpu.memory_space<vmem>>, vector<8x32xf32>,
    %146 = vector.extract_strided_slice %137 {offsets = [32, 0], sizes = [8, 32], strides = [1, 1]} : vector<64x32xf32> to vector<8x32xf32>
    %c81 = arith.constant 81 : index
    %c0_147 = arith.constant 0 : index
    %147 = vector.load %arg17[%c81, %c0_147] : memref<176x32xf32, #tpu.memory_space<vmem>>, vector<8x32xf32>
    tpu.vector_store %arg17[%c81, %c0_147], %146 {strides = array<i32>} : memref<176x32xf32, #tpu.memory_space<vmem>>, vector<8x32xf32>,
    %148 = vector.extract_strided_slice %137 {offsets = [40, 0], sizes = [8, 32], strides = [1, 1]} : vector<64x32xf32> to vector<8x32xf32>
    %c97_148 = arith.constant 97 : index
    %c0_149 = arith.constant 0 : index
    %149 = vector.load %arg17[%c97_148, %c0_149] : memref<176x32xf32, #tpu.memory_space<vmem>>, vector<8x32xf32>
    tpu.vector_store %arg17[%c97_148, %c0_149], %148 {strides = array<i32>} : memref<176x32xf32, #tpu.memory_space<vmem>>, vector<8x32xf32>,
    %150 = vector.extract_strided_slice %137 {offsets = [48, 0], sizes = [8, 32], strides = [1, 1]} : vector<64x32xf32> to vector<8x32xf32>
    %c113 = arith.constant 113 : index
    %c0_150 = arith.constant 0 : index
    %151 = vector.load %arg17[%c113, %c0_150] : memref<176x32xf32, #tpu.memory_space<vmem>>, vector<8x32xf32>
    tpu.vector_store %arg17[%c113, %c0_150], %150 {strides = array<i32>} : memref<176x32xf32, #tpu.memory_space<vmem>>, vector<8x32xf32>,
    %152 = vector.extract_strided_slice %137 {offsets = [56, 0], sizes = [8, 32], strides = [1, 1]} : vector<64x32xf32> to vector<8x32xf32>
    %c129 = arith.constant 129 : index
    %c0_151 = arith.constant 0 : index
    %153 = vector.load %arg17[%c129, %c0_151] : memref<176x32xf32, #tpu.memory_space<vmem>>, vector<8x32xf32>
    tpu.vector_store %arg17[%c129, %c0_151], %152 {strides = array<i32>} : memref<176x32xf32, #tpu.memory_space<vmem>>, vector<8x32xf32>,
    %cst_152 = arith.constant 0.000000e+00 : f32
    %154 = vector.broadcast %cst_152 : f32 to vector<128x16xf32>
    %c0_153 = arith.constant 0 : index
    %c0_154 = arith.constant 0 : index
    %155 = vector.load %arg17[%c0_153, %c0_154] : memref<176x32xf32, #tpu.memory_space<vmem>>, vector<128x32xf32>
    %c0_155 = arith.constant 0 : index
    %c0_156 = arith.constant 0 : index
    %c0_157 = arith.constant 0 : index
    %c0_158 = arith.constant 0 : index
    %156 = vector.load %arg4[%c0_155, %c0_156, %c0_157, %c0_158] : memref<3x3x32x16xf32, #tpu.memory_space<vmem>>, vector<1x1x32x16xf32>
    %157 = vector.shape_cast %156 : vector<1x1x32x16xf32> to vector<32x16xf32>
    %cst_159 = arith.constant dense<0.000000e+00> : vector<128x16xf32>
    %158 = tpu.matmul %155, %157, %cst_159 {dimension_numbers = #tpu.dot_dimension_numbers<[1], [0], [0], [1], [0, 0, 1, 1], [], []>} : vector<128x32xf32>, vector<32x16xf32>, vector<128x16xf32> -> vector<128x16xf32>
    %159 = arith.addf %154, %158 : vector<128x16xf32>
    %c1_160 = arith.constant 1 : index
    %c0_161 = arith.constant 0 : index
    %160 = vector.load %arg17[%c1_160, %c0_161] : memref<176x32xf32, #tpu.memory_space<vmem>>, vector<128x32xf32>
    %c0_162 = arith.constant 0 : index
    %c1_163 = arith.constant 1 : index
    %c0_164 = arith.constant 0 : index
    %c0_165 = arith.constant 0 : index
    %161 = vector.load %arg4[%c0_162, %c1_163, %c0_164, %c0_165] : memref<3x3x32x16xf32, #tpu.memory_space<vmem>>, vector<1x1x32x16xf32>
    %162 = vector.shape_cast %161 : vector<1x1x32x16xf32> to vector<32x16xf32>
    %cst_166 = arith.constant dense<0.000000e+00> : vector<128x16xf32>
    %163 = tpu.matmul %160, %162, %cst_166 {dimension_numbers = #tpu.dot_dimension_numbers<[1], [0], [0], [1], [0, 0, 1, 1], [], []>} : vector<128x32xf32>, vector<32x16xf32>, vector<128x16xf32> -> vector<128x16xf32>
    %164 = arith.addf %159, %163 : vector<128x16xf32>
    %c2_167 = arith.constant 2 : index
    %c0_168 = arith.constant 0 : index
    %165 = vector.load %arg17[%c2_167, %c0_168] : memref<176x32xf32, #tpu.memory_space<vmem>>, vector<128x32xf32>
    %c0_169 = arith.constant 0 : index
    %c2_170 = arith.constant 2 : index
    %c0_171 = arith.constant 0 : index
    %c0_172 = arith.constant 0 : index
    %166 = vector.load %arg4[%c0_169, %c2_170, %c0_171, %c0_172] : memref<3x3x32x16xf32, #tpu.memory_space<vmem>>, vector<1x1x32x16xf32>
    %167 = vector.shape_cast %166 : vector<1x1x32x16xf32> to vector<32x16xf32>
    %cst_173 = arith.constant dense<0.000000e+00> : vector<128x16xf32>
    %168 = tpu.matmul %165, %167, %cst_173 {dimension_numbers = #tpu.dot_dimension_numbers<[1], [0], [0], [1], [0, 0, 1, 1], [], []>} : vector<128x32xf32>, vector<32x16xf32>, vector<128x16xf32> -> vector<128x16xf32>
    %169 = arith.addf %164, %168 : vector<128x16xf32>
    %c16 = arith.constant 16 : index
    %c0_174 = arith.constant 0 : index
    %170 = vector.load %arg17[%c16, %c0_174] : memref<176x32xf32, #tpu.memory_space<vmem>>, vector<128x32xf32>
    %c1_175 = arith.constant 1 : index
    %c0_176 = arith.constant 0 : index
    %c0_177 = arith.constant 0 : index
    %c0_178 = arith.constant 0 : index
    %171 = vector.load %arg4[%c1_175, %c0_176, %c0_177, %c0_178] : memref<3x3x32x16xf32, #tpu.memory_space<vmem>>, vector<1x1x32x16xf32>
    %172 = vector.shape_cast %171 : vector<1x1x32x16xf32> to vector<32x16xf32>
    %cst_179 = arith.constant dense<0.000000e+00> : vector<128x16xf32>
    %173 = tpu.matmul %170, %172, %cst_179 {dimension_numbers = #tpu.dot_dimension_numbers<[1], [0], [0], [1], [0, 0, 1, 1], [], []>} : vector<128x32xf32>, vector<32x16xf32>, vector<128x16xf32> -> vector<128x16xf32>
    %174 = arith.addf %169, %173 : vector<128x16xf32>
    %c17_180 = arith.constant 17 : index
    %c0_181 = arith.constant 0 : index
    %175 = vector.load %arg17[%c17_180, %c0_181] : memref<176x32xf32, #tpu.memory_space<vmem>>, vector<128x32xf32>
    %c1_182 = arith.constant 1 : index
    %c1_183 = arith.constant 1 : index
    %c0_184 = arith.constant 0 : index
    %c0_185 = arith.constant 0 : index
    %176 = vector.load %arg4[%c1_182, %c1_183, %c0_184, %c0_185] : memref<3x3x32x16xf32, #tpu.memory_space<vmem>>, vector<1x1x32x16xf32>
    %177 = vector.shape_cast %176 : vector<1x1x32x16xf32> to vector<32x16xf32>
    %cst_186 = arith.constant dense<0.000000e+00> : vector<128x16xf32>
    %178 = tpu.matmul %175, %177, %cst_186 {dimension_numbers = #tpu.dot_dimension_numbers<[1], [0], [0], [1], [0, 0, 1, 1], [], []>} : vector<128x32xf32>, vector<32x16xf32>, vector<128x16xf32> -> vector<128x16xf32>
    %179 = arith.addf %174, %178 : vector<128x16xf32>
    %c18 = arith.constant 18 : index
    %c0_187 = arith.constant 0 : index
    %180 = vector.load %arg17[%c18, %c0_187] : memref<176x32xf32, #tpu.memory_space<vmem>>, vector<128x32xf32>
    %c1_188 = arith.constant 1 : index
    %c2_189 = arith.constant 2 : index
    %c0_190 = arith.constant 0 : index
    %c0_191 = arith.constant 0 : index
    %181 = vector.load %arg4[%c1_188, %c2_189, %c0_190, %c0_191] : memref<3x3x32x16xf32, #tpu.memory_space<vmem>>, vector<1x1x32x16xf32>
    %182 = vector.shape_cast %181 : vector<1x1x32x16xf32> to vector<32x16xf32>
    %cst_192 = arith.constant dense<0.000000e+00> : vector<128x16xf32>
    %183 = tpu.matmul %180, %182, %cst_192 {dimension_numbers = #tpu.dot_dimension_numbers<[1], [0], [0], [1], [0, 0, 1, 1], [], []>} : vector<128x32xf32>, vector<32x16xf32>, vector<128x16xf32> -> vector<128x16xf32>
    %184 = arith.addf %179, %183 : vector<128x16xf32>
    %c32 = arith.constant 32 : index
    %c0_193 = arith.constant 0 : index
    %185 = vector.load %arg17[%c32, %c0_193] : memref<176x32xf32, #tpu.memory_space<vmem>>, vector<128x32xf32>
    %c2_194 = arith.constant 2 : index
    %c0_195 = arith.constant 0 : index
    %c0_196 = arith.constant 0 : index
    %c0_197 = arith.constant 0 : index
    %186 = vector.load %arg4[%c2_194, %c0_195, %c0_196, %c0_197] : memref<3x3x32x16xf32, #tpu.memory_space<vmem>>, vector<1x1x32x16xf32>
    %187 = vector.shape_cast %186 : vector<1x1x32x16xf32> to vector<32x16xf32>
    %cst_198 = arith.constant dense<0.000000e+00> : vector<128x16xf32>
    %188 = tpu.matmul %185, %187, %cst_198 {dimension_numbers = #tpu.dot_dimension_numbers<[1], [0], [0], [1], [0, 0, 1, 1], [], []>} : vector<128x32xf32>, vector<32x16xf32>, vector<128x16xf32> -> vector<128x16xf32>
    %189 = arith.addf %184, %188 : vector<128x16xf32>
    %c33_199 = arith.constant 33 : index
    %c0_200 = arith.constant 0 : index
    %190 = vector.load %arg17[%c33_199, %c0_200] : memref<176x32xf32, #tpu.memory_space<vmem>>, vector<128x32xf32>
    %c2_201 = arith.constant 2 : index
    %c1_202 = arith.constant 1 : index
    %c0_203 = arith.constant 0 : index
    %c0_204 = arith.constant 0 : index
    %191 = vector.load %arg4[%c2_201, %c1_202, %c0_203, %c0_204] : memref<3x3x32x16xf32, #tpu.memory_space<vmem>>, vector<1x1x32x16xf32>
    %192 = vector.shape_cast %191 : vector<1x1x32x16xf32> to vector<32x16xf32>
    %cst_205 = arith.constant dense<0.000000e+00> : vector<128x16xf32>
    %193 = tpu.matmul %190, %192, %cst_205 {dimension_numbers = #tpu.dot_dimension_numbers<[1], [0], [0], [1], [0, 0, 1, 1], [], []>} : vector<128x32xf32>, vector<32x16xf32>, vector<128x16xf32> -> vector<128x16xf32>
    %194 = arith.addf %189, %193 : vector<128x16xf32>
    %c34 = arith.constant 34 : index
    %c0_206 = arith.constant 0 : index
    %195 = vector.load %arg17[%c34, %c0_206] : memref<176x32xf32, #tpu.memory_space<vmem>>, vector<128x32xf32>
    %c2_207 = arith.constant 2 : index
    %c2_208 = arith.constant 2 : index
    %c0_209 = arith.constant 0 : index
    %c0_210 = arith.constant 0 : index
    %196 = vector.load %arg4[%c2_207, %c2_208, %c0_209, %c0_210] : memref<3x3x32x16xf32, #tpu.memory_space<vmem>>, vector<1x1x32x16xf32>
    %197 = vector.shape_cast %196 : vector<1x1x32x16xf32> to vector<32x16xf32>
    %cst_211 = arith.constant dense<0.000000e+00> : vector<128x16xf32>
    %198 = tpu.matmul %195, %197, %cst_211 {dimension_numbers = #tpu.dot_dimension_numbers<[1], [0], [0], [1], [0, 0, 1, 1], [], []>} : vector<128x32xf32>, vector<32x16xf32>, vector<128x16xf32> -> vector<128x16xf32>
    %199 = arith.addf %194, %198 : vector<128x16xf32>
    %c0_212 = arith.constant 0 : index
    %c0_213 = arith.constant 0 : index
    %200 = vector.load %arg5[%c0_212, %c0_213] : memref<1x16xf32, #tpu.memory_space<vmem>>, vector<1x16xf32>
    %201 = vector.broadcast %200 : vector<1x16xf32> to vector<128x16xf32>
    %202 = arith.addf %199, %201 : vector<128x16xf32>
    %cst_214 = arith.constant 0.000000e+00 : f32
    %203 = vector.broadcast %cst_214 : f32 to vector<128x16xf32>
    %204 = arith.maximumf %202, %203 : vector<128x16xf32>
    %c0_215 = arith.constant 0 : index
    %c0_216 = arith.constant 0 : index
    %c0_217 = arith.constant 0 : index
    %205 = vector.load %arg13[%c0_215, %c0_216, %c0_217] : memref<4x16x128xf32, #tpu.memory_space<vmem>>, vector<1x16x128xf32>
    %206 = vector.shape_cast %205 : vector<1x16x128xf32> to vector<16x128xf32>
    %cst_218 = arith.constant dense<0.000000e+00> : vector<16x16xf32>
    %207 = tpu.matmul %206, %204, %cst_218 {dimension_numbers = #tpu.dot_dimension_numbers<[1], [0], [0], [1], [0, 0, 1, 1], [], []>} : vector<16x128xf32>, vector<128x16xf32>, vector<16x16xf32> -> vector<16x16xf32>
    %c1_219 = arith.constant 1 : index
    %c0_220 = arith.constant 0 : index
    %c0_221 = arith.constant 0 : index
    %208 = vector.load %arg13[%c1_219, %c0_220, %c0_221] : memref<4x16x128xf32, #tpu.memory_space<vmem>>, vector<1x16x128xf32>
    %209 = vector.shape_cast %208 : vector<1x16x128xf32> to vector<16x128xf32>
    %cst_222 = arith.constant dense<0.000000e+00> : vector<16x16xf32>
    %210 = tpu.matmul %209, %204, %cst_222 {dimension_numbers = #tpu.dot_dimension_numbers<[1], [0], [0], [1], [0, 0, 1, 1], [], []>} : vector<16x128xf32>, vector<128x16xf32>, vector<16x16xf32> -> vector<16x16xf32>
    %211 = arith.maximumf %207, %210 : vector<16x16xf32>
    %c2_223 = arith.constant 2 : index
    %c0_224 = arith.constant 0 : index
    %c0_225 = arith.constant 0 : index
    %212 = vector.load %arg13[%c2_223, %c0_224, %c0_225] : memref<4x16x128xf32, #tpu.memory_space<vmem>>, vector<1x16x128xf32>
    %213 = vector.shape_cast %212 : vector<1x16x128xf32> to vector<16x128xf32>
    %cst_226 = arith.constant dense<0.000000e+00> : vector<16x16xf32>
    %214 = tpu.matmul %213, %204, %cst_226 {dimension_numbers = #tpu.dot_dimension_numbers<[1], [0], [0], [1], [0, 0, 1, 1], [], []>} : vector<16x128xf32>, vector<128x16xf32>, vector<16x16xf32> -> vector<16x16xf32>
    %215 = arith.maximumf %211, %214 : vector<16x16xf32>
    %c3_227 = arith.constant 3 : index
    %c0_228 = arith.constant 0 : index
    %c0_229 = arith.constant 0 : index
    %216 = vector.load %arg13[%c3_227, %c0_228, %c0_229] : memref<4x16x128xf32, #tpu.memory_space<vmem>>, vector<1x16x128xf32>
    %217 = vector.shape_cast %216 : vector<1x16x128xf32> to vector<16x128xf32>
    %cst_230 = arith.constant dense<0.000000e+00> : vector<16x16xf32>
    %218 = tpu.matmul %217, %204, %cst_230 {dimension_numbers = #tpu.dot_dimension_numbers<[1], [0], [0], [1], [0, 0, 1, 1], [], []>} : vector<16x128xf32>, vector<128x16xf32>, vector<16x16xf32> -> vector<16x16xf32>
    %219 = arith.maximumf %215, %218 : vector<16x16xf32>
    %220 = vector.extract_strided_slice %219 {offsets = [0, 0], sizes = [4, 16], strides = [1, 1]} : vector<16x16xf32> to vector<4x16xf32>
    %c9_231 = arith.constant 9 : index
    %c0_232 = arith.constant 0 : index
    %221 = vector.load %arg18[%c9_231, %c0_232] : memref<56x16xf32, #tpu.memory_space<vmem>>, vector<4x16xf32>
    tpu.vector_store %arg18[%c9_231, %c0_232], %220 {strides = array<i32>} : memref<56x16xf32, #tpu.memory_space<vmem>>, vector<4x16xf32>,
    %222 = vector.extract_strided_slice %219 {offsets = [4, 0], sizes = [4, 16], strides = [1, 1]} : vector<16x16xf32> to vector<4x16xf32>
    %c17_233 = arith.constant 17 : index
    %c0_234 = arith.constant 0 : index
    %223 = vector.load %arg18[%c17_233, %c0_234] : memref<56x16xf32, #tpu.memory_space<vmem>>, vector<4x16xf32>
    tpu.vector_store %arg18[%c17_233, %c0_234], %222 {strides = array<i32>} : memref<56x16xf32, #tpu.memory_space<vmem>>, vector<4x16xf32>,
    %224 = vector.extract_strided_slice %219 {offsets = [8, 0], sizes = [4, 16], strides = [1, 1]} : vector<16x16xf32> to vector<4x16xf32>
    %c25_235 = arith.constant 25 : index
    %c0_236 = arith.constant 0 : index
    %225 = vector.load %arg18[%c25_235, %c0_236] : memref<56x16xf32, #tpu.memory_space<vmem>>, vector<4x16xf32>
    tpu.vector_store %arg18[%c25_235, %c0_236], %224 {strides = array<i32>} : memref<56x16xf32, #tpu.memory_space<vmem>>, vector<4x16xf32>,
    %226 = vector.extract_strided_slice %219 {offsets = [12, 0], sizes = [4, 16], strides = [1, 1]} : vector<16x16xf32> to vector<4x16xf32>
    %c33_237 = arith.constant 33 : index
    %c0_238 = arith.constant 0 : index
    %227 = vector.load %arg18[%c33_237, %c0_238] : memref<56x16xf32, #tpu.memory_space<vmem>>, vector<4x16xf32>
    tpu.vector_store %arg18[%c33_237, %c0_238], %226 {strides = array<i32>} : memref<56x16xf32, #tpu.memory_space<vmem>>, vector<4x16xf32>,
    %cst_239 = arith.constant 0.000000e+00 : f32
    %228 = vector.broadcast %cst_239 : f32 to vector<32x16xf32>
    %c0_240 = arith.constant 0 : index
    %c0_241 = arith.constant 0 : index
    %229 = vector.load %arg18[%c0_240, %c0_241] : memref<56x16xf32, #tpu.memory_space<vmem>>, vector<32x16xf32>
    %c0_242 = arith.constant 0 : index
    %c0_243 = arith.constant 0 : index
    %c0_244 = arith.constant 0 : index
    %c0_245 = arith.constant 0 : index
    %230 = vector.load %arg6[%c0_242, %c0_243, %c0_244, %c0_245] : memref<3x3x16x16xf32, #tpu.memory_space<vmem>>, vector<1x1x16x16xf32>
    %231 = vector.shape_cast %230 : vector<1x1x16x16xf32> to vector<16x16xf32>
    %cst_246 = arith.constant dense<0.000000e+00> : vector<32x16xf32>
    %232 = tpu.matmul %229, %231, %cst_246 {dimension_numbers = #tpu.dot_dimension_numbers<[1], [0], [0], [1], [0, 0, 1, 1], [], []>} : vector<32x16xf32>, vector<16x16xf32>, vector<32x16xf32> -> vector<32x16xf32>
    %233 = arith.addf %228, %232 : vector<32x16xf32>
    %c1_247 = arith.constant 1 : index
    %c0_248 = arith.constant 0 : index
    %234 = vector.load %arg18[%c1_247, %c0_248] : memref<56x16xf32, #tpu.memory_space<vmem>>, vector<32x16xf32>
    %c0_249 = arith.constant 0 : index
    %c1_250 = arith.constant 1 : index
    %c0_251 = arith.constant 0 : index
    %c0_252 = arith.constant 0 : index
    %235 = vector.load %arg6[%c0_249, %c1_250, %c0_251, %c0_252] : memref<3x3x16x16xf32, #tpu.memory_space<vmem>>, vector<1x1x16x16xf32>
    %236 = vector.shape_cast %235 : vector<1x1x16x16xf32> to vector<16x16xf32>
    %cst_253 = arith.constant dense<0.000000e+00> : vector<32x16xf32>
    %237 = tpu.matmul %234, %236, %cst_253 {dimension_numbers = #tpu.dot_dimension_numbers<[1], [0], [0], [1], [0, 0, 1, 1], [], []>} : vector<32x16xf32>, vector<16x16xf32>, vector<32x16xf32> -> vector<32x16xf32>
    %238 = arith.addf %233, %237 : vector<32x16xf32>
    %c2_254 = arith.constant 2 : index
    %c0_255 = arith.constant 0 : index
    %239 = vector.load %arg18[%c2_254, %c0_255] : memref<56x16xf32, #tpu.memory_space<vmem>>, vector<32x16xf32>
    %c0_256 = arith.constant 0 : index
    %c2_257 = arith.constant 2 : index
    %c0_258 = arith.constant 0 : index
    %c0_259 = arith.constant 0 : index
    %240 = vector.load %arg6[%c0_256, %c2_257, %c0_258, %c0_259] : memref<3x3x16x16xf32, #tpu.memory_space<vmem>>, vector<1x1x16x16xf32>
    %241 = vector.shape_cast %240 : vector<1x1x16x16xf32> to vector<16x16xf32>
    %cst_260 = arith.constant dense<0.000000e+00> : vector<32x16xf32>
    %242 = tpu.matmul %239, %241, %cst_260 {dimension_numbers = #tpu.dot_dimension_numbers<[1], [0], [0], [1], [0, 0, 1, 1], [], []>} : vector<32x16xf32>, vector<16x16xf32>, vector<32x16xf32> -> vector<32x16xf32>
    %243 = arith.addf %238, %242 : vector<32x16xf32>
    %c8_261 = arith.constant 8 : index
    %c0_262 = arith.constant 0 : index
    %244 = vector.load %arg18[%c8_261, %c0_262] : memref<56x16xf32, #tpu.memory_space<vmem>>, vector<32x16xf32>
    %c1_263 = arith.constant 1 : index
    %c0_264 = arith.constant 0 : index
    %c0_265 = arith.constant 0 : index
    %c0_266 = arith.constant 0 : index
    %245 = vector.load %arg6[%c1_263, %c0_264, %c0_265, %c0_266] : memref<3x3x16x16xf32, #tpu.memory_space<vmem>>, vector<1x1x16x16xf32>
    %246 = vector.shape_cast %245 : vector<1x1x16x16xf32> to vector<16x16xf32>
    %cst_267 = arith.constant dense<0.000000e+00> : vector<32x16xf32>
    %247 = tpu.matmul %244, %246, %cst_267 {dimension_numbers = #tpu.dot_dimension_numbers<[1], [0], [0], [1], [0, 0, 1, 1], [], []>} : vector<32x16xf32>, vector<16x16xf32>, vector<32x16xf32> -> vector<32x16xf32>
    %248 = arith.addf %243, %247 : vector<32x16xf32>
    %c9_268 = arith.constant 9 : index
    %c0_269 = arith.constant 0 : index
    %249 = vector.load %arg18[%c9_268, %c0_269] : memref<56x16xf32, #tpu.memory_space<vmem>>, vector<32x16xf32>
    %c1_270 = arith.constant 1 : index
    %c1_271 = arith.constant 1 : index
    %c0_272 = arith.constant 0 : index
    %c0_273 = arith.constant 0 : index
    %250 = vector.load %arg6[%c1_270, %c1_271, %c0_272, %c0_273] : memref<3x3x16x16xf32, #tpu.memory_space<vmem>>, vector<1x1x16x16xf32>
    %251 = vector.shape_cast %250 : vector<1x1x16x16xf32> to vector<16x16xf32>
    %cst_274 = arith.constant dense<0.000000e+00> : vector<32x16xf32>
    %252 = tpu.matmul %249, %251, %cst_274 {dimension_numbers = #tpu.dot_dimension_numbers<[1], [0], [0], [1], [0, 0, 1, 1], [], []>} : vector<32x16xf32>, vector<16x16xf32>, vector<32x16xf32> -> vector<32x16xf32>
    %253 = arith.addf %248, %252 : vector<32x16xf32>
    %c10_275 = arith.constant 10 : index
    %c0_276 = arith.constant 0 : index
    %254 = vector.load %arg18[%c10_275, %c0_276] : memref<56x16xf32, #tpu.memory_space<vmem>>, vector<32x16xf32>
    %c1_277 = arith.constant 1 : index
    %c2_278 = arith.constant 2 : index
    %c0_279 = arith.constant 0 : index
    %c0_280 = arith.constant 0 : index
    %255 = vector.load %arg6[%c1_277, %c2_278, %c0_279, %c0_280] : memref<3x3x16x16xf32, #tpu.memory_space<vmem>>, vector<1x1x16x16xf32>
    %256 = vector.shape_cast %255 : vector<1x1x16x16xf32> to vector<16x16xf32>
    %cst_281 = arith.constant dense<0.000000e+00> : vector<32x16xf32>
    %257 = tpu.matmul %254, %256, %cst_281 {dimension_numbers = #tpu.dot_dimension_numbers<[1], [0], [0], [1], [0, 0, 1, 1], [], []>} : vector<32x16xf32>, vector<16x16xf32>, vector<32x16xf32> -> vector<32x16xf32>
    %258 = arith.addf %253, %257 : vector<32x16xf32>
    %c16_282 = arith.constant 16 : index
    %c0_283 = arith.constant 0 : index
    %259 = vector.load %arg18[%c16_282, %c0_283] : memref<56x16xf32, #tpu.memory_space<vmem>>, vector<32x16xf32>
    %c2_284 = arith.constant 2 : index
    %c0_285 = arith.constant 0 : index
    %c0_286 = arith.constant 0 : index
    %c0_287 = arith.constant 0 : index
    %260 = vector.load %arg6[%c2_284, %c0_285, %c0_286, %c0_287] : memref<3x3x16x16xf32, #tpu.memory_space<vmem>>, vector<1x1x16x16xf32>
    %261 = vector.shape_cast %260 : vector<1x1x16x16xf32> to vector<16x16xf32>
    %cst_288 = arith.constant dense<0.000000e+00> : vector<32x16xf32>
    %262 = tpu.matmul %259, %261, %cst_288 {dimension_numbers = #tpu.dot_dimension_numbers<[1], [0], [0], [1], [0, 0, 1, 1], [], []>} : vector<32x16xf32>, vector<16x16xf32>, vector<32x16xf32> -> vector<32x16xf32>
    %263 = arith.addf %258, %262 : vector<32x16xf32>
    %c17_289 = arith.constant 17 : index
    %c0_290 = arith.constant 0 : index
    %264 = vector.load %arg18[%c17_289, %c0_290] : memref<56x16xf32, #tpu.memory_space<vmem>>, vector<32x16xf32>
    %c2_291 = arith.constant 2 : index
    %c1_292 = arith.constant 1 : index
    %c0_293 = arith.constant 0 : index
    %c0_294 = arith.constant 0 : index
    %265 = vector.load %arg6[%c2_291, %c1_292, %c0_293, %c0_294] : memref<3x3x16x16xf32, #tpu.memory_space<vmem>>, vector<1x1x16x16xf32>
    %266 = vector.shape_cast %265 : vector<1x1x16x16xf32> to vector<16x16xf32>
    %cst_295 = arith.constant dense<0.000000e+00> : vector<32x16xf32>
    %267 = tpu.matmul %264, %266, %cst_295 {dimension_numbers = #tpu.dot_dimension_numbers<[1], [0], [0], [1], [0, 0, 1, 1], [], []>} : vector<32x16xf32>, vector<16x16xf32>, vector<32x16xf32> -> vector<32x16xf32>
    %268 = arith.addf %263, %267 : vector<32x16xf32>
    %c18_296 = arith.constant 18 : index
    %c0_297 = arith.constant 0 : index
    %269 = vector.load %arg18[%c18_296, %c0_297] : memref<56x16xf32, #tpu.memory_space<vmem>>, vector<32x16xf32>
    %c2_298 = arith.constant 2 : index
    %c2_299 = arith.constant 2 : index
    %c0_300 = arith.constant 0 : index
    %c0_301 = arith.constant 0 : index
    %270 = vector.load %arg6[%c2_298, %c2_299, %c0_300, %c0_301] : memref<3x3x16x16xf32, #tpu.memory_space<vmem>>, vector<1x1x16x16xf32>
    %271 = vector.shape_cast %270 : vector<1x1x16x16xf32> to vector<16x16xf32>
    %cst_302 = arith.constant dense<0.000000e+00> : vector<32x16xf32>
    %272 = tpu.matmul %269, %271, %cst_302 {dimension_numbers = #tpu.dot_dimension_numbers<[1], [0], [0], [1], [0, 0, 1, 1], [], []>} : vector<32x16xf32>, vector<16x16xf32>, vector<32x16xf32> -> vector<32x16xf32>
    %273 = arith.addf %268, %272 : vector<32x16xf32>
    %c0_303 = arith.constant 0 : index
    %c0_304 = arith.constant 0 : index
    %274 = vector.load %arg7[%c0_303, %c0_304] : memref<1x16xf32, #tpu.memory_space<vmem>>, vector<1x16xf32>
    %275 = vector.broadcast %274 : vector<1x16xf32> to vector<32x16xf32>
    %276 = arith.addf %273, %275 : vector<32x16xf32>
    %cst_305 = arith.constant 0.000000e+00 : f32
    %277 = vector.broadcast %cst_305 : f32 to vector<32x16xf32>
    %278 = arith.maximumf %276, %277 : vector<32x16xf32>
    %c0_306 = arith.constant 0 : index
    %c0_307 = arith.constant 0 : index
    %c0_308 = arith.constant 0 : index
    %279 = vector.load %arg14[%c0_306, %c0_307, %c0_308] : memref<4x4x32xf32, #tpu.memory_space<vmem>>, vector<1x4x32xf32>
    %280 = vector.shape_cast %279 : vector<1x4x32xf32> to vector<4x32xf32>
    %cst_309 = arith.constant dense<0.000000e+00> : vector<4x16xf32>
    %281 = tpu.matmul %280, %278, %cst_309 {dimension_numbers = #tpu.dot_dimension_numbers<[1], [0], [0], [1], [0, 0, 1, 1], [], []>} : vector<4x32xf32>, vector<32x16xf32>, vector<4x16xf32> -> vector<4x16xf32>
    %c1_310 = arith.constant 1 : index
    %c0_311 = arith.constant 0 : index
    %c0_312 = arith.constant 0 : index
    %282 = vector.load %arg14[%c1_310, %c0_311, %c0_312] : memref<4x4x32xf32, #tpu.memory_space<vmem>>, vector<1x4x32xf32>
    %283 = vector.shape_cast %282 : vector<1x4x32xf32> to vector<4x32xf32>
    %cst_313 = arith.constant dense<0.000000e+00> : vector<4x16xf32>
    %284 = tpu.matmul %283, %278, %cst_313 {dimension_numbers = #tpu.dot_dimension_numbers<[1], [0], [0], [1], [0, 0, 1, 1], [], []>} : vector<4x32xf32>, vector<32x16xf32>, vector<4x16xf32> -> vector<4x16xf32>
    %285 = arith.maximumf %281, %284 : vector<4x16xf32>
    %c2_314 = arith.constant 2 : index
    %c0_315 = arith.constant 0 : index
    %c0_316 = arith.constant 0 : index
    %286 = vector.load %arg14[%c2_314, %c0_315, %c0_316] : memref<4x4x32xf32, #tpu.memory_space<vmem>>, vector<1x4x32xf32>
    %287 = vector.shape_cast %286 : vector<1x4x32xf32> to vector<4x32xf32>
    %cst_317 = arith.constant dense<0.000000e+00> : vector<4x16xf32>
    %288 = tpu.matmul %287, %278, %cst_317 {dimension_numbers = #tpu.dot_dimension_numbers<[1], [0], [0], [1], [0, 0, 1, 1], [], []>} : vector<4x32xf32>, vector<32x16xf32>, vector<4x16xf32> -> vector<4x16xf32>
    %289 = arith.maximumf %285, %288 : vector<4x16xf32>
    %c3_318 = arith.constant 3 : index
    %c0_319 = arith.constant 0 : index
    %c0_320 = arith.constant 0 : index
    %290 = vector.load %arg14[%c3_318, %c0_319, %c0_320] : memref<4x4x32xf32, #tpu.memory_space<vmem>>, vector<1x4x32xf32>
    %291 = vector.shape_cast %290 : vector<1x4x32xf32> to vector<4x32xf32>
    %cst_321 = arith.constant dense<0.000000e+00> : vector<4x16xf32>
    %292 = tpu.matmul %291, %278, %cst_321 {dimension_numbers = #tpu.dot_dimension_numbers<[1], [0], [0], [1], [0, 0, 1, 1], [], []>} : vector<4x32xf32>, vector<32x16xf32>, vector<4x16xf32> -> vector<4x16xf32>
    %293 = arith.maximumf %289, %292 : vector<4x16xf32>
    %c0_322 = arith.constant 0 : index
    %c0_323 = arith.constant 0 : index
    %294 = vector.load %arg9[%c0_322, %c0_323] : memref<1x32xf32, #tpu.memory_space<vmem>>, vector<1x32xf32>
    %295 = vector.extract_strided_slice %293 {offsets = [0, 0], sizes = [1, 16], strides = [1, 1]} : vector<4x16xf32> to vector<1x16xf32>
    %c0_324 = arith.constant 0 : index
    %c0_325 = arith.constant 0 : index
    %c0_326 = arith.constant 0 : index
    %296 = vector.load %arg8[%c0_324, %c0_325, %c0_326] : memref<4x16x32xf32, #tpu.memory_space<vmem>>, vector<1x16x32xf32>
    %297 = vector.shape_cast %296 : vector<1x16x32xf32> to vector<16x32xf32>
    %cst_327 = arith.constant dense<0.000000e+00> : vector<1x32xf32>
    %298 = tpu.matmul %295, %297, %cst_327 {dimension_numbers = #tpu.dot_dimension_numbers<[1], [0], [0], [1], [0, 0, 1, 1], [], []>} : vector<1x16xf32>, vector<16x32xf32>, vector<1x32xf32> -> vector<1x32xf32>
    %299 = arith.addf %294, %298 : vector<1x32xf32>
    %300 = vector.extract_strided_slice %293 {offsets = [1, 0], sizes = [1, 16], strides = [1, 1]} : vector<4x16xf32> to vector<1x16xf32>
    %c1_328 = arith.constant 1 : index
    %c0_329 = arith.constant 0 : index
    %c0_330 = arith.constant 0 : index
    %301 = vector.load %arg8[%c1_328, %c0_329, %c0_330] : memref<4x16x32xf32, #tpu.memory_space<vmem>>, vector<1x16x32xf32>
    %302 = vector.shape_cast %301 : vector<1x16x32xf32> to vector<16x32xf32>
    %cst_331 = arith.constant dense<0.000000e+00> : vector<1x32xf32>
    %303 = tpu.matmul %300, %302, %cst_331 {dimension_numbers = #tpu.dot_dimension_numbers<[1], [0], [0], [1], [0, 0, 1, 1], [], []>} : vector<1x16xf32>, vector<16x32xf32>, vector<1x32xf32> -> vector<1x32xf32>
    %304 = arith.addf %299, %303 : vector<1x32xf32>
    %305 = vector.extract_strided_slice %293 {offsets = [2, 0], sizes = [1, 16], strides = [1, 1]} : vector<4x16xf32> to vector<1x16xf32>
    %c2_332 = arith.constant 2 : index
    %c0_333 = arith.constant 0 : index
    %c0_334 = arith.constant 0 : index
    %306 = vector.load %arg8[%c2_332, %c0_333, %c0_334] : memref<4x16x32xf32, #tpu.memory_space<vmem>>, vector<1x16x32xf32>
    %307 = vector.shape_cast %306 : vector<1x16x32xf32> to vector<16x32xf32>
    %cst_335 = arith.constant dense<0.000000e+00> : vector<1x32xf32>
    %308 = tpu.matmul %305, %307, %cst_335 {dimension_numbers = #tpu.dot_dimension_numbers<[1], [0], [0], [1], [0, 0, 1, 1], [], []>} : vector<1x16xf32>, vector<16x32xf32>, vector<1x32xf32> -> vector<1x32xf32>
    %309 = arith.addf %304, %308 : vector<1x32xf32>
    %310 = vector.extract_strided_slice %293 {offsets = [3, 0], sizes = [1, 16], strides = [1, 1]} : vector<4x16xf32> to vector<1x16xf32>
    %c3_336 = arith.constant 3 : index
    %c0_337 = arith.constant 0 : index
    %c0_338 = arith.constant 0 : index
    %311 = vector.load %arg8[%c3_336, %c0_337, %c0_338] : memref<4x16x32xf32, #tpu.memory_space<vmem>>, vector<1x16x32xf32>
    %312 = vector.shape_cast %311 : vector<1x16x32xf32> to vector<16x32xf32>
    %cst_339 = arith.constant dense<0.000000e+00> : vector<1x32xf32>
    %313 = tpu.matmul %310, %312, %cst_339 {dimension_numbers = #tpu.dot_dimension_numbers<[1], [0], [0], [1], [0, 0, 1, 1], [], []>} : vector<1x16xf32>, vector<16x32xf32>, vector<1x32xf32> -> vector<1x32xf32>
    %314 = arith.addf %309, %313 : vector<1x32xf32>
    %cst_340 = arith.constant 0.000000e+00 : f32
    %315 = vector.broadcast %cst_340 : f32 to vector<1x32xf32>
    %316 = arith.maximumf %314, %315 : vector<1x32xf32>
    %c0_341 = arith.constant 0 : index
    %c0_342 = arith.constant 0 : index
    %317 = vector.load %arg10[%c0_341, %c0_342] : memref<32x10xf32, #tpu.memory_space<vmem>>, vector<32x10xf32>
    %cst_343 = arith.constant dense<0.000000e+00> : vector<1x10xf32>
    %318 = tpu.matmul %316, %317, %cst_343 {dimension_numbers = #tpu.dot_dimension_numbers<[1], [0], [0], [1], [0, 0, 1, 1], [], []>} : vector<1x32xf32>, vector<32x10xf32>, vector<1x10xf32> -> vector<1x10xf32>
    %c0_344 = arith.constant 0 : index
    %c0_345 = arith.constant 0 : index
    %319 = vector.load %arg11[%c0_344, %c0_345] : memref<1x10xf32, #tpu.memory_space<vmem>>, vector<1x10xf32>
    %320 = arith.addf %318, %319 : vector<1x10xf32>
    %c0_346 = arith.constant 0 : index
    %c0_347 = arith.constant 0 : index
    %c0_348 = arith.constant 0 : index
    %321 = vector.load %arg15[%c0_346, %c0_347, %c0_348] : memref<1x1x10xf32, #tpu.memory_space<vmem>>, vector<1x1x10xf32>
    %322 = vector.shape_cast %321 : vector<1x1x10xf32> to vector<1x10xf32>
    %323 = vector.shape_cast %320 : vector<1x10xf32> to vector<1x1x10xf32>
    tpu.vector_store %arg15[%c0_346, %c0_347, %c0_348], %323 {strides = array<i32>} : memref<1x1x10xf32, #tpu.memory_space<vmem>>, vector<1x1x10xf32>,
    return
  }
  func.func @transform_0(%arg0: i32) -> (i32, i32, i32, i32) {
    %c0_i32 = arith.constant 0 : i32
    %c0_i32_0 = arith.constant 0 : i32
    %c0_i32_1 = arith.constant 0 : i32
    %c0_i32_2 = arith.constant 0 : i32
    return %arg0, %c0_i32, %c0_i32_0, %c0_i32_1 : i32, i32, i32, i32
  }
  func.func @transform_1(%arg0: i32) -> (i32, i32, i32, i32) {
    %c0_i32 = arith.constant 0 : i32
    %c0_i32_0 = arith.constant 0 : i32
    %c0_i32_1 = arith.constant 0 : i32
    %c0_i32_2 = arith.constant 0 : i32
    %c0_i32_3 = arith.constant 0 : i32
    return %c0_i32, %c0_i32_0, %c0_i32_1, %c0_i32_2 : i32, i32, i32, i32
  }
  func.func @transform_2(%arg0: i32) -> (i32, i32) {
    %c0_i32 = arith.constant 0 : i32
    %c0_i32_0 = arith.constant 0 : i32
    %c0_i32_1 = arith.constant 0 : i32
    return %c0_i32, %c0_i32_0 : i32, i32
  }
  func.func @transform_3(%arg0: i32) -> (i32, i32, i32, i32) {
    %c0_i32 = arith.constant 0 : i32
    %c0_i32_0 = arith.constant 0 : i32
    %c0_i32_1 = arith.constant 0 : i32
    %c0_i32_2 = arith.constant 0 : i32
    %c0_i32_3 = arith.constant 0 : i32
    return %c0_i32, %c0_i32_0, %c0_i32_1, %c0_i32_2 : i32, i32, i32, i32
  }
  func.func @transform_4(%arg0: i32) -> (i32, i32) {
    %c0_i32 = arith.constant 0 : i32
    %c0_i32_0 = arith.constant 0 : i32
    %c0_i32_1 = arith.constant 0 : i32
    return %c0_i32, %c0_i32_0 : i32, i32
  }
  func.func @transform_5(%arg0: i32) -> (i32, i32, i32, i32) {
    %c0_i32 = arith.constant 0 : i32
    %c0_i32_0 = arith.constant 0 : i32
    %c0_i32_1 = arith.constant 0 : i32
    %c0_i32_2 = arith.constant 0 : i32
    %c0_i32_3 = arith.constant 0 : i32
    return %c0_i32, %c0_i32_0, %c0_i32_1, %c0_i32_2 : i32, i32, i32, i32
  }
  func.func @transform_6(%arg0: i32) -> (i32, i32) {
    %c0_i32 = arith.constant 0 : i32
    %c0_i32_0 = arith.constant 0 : i32
    %c0_i32_1 = arith.constant 0 : i32
    return %c0_i32, %c0_i32_0 : i32, i32
  }
  func.func @transform_7(%arg0: i32) -> (i32, i32, i32) {
    %c0_i32 = arith.constant 0 : i32
    %c0_i32_0 = arith.constant 0 : i32
    %c0_i32_1 = arith.constant 0 : i32
    %c0_i32_2 = arith.constant 0 : i32
    return %c0_i32, %c0_i32_0, %c0_i32_1 : i32, i32, i32
  }
  func.func @transform_8(%arg0: i32) -> (i32, i32) {
    %c0_i32 = arith.constant 0 : i32
    %c0_i32_0 = arith.constant 0 : i32
    %c0_i32_1 = arith.constant 0 : i32
    return %c0_i32, %c0_i32_0 : i32, i32
  }
  func.func @transform_9(%arg0: i32) -> (i32, i32) {
    %c0_i32 = arith.constant 0 : i32
    %c0_i32_0 = arith.constant 0 : i32
    %c0_i32_1 = arith.constant 0 : i32
    return %c0_i32, %c0_i32_0 : i32, i32
  }
  func.func @transform_10(%arg0: i32) -> (i32, i32) {
    %c0_i32 = arith.constant 0 : i32
    %c0_i32_0 = arith.constant 0 : i32
    %c0_i32_1 = arith.constant 0 : i32
    return %c0_i32, %c0_i32_0 : i32, i32
  }
  func.func @transform_11(%arg0: i32) -> (i32, i32, i32) {
    %c0_i32 = arith.constant 0 : i32
    %c0_i32_0 = arith.constant 0 : i32
    %c0_i32_1 = arith.constant 0 : i32
    %c0_i32_2 = arith.constant 0 : i32
    return %c0_i32, %c0_i32_0, %c0_i32_1 : i32, i32, i32
  }
  func.func @transform_12(%arg0: i32) -> (i32, i32, i32) {
    %c0_i32 = arith.constant 0 : i32
    %c0_i32_0 = arith.constant 0 : i32
    %c0_i32_1 = arith.constant 0 : i32
    %c0_i32_2 = arith.constant 0 : i32
    return %c0_i32, %c0_i32_0, %c0_i32_1 : i32, i32, i32
  }
  func.func @transform_13(%arg0: i32) -> (i32, i32, i32) {
    %c0_i32 = arith.constant 0 : i32
    %c0_i32_0 = arith.constant 0 : i32
    %c0_i32_1 = arith.constant 0 : i32
    %c0_i32_2 = arith.constant 0 : i32
    return %c0_i32, %c0_i32_0, %c0_i32_1 : i32, i32, i32
  }
  func.func @transform_14(%arg0: i32) -> (i32, i32, i32) {
    %c0_i32 = arith.constant 0 : i32
    %c0_i32_0 = arith.constant 0 : i32
    %c0_i32_1 = arith.constant 0 : i32
    return %arg0, %c0_i32, %c0_i32_0 : i32, i32, i32
  }
}

</mosaic_0001>

<llo_original>
// kernel: mynet_depth_forward.1
$region0: #{mynet_depth_forward.1}
  #allocation0 [shape = 'u32[]', space=smem, size = 0x4, offset = 0x4, fixed_abs, tag = 'smem constant byte address 0x4 - core index']
  #allocation1 [shape = 'u32[144,128]{1,0:T(1,128)}', space=vmem, size = 0x12000, scoped, tag = 'internal scratch']
  #allocation2 [shape = 'f32[456,1]{1,0:T(8,128)}', space=vmem, size = 0x39000, scoped, tag = 'scratch operand']
  #allocation3 [shape = 'f32[176,32]{1,0:T(8,128)}', space=vmem, size = 0x16000, scoped, tag = 'scratch operand']
  #allocation4 [shape = 'f32[56,16]{1,0:T(8,128)}', space=vmem, size = 0x7000, scoped, tag = 'scratch operand']
  %s0 = inlined_call_operand.vmem [shape: f32[2,16,16,1], index: 0, kind: input, shape index: {}]
  %s1 = inlined_call_operand.vmem [shape: f32[3,3,1,32], index: 1, kind: input, shape index: {}]
  %s2 = inlined_call_operand.vmem [shape: f32[1,32], index: 2, kind: input, shape index: {}]
  %s3 = inlined_call_operand.vmem [shape: f32[3,3,32,16], index: 3, kind: input, shape index: {}]
  %s4 = inlined_call_operand.vmem [shape: f32[1,16], index: 4, kind: input, shape index: {}]
  %s5 = inlined_call_operand.vmem [shape: f32[3,3,16,16], index: 5, kind: input, shape index: {}]
  %s6 = inlined_call_operand.vmem [shape: f32[1,16], index: 6, kind: input, shape index: {}]
  %s7 = inlined_call_operand.vmem [shape: f32[4,16,32], index: 7, kind: input, shape index: {}]
  %s8 = inlined_call_operand.vmem [shape: f32[1,32], index: 8, kind: input, shape index: {}]
  %s9 = inlined_call_operand.vmem [shape: f32[32,10], index: 9, kind: input, shape index: {}]
  %s10 = inlined_call_operand.vmem [shape: f32[1,10], index: 10, kind: input, shape index: {}]
  %s11 = inlined_call_operand.vmem [shape: f32[4,64,384], index: 11, kind: input, shape index: {}]
  %s12 = inlined_call_operand.vmem [shape: f32[4,16,128], index: 12, kind: input, shape index: {}]
  %s13 = inlined_call_operand.vmem [shape: f32[4,4,32], index: 13, kind: input, shape index: {}]
  %s14 = inlined_call_operand.hbm [shape: f32[2,1,10], index: 14, kind: output, shape index: {}]
  %s15 = sld [smem:[#allocation0]]
  $region89: #{mynet_depth_forward.1} parent=0
    _
  %s17 = ssub.s32 1, %s15
  %s18 = scalar_select 0, %s17, %s15
  $region1: #{mynet_depth_forward.1} parent=0
    #allocation5 [shape = 'u8[1024]{0}', space=vmem, size = 0x400, scoped, tag = 'output window, operand 0']
    #allocation6 [shape = 's32[2]{0}', space=sflag, size = 0x8, scoped, tag = 'scoped memory for mynet_depth_forward.1']
    %19 = vsyncpa [#allocation6], 0
    %s20 = scalar_lea.sflag [#allocation6], 1
    %21 = vsyncpa %s20, 0
    loop: start=0, step=1, limit=4
    $region2: #{mynet_depth_forward.1} parent=1 // loop_pre_header
      _
    $region3: #{mynet_depth_forward.1} parent=1 // loop_header
      %s23 = sphi 0, %s27
      %p24 = scmp.ge.s32.totalorder %s23, 4
      %s33 = sphi 0, %s35
      %s36 = sphi 0, %s33
      %s37 = sphi 0, %s36
      %s53 = sphi 0, %s37
      %s57 = sphi 0, %s57
      %s59 = sphi 0, %s57
      %s60 = sphi 0, %s59
      %s74 = sphi 0, %s60
      %s78 = sphi 0, %s78
      %s80 = sphi 0, %s78
      %s81 = sphi 0, %s80
      %s95 = sphi 0, %s81
      %s99 = sphi 0, %s99
      %s101 = sphi 0, %s99
      %s102 = sphi 0, %s101
      %s116 = sphi 0, %s102
      %s120 = sphi 0, %s120
      %s122 = sphi 0, %s120
      %s123 = sphi 0, %s122
      %s137 = sphi 0, %s123
      %s141 = sphi 0, %s141
      %s143 = sphi 0, %s141
      %s144 = sphi 0, %s143
      %s158 = sphi 0, %s144
      %s162 = sphi 0, %s162
      %s164 = sphi 0, %s162
      %s165 = sphi 0, %s164
      %s179 = sphi 0, %s165
      %s183 = sphi 0, %s183
      %s185 = sphi 0, %s183
      %s186 = sphi 0, %s185
      %s200 = sphi 0, %s186
      %s204 = sphi 0, %s204
      %s206 = sphi 0, %s204
      %s207 = sphi 0, %s206
      %s221 = sphi 0, %s207
      %s225 = sphi 0, %s225
      %s227 = sphi 0, %s225
      %s228 = sphi 0, %s227
      %s242 = sphi 0, %s228
      %s246 = sphi 0, %s246
      %s248 = sphi 0, %s246
      %s249 = sphi 0, %s248
      %s263 = sphi 0, %s249
      %s267 = sphi 0, %s267
      %s269 = sphi 0, %s267
      %s270 = sphi 0, %s269
      %s284 = sphi 0, %s270
      %s288 = sphi 0, %s288
      %s290 = sphi 0, %s288
      %s291 = sphi 0, %s290
      %s305 = sphi 0, %s291
      %s309 = sphi 0, %s309
      %s311 = sphi 0, %s309
      %s312 = sphi 0, %s311
      %s326 = sphi 0, %s312
      %s332 = sphi 0, %s334
      %s335 = sphi 0, %s332
      %s336 = sphi 0, %s335
      %s352 = sphi 0, %s336
    $region4: #{mynet_depth_forward.1} parent=1 // loop_header_branch
      %26 = sbr.rel (%p24) target = $region8
    $region5: #{mynet_depth_forward.1} parent=1 // loop_body
      %s28 = ssub.s32 %s23, 1
      %s29 = ssub.s32 %s23, 2
      %s30 = sadd.s32 %s23, 1
      %s31 = ssub.s32 %s23, %s30
      %p32 = scmp.eq.s32.totalorder %s31, 0
      %s34 = sadd.s32 %s33, 1
      %s35 = scalar_select %p32, %s33, %s34
      %p38 = pneg %p32
      %p39 = scmp.eq.s32.totalorder %s23, 1
      %p40 = por %p38, %p39
      %p41 = scmp.ne.s32.totalorder %s33, %s36
      %p42 = scmp.eq.s32.totalorder %s23, 0
      %p43 = por %p41, %p42
      %p44 = scmp.ne.s32.totalorder %s33, %s36
      %p45 = scmp.eq.s32.totalorder %s28, 1
      %p46 = por %p44, %p45
      %p47 = scmp.ne.s32.totalorder %s36, %s37
      %p48 = scmp.eq.s32.totalorder %s28, 0
      %p49 = por %p47, %p48
      %p50 = scmp.ne.s32.totalorder %s36, %s37
      %p51 = scmp.eq.s32.totalorder %s29, 1
      %p52 = por %p50, %p51
      %p54 = scmp.ne.s32.totalorder %s37, %s53
      %p55 = scmp.eq.s32.totalorder %s29, 0
      %p56 = por %p54, %p55
      %s58 = sadd.s32 %s57, 1
      %p61 = scmp.eq.s32.totalorder %s23, 1
      %p62 = scmp.ne.s32.totalorder %s57, %s59
      %p63 = scmp.eq.s32.totalorder %s23, 0
      %p64 = por %p62, %p63
      %p65 = scmp.ne.s32.totalorder %s57, %s59
      %p66 = scmp.eq.s32.totalorder %s28, 1
      %p67 = por %p65, %p66
      %p68 = scmp.ne.s32.totalorder %s59, %s60
      %p69 = scmp.eq.s32.totalorder %s28, 0
      %p70 = por %p68, %p69
      %p71 = scmp.ne.s32.totalorder %s59, %s60
      %p72 = scmp.eq.s32.totalorder %s29, 1
      %p73 = por %p71, %p72
      %p75 = scmp.ne.s32.totalorder %s60, %s74
      %p76 = scmp.eq.s32.totalorder %s29, 0
      %p77 = por %p75, %p76
      %s79 = sadd.s32 %s78, 1
      %p82 = scmp.eq.s32.totalorder %s23, 1
      %p83 = scmp.ne.s32.totalorder %s78, %s80
      %p84 = scmp.eq.s32.totalorder %s23, 0
      %p85 = por %p83, %p84
      %p86 = scmp.ne.s32.totalorder %s78, %s80
      %p87 = scmp.eq.s32.totalorder %s28, 1
      %p88 = por %p86, %p87
      %p89 = scmp.ne.s32.totalorder %s80, %s81
      %p90 = scmp.eq.s32.totalorder %s28, 0
      %p91 = por %p89, %p90
      %p92 = scmp.ne.s32.totalorder %s80, %s81
      %p93 = scmp.eq.s32.totalorder %s29, 1
      %p94 = por %p92, %p93
      %p96 = scmp.ne.s32.totalorder %s81, %s95
      %p97 = scmp.eq.s32.totalorder %s29, 0
      %p98 = por %p96, %p97
      %s100 = sadd.s32 %s99, 1
      %p103 = scmp.eq.s32.totalorder %s23, 1
      %p104 = scmp.ne.s32.totalorder %s99, %s101
      %p105 = scmp.eq.s32.totalorder %s23, 0
      %p106 = por %p104, %p105
      %p107 = scmp.ne.s32.totalorder %s99, %s101
      %p108 = scmp.eq.s32.totalorder %s28, 1
      %p109 = por %p107, %p108
      %p110 = scmp.ne.s32.totalorder %s101, %s102
      %p111 = scmp.eq.s32.totalorder %s28, 0
      %p112 = por %p110, %p111
      %p113 = scmp.ne.s32.totalorder %s101, %s102
      %p114 = scmp.eq.s32.totalorder %s29, 1
      %p115 = por %p113, %p114
      %p117 = scmp.ne.s32.totalorder %s102, %s116
      %p118 = scmp.eq.s32.totalorder %s29, 0
      %p119 = por %p117, %p118
      %s121 = sadd.s32 %s120, 1
      %p124 = scmp.eq.s32.totalorder %s23, 1
      %p125 = scmp.ne.s32.totalorder %s120, %s122
      %p126 = scmp.eq.s32.totalorder %s23, 0
      %p127 = por %p125, %p126
      %p128 = scmp.ne.s32.totalorder %s120, %s122
      %p129 = scmp.eq.s32.totalorder %s28, 1
      %p130 = por %p128, %p129
      %p131 = scmp.ne.s32.totalorder %s122, %s123
      %p132 = scmp.eq.s32.totalorder %s28, 0
      %p133 = por %p131, %p132
      %p134 = scmp.ne.s32.totalorder %s122, %s123
      %p135 = scmp.eq.s32.totalorder %s29, 1
      %p136 = por %p134, %p135
      %p138 = scmp.ne.s32.totalorder %s123, %s137
      %p139 = scmp.eq.s32.totalorder %s29, 0
      %p140 = por %p138, %p139
      %s142 = sadd.s32 %s141, 1
      %p145 = scmp.eq.s32.totalorder %s23, 1
      %p146 = scmp.ne.s32.totalorder %s141, %s143
      %p147 = scmp.eq.s32.totalorder %s23, 0
      %p148 = por %p146, %p147
      %p149 = scmp.ne.s32.totalorder %s141, %s143
      %p150 = scmp.eq.s32.totalorder %s28, 1
      %p151 = por %p149, %p150
      %p152 = scmp.ne.s32.totalorder %s143, %s144
      %p153 = scmp.eq.s32.totalorder %s28, 0
      %p154 = por %p152, %p153
      %p155 = scmp.ne.s32.totalorder %s143, %s144
      %p156 = scmp.eq.s32.totalorder %s29, 1
      %p157 = por %p155, %p156
      %p159 = scmp.ne.s32.totalorder %s144, %s158
      %p160 = scmp.eq.s32.totalorder %s29, 0
      %p161 = por %p159, %p160
      %s163 = sadd.s32 %s162, 1
      %p166 = scmp.eq.s32.totalorder %s23, 1
      %p167 = scmp.ne.s32.totalorder %s162, %s164
      %p168 = scmp.eq.s32.totalorder %s23, 0
      %p169 = por %p167, %p168
      %p170 = scmp.ne.s32.totalorder %s162, %s164
      %p171 = scmp.eq.s32.totalorder %s28, 1
      %p172 = por %p170, %p171
      %p173 = scmp.ne.s32.totalorder %s164, %s165
      %p174 = scmp.eq.s32.totalorder %s28, 0
      %p175 = por %p173, %p174
      %p176 = scmp.ne.s32.totalorder %s164, %s165
      %p177 = scmp.eq.s32.totalorder %s29, 1
      %p178 = por %p176, %p177
      %p180 = scmp.ne.s32.totalorder %s165, %s179
      %p181 = scmp.eq.s32.totalorder %s29, 0
      %p182 = por %p180, %p181
      %s184 = sadd.s32 %s183, 1
      %p187 = scmp.eq.s32.totalorder %s23, 1
      %p188 = scmp.ne.s32.totalorder %s183, %s185
      %p189 = scmp.eq.s32.totalorder %s23, 0
      %p190 = por %p188, %p189
      %p191 = scmp.ne.s32.totalorder %s183, %s185
      %p192 = scmp.eq.s32.totalorder %s28, 1
      %p193 = por %p191, %p192
      %p194 = scmp.ne.s32.totalorder %s185, %s186
      %p195 = scmp.eq.s32.totalorder %s28, 0
      %p196 = por %p194, %p195
      %p197 = scmp.ne.s32.totalorder %s185, %s186
      %p198 = scmp.eq.s32.totalorder %s29, 1
      %p199 = por %p197, %p198
      %p201 = scmp.ne.s32.totalorder %s186, %s200
      %p202 = scmp.eq.s32.totalorder %s29, 0
      %p203 = por %p201, %p202
      %s205 = sadd.s32 %s204, 1
      %p208 = scmp.eq.s32.totalorder %s23, 1
      %p209 = scmp.ne.s32.totalorder %s204, %s206
      %p210 = scmp.eq.s32.totalorder %s23, 0
      %p211 = por %p209, %p210
      %p212 = scmp.ne.s32.totalorder %s204, %s206
      %p213 = scmp.eq.s32.totalorder %s28, 1
      %p214 = por %p212, %p213
      %p215 = scmp.ne.s32.totalorder %s206, %s207
      %p216 = scmp.eq.s32.totalorder %s28, 0
      %p217 = por %p215, %p216
      %p218 = scmp.ne.s32.totalorder %s206, %s207
      %p219 = scmp.eq.s32.totalorder %s29, 1
      %p220 = por %p218, %p219
      %p222 = scmp.ne.s32.totalorder %s207, %s221
      %p223 = scmp.eq.s32.totalorder %s29, 0
      %p224 = por %p222, %p223
      %s226 = sadd.s32 %s225, 1
      %p229 = scmp.eq.s32.totalorder %s23, 1
      %p230 = scmp.ne.s32.totalorder %s225, %s227
      %p231 = scmp.eq.s32.totalorder %s23, 0
      %p232 = por %p230, %p231
      %p233 = scmp.ne.s32.totalorder %s225, %s227
      %p234 = scmp.eq.s32.totalorder %s28, 1
      %p235 = por %p233, %p234
      %p236 = scmp.ne.s32.totalorder %s227, %s228
      %p237 = scmp.eq.s32.totalorder %s28, 0
      %p238 = por %p236, %p237
      %p239 = scmp.ne.s32.totalorder %s227, %s228
      %p240 = scmp.eq.s32.totalorder %s29, 1
      %p241 = por %p239, %p240
      %p243 = scmp.ne.s32.totalorder %s228, %s242
      %p244 = scmp.eq.s32.totalorder %s29, 0
      %p245 = por %p243, %p244
      %s247 = sadd.s32 %s246, 1
      %p250 = scmp.eq.s32.totalorder %s23, 1
      %p251 = scmp.ne.s32.totalorder %s246, %s248
      %p252 = scmp.eq.s32.totalorder %s23, 0
      %p253 = por %p251, %p252
      %p254 = scmp.ne.s32.totalorder %s246, %s248
      %p255 = scmp.eq.s32.totalorder %s28, 1
      %p256 = por %p254, %p255
      %p257 = scmp.ne.s32.totalorder %s248, %s249
      %p258 = scmp.eq.s32.totalorder %s28, 0
      %p259 = por %p257, %p258
      %p260 = scmp.ne.s32.totalorder %s248, %s249
      %p261 = scmp.eq.s32.totalorder %s29, 1
      %p262 = por %p260, %p261
      %p264 = scmp.ne.s32.totalorder %s249, %s263
      %p265 = scmp.eq.s32.totalorder %s29, 0
      %p266 = por %p264, %p265
      %s268 = sadd.s32 %s267, 1
      %p271 = scmp.eq.s32.totalorder %s23, 1
      %p272 = scmp.ne.s32.totalorder %s267, %s269
      %p273 = scmp.eq.s32.totalorder %s23, 0
      %p274 = por %p272, %p273
      %p275 = scmp.ne.s32.totalorder %s267, %s269
      %p276 = scmp.eq.s32.totalorder %s28, 1
      %p277 = por %p275, %p276
      %p278 = scmp.ne.s32.totalorder %s269, %s270
      %p279 = scmp.eq.s32.totalorder %s28, 0
      %p280 = por %p278, %p279
      %p281 = scmp.ne.s32.totalorder %s269, %s270
      %p282 = scmp.eq.s32.totalorder %s29, 1
      %p283 = por %p281, %p282
      %p285 = scmp.ne.s32.totalorder %s270, %s284
      %p286 = scmp.eq.s32.totalorder %s29, 0
      %p287 = por %p285, %p286
      %s289 = sadd.s32 %s288, 1
      %p292 = scmp.eq.s32.totalorder %s23, 1
      %p293 = scmp.ne.s32.totalorder %s288, %s290
      %p294 = scmp.eq.s32.totalorder %s23, 0
      %p295 = por %p293, %p294
      %p296 = scmp.ne.s32.totalorder %s288, %s290
      %p297 = scmp.eq.s32.totalorder %s28, 1
      %p298 = por %p296, %p297
      %p299 = scmp.ne.s32.totalorder %s290, %s291
      %p300 = scmp.eq.s32.totalorder %s28, 0
      %p301 = por %p299, %p300
      %p302 = scmp.ne.s32.totalorder %s290, %s291
      %p303 = scmp.eq.s32.totalorder %s29, 1
      %p304 = por %p302, %p303
      %p306 = scmp.ne.s32.totalorder %s291, %s305
      %p307 = scmp.eq.s32.totalorder %s29, 0
      %p308 = por %p306, %p307
      %s310 = sadd.s32 %s309, 1
      %p313 = scmp.eq.s32.totalorder %s23, 1
      %p314 = scmp.ne.s32.totalorder %s309, %s311
      %p315 = scmp.eq.s32.totalorder %s23, 0
      %p316 = por %p314, %p315
      %p317 = scmp.ne.s32.totalorder %s309, %s311
      %p318 = scmp.eq.s32.totalorder %s28, 1
      %p319 = por %p317, %p318
      %p320 = scmp.ne.s32.totalorder %s311, %s312
      %p321 = scmp.eq.s32.totalorder %s28, 0
      %p322 = por %p320, %p321
      %p323 = scmp.ne.s32.totalorder %s311, %s312
      %p324 = scmp.eq.s32.totalorder %s29, 1
      %p325 = por %p323, %p324
      %p327 = scmp.ne.s32.totalorder %s312, %s326
      %p328 = scmp.eq.s32.totalorder %s29, 0
      %p329 = por %p327, %p328
      %s330 = ssub.s32 %s23, %s30
      %p331 = scmp.eq.s32.totalorder %s330, 0
      %s333 = sadd.s32 %s332, 1
      %s334 = scalar_select %p331, %s332, %s333
      %p337 = pneg %p331
      %p338 = scmp.eq.s32.totalorder %s23, 1
      %p339 = por %p337, %p338
      %p340 = scmp.ne.s32.totalorder %s332, %s335
      %p341 = scmp.eq.s32.totalorder %s23, 0
      %p342 = por %p340, %p341
      %p343 = scmp.ne.s32.totalorder %s332, %s335
      %p344 = scmp.eq.s32.totalorder %s28, 1
      %p345 = por %p343, %p344
      %p346 = scmp.ne.s32.totalorder %s335, %s336
      %p347 = scmp.eq.s32.totalorder %s28, 0
      %p348 = por %p346, %p347
      %p349 = scmp.ne.s32.totalorder %s335, %s336
      %p350 = scmp.eq.s32.totalorder %s29, 1
      %p351 = por %p349, %p350
      %p353 = scmp.ne.s32.totalorder %s336, %s352
      %p354 = scmp.eq.s32.totalorder %s29, 0
      %p355 = por %p353, %p354
      %p356 = scmp.le.s32.totalorder 1, %s23
      %p357 = scmp.lt.s32.totalorder %s23, 3
      %p358 = pnand %p356, %p357
      %p359 = pneg %p358
      // Predicated region
      $region9: #{mynet_depth_forward.1} parent=5 // pred_check
        _
      $region10: #{mynet_depth_forward.1} parent=5 // pred_check_branch
        %361 = sbr.rel (%p358) target = $region12
      $region11: #{mynet_depth_forward.1} parent=5 // pred_region
        %s362 = ssub.s32 %s23, 1
        // Predicated region
        $region13: #{mynet_depth_forward.1} parent=11 // pred_check
          %p363 = pneg %p70
        $region14: #{mynet_depth_forward.1} parent=11 // pred_check_branch
          %365 = sbr.rel (%p363) target = $region16
        $region15: #{mynet_depth_forward.1} parent=11 // pred_region
          _
        $region16: #{mynet_depth_forward.1} parent=11 // pred_fallthru
          _
        // Predicated region
        $region17: #{mynet_depth_forward.1} parent=11 // pred_check
          %p366 = pneg %p91
        $region18: #{mynet_depth_forward.1} parent=11 // pred_check_branch
          %368 = sbr.rel (%p366) target = $region20
        $region19: #{mynet_depth_forward.1} parent=11 // pred_region
          _
        $region20: #{mynet_depth_forward.1} parent=11 // pred_fallthru
          _
        // Predicated region
        $region21: #{mynet_depth_forward.1} parent=11 // pred_check
          %p369 = pneg %p112
        $region22: #{mynet_depth_forward.1} parent=11 // pred_check_branch
          %371 = sbr.rel (%p369) target = $region24
        $region23: #{mynet_depth_forward.1} parent=11 // pred_region
          _
        $region24: #{mynet_depth_forward.1} parent=11 // pred_fallthru
          _
        // Predicated region
        $region25: #{mynet_depth_forward.1} parent=11 // pred_check
          %p372 = pneg %p133
        $region26: #{mynet_depth_forward.1} parent=11 // pred_check_branch
          %374 = sbr.rel (%p372) target = $region28
        $region27: #{mynet_depth_forward.1} parent=11 // pred_region
          _
        $region28: #{mynet_depth_forward.1} parent=11 // pred_fallthru
          _
        // Predicated region
        $region29: #{mynet_depth_forward.1} parent=11 // pred_check
          %p375 = pneg %p154
        $region30: #{mynet_depth_forward.1} parent=11 // pred_check_branch
          %377 = sbr.rel (%p375) target = $region32
        $region31: #{mynet_depth_forward.1} parent=11 // pred_region
          _
        $region32: #{mynet_depth_forward.1} parent=11 // pred_fallthru
          _
        // Predicated region
        $region33: #{mynet_depth_forward.1} parent=11 // pred_check
          %p378 = pneg %p175
        $region34: #{mynet_depth_forward.1} parent=11 // pred_check_branch
          %380 = sbr.rel (%p378) target = $region36
        $region35: #{mynet_depth_forward.1} parent=11 // pred_region
          _
        $region36: #{mynet_depth_forward.1} parent=11 // pred_fallthru
          _
        // Predicated region
        $region37: #{mynet_depth_forward.1} parent=11 // pred_check
          %p381 = pneg %p196
        $region38: #{mynet_depth_forward.1} parent=11 // pred_check_branch
          %383 = sbr.rel (%p381) target = $region40
        $region39: #{mynet_depth_forward.1} parent=11 // pred_region
          _
        $region40: #{mynet_depth_forward.1} parent=11 // pred_fallthru
          _
        // Predicated region
        $region41: #{mynet_depth_forward.1} parent=11 // pred_check
          %p384 = pneg %p217
        $region42: #{mynet_depth_forward.1} parent=11 // pred_check_branch
          %386 = sbr.rel (%p384) target = $region44
        $region43: #{mynet_depth_forward.1} parent=11 // pred_region
          _
        $region44: #{mynet_depth_forward.1} parent=11 // pred_fallthru
          _
        // Predicated region
        $region45: #{mynet_depth_forward.1} parent=11 // pred_check
          %p387 = pneg %p238
        $region46: #{mynet_depth_forward.1} parent=11 // pred_check_branch
          %389 = sbr.rel (%p387) target = $region48
        $region47: #{mynet_depth_forward.1} parent=11 // pred_region
          _
        $region48: #{mynet_depth_forward.1} parent=11 // pred_fallthru
          _
        // Predicated region
        $region49: #{mynet_depth_forward.1} parent=11 // pred_check
          %p390 = pneg %p259
        $region50: #{mynet_depth_forward.1} parent=11 // pred_check_branch
          %392 = sbr.rel (%p390) target = $region52
        $region51: #{mynet_depth_forward.1} parent=11 // pred_region
          _
        $region52: #{mynet_depth_forward.1} parent=11 // pred_fallthru
          _
        // Predicated region
        $region53: #{mynet_depth_forward.1} parent=11 // pred_check
          %p393 = pneg %p280
        $region54: #{mynet_depth_forward.1} parent=11 // pred_check_branch
          %395 = sbr.rel (%p393) target = $region56
        $region55: #{mynet_depth_forward.1} parent=11 // pred_region
          _
        $region56: #{mynet_depth_forward.1} parent=11 // pred_fallthru
          _
        // Predicated region
        $region57: #{mynet_depth_forward.1} parent=11 // pred_check
          %p396 = pneg %p301
        $region58: #{mynet_depth_forward.1} parent=11 // pred_check_branch
          %398 = sbr.rel (%p396) target = $region60
        $region59: #{mynet_depth_forward.1} parent=11 // pred_region
          _
        $region60: #{mynet_depth_forward.1} parent=11 // pred_fallthru
          _
        // Predicated region
        $region61: #{mynet_depth_forward.1} parent=11 // pred_check
          %p399 = pneg %p322
        $region62: #{mynet_depth_forward.1} parent=11 // pred_check_branch
          %401 = sbr.rel (%p399) target = $region64
        $region63: #{mynet_depth_forward.1} parent=11 // pred_region
          _
        $region64: #{mynet_depth_forward.1} parent=11 // pred_fallthru
          _
      $region12: #{mynet_depth_forward.1} parent=5 // pred_fallthru
        _
      %p402 = scmp.lt.s32.totalorder %s23, 2
      // Predicated region
      $region65: #{mynet_depth_forward.1} parent=5 // pred_check
        %p403 = pneg %p402
      $region66: #{mynet_depth_forward.1} parent=5 // pred_check_branch
        %405 = sbr.rel (%p403) target = $region68
      $region67: #{mynet_depth_forward.1} parent=5 // pred_region
        // Predicated region
        $region69: #{mynet_depth_forward.1} parent=67 // pred_check
          %p406 = pneg %p43
        $region70: #{mynet_depth_forward.1} parent=67 // pred_check_branch
          %408 = sbr.rel (%p406) target = $region72
        $region71: #{mynet_depth_forward.1} parent=67 // pred_region
          %p409 = scmp.lt.s32.totalorder %s23, 1
          %s410 = scalar_select %p409, %s23, 1
          %s411 = smul.addr %s410, 32
          %s412 = smul.addr %s411, 8
          %s413 = scalar_lea.vmem %s0, %s412
        $region72: #{mynet_depth_forward.1} parent=67 // pred_fallthru
          _
      $region68: #{mynet_depth_forward.1} parent=5 // pred_fallthru
        _
      %p414 = scmp.le.s32.totalorder 1, %s23
      %p415 = scmp.lt.s32.totalorder %s23, 3
      %p416 = pnand %p414, %p415
      %p417 = pneg %p416
      // Predicated region
      $region73: #{mynet_depth_forward.1} parent=5 // pred_check
        _
      $region74: #{mynet_depth_forward.1} parent=5 // pred_check_branch
        %419 = sbr.rel (%p416) target = $region76
      $region75: #{mynet_depth_forward.1} parent=5 // pred_region
        %s420 = ssub.s32 %s23, 1
        %p421 = scmp.lt.s32.totalorder %s28, 1
        %s422 = scalar_select %p421, %s28, 1
        %s423 = smul.addr %s422, 32
        %s424 = smul.addr %s423, 8
        %s425 = scalar_lea.vmem %s0, %s424
        %p426 = pneg %p49
        %p427 = pneg %p46
        %p428 = pneg %p70
        %p429 = pneg %p67
        %p430 = pneg %p91
        %p431 = pneg %p88
        %p432 = pneg %p112
        %p433 = pneg %p109
        %p434 = pneg %p133
        %p435 = pneg %p130
        %p436 = pneg %p154
        %p437 = pneg %p151
        %p438 = pneg %p175
        %p439 = pneg %p172
        %p440 = pneg %p196
        %p441 = pneg %p193
        %p442 = pneg %p217
        %p443 = pneg %p214
        %p444 = pneg %p238
        %p445 = pneg %p235
        %p446 = pneg %p259
        %p447 = pneg %p256
        %p448 = pneg %p280
        %p449 = pneg %p277
        %p450 = pneg %p301
        %p451 = pneg %p298
        %p452 = pneg %p322
        %p453 = pneg %p319
        %p454 = pneg %p348
        %p455 = pneg %p345
        %s456 = sand.u32 %s335, 1
        %s457 = scalar_lea.sflag [#allocation6], %s456
        %s458 = sand.u32 %s335, 1
        %s459 = scalar_lea.vmem [#allocation5], %s458
        %p460 = scmp.lt.s32.totalorder %s28, 1
        %s461 = scalar_select %p460, %s28, 1
        %s462 = smul.addr %s461, 32
        %s463 = smul.addr %s462, 8
        %s464 = scalar_lea.vmem %s0, %s463
        %vm465 = vcmask 7168
        %466 = vst.msk [vmem:[#allocation2] sm:$0xff] %vm465, 0.0
        %467 = vst.msk [vmem:[#allocation2 + $0x8] sm:$0xff] %vm465, 0.0
        %468 = vst.msk [vmem:[#allocation2 + $0x10] sm:$0xff] %vm465, 0.0
        %469 = vst.msk [vmem:[#allocation2 + $0x18] sm:$0xff] %vm465, 0.0
        %470 = vst.msk [vmem:[#allocation2 + $0x20] sm:$0xff] %vm465, 0.0
        %471 = vst.msk [vmem:[#allocation2 + $0x28] sm:$0xff] %vm465, 0.0
        %472 = vst.msk [vmem:[#allocation2 + $0x30] sm:$0xff] %vm465, 0.0
        %473 = vst.msk [vmem:[#allocation2 + $0x38] sm:$0xff] %vm465, 0.0
        %474 = vst.msk [vmem:[#allocation2 + $0x40] sm:$0xff] %vm465, 0.0
        %475 = vst.msk [vmem:[#allocation2 + $0x48] sm:$0xff] %vm465, 0.0
        %476 = vst.msk [vmem:[#allocation2 + $0x50] sm:$0xff] %vm465, 0.0
        %477 = vst.msk [vmem:[#allocation2 + $0x58] sm:$0xff] %vm465, 0.0
        %478 = vst.msk [vmem:[#allocation2 + $0x60] sm:$0xff] %vm465, 0.0
        %479 = vst.msk [vmem:[#allocation2 + $0x68] sm:$0xff] %vm465, 0.0
        %480 = vst.msk [vmem:[#allocation2 + $0x70] sm:$0xff] %vm465, 0.0
        %481 = vst.msk [vmem:[#allocation2 + $0x78] sm:$0xff] %vm465, 0.0
        %482 = vst.msk [vmem:[#allocation2 + $0x80] sm:$0xff] %vm465, 0.0
        %483 = vst.msk [vmem:[#allocation2 + $0x88] sm:$0xff] %vm465, 0.0
        %484 = vst.msk [vmem:[#allocation2 + $0x90] sm:$0xff] %vm465, 0.0
        %485 = vst.msk [vmem:[#allocation2 + $0x98] sm:$0xff] %vm465, 0.0
        %486 = vst.msk [vmem:[#allocation2 + $0xa0] sm:$0xff] %vm465, 0.0
        %487 = vst.msk [vmem:[#allocation2 + $0xa8] sm:$0xff] %vm465, 0.0
        %488 = vst.msk [vmem:[#allocation2 + $0xb0] sm:$0xff] %vm465, 0.0
        %489 = vst.msk [vmem:[#allocation2 + $0xb8] sm:$0xff] %vm465, 0.0
        %490 = vst.msk [vmem:[#allocation2 + $0xc0] sm:$0xff] %vm465, 0.0
        %491 = vst.msk [vmem:[#allocation2 + $0xc8] sm:$0xff] %vm465, 0.0
        %492 = vst.msk [vmem:[#allocation2 + $0xd0] sm:$0xff] %vm465, 0.0
        %493 = vst.msk [vmem:[#allocation2 + $0xd8] sm:$0xff] %vm465, 0.0
        %494 = vst.msk [vmem:[#allocation2 + $0xe0] sm:$0xff] %vm465, 0.0
        %495 = vst.msk [vmem:[#allocation2 + $0xe8] sm:$0xff] %vm465, 0.0
        %496 = vst.msk [vmem:[#allocation2 + $0xf0] sm:$0xff] %vm465, 0.0
        %497 = vst.msk [vmem:[#allocation2 + $0xf8] sm:$0xff] %vm465, 0.0
        %498 = vst.msk [vmem:[#allocation2 + $0x100] sm:$0xff] %vm465, 0.0
        %499 = vst.msk [vmem:[#allocation2 + $0x108] sm:$0xff] %vm465, 0.0
        %500 = vst.msk [vmem:[#allocation2 + $0x110] sm:$0xff] %vm465, 0.0
        %501 = vst.msk [vmem:[#allocation2 + $0x118] sm:$0xff] %vm465, 0.0
        %502 = vst.msk [vmem:[#allocation2 + $0x120] sm:$0xff] %vm465, 0.0
        %503 = vst.msk [vmem:[#allocation2 + $0x128] sm:$0xff] %vm465, 0.0
        %504 = vst.msk [vmem:[#allocation2 + $0x130] sm:$0xff] %vm465, 0.0
        %505 = vst.msk [vmem:[#allocation2 + $0x138] sm:$0xff] %vm465, 0.0
        %506 = vst.msk [vmem:[#allocation2 + $0x140] sm:$0xff] %vm465, 0.0
        %507 = vst.msk [vmem:[#allocation2 + $0x148] sm:$0xff] %vm465, 0.0
        %508 = vst.msk [vmem:[#allocation2 + $0x150] sm:$0xff] %vm465, 0.0
        %509 = vst.msk [vmem:[#allocation2 + $0x158] sm:$0xff] %vm465, 0.0
        %510 = vst.msk [vmem:[#allocation2 + $0x160] sm:$0xff] %vm465, 0.0
        %511 = vst.msk [vmem:[#allocation2 + $0x168] sm:$0xff] %vm465, 0.0
        %512 = vst.msk [vmem:[#allocation2 + $0x170] sm:$0xff] %vm465, 0.0
        %513 = vst.msk [vmem:[#allocation2 + $0x178] sm:$0xff] %vm465, 0.0
        %514 = vst.msk [vmem:[#allocation2 + $0x180] sm:$0xff] %vm465, 0.0
        %515 = vst.msk [vmem:[#allocation2 + $0x188] sm:$0xff] %vm465, 0.0
        %516 = vst.msk [vmem:[#allocation2 + $0x190] sm:$0xff] %vm465, 0.0
        %517 = vst.msk [vmem:[#allocation2 + $0x198] sm:$0xff] %vm465, 0.0
        %518 = vst.msk [vmem:[#allocation2 + $0x1a0] sm:$0xff] %vm465, 0.0
        %519 = vst.msk [vmem:[#allocation2 + $0x1a8] sm:$0xff] %vm465, 0.0
        %520 = vst.msk [vmem:[#allocation2 + $0x1b0] sm:$0xff] %vm465, 0.0
        %521 = vst.msk [vmem:[#allocation2 + $0x1b8] sm:$0xff] %vm465, 0.0
        %522 = vst.msk [vmem:[#allocation2 + $0x1c0] sm:$0xff] %vm465, 0.0
        %vm523 = vcmask 261120
        %524 = vst.msk [vmem:[#allocation3] sm:$0xff] %vm523, 0.0
        %525 = vst.msk [vmem:[#allocation3 + $0x8] sm:$0xff] %vm523, 0.0
        %526 = vst.msk [vmem:[#allocation3 + $0x10] sm:$0xff] %vm523, 0.0
        %527 = vst.msk [vmem:[#allocation3 + $0x18] sm:$0xff] %vm523, 0.0
        %528 = vst.msk [vmem:[#allocation3 + $0x20] sm:$0xff] %vm523, 0.0
        %529 = vst.msk [vmem:[#allocation3 + $0x28] sm:$0xff] %vm523, 0.0
        %530 = vst.msk [vmem:[#allocation3 + $0x30] sm:$0xff] %vm523, 0.0
        %531 = vst.msk [vmem:[#allocation3 + $0x38] sm:$0xff] %vm523, 0.0
        %532 = vst.msk [vmem:[#allocation3 + $0x40] sm:$0xff] %vm523, 0.0
        %533 = vst.msk [vmem:[#allocation3 + $0x48] sm:$0xff] %vm523, 0.0
        %534 = vst.msk [vmem:[#allocation3 + $0x50] sm:$0xff] %vm523, 0.0
        %535 = vst.msk [vmem:[#allocation3 + $0x58] sm:$0xff] %vm523, 0.0
        %536 = vst.msk [vmem:[#allocation3 + $0x60] sm:$0xff] %vm523, 0.0
        %537 = vst.msk [vmem:[#allocation3 + $0x68] sm:$0xff] %vm523, 0.0
        %538 = vst.msk [vmem:[#allocation3 + $0x70] sm:$0xff] %vm523, 0.0
        %539 = vst.msk [vmem:[#allocation3 + $0x78] sm:$0xff] %vm523, 0.0
        %540 = vst.msk [vmem:[#allocation3 + $0x80] sm:$0xff] %vm523, 0.0
        %541 = vst.msk [vmem:[#allocation3 + $0x88] sm:$0xff] %vm523, 0.0
        %542 = vst.msk [vmem:[#allocation3 + $0x90] sm:$0xff] %vm523, 0.0
        %543 = vst.msk [vmem:[#allocation3 + $0x98] sm:$0xff] %vm523, 0.0
        %544 = vst.msk [vmem:[#allocation3 + $0xa0] sm:$0xff] %vm523, 0.0
        %545 = vst.msk [vmem:[#allocation3 + $0xa8] sm:$0xff] %vm523, 0.0
        %vm546 = vcmask 130048
        %547 = vst.msk [vmem:[#allocation4] sm:$0xff] %vm546, 0.0
        %548 = vst.msk [vmem:[#allocation4 + $0x8] sm:$0xff] %vm546, 0.0
        %549 = vst.msk [vmem:[#allocation4 + $0x10] sm:$0xff] %vm546, 0.0
        %550 = vst.msk [vmem:[#allocation4 + $0x18] sm:$0xff] %vm546, 0.0
        %551 = vst.msk [vmem:[#allocation4 + $0x20] sm:$0xff] %vm546, 0.0
        %552 = vst.msk [vmem:[#allocation4 + $0x28] sm:$0xff] %vm546, 0.0
        %553 = vst.msk [vmem:[#allocation4 + $0x30] sm:$0xff] %vm546, 0.0
        %v554 = vld [vmem:[%s464] sm:$0xff]
        %v555 = vld [vmem:[%s464 + $0x8] sm:$0xff]
        %556 = vst.msk [vmem:[#allocation2 + $0x19] sm:$0xff] %vm465, %v554
        %557 = vst.msk [vmem:[#allocation2 + $0x21] sm:$0xff] %vm465, %v555
        %s558 = scalar_lea.vmem %s464, 16
        %v559 = vld [vmem:[%s558] sm:$0xff]
        %v560 = vld [vmem:[%s558 + $0x8] sm:$0xff]
        %561 = vst.msk [vmem:[#allocation2 + $0x31] sm:$0xff] %vm465, %v559
        %562 = vst.msk [vmem:[#allocation2 + $0x39] sm:$0xff] %vm465, %v560
        %s563 = scalar_lea.vmem %s464, 32
        %v564 = vld [vmem:[%s563] sm:$0xff]
        %v565 = vld [vmem:[%s563 + $0x8] sm:$0xff]
        %566 = vst.msk [vmem:[#allocation2 + $0x49] sm:$0xff] %vm465, %v564
        %567 = vst.msk [vmem:[#allocation2 + $0x51] sm:$0xff] %vm465, %v565
        %s568 = scalar_lea.vmem %s464, 48
        %v569 = vld [vmem:[%s568] sm:$0xff]
        %v570 = vld [vmem:[%s568 + $0x8] sm:$0xff]
        %571 = vst.msk [vmem:[#allocation2 + $0x61] sm:$0xff] %vm465, %v569
        %572 = vst.msk [vmem:[#allocation2 + $0x69] sm:$0xff] %vm465, %v570
        %s573 = scalar_lea.vmem %s464, 64
        %v574 = vld [vmem:[%s573] sm:$0xff]
        %v575 = vld [vmem:[%s573 + $0x8] sm:$0xff]
        %576 = vst.msk [vmem:[#allocation2 + $0x79] sm:$0xff] %vm465, %v574
        %577 = vst.msk [vmem:[#allocation2 + $0x81] sm:$0xff] %vm465, %v575
        %s578 = scalar_lea.vmem %s464, 80
        %v579 = vld [vmem:[%s578] sm:$0xff]
        %v580 = vld [vmem:[%s578 + $0x8] sm:$0xff]
        %581 = vst.msk [vmem:[#allocation2 + $0x91] sm:$0xff] %vm465, %v579
        %582 = vst.msk [vmem:[#allocation2 + $0x99] sm:$0xff] %vm465, %v580
        %s583 = scalar_lea.vmem %s464, 96
        %v584 = vld [vmem:[%s583] sm:$0xff]
        %v585 = vld [vmem:[%s583 + $0x8] sm:$0xff]
        %586 = vst.msk [vmem:[#allocation2 + $0xa9] sm:$0xff] %vm465, %v584
        %587 = vst.msk [vmem:[#allocation2 + $0xb1] sm:$0xff] %vm465, %v585
        %s588 = scalar_lea.vmem %s464, 112
        %v589 = vld [vmem:[%s588] sm:$0xff]
        %v590 = vld [vmem:[%s588 + $0x8] sm:$0xff]
        %591 = vst.msk [vmem:[#allocation2 + $0xc1] sm:$0xff] %vm465, %v589
        %592 = vst.msk [vmem:[#allocation2 + $0xc9] sm:$0xff] %vm465, %v590
        %s593 = scalar_lea.vmem %s464, 128
        %v594 = vld [vmem:[%s593] sm:$0xff]
        %v595 = vld [vmem:[%s593 + $0x8] sm:$0xff]
        %596 = vst.msk [vmem:[#allocation2 + $0xd9] sm:$0xff] %vm465, %v594
        %597 = vst.msk [vmem:[#allocation2 + $0xe1] sm:$0xff] %vm465, %v595
        %s598 = scalar_lea.vmem %s464, 144
        %v599 = vld [vmem:[%s598] sm:$0xff]
        %v600 = vld [vmem:[%s598 + $0x8] sm:$0xff]
        %601 = vst.msk [vmem:[#allocation2 + $0xf1] sm:$0xff] %vm465, %v599
        %602 = vst.msk [vmem:[#allocation2 + $0xf9] sm:$0xff] %vm465, %v600
        %s603 = scalar_lea.vmem %s464, 160
        %v604 = vld [vmem:[%s603] sm:$0xff]
        %v605 = vld [vmem:[%s603 + $0x8] sm:$0xff]
        %606 = vst.msk [vmem:[#allocation2 + $0x109] sm:$0xff] %vm465, %v604
        %607 = vst.msk [vmem:[#allocation2 + $0x111] sm:$0xff] %vm465, %v605
        %s608 = scalar_lea.vmem %s464, 176
        %v609 = vld [vmem:[%s608] sm:$0xff]
        %v610 = vld [vmem:[%s608 + $0x8] sm:$0xff]
        %611 = vst.msk [vmem:[#allocation2 + $0x121] sm:$0xff] %vm465, %v609
        %612 = vst.msk [vmem:[#allocation2 + $0x129] sm:$0xff] %vm465, %v610
        %s613 = scalar_lea.vmem %s464, 192
        %v614 = vld [vmem:[%s613] sm:$0xff]
        %v615 = vld [vmem:[%s613 + $0x8] sm:$0xff]
        %616 = vst.msk [vmem:[#allocation2 + $0x139] sm:$0xff] %vm465, %v614
        %617 = vst.msk [vmem:[#allocation2 + $0x141] sm:$0xff] %vm465, %v615
        %s618 = scalar_lea.vmem %s464, 208
        %v619 = vld [vmem:[%s618] sm:$0xff]
        %v620 = vld [vmem:[%s618 + $0x8] sm:$0xff]
        %621 = vst.msk [vmem:[#allocation2 + $0x151] sm:$0xff] %vm465, %v619
        %622 = vst.msk [vmem:[#allocation2 + $0x159] sm:$0xff] %vm465, %v620
        %s623 = scalar_lea.vmem %s464, 224
        %v624 = vld [vmem:[%s623] sm:$0xff]
        %v625 = vld [vmem:[%s623 + $0x8] sm:$0xff]
        %626 = vst.msk [vmem:[#allocation2 + $0x169] sm:$0xff] %vm465, %v624
        %627 = vst.msk [vmem:[#allocation2 + $0x171] sm:$0xff] %vm465, %v625
        %s628 = scalar_lea.vmem %s464, 240
        %v629 = vld [vmem:[%s628] sm:$0xff]
        %v630 = vld [vmem:[%s628 + $0x8] sm:$0xff]
        %631 = vst.msk [vmem:[#allocation2 + $0x181] sm:$0xff] %vm465, %v629
        %632 = vst.msk [vmem:[#allocation2 + $0x189] sm:$0xff] %vm465, %v630
        %v633 = vld [vmem:[#allocation2] sm:$0xff]
        %v634 = vld [vmem:[#allocation2 + $0x8] sm:$0xff]
        %v635 = vld [vmem:[#allocation2 + $0x10] sm:$0xff]
        %v636 = vld [vmem:[#allocation2 + $0x18] sm:$0xff]
        %v637 = vld [vmem:[#allocation2 + $0x20] sm:$0xff]
        %v638 = vld [vmem:[#allocation2 + $0x28] sm:$0xff]
        %v639 = vld [vmem:[#allocation2 + $0x30] sm:$0xff]
        %v640 = vld [vmem:[#allocation2 + $0x38] sm:$0xff]
        %v641 = vld [vmem:[#allocation2 + $0x40] sm:$0xff]
        %v642 = vld [vmem:[#allocation2 + $0x48] sm:$0xff]
        %v643 = vld [vmem:[#allocation2 + $0x50] sm:$0xff]
        %v644 = vld [vmem:[#allocation2 + $0x58] sm:$0xff]
        %v645 = vld [vmem:[#allocation2 + $0x60] sm:$0xff]
        %v646 = vld [vmem:[#allocation2 + $0x68] sm:$0xff]
        %v647 = vld [vmem:[#allocation2 + $0x70] sm:$0xff]
        %v648 = vld [vmem:[#allocation2 + $0x78] sm:$0xff]
        %v649 = vld [vmem:[#allocation2 + $0x80] sm:$0xff]
        %v650 = vld [vmem:[#allocation2 + $0x88] sm:$0xff]
        %v651 = vld [vmem:[#allocation2 + $0x90] sm:$0xff]
        %v652 = vld [vmem:[#allocation2 + $0x98] sm:$0xff]
        %v653 = vld [vmem:[#allocation2 + $0xa0] sm:$0xff]
        %v654 = vld [vmem:[#allocation2 + $0xa8] sm:$0xff]
        %v655 = vld [vmem:[#allocation2 + $0xb0] sm:$0xff]
        %v656 = vld [vmem:[#allocation2 + $0xb8] sm:$0xff]
        %v657 = vld [vmem:[#allocation2 + $0xc0] sm:$0xff]
        %v658 = vld [vmem:[#allocation2 + $0xc8] sm:$0xff]
        %v659 = vld [vmem:[#allocation2 + $0xd0] sm:$0xff]
        %v660 = vld [vmem:[#allocation2 + $0xd8] sm:$0xff]
        %v661 = vld [vmem:[#allocation2 + $0xe0] sm:$0xff]
        %v662 = vld [vmem:[#allocation2 + $0xe8] sm:$0xff]
        %v663 = vld [vmem:[#allocation2 + $0xf0] sm:$0xff]
        %v664 = vld [vmem:[#allocation2 + $0xf8] sm:$0xff]
        %v665 = vld [vmem:[#allocation2 + $0x100] sm:$0xff]
        %v666 = vld [vmem:[#allocation2 + $0x108] sm:$0xff]
        %v667 = vld [vmem:[#allocation2 + $0x110] sm:$0xff]
        %v668 = vld [vmem:[#allocation2 + $0x118] sm:$0xff]
        %v669 = vld [vmem:[#allocation2 + $0x120] sm:$0xff]
        %v670 = vld [vmem:[#allocation2 + $0x128] sm:$0xff]
        %v671 = vld [vmem:[#allocation2 + $0x130] sm:$0xff]
        %v672 = vld [vmem:[#allocation2 + $0x138] sm:$0xff]
        %v673 = vld [vmem:[#allocation2 + $0x140] sm:$0xff]
        %v674 = vld [vmem:[#allocation2 + $0x148] sm:$0xff]
        %v675 = vld [vmem:[#allocation2 + $0x150] sm:$0xff]
        %v676 = vld [vmem:[#allocation2 + $0x158] sm:$0xff]
        %v677 = vld [vmem:[#allocation2 + $0x160] sm:$0xff]
        %v678 = vld [vmem:[#allocation2 + $0x168] sm:$0xff]
        %v679 = vld [vmem:[#allocation2 + $0x170] sm:$0xff]
        %v680 = vld [vmem:[#allocation2 + $0x178] sm:$0xff]
        %v681 = vld [vmem:[%s1] sm:$0x1]
        %683 = vset.pattern.permute.xlu0 0
        %684 = vperm.xlu0 %683, %v633
        %v685 = vpop.permute.xlu0 %684
        %688 = vset.pattern.permute.xlu0 0
        %689 = vperm.xlu0 %688, %v634
        %v690 = vpop.permute.xlu0 %689
        %693 = vset.pattern.permute.xlu0 0
        %694 = vperm.xlu0 %693, %v635
        %v695 = vpop.permute.xlu0 %694
        %698 = vset.pattern.permute.xlu0 0
        %699 = vperm.xlu0 %698, %v636
        %v700 = vpop.permute.xlu0 %699
        %703 = vset.pattern.permute.xlu0 0
        %704 = vperm.xlu0 %703, %v637
        %v705 = vpop.permute.xlu0 %704
        %708 = vset.pattern.permute.xlu0 0
        %709 = vperm.xlu0 %708, %v638
        %v710 = vpop.permute.xlu0 %709
        %713 = vset.pattern.permute.xlu0 0
        %714 = vperm.xlu0 %713, %v639
        %v715 = vpop.permute.xlu0 %714
        %718 = vset.pattern.permute.xlu0 0
        %719 = vperm.xlu0 %718, %v640
        %v720 = vpop.permute.xlu0 %719
        %723 = vset.pattern.permute.xlu0 0
        %724 = vperm.xlu0 %723, %v641
        %v725 = vpop.permute.xlu0 %724
        %728 = vset.pattern.permute.xlu0 0
        %729 = vperm.xlu0 %728, %v642
        %v730 = vpop.permute.xlu0 %729
        %733 = vset.pattern.permute.xlu0 0
        %734 = vperm.xlu0 %733, %v643
        %v735 = vpop.permute.xlu0 %734
        %738 = vset.pattern.permute.xlu0 0
        %739 = vperm.xlu0 %738, %v644
        %v740 = vpop.permute.xlu0 %739
        %743 = vset.pattern.permute.xlu0 0
        %744 = vperm.xlu0 %743, %v645
        %v745 = vpop.permute.xlu0 %744
        %748 = vset.pattern.permute.xlu0 0
        %749 = vperm.xlu0 %748, %v646
        %v750 = vpop.permute.xlu0 %749
        %753 = vset.pattern.permute.xlu0 0
        %754 = vperm.xlu0 %753, %v647
        %v755 = vpop.permute.xlu0 %754
        %758 = vset.pattern.permute.xlu0 0
        %759 = vperm.xlu0 %758, %v648
        %v760 = vpop.permute.xlu0 %759
        %763 = vset.pattern.permute.xlu0 0
        %764 = vperm.xlu0 %763, %v649
        %v765 = vpop.permute.xlu0 %764
        %768 = vset.pattern.permute.xlu0 0
        %769 = vperm.xlu0 %768, %v650
        %v770 = vpop.permute.xlu0 %769
        %773 = vset.pattern.permute.xlu0 0
        %774 = vperm.xlu0 %773, %v651
        %v775 = vpop.permute.xlu0 %774
        %778 = vset.pattern.permute.xlu0 0
        %779 = vperm.xlu0 %778, %v652
        %v780 = vpop.permute.xlu0 %779
        %783 = vset.pattern.permute.xlu0 0
        %784 = vperm.xlu0 %783, %v653
        %v785 = vpop.permute.xlu0 %784
        %788 = vset.pattern.permute.xlu0 0
        %789 = vperm.xlu0 %788, %v654
        %v790 = vpop.permute.xlu0 %789
        %793 = vset.pattern.permute.xlu0 0
        %794 = vperm.xlu0 %793, %v655
        %v795 = vpop.permute.xlu0 %794
        %798 = vset.pattern.permute.xlu0 0
        %799 = vperm.xlu0 %798, %v656
        %v800 = vpop.permute.xlu0 %799
        %803 = vset.pattern.permute.xlu0 0
        %804 = vperm.xlu0 %803, %v657
        %v805 = vpop.permute.xlu0 %804
        %808 = vset.pattern.permute.xlu0 0
        %809 = vperm.xlu0 %808, %v658
        %v810 = vpop.permute.xlu0 %809
        %813 = vset.pattern.permute.xlu0 0
        %814 = vperm.xlu0 %813, %v659
        %v815 = vpop.permute.xlu0 %814
        %818 = vset.pattern.permute.xlu0 0
        %819 = vperm.xlu0 %818, %v660
        %v820 = vpop.permute.xlu0 %819
        %823 = vset.pattern.permute.xlu0 0
        %824 = vperm.xlu0 %823, %v661
        %v825 = vpop.permute.xlu0 %824
        %828 = vset.pattern.permute.xlu0 0
        %829 = vperm.xlu0 %828, %v662
        %v830 = vpop.permute.xlu0 %829
        %833 = vset.pattern.permute.xlu0 0
        %834 = vperm.xlu0 %833, %v663
        %v835 = vpop.permute.xlu0 %834
        %838 = vset.pattern.permute.xlu0 0
        %839 = vperm.xlu0 %838, %v664
        %v840 = vpop.permute.xlu0 %839
        %843 = vset.pattern.permute.xlu0 0
        %844 = vperm.xlu0 %843, %v665
        %v845 = vpop.permute.xlu0 %844
        %848 = vset.pattern.permute.xlu0 0
        %849 = vperm.xlu0 %848, %v666
        %v850 = vpop.permute.xlu0 %849
        %853 = vset.pattern.permute.xlu0 0
        %854 = vperm.xlu0 %853, %v667
        %v855 = vpop.permute.xlu0 %854
        %858 = vset.pattern.permute.xlu0 0
        %859 = vperm.xlu0 %858, %v668
        %v860 = vpop.permute.xlu0 %859
        %863 = vset.pattern.permute.xlu0 0
        %864 = vperm.xlu0 %863, %v669
        %v865 = vpop.permute.xlu0 %864
        %868 = vset.pattern.permute.xlu0 0
        %869 = vperm.xlu0 %868, %v670
        %v870 = vpop.permute.xlu0 %869
        %873 = vset.pattern.permute.xlu0 0
        %874 = vperm.xlu0 %873, %v671
        %v875 = vpop.permute.xlu0 %874
        %878 = vset.pattern.permute.xlu0 0
        %879 = vperm.xlu0 %878, %v672
        %v880 = vpop.permute.xlu0 %879
        %883 = vset.pattern.permute.xlu0 0
        %884 = vperm.xlu0 %883, %v673
        %v885 = vpop.permute.xlu0 %884
        %888 = vset.pattern.permute.xlu0 0
        %889 = vperm.xlu0 %888, %v674
        %v890 = vpop.permute.xlu0 %889
        %893 = vset.pattern.permute.xlu0 0
        %894 = vperm.xlu0 %893, %v675
        %v895 = vpop.permute.xlu0 %894
        %898 = vset.pattern.permute.xlu0 0
        %899 = vperm.xlu0 %898, %v676
        %v900 = vpop.permute.xlu0 %899
        %903 = vset.pattern.permute.xlu0 0
        %904 = vperm.xlu0 %903, %v677
        %v905 = vpop.permute.xlu0 %904
        %908 = vset.pattern.permute.xlu0 0
        %909 = vperm.xlu0 %908, %v678
        %v910 = vpop.permute.xlu0 %909
        %913 = vset.pattern.permute.xlu0 0
        %914 = vperm.xlu0 %913, %v679
        %v915 = vpop.permute.xlu0 %914
        %918 = vset.pattern.permute.xlu0 0
        %919 = vperm.xlu0 %918, %v680
        %v920 = vpop.permute.xlu0 %919
        %v923 = vlaneseq
        %v924 = vshrl.u32 %v923, 7
        %v925 = vsub.s32 0, %v924
        %v926 = vrot.slane %v681, %v925
        %v928 = vmul.f32 %v685, %v926
        %v929 = vmul.f32 %v690, %v926
        %v930 = vmul.f32 %v695, %v926
        %v931 = vmul.f32 %v700, %v926
        %v932 = vmul.f32 %v705, %v926
        %v933 = vmul.f32 %v710, %v926
        %v934 = vmul.f32 %v715, %v926
        %v935 = vmul.f32 %v720, %v926
        %v936 = vmul.f32 %v725, %v926
        %v937 = vmul.f32 %v730, %v926
        %v938 = vmul.f32 %v735, %v926
        %v939 = vmul.f32 %v740, %v926
        %v940 = vmul.f32 %v745, %v926
        %v941 = vmul.f32 %v750, %v926
        %v942 = vmul.f32 %v755, %v926
        %v943 = vmul.f32 %v760, %v926
        %v944 = vmul.f32 %v765, %v926
        %v945 = vmul.f32 %v770, %v926
        %v946 = vmul.f32 %v775, %v926
        %v947 = vmul.f32 %v780, %v926
        %v948 = vmul.f32 %v785, %v926
        %v949 = vmul.f32 %v790, %v926
        %v950 = vmul.f32 %v795, %v926
        %v951 = vmul.f32 %v800, %v926
        %v952 = vmul.f32 %v805, %v926
        %v953 = vmul.f32 %v810, %v926
        %v954 = vmul.f32 %v815, %v926
        %v955 = vmul.f32 %v820, %v926
        %v956 = vmul.f32 %v825, %v926
        %v957 = vmul.f32 %v830, %v926
        %v958 = vmul.f32 %v835, %v926
        %v959 = vmul.f32 %v840, %v926
        %v960 = vmul.f32 %v845, %v926
        %v961 = vmul.f32 %v850, %v926
        %v962 = vmul.f32 %v855, %v926
        %v963 = vmul.f32 %v860, %v926
        %v964 = vmul.f32 %v865, %v926
        %v965 = vmul.f32 %v870, %v926
        %v966 = vmul.f32 %v875, %v926
        %v967 = vmul.f32 %v880, %v926
        %v968 = vmul.f32 %v885, %v926
        %v969 = vmul.f32 %v890, %v926
        %v970 = vmul.f32 %v895, %v926
        %v971 = vmul.f32 %v900, %v926
        %v972 = vmul.f32 %v905, %v926
        %v973 = vmul.f32 %v910, %v926
        %v974 = vmul.f32 %v915, %v926
        %v975 = vmul.f32 %v920, %v926
        %v976 = vadd.f32 %v928, 0.0
        %v977 = vadd.f32 %v929, 0.0
        %v978 = vadd.f32 %v930, 0.0
        %v979 = vadd.f32 %v931, 0.0
        %v980 = vadd.f32 %v932, 0.0
        %v981 = vadd.f32 %v933, 0.0
        %v982 = vadd.f32 %v934, 0.0
        %v983 = vadd.f32 %v935, 0.0
        %v984 = vadd.f32 %v936, 0.0
        %v985 = vadd.f32 %v937, 0.0
        %v986 = vadd.f32 %v938, 0.0
        %v987 = vadd.f32 %v939, 0.0
        %v988 = vadd.f32 %v940, 0.0
        %v989 = vadd.f32 %v941, 0.0
        %v990 = vadd.f32 %v942, 0.0
        %v991 = vadd.f32 %v943, 0.0
        %v992 = vadd.f32 %v944, 0.0
        %v993 = vadd.f32 %v945, 0.0
        %v994 = vadd.f32 %v946, 0.0
        %v995 = vadd.f32 %v947, 0.0
        %v996 = vadd.f32 %v948, 0.0
        %v997 = vadd.f32 %v949, 0.0
        %v998 = vadd.f32 %v950, 0.0
        %v999 = vadd.f32 %v951, 0.0
        %v1000 = vadd.f32 %v952, 0.0
        %v1001 = vadd.f32 %v953, 0.0
        %v1002 = vadd.f32 %v954, 0.0
        %v1003 = vadd.f32 %v955, 0.0
        %v1004 = vadd.f32 %v956, 0.0
        %v1005 = vadd.f32 %v957, 0.0
        %v1006 = vadd.f32 %v958, 0.0
        %v1007 = vadd.f32 %v959, 0.0
        %v1008 = vadd.f32 %v960, 0.0
        %v1009 = vadd.f32 %v961, 0.0
        %v1010 = vadd.f32 %v962, 0.0
        %v1011 = vadd.f32 %v963, 0.0
        %v1012 = vadd.f32 %v964, 0.0
        %v1013 = vadd.f32 %v965, 0.0
        %v1014 = vadd.f32 %v966, 0.0
        %v1015 = vadd.f32 %v967, 0.0
        %v1016 = vadd.f32 %v968, 0.0
        %v1017 = vadd.f32 %v969, 0.0
        %v1018 = vadd.f32 %v970, 0.0
        %v1019 = vadd.f32 %v971, 0.0
        %v1020 = vadd.f32 %v972, 0.0
        %v1021 = vadd.f32 %v973, 0.0
        %v1022 = vadd.f32 %v974, 0.0
        %v1023 = vadd.f32 %v975, 0.0
        %v1024 = vld [vmem:[#allocation2 + $0x1] sm:$0xff]
        %v1025 = vld [vmem:[#allocation2 + $0x9] sm:$0xff]
        %v1026 = vld [vmem:[#allocation2 + $0x11] sm:$0xff]
        %v1027 = vld [vmem:[#allocation2 + $0x19] sm:$0xff]
        %v1028 = vld [vmem:[#allocation2 + $0x21] sm:$0xff]
        %v1029 = vld [vmem:[#allocation2 + $0x29] sm:$0xff]
        %v1030 = vld [vmem:[#allocation2 + $0x31] sm:$0xff]
        %v1031 = vld [vmem:[#allocation2 + $0x39] sm:$0xff]
        %v1032 = vld [vmem:[#allocation2 + $0x41] sm:$0xff]
        %v1033 = vld [vmem:[#allocation2 + $0x49] sm:$0xff]
        %v1034 = vld [vmem:[#allocation2 + $0x51] sm:$0xff]
        %v1035 = vld [vmem:[#allocation2 + $0x59] sm:$0xff]
        %v1036 = vld [vmem:[#allocation2 + $0x61] sm:$0xff]
        %v1037 = vld [vmem:[#allocation2 + $0x69] sm:$0xff]
        %v1038 = vld [vmem:[#allocation2 + $0x71] sm:$0xff]
        %v1039 = vld [vmem:[#allocation2 + $0x79] sm:$0xff]
        %v1040 = vld [vmem:[#allocation2 + $0x81] sm:$0xff]
        %v1041 = vld [vmem:[#allocation2 + $0x89] sm:$0xff]
        %v1042 = vld [vmem:[#allocation2 + $0x91] sm:$0xff]
        %v1043 = vld [vmem:[#allocation2 + $0x99] sm:$0xff]
        %v1044 = vld [vmem:[#allocation2 + $0xa1] sm:$0xff]
        %v1045 = vld [vmem:[#allocation2 + $0xa9] sm:$0xff]
        %v1046 = vld [vmem:[#allocation2 + $0xb1] sm:$0xff]
        %v1047 = vld [vmem:[#allocation2 + $0xb9] sm:$0xff]
        %v1048 = vld [vmem:[#allocation2 + $0xc1] sm:$0xff]
        %v1049 = vld [vmem:[#allocation2 + $0xc9] sm:$0xff]
        %v1050 = vld [vmem:[#allocation2 + $0xd1] sm:$0xff]
        %v1051 = vld [vmem:[#allocation2 + $0xd9] sm:$0xff]
        %v1052 = vld [vmem:[#allocation2 + $0xe1] sm:$0xff]
        %v1053 = vld [vmem:[#allocation2 + $0xe9] sm:$0xff]
        %v1054 = vld [vmem:[#allocation2 + $0xf1] sm:$0xff]
        %v1055 = vld [vmem:[#allocation2 + $0xf9] sm:$0xff]
        %v1056 = vld [vmem:[#allocation2 + $0x101] sm:$0xff]
        %v1057 = vld [vmem:[#allocation2 + $0x109] sm:$0xff]
        %v1058 = vld [vmem:[#allocation2 + $0x111] sm:$0xff]
        %v1059 = vld [vmem:[#allocation2 + $0x119] sm:$0xff]
        %v1060 = vld [vmem:[#allocation2 + $0x121] sm:$0xff]
        %v1061 = vld [vmem:[#allocation2 + $0x129] sm:$0xff]
        %v1062 = vld [vmem:[#allocation2 + $0x131] sm:$0xff]
        %v1063 = vld [vmem:[#allocation2 + $0x139] sm:$0xff]
        %v1064 = vld [vmem:[#allocation2 + $0x141] sm:$0xff]
        %v1065 = vld [vmem:[#allocation2 + $0x149] sm:$0xff]
        %v1066 = vld [vmem:[#allocation2 + $0x151] sm:$0xff]
        %v1067 = vld [vmem:[#allocation2 + $0x159] sm:$0xff]
        %v1068 = vld [vmem:[#allocation2 + $0x161] sm:$0xff]
        %v1069 = vld [vmem:[#allocation2 + $0x169] sm:$0xff]
        %v1070 = vld [vmem:[#allocation2 + $0x171] sm:$0xff]
        %v1071 = vld [vmem:[#allocation2 + $0x179] sm:$0xff]
        %s1072 = scalar_lea.vmem %s1, 1
        %v1073 = vld [vmem:[%s1072] sm:$0x1]
        %1075 = vset.pattern.permute.xlu0 0
        %1076 = vperm.xlu0 %1075, %v1024
        %v1077 = vpop.permute.xlu0 %1076
        %1080 = vset.pattern.permute.xlu0 0
        %1081 = vperm.xlu0 %1080, %v1025
        %v1082 = vpop.permute.xlu0 %1081
        %1085 = vset.pattern.permute.xlu0 0
        %1086 = vperm.xlu0 %1085, %v1026
        %v1087 = vpop.permute.xlu0 %1086
        %1090 = vset.pattern.permute.xlu0 0
        %1091 = vperm.xlu0 %1090, %v1027
        %v1092 = vpop.permute.xlu0 %1091
        %1095 = vset.pattern.permute.xlu0 0
        %1096 = vperm.xlu0 %1095, %v1028
        %v1097 = vpop.permute.xlu0 %1096
        %1100 = vset.pattern.permute.xlu0 0
        %1101 = vperm.xlu0 %1100, %v1029
        %v1102 = vpop.permute.xlu0 %1101
        %1105 = vset.pattern.permute.xlu0 0
        %1106 = vperm.xlu0 %1105, %v1030
        %v1107 = vpop.permute.xlu0 %1106
        %1110 = vset.pattern.permute.xlu0 0
        %1111 = vperm.xlu0 %1110, %v1031
        %v1112 = vpop.permute.xlu0 %1111
        %1115 = vset.pattern.permute.xlu0 0
        %1116 = vperm.xlu0 %1115, %v1032
        %v1117 = vpop.permute.xlu0 %1116
        %1120 = vset.pattern.permute.xlu0 0
        %1121 = vperm.xlu0 %1120, %v1033
        %v1122 = vpop.permute.xlu0 %1121
        %1125 = vset.pattern.permute.xlu0 0
        %1126 = vperm.xlu0 %1125, %v1034
        %v1127 = vpop.permute.xlu0 %1126
        %1130 = vset.pattern.permute.xlu0 0
        %1131 = vperm.xlu0 %1130, %v1035
        %v1132 = vpop.permute.xlu0 %1131
        %1135 = vset.pattern.permute.xlu0 0
        %1136 = vperm.xlu0 %1135, %v1036
        %v1137 = vpop.permute.xlu0 %1136
        %1140 = vset.pattern.permute.xlu0 0
        %1141 = vperm.xlu0 %1140, %v1037
        %v1142 = vpop.permute.xlu0 %1141
        %1145 = vset.pattern.permute.xlu0 0
        %1146 = vperm.xlu0 %1145, %v1038
        %v1147 = vpop.permute.xlu0 %1146
        %1150 = vset.pattern.permute.xlu0 0
        %1151 = vperm.xlu0 %1150, %v1039
        %v1152 = vpop.permute.xlu0 %1151
        %1155 = vset.pattern.permute.xlu0 0
        %1156 = vperm.xlu0 %1155, %v1040
        %v1157 = vpop.permute.xlu0 %1156
        %1160 = vset.pattern.permute.xlu0 0
        %1161 = vperm.xlu0 %1160, %v1041
        %v1162 = vpop.permute.xlu0 %1161
        %1165 = vset.pattern.permute.xlu0 0
        %1166 = vperm.xlu0 %1165, %v1042
        %v1167 = vpop.permute.xlu0 %1166
        %1170 = vset.pattern.permute.xlu0 0
        %1171 = vperm.xlu0 %1170, %v1043
        %v1172 = vpop.permute.xlu0 %1171
        %1175 = vset.pattern.permute.xlu0 0
        %1176 = vperm.xlu0 %1175, %v1044
        %v1177 = vpop.permute.xlu0 %1176
        %1180 = vset.pattern.permute.xlu0 0
        %1181 = vperm.xlu0 %1180, %v1045
        %v1182 = vpop.permute.xlu0 %1181
        %1185 = vset.pattern.permute.xlu0 0
        %1186 = vperm.xlu0 %1185, %v1046
        %v1187 = vpop.permute.xlu0 %1186
        %1190 = vset.pattern.permute.xlu0 0
        %1191 = vperm.xlu0 %1190, %v1047
        %v1192 = vpop.permute.xlu0 %1191
        %1195 = vset.pattern.permute.xlu0 0
        %1196 = vperm.xlu0 %1195, %v1048
        %v1197 = vpop.permute.xlu0 %1196
        %1200 = vset.pattern.permute.xlu0 0
        %1201 = vperm.xlu0 %1200, %v1049
        %v1202 = vpop.permute.xlu0 %1201
        %1205 = vset.pattern.permute.xlu0 0
        %1206 = vperm.xlu0 %1205, %v1050
        %v1207 = vpop.permute.xlu0 %1206
        %1210 = vset.pattern.permute.xlu0 0
        %1211 = vperm.xlu0 %1210, %v1051
        %v1212 = vpop.permute.xlu0 %1211
        %1215 = vset.pattern.permute.xlu0 0
        %1216 = vperm.xlu0 %1215, %v1052
        %v1217 = vpop.permute.xlu0 %1216
        %1220 = vset.pattern.permute.xlu0 0
        %1221 = vperm.xlu0 %1220, %v1053
        %v1222 = vpop.permute.xlu0 %1221
        %1225 = vset.pattern.permute.xlu0 0
        %1226 = vperm.xlu0 %1225, %v1054
        %v1227 = vpop.permute.xlu0 %1226
        %1230 = vset.pattern.permute.xlu0 0
        %1231 = vperm.xlu0 %1230, %v1055
        %v1232 = vpop.permute.xlu0 %1231
        %1235 = vset.pattern.permute.xlu0 0
        %1236 = vperm.xlu0 %1235, %v1056
        %v1237 = vpop.permute.xlu0 %1236
        %1240 = vset.pattern.permute.xlu0 0
        %1241 = vperm.xlu0 %1240, %v1057
        %v1242 = vpop.permute.xlu0 %1241
        %1245 = vset.pattern.permute.xlu0 0
        %1246 = vperm.xlu0 %1245, %v1058
        %v1247 = vpop.permute.xlu0 %1246
        %1250 = vset.pattern.permute.xlu0 0
        %1251 = vperm.xlu0 %1250, %v1059
        %v1252 = vpop.permute.xlu0 %1251
        %1255 = vset.pattern.permute.xlu0 0
        %1256 = vperm.xlu0 %1255, %v1060
        %v1257 = vpop.permute.xlu0 %1256
        %1260 = vset.pattern.permute.xlu0 0
        %1261 = vperm.xlu0 %1260, %v1061
        %v1262 = vpop.permute.xlu0 %1261
        %1265 = vset.pattern.permute.xlu0 0
        %1266 = vperm.xlu0 %1265, %v1062
        %v1267 = vpop.permute.xlu0 %1266
        %1270 = vset.pattern.permute.xlu0 0
        %1271 = vperm.xlu0 %1270, %v1063
        %v1272 = vpop.permute.xlu0 %1271
        %1275 = vset.pattern.permute.xlu0 0
        %1276 = vperm.xlu0 %1275, %v1064
        %v1277 = vpop.permute.xlu0 %1276
        %1280 = vset.pattern.permute.xlu0 0
        %1281 = vperm.xlu0 %1280, %v1065
        %v1282 = vpop.permute.xlu0 %1281
        %1285 = vset.pattern.permute.xlu0 0
        %1286 = vperm.xlu0 %1285, %v1066
        %v1287 = vpop.permute.xlu0 %1286
        %1290 = vset.pattern.permute.xlu0 0
        %1291 = vperm.xlu0 %1290, %v1067
        %v1292 = vpop.permute.xlu0 %1291
        %1295 = vset.pattern.permute.xlu0 0
        %1296 = vperm.xlu0 %1295, %v1068
        %v1297 = vpop.permute.xlu0 %1296
        %1300 = vset.pattern.permute.xlu0 0
        %1301 = vperm.xlu0 %1300, %v1069
        %v1302 = vpop.permute.xlu0 %1301
        %1305 = vset.pattern.permute.xlu0 0
        %1306 = vperm.xlu0 %1305, %v1070
        %v1307 = vpop.permute.xlu0 %1306
        %1310 = vset.pattern.permute.xlu0 0
        %1311 = vperm.xlu0 %1310, %v1071
        %v1312 = vpop.permute.xlu0 %1311
        %v1315 = vlaneseq
        %v1316 = vshrl.u32 %v1315, 7
        %v1317 = vsub.s32 0, %v1316
        %v1318 = vrot.slane %v1073, %v1317
        %v1320 = vmul.f32 %v1077, %v1318
        %v1321 = vmul.f32 %v1082, %v1318
        %v1322 = vmul.f32 %v1087, %v1318
        %v1323 = vmul.f32 %v1092, %v1318
        %v1324 = vmul.f32 %v1097, %v1318
        %v1325 = vmul.f32 %v1102, %v1318
        %v1326 = vmul.f32 %v1107, %v1318
        %v1327 = vmul.f32 %v1112, %v1318
        %v1328 = vmul.f32 %v1117, %v1318
        %v1329 = vmul.f32 %v1122, %v1318
        %v1330 = vmul.f32 %v1127, %v1318
        %v1331 = vmul.f32 %v1132, %v1318
        %v1332 = vmul.f32 %v1137, %v1318
        %v1333 = vmul.f32 %v1142, %v1318
        %v1334 = vmul.f32 %v1147, %v1318
        %v1335 = vmul.f32 %v1152, %v1318
        %v1336 = vmul.f32 %v1157, %v1318
        %v1337 = vmul.f32 %v1162, %v1318
        %v1338 = vmul.f32 %v1167, %v1318
        %v1339 = vmul.f32 %v1172, %v1318
        %v1340 = vmul.f32 %v1177, %v1318
        %v1341 = vmul.f32 %v1182, %v1318
        %v1342 = vmul.f32 %v1187, %v1318
        %v1343 = vmul.f32 %v1192, %v1318
        %v1344 = vmul.f32 %v1197, %v1318
        %v1345 = vmul.f32 %v1202, %v1318
        %v1346 = vmul.f32 %v1207, %v1318
        %v1347 = vmul.f32 %v1212, %v1318
        %v1348 = vmul.f32 %v1217, %v1318
        %v1349 = vmul.f32 %v1222, %v1318
        %v1350 = vmul.f32 %v1227, %v1318
        %v1351 = vmul.f32 %v1232, %v1318
        %v1352 = vmul.f32 %v1237, %v1318
        %v1353 = vmul.f32 %v1242, %v1318
        %v1354 = vmul.f32 %v1247, %v1318
        %v1355 = vmul.f32 %v1252, %v1318
        %v1356 = vmul.f32 %v1257, %v1318
        %v1357 = vmul.f32 %v1262, %v1318
        %v1358 = vmul.f32 %v1267, %v1318
        %v1359 = vmul.f32 %v1272, %v1318
        %v1360 = vmul.f32 %v1277, %v1318
        %v1361 = vmul.f32 %v1282, %v1318
        %v1362 = vmul.f32 %v1287, %v1318
        %v1363 = vmul.f32 %v1292, %v1318
        %v1364 = vmul.f32 %v1297, %v1318
        %v1365 = vmul.f32 %v1302, %v1318
        %v1366 = vmul.f32 %v1307, %v1318
        %v1367 = vmul.f32 %v1312, %v1318
        %v1368 = vadd.f32 %v976, %v1320
        %v1369 = vadd.f32 %v977, %v1321
        %v1370 = vadd.f32 %v978, %v1322
        %v1371 = vadd.f32 %v979, %v1323
        %v1372 = vadd.f32 %v980, %v1324
        %v1373 = vadd.f32 %v981, %v1325
        %v1374 = vadd.f32 %v982, %v1326
        %v1375 = vadd.f32 %v983, %v1327
        %v1376 = vadd.f32 %v984, %v1328
        %v1377 = vadd.f32 %v985, %v1329
        %v1378 = vadd.f32 %v986, %v1330
        %v1379 = vadd.f32 %v987, %v1331
        %v1380 = vadd.f32 %v988, %v1332
        %v1381 = vadd.f32 %v989, %v1333
        %v1382 = vadd.f32 %v990, %v1334
        %v1383 = vadd.f32 %v991, %v1335
        %v1384 = vadd.f32 %v992, %v1336
        %v1385 = vadd.f32 %v993, %v1337
        %v1386 = vadd.f32 %v994, %v1338
        %v1387 = vadd.f32 %v995, %v1339
        %v1388 = vadd.f32 %v996, %v1340
        %v1389 = vadd.f32 %v997, %v1341
        %v1390 = vadd.f32 %v998, %v1342
        %v1391 = vadd.f32 %v999, %v1343
        %v1392 = vadd.f32 %v1000, %v1344
        %v1393 = vadd.f32 %v1001, %v1345
        %v1394 = vadd.f32 %v1002, %v1346
        %v1395 = vadd.f32 %v1003, %v1347
        %v1396 = vadd.f32 %v1004, %v1348
        %v1397 = vadd.f32 %v1005, %v1349
        %v1398 = vadd.f32 %v1006, %v1350
        %v1399 = vadd.f32 %v1007, %v1351
        %v1400 = vadd.f32 %v1008, %v1352
        %v1401 = vadd.f32 %v1009, %v1353
        %v1402 = vadd.f32 %v1010, %v1354
        %v1403 = vadd.f32 %v1011, %v1355
        %v1404 = vadd.f32 %v1012, %v1356
        %v1405 = vadd.f32 %v1013, %v1357
        %v1406 = vadd.f32 %v1014, %v1358
        %v1407 = vadd.f32 %v1015, %v1359
        %v1408 = vadd.f32 %v1016, %v1360
        %v1409 = vadd.f32 %v1017, %v1361
        %v1410 = vadd.f32 %v1018, %v1362
        %v1411 = vadd.f32 %v1019, %v1363
        %v1412 = vadd.f32 %v1020, %v1364
        %v1413 = vadd.f32 %v1021, %v1365
        %v1414 = vadd.f32 %v1022, %v1366
        %v1415 = vadd.f32 %v1023, %v1367
        %v1416 = vld [vmem:[#allocation2 + $0x2] sm:$0xff]
        %v1417 = vld [vmem:[#allocation2 + $0xa] sm:$0xff]
        %v1418 = vld [vmem:[#allocation2 + $0x12] sm:$0xff]
        %v1419 = vld [vmem:[#allocation2 + $0x1a] sm:$0xff]
        %v1420 = vld [vmem:[#allocation2 + $0x22] sm:$0xff]
        %v1421 = vld [vmem:[#allocation2 + $0x2a] sm:$0xff]
        %v1422 = vld [vmem:[#allocation2 + $0x32] sm:$0xff]
        %v1423 = vld [vmem:[#allocation2 + $0x3a] sm:$0xff]
        %v1424 = vld [vmem:[#allocation2 + $0x42] sm:$0xff]
        %v1425 = vld [vmem:[#allocation2 + $0x4a] sm:$0xff]
        %v1426 = vld [vmem:[#allocation2 + $0x52] sm:$0xff]
        %v1427 = vld [vmem:[#allocation2 + $0x5a] sm:$0xff]
        %v1428 = vld [vmem:[#allocation2 + $0x62] sm:$0xff]
        %v1429 = vld [vmem:[#allocation2 + $0x6a] sm:$0xff]
        %v1430 = vld [vmem:[#allocation2 + $0x72] sm:$0xff]
        %v1431 = vld [vmem:[#allocation2 + $0x7a] sm:$0xff]
        %v1432 = vld [vmem:[#allocation2 + $0x82] sm:$0xff]
        %v1433 = vld [vmem:[#allocation2 + $0x8a] sm:$0xff]
        %v1434 = vld [vmem:[#allocation2 + $0x92] sm:$0xff]
        %v1435 = vld [vmem:[#allocation2 + $0x9a] sm:$0xff]
        %v1436 = vld [vmem:[#allocation2 + $0xa2] sm:$0xff]
        %v1437 = vld [vmem:[#allocation2 + $0xaa] sm:$0xff]
        %v1438 = vld [vmem:[#allocation2 + $0xb2] sm:$0xff]
        %v1439 = vld [vmem:[#allocation2 + $0xba] sm:$0xff]
        %v1440 = vld [vmem:[#allocation2 + $0xc2] sm:$0xff]
        %v1441 = vld [vmem:[#allocation2 + $0xca] sm:$0xff]
        %v1442 = vld [vmem:[#allocation2 + $0xd2] sm:$0xff]
        %v1443 = vld [vmem:[#allocation2 + $0xda] sm:$0xff]
        %v1444 = vld [vmem:[#allocation2 + $0xe2] sm:$0xff]
        %v1445 = vld [vmem:[#allocation2 + $0xea] sm:$0xff]
        %v1446 = vld [vmem:[#allocation2 + $0xf2] sm:$0xff]
        %v1447 = vld [vmem:[#allocation2 + $0xfa] sm:$0xff]
        %v1448 = vld [vmem:[#allocation2 + $0x102] sm:$0xff]
        %v1449 = vld [vmem:[#allocation2 + $0x10a] sm:$0xff]
        %v1450 = vld [vmem:[#allocation2 + $0x112] sm:$0xff]
        %v1451 = vld [vmem:[#allocation2 + $0x11a] sm:$0xff]
        %v1452 = vld [vmem:[#allocation2 + $0x122] sm:$0xff]
        %v1453 = vld [vmem:[#allocation2 + $0x12a] sm:$0xff]
        %v1454 = vld [vmem:[#allocation2 + $0x132] sm:$0xff]
        %v1455 = vld [vmem:[#allocation2 + $0x13a] sm:$0xff]
        %v1456 = vld [vmem:[#allocation2 + $0x142] sm:$0xff]
        %v1457 = vld [vmem:[#allocation2 + $0x14a] sm:$0xff]
        %v1458 = vld [vmem:[#allocation2 + $0x152] sm:$0xff]
        %v1459 = vld [vmem:[#allocation2 + $0x15a] sm:$0xff]
        %v1460 = vld [vmem:[#allocation2 + $0x162] sm:$0xff]
        %v1461 = vld [vmem:[#allocation2 + $0x16a] sm:$0xff]
        %v1462 = vld [vmem:[#allocation2 + $0x172] sm:$0xff]
        %v1463 = vld [vmem:[#allocation2 + $0x17a] sm:$0xff]
        %s1464 = scalar_lea.vmem %s1, 2
        %v1465 = vld [vmem:[%s1464] sm:$0x1]
        %1467 = vset.pattern.permute.xlu0 0
        %1468 = vperm.xlu0 %1467, %v1416
        %v1469 = vpop.permute.xlu0 %1468
        %1472 = vset.pattern.permute.xlu0 0
        %1473 = vperm.xlu0 %1472, %v1417
        %v1474 = vpop.permute.xlu0 %1473
        %1477 = vset.pattern.permute.xlu0 0
        %1478 = vperm.xlu0 %1477, %v1418
        %v1479 = vpop.permute.xlu0 %1478
        %1482 = vset.pattern.permute.xlu0 0
        %1483 = vperm.xlu0 %1482, %v1419
        %v1484 = vpop.permute.xlu0 %1483
        %1487 = vset.pattern.permute.xlu0 0
        %1488 = vperm.xlu0 %1487, %v1420
        %v1489 = vpop.permute.xlu0 %1488
        %1492 = vset.pattern.permute.xlu0 0
        %1493 = vperm.xlu0 %1492, %v1421
        %v1494 = vpop.permute.xlu0 %1493
        %1497 = vset.pattern.permute.xlu0 0
        %1498 = vperm.xlu0 %1497, %v1422
        %v1499 = vpop.permute.xlu0 %1498
        %1502 = vset.pattern.permute.xlu0 0
        %1503 = vperm.xlu0 %1502, %v1423
        %v1504 = vpop.permute.xlu0 %1503
        %1507 = vset.pattern.permute.xlu0 0
        %1508 = vperm.xlu0 %1507, %v1424
        %v1509 = vpop.permute.xlu0 %1508
        %1512 = vset.pattern.permute.xlu0 0
        %1513 = vperm.xlu0 %1512, %v1425
        %v1514 = vpop.permute.xlu0 %1513
        %1517 = vset.pattern.permute.xlu0 0
        %1518 = vperm.xlu0 %1517, %v1426
        %v1519 = vpop.permute.xlu0 %1518
        %1522 = vset.pattern.permute.xlu0 0
        %1523 = vperm.xlu0 %1522, %v1427
        %v1524 = vpop.permute.xlu0 %1523
        %1527 = vset.pattern.permute.xlu0 0
        %1528 = vperm.xlu0 %1527, %v1428
        %v1529 = vpop.permute.xlu0 %1528
        %1532 = vset.pattern.permute.xlu0 0
        %1533 = vperm.xlu0 %1532, %v1429
        %v1534 = vpop.permute.xlu0 %1533
        %1537 = vset.pattern.permute.xlu0 0
        %1538 = vperm.xlu0 %1537, %v1430
        %v1539 = vpop.permute.xlu0 %1538
        %1542 = vset.pattern.permute.xlu0 0
        %1543 = vperm.xlu0 %1542, %v1431
        %v1544 = vpop.permute.xlu0 %1543
        %1547 = vset.pattern.permute.xlu0 0
        %1548 = vperm.xlu0 %1547, %v1432
        %v1549 = vpop.permute.xlu0 %1548
        %1552 = vset.pattern.permute.xlu0 0
        %1553 = vperm.xlu0 %1552, %v1433
        %v1554 = vpop.permute.xlu0 %1553
        %1557 = vset.pattern.permute.xlu0 0
        %1558 = vperm.xlu0 %1557, %v1434
        %v1559 = vpop.permute.xlu0 %1558
        %1562 = vset.pattern.permute.xlu0 0
        %1563 = vperm.xlu0 %1562, %v1435
        %v1564 = vpop.permute.xlu0 %1563
        %1567 = vset.pattern.permute.xlu0 0
        %1568 = vperm.xlu0 %1567, %v1436
        %v1569 = vpop.permute.xlu0 %1568
        %1572 = vset.pattern.permute.xlu0 0
        %1573 = vperm.xlu0 %1572, %v1437
        %v1574 = vpop.permute.xlu0 %1573
        %1577 = vset.pattern.permute.xlu0 0
        %1578 = vperm.xlu0 %1577, %v1438
        %v1579 = vpop.permute.xlu0 %1578
        %1582 = vset.pattern.permute.xlu0 0
        %1583 = vperm.xlu0 %1582, %v1439
        %v1584 = vpop.permute.xlu0 %1583
        %1587 = vset.pattern.permute.xlu0 0
        %1588 = vperm.xlu0 %1587, %v1440
        %v1589 = vpop.permute.xlu0 %1588
        %1592 = vset.pattern.permute.xlu0 0
        %1593 = vperm.xlu0 %1592, %v1441
        %v1594 = vpop.permute.xlu0 %1593
        %1597 = vset.pattern.permute.xlu0 0
        %1598 = vperm.xlu0 %1597, %v1442
        %v1599 = vpop.permute.xlu0 %1598
        %1602 = vset.pattern.permute.xlu0 0
        %1603 = vperm.xlu0 %1602, %v1443
        %v1604 = vpop.permute.xlu0 %1603
        %1607 = vset.pattern.permute.xlu0 0
        %1608 = vperm.xlu0 %1607, %v1444
        %v1609 = vpop.permute.xlu0 %1608
        %1612 = vset.pattern.permute.xlu0 0
        %1613 = vperm.xlu0 %1612, %v1445
        %v1614 = vpop.permute.xlu0 %1613
        %1617 = vset.pattern.permute.xlu0 0
        %1618 = vperm.xlu0 %1617, %v1446
        %v1619 = vpop.permute.xlu0 %1618
        %1622 = vset.pattern.permute.xlu0 0
        %1623 = vperm.xlu0 %1622, %v1447
        %v1624 = vpop.permute.xlu0 %1623
        %1627 = vset.pattern.permute.xlu0 0
        %1628 = vperm.xlu0 %1627, %v1448
        %v1629 = vpop.permute.xlu0 %1628
        %1632 = vset.pattern.permute.xlu0 0
        %1633 = vperm.xlu0 %1632, %v1449
        %v1634 = vpop.permute.xlu0 %1633
        %1637 = vset.pattern.permute.xlu0 0
        %1638 = vperm.xlu0 %1637, %v1450
        %v1639 = vpop.permute.xlu0 %1638
        %1642 = vset.pattern.permute.xlu0 0
        %1643 = vperm.xlu0 %1642, %v1451
        %v1644 = vpop.permute.xlu0 %1643
        %1647 = vset.pattern.permute.xlu0 0
        %1648 = vperm.xlu0 %1647, %v1452
        %v1649 = vpop.permute.xlu0 %1648
        %1652 = vset.pattern.permute.xlu0 0
        %1653 = vperm.xlu0 %1652, %v1453
        %v1654 = vpop.permute.xlu0 %1653
        %1657 = vset.pattern.permute.xlu0 0
        %1658 = vperm.xlu0 %1657, %v1454
        %v1659 = vpop.permute.xlu0 %1658
        %1662 = vset.pattern.permute.xlu0 0
        %1663 = vperm.xlu0 %1662, %v1455
        %v1664 = vpop.permute.xlu0 %1663
        %1667 = vset.pattern.permute.xlu0 0
        %1668 = vperm.xlu0 %1667, %v1456
        %v1669 = vpop.permute.xlu0 %1668
        %1672 = vset.pattern.permute.xlu0 0
        %1673 = vperm.xlu0 %1672, %v1457
        %v1674 = vpop.permute.xlu0 %1673
        %1677 = vset.pattern.permute.xlu0 0
        %1678 = vperm.xlu0 %1677, %v1458
        %v1679 = vpop.permute.xlu0 %1678
        %1682 = vset.pattern.permute.xlu0 0
        %1683 = vperm.xlu0 %1682, %v1459
        %v1684 = vpop.permute.xlu0 %1683
        %1687 = vset.pattern.permute.xlu0 0
        %1688 = vperm.xlu0 %1687, %v1460
        %v1689 = vpop.permute.xlu0 %1688
        %1692 = vset.pattern.permute.xlu0 0
        %1693 = vperm.xlu0 %1692, %v1461
        %v1694 = vpop.permute.xlu0 %1693
        %1697 = vset.pattern.permute.xlu0 0
        %1698 = vperm.xlu0 %1697, %v1462
        %v1699 = vpop.permute.xlu0 %1698
        %1702 = vset.pattern.permute.xlu0 0
        %1703 = vperm.xlu0 %1702, %v1463
        %v1704 = vpop.permute.xlu0 %1703
        %v1707 = vlaneseq
        %v1708 = vshrl.u32 %v1707, 7
        %v1709 = vsub.s32 0, %v1708
        %v1710 = vrot.slane %v1465, %v1709
        %v1712 = vmul.f32 %v1469, %v1710
        %v1713 = vmul.f32 %v1474, %v1710
        %v1714 = vmul.f32 %v1479, %v1710
        %v1715 = vmul.f32 %v1484, %v1710
        %v1716 = vmul.f32 %v1489, %v1710
        %v1717 = vmul.f32 %v1494, %v1710
        %v1718 = vmul.f32 %v1499, %v1710
        %v1719 = vmul.f32 %v1504, %v1710
        %v1720 = vmul.f32 %v1509, %v1710
        %v1721 = vmul.f32 %v1514, %v1710
        %v1722 = vmul.f32 %v1519, %v1710
        %v1723 = vmul.f32 %v1524, %v1710
        %v1724 = vmul.f32 %v1529, %v1710
        %v1725 = vmul.f32 %v1534, %v1710
        %v1726 = vmul.f32 %v1539, %v1710
        %v1727 = vmul.f32 %v1544, %v1710
        %v1728 = vmul.f32 %v1549, %v1710
        %v1729 = vmul.f32 %v1554, %v1710
        %v1730 = vmul.f32 %v1559, %v1710
        %v1731 = vmul.f32 %v1564, %v1710
        %v1732 = vmul.f32 %v1569, %v1710
        %v1733 = vmul.f32 %v1574, %v1710
        %v1734 = vmul.f32 %v1579, %v1710
        %v1735 = vmul.f32 %v1584, %v1710
        %v1736 = vmul.f32 %v1589, %v1710
        %v1737 = vmul.f32 %v1594, %v1710
        %v1738 = vmul.f32 %v1599, %v1710
        %v1739 = vmul.f32 %v1604, %v1710
        %v1740 = vmul.f32 %v1609, %v1710
        %v1741 = vmul.f32 %v1614, %v1710
        %v1742 = vmul.f32 %v1619, %v1710
        %v1743 = vmul.f32 %v1624, %v1710
        %v1744 = vmul.f32 %v1629, %v1710
        %v1745 = vmul.f32 %v1634, %v1710
        %v1746 = vmul.f32 %v1639, %v1710
        %v1747 = vmul.f32 %v1644, %v1710
        %v1748 = vmul.f32 %v1649, %v1710
        %v1749 = vmul.f32 %v1654, %v1710
        %v1750 = vmul.f32 %v1659, %v1710
        %v1751 = vmul.f32 %v1664, %v1710
        %v1752 = vmul.f32 %v1669, %v1710
        %v1753 = vmul.f32 %v1674, %v1710
        %v1754 = vmul.f32 %v1679, %v1710
        %v1755 = vmul.f32 %v1684, %v1710
        %v1756 = vmul.f32 %v1689, %v1710
        %v1757 = vmul.f32 %v1694, %v1710
        %v1758 = vmul.f32 %v1699, %v1710
        %v1759 = vmul.f32 %v1704, %v1710
        %v1760 = vadd.f32 %v1368, %v1712
        %v1761 = vadd.f32 %v1369, %v1713
        %v1762 = vadd.f32 %v1370, %v1714
        %v1763 = vadd.f32 %v1371, %v1715
        %v1764 = vadd.f32 %v1372, %v1716
        %v1765 = vadd.f32 %v1373, %v1717
        %v1766 = vadd.f32 %v1374, %v1718
        %v1767 = vadd.f32 %v1375, %v1719
        %v1768 = vadd.f32 %v1376, %v1720
        %v1769 = vadd.f32 %v1377, %v1721
        %v1770 = vadd.f32 %v1378, %v1722
        %v1771 = vadd.f32 %v1379, %v1723
        %v1772 = vadd.f32 %v1380, %v1724
        %v1773 = vadd.f32 %v1381, %v1725
        %v1774 = vadd.f32 %v1382, %v1726
        %v1775 = vadd.f32 %v1383, %v1727
        %v1776 = vadd.f32 %v1384, %v1728
        %v1777 = vadd.f32 %v1385, %v1729
        %v1778 = vadd.f32 %v1386, %v1730
        %v1779 = vadd.f32 %v1387, %v1731
        %v1780 = vadd.f32 %v1388, %v1732
        %v1781 = vadd.f32 %v1389, %v1733
        %v1782 = vadd.f32 %v1390, %v1734
        %v1783 = vadd.f32 %v1391, %v1735
        %v1784 = vadd.f32 %v1392, %v1736
        %v1785 = vadd.f32 %v1393, %v1737
        %v1786 = vadd.f32 %v1394, %v1738
        %v1787 = vadd.f32 %v1395, %v1739
        %v1788 = vadd.f32 %v1396, %v1740
        %v1789 = vadd.f32 %v1397, %v1741
        %v1790 = vadd.f32 %v1398, %v1742
        %v1791 = vadd.f32 %v1399, %v1743
        %v1792 = vadd.f32 %v1400, %v1744
        %v1793 = vadd.f32 %v1401, %v1745
        %v1794 = vadd.f32 %v1402, %v1746
        %v1795 = vadd.f32 %v1403, %v1747
        %v1796 = vadd.f32 %v1404, %v1748
        %v1797 = vadd.f32 %v1405, %v1749
        %v1798 = vadd.f32 %v1406, %v1750
        %v1799 = vadd.f32 %v1407, %v1751
        %v1800 = vadd.f32 %v1408, %v1752
        %v1801 = vadd.f32 %v1409, %v1753
        %v1802 = vadd.f32 %v1410, %v1754
        %v1803 = vadd.f32 %v1411, %v1755
        %v1804 = vadd.f32 %v1412, %v1756
        %v1805 = vadd.f32 %v1413, %v1757
        %v1806 = vadd.f32 %v1414, %v1758
        %v1807 = vadd.f32 %v1415, %v1759
        %v1808 = vld [vmem:[#allocation2 + $0x18] sm:$0xff]
        %v1809 = vld [vmem:[#allocation2 + $0x20] sm:$0xff]
        %v1810 = vld [vmem:[#allocation2 + $0x28] sm:$0xff]
        %v1811 = vld [vmem:[#allocation2 + $0x30] sm:$0xff]
        %v1812 = vld [vmem:[#allocation2 + $0x38] sm:$0xff]
        %v1813 = vld [vmem:[#allocation2 + $0x40] sm:$0xff]
        %v1814 = vld [vmem:[#allocation2 + $0x48] sm:$0xff]
        %v1815 = vld [vmem:[#allocation2 + $0x50] sm:$0xff]
        %v1816 = vld [vmem:[#allocation2 + $0x58] sm:$0xff]
        %v1817 = vld [vmem:[#allocation2 + $0x60] sm:$0xff]
        %v1818 = vld [vmem:[#allocation2 + $0x68] sm:$0xff]
        %v1819 = vld [vmem:[#allocation2 + $0x70] sm:$0xff]
        %v1820 = vld [vmem:[#allocation2 + $0x78] sm:$0xff]
        %v1821 = vld [vmem:[#allocation2 + $0x80] sm:$0xff]
        %v1822 = vld [vmem:[#allocation2 + $0x88] sm:$0xff]
        %v1823 = vld [vmem:[#allocation2 + $0x90] sm:$0xff]
        %v1824 = vld [vmem:[#allocation2 + $0x98] sm:$0xff]
        %v1825 = vld [vmem:[#allocation2 + $0xa0] sm:$0xff]
        %v1826 = vld [vmem:[#allocation2 + $0xa8] sm:$0xff]
        %v1827 = vld [vmem:[#allocation2 + $0xb0] sm:$0xff]
        %v1828 = vld [vmem:[#allocation2 + $0xb8] sm:$0xff]
        %v1829 = vld [vmem:[#allocation2 + $0xc0] sm:$0xff]
        %v1830 = vld [vmem:[#allocation2 + $0xc8] sm:$0xff]
        %v1831 = vld [vmem:[#allocation2 + $0xd0] sm:$0xff]
        %v1832 = vld [vmem:[#allocation2 + $0xd8] sm:$0xff]
        %v1833 = vld [vmem:[#allocation2 + $0xe0] sm:$0xff]
        %v1834 = vld [vmem:[#allocation2 + $0xe8] sm:$0xff]
        %v1835 = vld [vmem:[#allocation2 + $0xf0] sm:$0xff]
        %v1836 = vld [vmem:[#allocation2 + $0xf8] sm:$0xff]
        %v1837 = vld [vmem:[#allocation2 + $0x100] sm:$0xff]
        %v1838 = vld [vmem:[#allocation2 + $0x108] sm:$0xff]
        %v1839 = vld [vmem:[#allocation2 + $0x110] sm:$0xff]
        %v1840 = vld [vmem:[#allocation2 + $0x118] sm:$0xff]
        %v1841 = vld [vmem:[#allocation2 + $0x120] sm:$0xff]
        %v1842 = vld [vmem:[#allocation2 + $0x128] sm:$0xff]
        %v1843 = vld [vmem:[#allocation2 + $0x130] sm:$0xff]
        %v1844 = vld [vmem:[#allocation2 + $0x138] sm:$0xff]
        %v1845 = vld [vmem:[#allocation2 + $0x140] sm:$0xff]
        %v1846 = vld [vmem:[#allocation2 + $0x148] sm:$0xff]
        %v1847 = vld [vmem:[#allocation2 + $0x150] sm:$0xff]
        %v1848 = vld [vmem:[#allocation2 + $0x158] sm:$0xff]
        %v1849 = vld [vmem:[#allocation2 + $0x160] sm:$0xff]
        %v1850 = vld [vmem:[#allocation2 + $0x168] sm:$0xff]
        %v1851 = vld [vmem:[#allocation2 + $0x170] sm:$0xff]
        %v1852 = vld [vmem:[#allocation2 + $0x178] sm:$0xff]
        %v1853 = vld [vmem:[#allocation2 + $0x180] sm:$0xff]
        %v1854 = vld [vmem:[#allocation2 + $0x188] sm:$0xff]
        %v1855 = vld [vmem:[#allocation2 + $0x190] sm:$0xff]
        %s1856 = scalar_lea.vmem %s1, 3
        %v1857 = vld [vmem:[%s1856] sm:$0x1]
        %1859 = vset.pattern.permute.xlu0 0
        %1860 = vperm.xlu0 %1859, %v1808
        %v1861 = vpop.permute.xlu0 %1860
        %1864 = vset.pattern.permute.xlu0 0
        %1865 = vperm.xlu0 %1864, %v1809
        %v1866 = vpop.permute.xlu0 %1865
        %1869 = vset.pattern.permute.xlu0 0
        %1870 = vperm.xlu0 %1869, %v1810
        %v1871 = vpop.permute.xlu0 %1870
        %1874 = vset.pattern.permute.xlu0 0
        %1875 = vperm.xlu0 %1874, %v1811
        %v1876 = vpop.permute.xlu0 %1875
        %1879 = vset.pattern.permute.xlu0 0
        %1880 = vperm.xlu0 %1879, %v1812
        %v1881 = vpop.permute.xlu0 %1880
        %1884 = vset.pattern.permute.xlu0 0
        %1885 = vperm.xlu0 %1884, %v1813
        %v1886 = vpop.permute.xlu0 %1885
        %1889 = vset.pattern.permute.xlu0 0
        %1890 = vperm.xlu0 %1889, %v1814
        %v1891 = vpop.permute.xlu0 %1890
        %1894 = vset.pattern.permute.xlu0 0
        %1895 = vperm.xlu0 %1894, %v1815
        %v1896 = vpop.permute.xlu0 %1895
        %1899 = vset.pattern.permute.xlu0 0
        %1900 = vperm.xlu0 %1899, %v1816
        %v1901 = vpop.permute.xlu0 %1900
        %1904 = vset.pattern.permute.xlu0 0
        %1905 = vperm.xlu0 %1904, %v1817
        %v1906 = vpop.permute.xlu0 %1905
        %1909 = vset.pattern.permute.xlu0 0
        %1910 = vperm.xlu0 %1909, %v1818
        %v1911 = vpop.permute.xlu0 %1910
        %1914 = vset.pattern.permute.xlu0 0
        %1915 = vperm.xlu0 %1914, %v1819
        %v1916 = vpop.permute.xlu0 %1915
        %1919 = vset.pattern.permute.xlu0 0
        %1920 = vperm.xlu0 %1919, %v1820
        %v1921 = vpop.permute.xlu0 %1920
        %1924 = vset.pattern.permute.xlu0 0
        %1925 = vperm.xlu0 %1924, %v1821
        %v1926 = vpop.permute.xlu0 %1925
        %1929 = vset.pattern.permute.xlu0 0
        %1930 = vperm.xlu0 %1929, %v1822
        %v1931 = vpop.permute.xlu0 %1930
        %1934 = vset.pattern.permute.xlu0 0
        %1935 = vperm.xlu0 %1934, %v1823
        %v1936 = vpop.permute.xlu0 %1935
        %1939 = vset.pattern.permute.xlu0 0
        %1940 = vperm.xlu0 %1939, %v1824
        %v1941 = vpop.permute.xlu0 %1940
        %1944 = vset.pattern.permute.xlu0 0
        %1945 = vperm.xlu0 %1944, %v1825
        %v1946 = vpop.permute.xlu0 %1945
        %1949 = vset.pattern.permute.xlu0 0
        %1950 = vperm.xlu0 %1949, %v1826
        %v1951 = vpop.permute.xlu0 %1950
        %1954 = vset.pattern.permute.xlu0 0
        %1955 = vperm.xlu0 %1954, %v1827
        %v1956 = vpop.permute.xlu0 %1955
        %1959 = vset.pattern.permute.xlu0 0
        %1960 = vperm.xlu0 %1959, %v1828
        %v1961 = vpop.permute.xlu0 %1960
        %1964 = vset.pattern.permute.xlu0 0
        %1965 = vperm.xlu0 %1964, %v1829
        %v1966 = vpop.permute.xlu0 %1965
        %1969 = vset.pattern.permute.xlu0 0
        %1970 = vperm.xlu0 %1969, %v1830
        %v1971 = vpop.permute.xlu0 %1970
        %1974 = vset.pattern.permute.xlu0 0
        %1975 = vperm.xlu0 %1974, %v1831
        %v1976 = vpop.permute.xlu0 %1975
        %1979 = vset.pattern.permute.xlu0 0
        %1980 = vperm.xlu0 %1979, %v1832
        %v1981 = vpop.permute.xlu0 %1980
        %1984 = vset.pattern.permute.xlu0 0
        %1985 = vperm.xlu0 %1984, %v1833
        %v1986 = vpop.permute.xlu0 %1985
        %1989 = vset.pattern.permute.xlu0 0
        %1990 = vperm.xlu0 %1989, %v1834
        %v1991 = vpop.permute.xlu0 %1990
        %1994 = vset.pattern.permute.xlu0 0
        %1995 = vperm.xlu0 %1994, %v1835
        %v1996 = vpop.permute.xlu0 %1995
        %1999 = vset.pattern.permute.xlu0 0
        %2000 = vperm.xlu0 %1999, %v1836
        %v2001 = vpop.permute.xlu0 %2000
        %2004 = vset.pattern.permute.xlu0 0
        %2005 = vperm.xlu0 %2004, %v1837
        %v2006 = vpop.permute.xlu0 %2005
        %2009 = vset.pattern.permute.xlu0 0
        %2010 = vperm.xlu0 %2009, %v1838
        %v2011 = vpop.permute.xlu0 %2010
        %2014 = vset.pattern.permute.xlu0 0
        %2015 = vperm.xlu0 %2014, %v1839
        %v2016 = vpop.permute.xlu0 %2015
        %2019 = vset.pattern.permute.xlu0 0
        %2020 = vperm.xlu0 %2019, %v1840
        %v2021 = vpop.permute.xlu0 %2020
        %2024 = vset.pattern.permute.xlu0 0
        %2025 = vperm.xlu0 %2024, %v1841
        %v2026 = vpop.permute.xlu0 %2025
        %2029 = vset.pattern.permute.xlu0 0
        %2030 = vperm.xlu0 %2029, %v1842
        %v2031 = vpop.permute.xlu0 %2030
        %2034 = vset.pattern.permute.xlu0 0
        %2035 = vperm.xlu0 %2034, %v1843
        %v2036 = vpop.permute.xlu0 %2035
        %2039 = vset.pattern.permute.xlu0 0
        %2040 = vperm.xlu0 %2039, %v1844
        %v2041 = vpop.permute.xlu0 %2040
        %2044 = vset.pattern.permute.xlu0 0
        %2045 = vperm.xlu0 %2044, %v1845
        %v2046 = vpop.permute.xlu0 %2045
        %2049 = vset.pattern.permute.xlu0 0
        %2050 = vperm.xlu0 %2049, %v1846
        %v2051 = vpop.permute.xlu0 %2050
        %2054 = vset.pattern.permute.xlu0 0
        %2055 = vperm.xlu0 %2054, %v1847
        %v2056 = vpop.permute.xlu0 %2055
        %2059 = vset.pattern.permute.xlu0 0
        %2060 = vperm.xlu0 %2059, %v1848
        %v2061 = vpop.permute.xlu0 %2060
        %2064 = vset.pattern.permute.xlu0 0
        %2065 = vperm.xlu0 %2064, %v1849
        %v2066 = vpop.permute.xlu0 %2065
        %2069 = vset.pattern.permute.xlu0 0
        %2070 = vperm.xlu0 %2069, %v1850
        %v2071 = vpop.permute.xlu0 %2070
        %2074 = vset.pattern.permute.xlu0 0
        %2075 = vperm.xlu0 %2074, %v1851
        %v2076 = vpop.permute.xlu0 %2075
        %2079 = vset.pattern.permute.xlu0 0
        %2080 = vperm.xlu0 %2079, %v1852
        %v2081 = vpop.permute.xlu0 %2080
        %2084 = vset.pattern.permute.xlu0 0
        %2085 = vperm.xlu0 %2084, %v1853
        %v2086 = vpop.permute.xlu0 %2085
        %2089 = vset.pattern.permute.xlu0 0
        %2090 = vperm.xlu0 %2089, %v1854
        %v2091 = vpop.permute.xlu0 %2090
        %2094 = vset.pattern.permute.xlu0 0
        %2095 = vperm.xlu0 %2094, %v1855
        %v2096 = vpop.permute.xlu0 %2095
        %v2099 = vlaneseq
        %v2100 = vshrl.u32 %v2099, 7
        %v2101 = vsub.s32 0, %v2100
        %v2102 = vrot.slane %v1857, %v2101
        %v2104 = vmul.f32 %v1861, %v2102
        %v2105 = vmul.f32 %v1866, %v2102
        %v2106 = vmul.f32 %v1871, %v2102
        %v2107 = vmul.f32 %v1876, %v2102
        %v2108 = vmul.f32 %v1881, %v2102
        %v2109 = vmul.f32 %v1886, %v2102
        %v2110 = vmul.f32 %v1891, %v2102
        %v2111 = vmul.f32 %v1896, %v2102
        %v2112 = vmul.f32 %v1901, %v2102
        %v2113 = vmul.f32 %v1906, %v2102
        %v2114 = vmul.f32 %v1911, %v2102
        %v2115 = vmul.f32 %v1916, %v2102
        %v2116 = vmul.f32 %v1921, %v2102
        %v2117 = vmul.f32 %v1926, %v2102
        %v2118 = vmul.f32 %v1931, %v2102
        %v2119 = vmul.f32 %v1936, %v2102
        %v2120 = vmul.f32 %v1941, %v2102
        %v2121 = vmul.f32 %v1946, %v2102
        %v2122 = vmul.f32 %v1951, %v2102
        %v2123 = vmul.f32 %v1956, %v2102
        %v2124 = vmul.f32 %v1961, %v2102
        %v2125 = vmul.f32 %v1966, %v2102
        %v2126 = vmul.f32 %v1971, %v2102
        %v2127 = vmul.f32 %v1976, %v2102
        %v2128 = vmul.f32 %v1981, %v2102
        %v2129 = vmul.f32 %v1986, %v2102
        %v2130 = vmul.f32 %v1991, %v2102
        %v2131 = vmul.f32 %v1996, %v2102
        %v2132 = vmul.f32 %v2001, %v2102
        %v2133 = vmul.f32 %v2006, %v2102
        %v2134 = vmul.f32 %v2011, %v2102
        %v2135 = vmul.f32 %v2016, %v2102
        %v2136 = vmul.f32 %v2021, %v2102
        %v2137 = vmul.f32 %v2026, %v2102
        %v2138 = vmul.f32 %v2031, %v2102
        %v2139 = vmul.f32 %v2036, %v2102
        %v2140 = vmul.f32 %v2041, %v2102
        %v2141 = vmul.f32 %v2046, %v2102
        %v2142 = vmul.f32 %v2051, %v2102
        %v2143 = vmul.f32 %v2056, %v2102
        %v2144 = vmul.f32 %v2061, %v2102
        %v2145 = vmul.f32 %v2066, %v2102
        %v2146 = vmul.f32 %v2071, %v2102
        %v2147 = vmul.f32 %v2076, %v2102
        %v2148 = vmul.f32 %v2081, %v2102
        %v2149 = vmul.f32 %v2086, %v2102
        %v2150 = vmul.f32 %v2091, %v2102
        %v2151 = vmul.f32 %v2096, %v2102
        %v2152 = vadd.f32 %v1760, %v2104
        %v2153 = vadd.f32 %v1761, %v2105
        %v2154 = vadd.f32 %v1762, %v2106
        %v2155 = vadd.f32 %v1763, %v2107
        %v2156 = vadd.f32 %v1764, %v2108
        %v2157 = vadd.f32 %v1765, %v2109
        %v2158 = vadd.f32 %v1766, %v2110
        %v2159 = vadd.f32 %v1767, %v2111
        %v2160 = vadd.f32 %v1768, %v2112
        %v2161 = vadd.f32 %v1769, %v2113
        %v2162 = vadd.f32 %v1770, %v2114
        %v2163 = vadd.f32 %v1771, %v2115
        %v2164 = vadd.f32 %v1772, %v2116
        %v2165 = vadd.f32 %v1773, %v2117
        %v2166 = vadd.f32 %v1774, %v2118
        %v2167 = vadd.f32 %v1775, %v2119
        %v2168 = vadd.f32 %v1776, %v2120
        %v2169 = vadd.f32 %v1777, %v2121
        %v2170 = vadd.f32 %v1778, %v2122
        %v2171 = vadd.f32 %v1779, %v2123
        %v2172 = vadd.f32 %v1780, %v2124
        %v2173 = vadd.f32 %v1781, %v2125
        %v2174 = vadd.f32 %v1782, %v2126
        %v2175 = vadd.f32 %v1783, %v2127
        %v2176 = vadd.f32 %v1784, %v2128
        %v2177 = vadd.f32 %v1785, %v2129
        %v2178 = vadd.f32 %v1786, %v2130
        %v2179 = vadd.f32 %v1787, %v2131
        %v2180 = vadd.f32 %v1788, %v2132
        %v2181 = vadd.f32 %v1789, %v2133
        %v2182 = vadd.f32 %v1790, %v2134
        %v2183 = vadd.f32 %v1791, %v2135
        %v2184 = vadd.f32 %v1792, %v2136
        %v2185 = vadd.f32 %v1793, %v2137
        %v2186 = vadd.f32 %v1794, %v2138
        %v2187 = vadd.f32 %v1795, %v2139
        %v2188 = vadd.f32 %v1796, %v2140
        %v2189 = vadd.f32 %v1797, %v2141
        %v2190 = vadd.f32 %v1798, %v2142
        %v2191 = vadd.f32 %v1799, %v2143
        %v2192 = vadd.f32 %v1800, %v2144
        %v2193 = vadd.f32 %v1801, %v2145
        %v2194 = vadd.f32 %v1802, %v2146
        %v2195 = vadd.f32 %v1803, %v2147
        %v2196 = vadd.f32 %v1804, %v2148
        %v2197 = vadd.f32 %v1805, %v2149
        %v2198 = vadd.f32 %v1806, %v2150
        %v2199 = vadd.f32 %v1807, %v2151
        %v2200 = vld [vmem:[#allocation2 + $0x19] sm:$0xff]
        %v2201 = vld [vmem:[#allocation2 + $0x21] sm:$0xff]
        %v2202 = vld [vmem:[#allocation2 + $0x29] sm:$0xff]
        %v2203 = vld [vmem:[#allocation2 + $0x31] sm:$0xff]
        %v2204 = vld [vmem:[#allocation2 + $0x39] sm:$0xff]
        %v2205 = vld [vmem:[#allocation2 + $0x41] sm:$0xff]
        %v2206 = vld [vmem:[#allocation2 + $0x49] sm:$0xff]
        %v2207 = vld [vmem:[#allocation2 + $0x51] sm:$0xff]
        %v2208 = vld [vmem:[#allocation2 + $0x59] sm:$0xff]
        %v2209 = vld [vmem:[#allocation2 + $0x61] sm:$0xff]
        %v2210 = vld [vmem:[#allocation2 + $0x69] sm:$0xff]
        %v2211 = vld [vmem:[#allocation2 + $0x71] sm:$0xff]
        %v2212 = vld [vmem:[#allocation2 + $0x79] sm:$0xff]
        %v2213 = vld [vmem:[#allocation2 + $0x81] sm:$0xff]
        %v2214 = vld [vmem:[#allocation2 + $0x89] sm:$0xff]
        %v2215 = vld [vmem:[#allocation2 + $0x91] sm:$0xff]
        %v2216 = vld [vmem:[#allocation2 + $0x99] sm:$0xff]
        %v2217 = vld [vmem:[#allocation2 + $0xa1] sm:$0xff]
        %v2218 = vld [vmem:[#allocation2 + $0xa9] sm:$0xff]
        %v2219 = vld [vmem:[#allocation2 + $0xb1] sm:$0xff]
        %v2220 = vld [vmem:[#allocation2 + $0xb9] sm:$0xff]
        %v2221 = vld [vmem:[#allocation2 + $0xc1] sm:$0xff]
        %v2222 = vld [vmem:[#allocation2 + $0xc9] sm:$0xff]
        %v2223 = vld [vmem:[#allocation2 + $0xd1] sm:$0xff]
        %v2224 = vld [vmem:[#allocation2 + $0xd9] sm:$0xff]
        %v2225 = vld [vmem:[#allocation2 + $0xe1] sm:$0xff]
        %v2226 = vld [vmem:[#allocation2 + $0xe9] sm:$0xff]
        %v2227 = vld [vmem:[#allocation2 + $0xf1] sm:$0xff]
        %v2228 = vld [vmem:[#allocation2 + $0xf9] sm:$0xff]
        %v2229 = vld [vmem:[#allocation2 + $0x101] sm:$0xff]
        %v2230 = vld [vmem:[#allocation2 + $0x109] sm:$0xff]
        %v2231 = vld [vmem:[#allocation2 + $0x111] sm:$0xff]
        %v2232 = vld [vmem:[#allocation2 + $0x119] sm:$0xff]
        %v2233 = vld [vmem:[#allocation2 + $0x121] sm:$0xff]
        %v2234 = vld [vmem:[#allocation2 + $0x129] sm:$0xff]
        %v2235 = vld [vmem:[#allocation2 + $0x131] sm:$0xff]
        %v2236 = vld [vmem:[#allocation2 + $0x139] sm:$0xff]
        %v2237 = vld [vmem:[#allocation2 + $0x141] sm:$0xff]
        %v2238 = vld [vmem:[#allocation2 + $0x149] sm:$0xff]
        %v2239 = vld [vmem:[#allocation2 + $0x151] sm:$0xff]
        %v2240 = vld [vmem:[#allocation2 + $0x159] sm:$0xff]
        %v2241 = vld [vmem:[#allocation2 + $0x161] sm:$0xff]
        %v2242 = vld [vmem:[#allocation2 + $0x169] sm:$0xff]
        %v2243 = vld [vmem:[#allocation2 + $0x171] sm:$0xff]
        %v2244 = vld [vmem:[#allocation2 + $0x179] sm:$0xff]
        %v2245 = vld [vmem:[#allocation2 + $0x181] sm:$0xff]
        %v2246 = vld [vmem:[#allocation2 + $0x189] sm:$0xff]
        %v2247 = vld [vmem:[#allocation2 + $0x191] sm:$0xff]
        %s2248 = scalar_lea.vmem %s1, 4
        %v2249 = vld [vmem:[%s2248] sm:$0x1]
        %2251 = vset.pattern.permute.xlu0 0
        %2252 = vperm.xlu0 %2251, %v2200
        %v2253 = vpop.permute.xlu0 %2252
        %2256 = vset.pattern.permute.xlu0 0
        %2257 = vperm.xlu0 %2256, %v2201
        %v2258 = vpop.permute.xlu0 %2257
        %2261 = vset.pattern.permute.xlu0 0
        %2262 = vperm.xlu0 %2261, %v2202
        %v2263 = vpop.permute.xlu0 %2262
        %2266 = vset.pattern.permute.xlu0 0
        %2267 = vperm.xlu0 %2266, %v2203
        %v2268 = vpop.permute.xlu0 %2267
        %2271 = vset.pattern.permute.xlu0 0
        %2272 = vperm.xlu0 %2271, %v2204
        %v2273 = vpop.permute.xlu0 %2272
        %2276 = vset.pattern.permute.xlu0 0
        %2277 = vperm.xlu0 %2276, %v2205
        %v2278 = vpop.permute.xlu0 %2277
        %2281 = vset.pattern.permute.xlu0 0
        %2282 = vperm.xlu0 %2281, %v2206
        %v2283 = vpop.permute.xlu0 %2282
        %2286 = vset.pattern.permute.xlu0 0
        %2287 = vperm.xlu0 %2286, %v2207
        %v2288 = vpop.permute.xlu0 %2287
        %2291 = vset.pattern.permute.xlu0 0
        %2292 = vperm.xlu0 %2291, %v2208
        %v2293 = vpop.permute.xlu0 %2292
        %2296 = vset.pattern.permute.xlu0 0
        %2297 = vperm.xlu0 %2296, %v2209
        %v2298 = vpop.permute.xlu0 %2297
        %2301 = vset.pattern.permute.xlu0 0
        %2302 = vperm.xlu0 %2301, %v2210
        %v2303 = vpop.permute.xlu0 %2302
        %2306 = vset.pattern.permute.xlu0 0
        %2307 = vperm.xlu0 %2306, %v2211
        %v2308 = vpop.permute.xlu0 %2307
        %2311 = vset.pattern.permute.xlu0 0
        %2312 = vperm.xlu0 %2311, %v2212
        %v2313 = vpop.permute.xlu0 %2312
        %2316 = vset.pattern.permute.xlu0 0
        %2317 = vperm.xlu0 %2316, %v2213
        %v2318 = vpop.permute.xlu0 %2317
        %2321 = vset.pattern.permute.xlu0 0
        %2322 = vperm.xlu0 %2321, %v2214
        %v2323 = vpop.permute.xlu0 %2322
        %2326 = vset.pattern.permute.xlu0 0
        %2327 = vperm.xlu0 %2326, %v2215
        %v2328 = vpop.permute.xlu0 %2327
        %2331 = vset.pattern.permute.xlu0 0
        %2332 = vperm.xlu0 %2331, %v2216
        %v2333 = vpop.permute.xlu0 %2332
        %2336 = vset.pattern.permute.xlu0 0
        %2337 = vperm.xlu0 %2336, %v2217
        %v2338 = vpop.permute.xlu0 %2337
        %2341 = vset.pattern.permute.xlu0 0
        %2342 = vperm.xlu0 %2341, %v2218
        %v2343 = vpop.permute.xlu0 %2342
        %2346 = vset.pattern.permute.xlu0 0
        %2347 = vperm.xlu0 %2346, %v2219
        %v2348 = vpop.permute.xlu0 %2347
        %2351 = vset.pattern.permute.xlu0 0
        %2352 = vperm.xlu0 %2351, %v2220
        %v2353 = vpop.permute.xlu0 %2352
        %2356 = vset.pattern.permute.xlu0 0
        %2357 = vperm.xlu0 %2356, %v2221
        %v2358 = vpop.permute.xlu0 %2357
        %2361 = vset.pattern.permute.xlu0 0
        %2362 = vperm.xlu0 %2361, %v2222
        %v2363 = vpop.permute.xlu0 %2362
        %2366 = vset.pattern.permute.xlu0 0
        %2367 = vperm.xlu0 %2366, %v2223
        %v2368 = vpop.permute.xlu0 %2367
        %2371 = vset.pattern.permute.xlu0 0
        %2372 = vperm.xlu0 %2371, %v2224
        %v2373 = vpop.permute.xlu0 %2372
        %2376 = vset.pattern.permute.xlu0 0
        %2377 = vperm.xlu0 %2376, %v2225
        %v2378 = vpop.permute.xlu0 %2377
        %2381 = vset.pattern.permute.xlu0 0
        %2382 = vperm.xlu0 %2381, %v2226
        %v2383 = vpop.permute.xlu0 %2382
        %2386 = vset.pattern.permute.xlu0 0
        %2387 = vperm.xlu0 %2386, %v2227
        %v2388 = vpop.permute.xlu0 %2387
        %2391 = vset.pattern.permute.xlu0 0
        %2392 = vperm.xlu0 %2391, %v2228
        %v2393 = vpop.permute.xlu0 %2392
        %2396 = vset.pattern.permute.xlu0 0
        %2397 = vperm.xlu0 %2396, %v2229
        %v2398 = vpop.permute.xlu0 %2397
        %2401 = vset.pattern.permute.xlu0 0
        %2402 = vperm.xlu0 %2401, %v2230
        %v2403 = vpop.permute.xlu0 %2402
        %2406 = vset.pattern.permute.xlu0 0
        %2407 = vperm.xlu0 %2406, %v2231
        %v2408 = vpop.permute.xlu0 %2407
        %2411 = vset.pattern.permute.xlu0 0
        %2412 = vperm.xlu0 %2411, %v2232
        %v2413 = vpop.permute.xlu0 %2412
        %2416 = vset.pattern.permute.xlu0 0
        %2417 = vperm.xlu0 %2416, %v2233
        %v2418 = vpop.permute.xlu0 %2417
        %2421 = vset.pattern.permute.xlu0 0
        %2422 = vperm.xlu0 %2421, %v2234
        %v2423 = vpop.permute.xlu0 %2422
        %2426 = vset.pattern.permute.xlu0 0
        %2427 = vperm.xlu0 %2426, %v2235
        %v2428 = vpop.permute.xlu0 %2427
        %2431 = vset.pattern.permute.xlu0 0
        %2432 = vperm.xlu0 %2431, %v2236
        %v2433 = vpop.permute.xlu0 %2432
        %2436 = vset.pattern.permute.xlu0 0
        %2437 = vperm.xlu0 %2436, %v2237
        %v2438 = vpop.permute.xlu0 %2437
        %2441 = vset.pattern.permute.xlu0 0
        %2442 = vperm.xlu0 %2441, %v2238
        %v2443 = vpop.permute.xlu0 %2442
        %2446 = vset.pattern.permute.xlu0 0
        %2447 = vperm.xlu0 %2446, %v2239
        %v2448 = vpop.permute.xlu0 %2447
        %2451 = vset.pattern.permute.xlu0 0
        %2452 = vperm.xlu0 %2451, %v2240
        %v2453 = vpop.permute.xlu0 %2452
        %2456 = vset.pattern.permute.xlu0 0
        %2457 = vperm.xlu0 %2456, %v2241
        %v2458 = vpop.permute.xlu0 %2457
        %2461 = vset.pattern.permute.xlu0 0
        %2462 = vperm.xlu0 %2461, %v2242
        %v2463 = vpop.permute.xlu0 %2462
        %2466 = vset.pattern.permute.xlu0 0
        %2467 = vperm.xlu0 %2466, %v2243
        %v2468 = vpop.permute.xlu0 %2467
        %2471 = vset.pattern.permute.xlu0 0
        %2472 = vperm.xlu0 %2471, %v2244
        %v2473 = vpop.permute.xlu0 %2472
        %2476 = vset.pattern.permute.xlu0 0
        %2477 = vperm.xlu0 %2476, %v2245
        %v2478 = vpop.permute.xlu0 %2477
        %2481 = vset.pattern.permute.xlu0 0
        %2482 = vperm.xlu0 %2481, %v2246
        %v2483 = vpop.permute.xlu0 %2482
        %2486 = vset.pattern.permute.xlu0 0
        %2487 = vperm.xlu0 %2486, %v2247
        %v2488 = vpop.permute.xlu0 %2487
        %v2491 = vlaneseq
        %v2492 = vshrl.u32 %v2491, 7
        %v2493 = vsub.s32 0, %v2492
        %v2494 = vrot.slane %v2249, %v2493
        %v2496 = vmul.f32 %v2253, %v2494
        %v2497 = vmul.f32 %v2258, %v2494
        %v2498 = vmul.f32 %v2263, %v2494
        %v2499 = vmul.f32 %v2268, %v2494
        %v2500 = vmul.f32 %v2273, %v2494
        %v2501 = vmul.f32 %v2278, %v2494
        %v2502 = vmul.f32 %v2283, %v2494
        %v2503 = vmul.f32 %v2288, %v2494
        %v2504 = vmul.f32 %v2293, %v2494
        %v2505 = vmul.f32 %v2298, %v2494
        %v2506 = vmul.f32 %v2303, %v2494
        %v2507 = vmul.f32 %v2308, %v2494
        %v2508 = vmul.f32 %v2313, %v2494
        %v2509 = vmul.f32 %v2318, %v2494
        %v2510 = vmul.f32 %v2323, %v2494
        %v2511 = vmul.f32 %v2328, %v2494
        %v2512 = vmul.f32 %v2333, %v2494
        %v2513 = vmul.f32 %v2338, %v2494
        %v2514 = vmul.f32 %v2343, %v2494
        %v2515 = vmul.f32 %v2348, %v2494
        %v2516 = vmul.f32 %v2353, %v2494
        %v2517 = vmul.f32 %v2358, %v2494
        %v2518 = vmul.f32 %v2363, %v2494
        %v2519 = vmul.f32 %v2368, %v2494
        %v2520 = vmul.f32 %v2373, %v2494
        %v2521 = vmul.f32 %v2378, %v2494
        %v2522 = vmul.f32 %v2383, %v2494
        %v2523 = vmul.f32 %v2388, %v2494
        %v2524 = vmul.f32 %v2393, %v2494
        %v2525 = vmul.f32 %v2398, %v2494
        %v2526 = vmul.f32 %v2403, %v2494
        %v2527 = vmul.f32 %v2408, %v2494
        %v2528 = vmul.f32 %v2413, %v2494
        %v2529 = vmul.f32 %v2418, %v2494
        %v2530 = vmul.f32 %v2423, %v2494
        %v2531 = vmul.f32 %v2428, %v2494
        %v2532 = vmul.f32 %v2433, %v2494
        %v2533 = vmul.f32 %v2438, %v2494
        %v2534 = vmul.f32 %v2443, %v2494
        %v2535 = vmul.f32 %v2448, %v2494
        %v2536 = vmul.f32 %v2453, %v2494
        %v2537 = vmul.f32 %v2458, %v2494
        %v2538 = vmul.f32 %v2463, %v2494
        %v2539 = vmul.f32 %v2468, %v2494
        %v2540 = vmul.f32 %v2473, %v2494
        %v2541 = vmul.f32 %v2478, %v2494
        %v2542 = vmul.f32 %v2483, %v2494
        %v2543 = vmul.f32 %v2488, %v2494
        %v2544 = vadd.f32 %v2152, %v2496
        %v2545 = vadd.f32 %v2153, %v2497
        %v2546 = vadd.f32 %v2154, %v2498
        %v2547 = vadd.f32 %v2155, %v2499
        %v2548 = vadd.f32 %v2156, %v2500
        %v2549 = vadd.f32 %v2157, %v2501
        %v2550 = vadd.f32 %v2158, %v2502
        %v2551 = vadd.f32 %v2159, %v2503
        %v2552 = vadd.f32 %v2160, %v2504
        %v2553 = vadd.f32 %v2161, %v2505
        %v2554 = vadd.f32 %v2162, %v2506
        %v2555 = vadd.f32 %v2163, %v2507
        %v2556 = vadd.f32 %v2164, %v2508
        %v2557 = vadd.f32 %v2165, %v2509
        %v2558 = vadd.f32 %v2166, %v2510
        %v2559 = vadd.f32 %v2167, %v2511
        %v2560 = vadd.f32 %v2168, %v2512
        %v2561 = vadd.f32 %v2169, %v2513
        %v2562 = vadd.f32 %v2170, %v2514
        %v2563 = vadd.f32 %v2171, %v2515
        %v2564 = vadd.f32 %v2172, %v2516
        %v2565 = vadd.f32 %v2173, %v2517
        %v2566 = vadd.f32 %v2174, %v2518
        %v2567 = vadd.f32 %v2175, %v2519
        %v2568 = vadd.f32 %v2176, %v2520
        %v2569 = vadd.f32 %v2177, %v2521
        %v2570 = vadd.f32 %v2178, %v2522
        %v2571 = vadd.f32 %v2179, %v2523
        %v2572 = vadd.f32 %v2180, %v2524
        %v2573 = vadd.f32 %v2181, %v2525
        %v2574 = vadd.f32 %v2182, %v2526
        %v2575 = vadd.f32 %v2183, %v2527
        %v2576 = vadd.f32 %v2184, %v2528
        %v2577 = vadd.f32 %v2185, %v2529
        %v2578 = vadd.f32 %v2186, %v2530
        %v2579 = vadd.f32 %v2187, %v2531
        %v2580 = vadd.f32 %v2188, %v2532
        %v2581 = vadd.f32 %v2189, %v2533
        %v2582 = vadd.f32 %v2190, %v2534
        %v2583 = vadd.f32 %v2191, %v2535
        %v2584 = vadd.f32 %v2192, %v2536
        %v2585 = vadd.f32 %v2193, %v2537
        %v2586 = vadd.f32 %v2194, %v2538
        %v2587 = vadd.f32 %v2195, %v2539
        %v2588 = vadd.f32 %v2196, %v2540
        %v2589 = vadd.f32 %v2197, %v2541
        %v2590 = vadd.f32 %v2198, %v2542
        %v2591 = vadd.f32 %v2199, %v2543
        %v2592 = vld [vmem:[#allocation2 + $0x1a] sm:$0xff]
        %v2593 = vld [vmem:[#allocation2 + $0x22] sm:$0xff]
        %v2594 = vld [vmem:[#allocation2 + $0x2a] sm:$0xff]
        %v2595 = vld [vmem:[#allocation2 + $0x32] sm:$0xff]
        %v2596 = vld [vmem:[#allocation2 + $0x3a] sm:$0xff]
        %v2597 = vld [vmem:[#allocation2 + $0x42] sm:$0xff]
        %v2598 = vld [vmem:[#allocation2 + $0x4a] sm:$0xff]
        %v2599 = vld [vmem:[#allocation2 + $0x52] sm:$0xff]
        %v2600 = vld [vmem:[#allocation2 + $0x5a] sm:$0xff]
        %v2601 = vld [vmem:[#allocation2 + $0x62] sm:$0xff]
        %v2602 = vld [vmem:[#allocation2 + $0x6a] sm:$0xff]
        %v2603 = vld [vmem:[#allocation2 + $0x72] sm:$0xff]
        %v2604 = vld [vmem:[#allocation2 + $0x7a] sm:$0xff]
        %v2605 = vld [vmem:[#allocation2 + $0x82] sm:$0xff]
        %v2606 = vld [vmem:[#allocation2 + $0x8a] sm:$0xff]
        %v2607 = vld [vmem:[#allocation2 + $0x92] sm:$0xff]
        %v2608 = vld [vmem:[#allocation2 + $0x9a] sm:$0xff]
        %v2609 = vld [vmem:[#allocation2 + $0xa2] sm:$0xff]
        %v2610 = vld [vmem:[#allocation2 + $0xaa] sm:$0xff]
        %v2611 = vld [vmem:[#allocation2 + $0xb2] sm:$0xff]
        %v2612 = vld [vmem:[#allocation2 + $0xba] sm:$0xff]
        %v2613 = vld [vmem:[#allocation2 + $0xc2] sm:$0xff]
        %v2614 = vld [vmem:[#allocation2 + $0xca] sm:$0xff]
        %v2615 = vld [vmem:[#allocation2 + $0xd2] sm:$0xff]
        %v2616 = vld [vmem:[#allocation2 + $0xda] sm:$0xff]
        %v2617 = vld [vmem:[#allocation2 + $0xe2] sm:$0xff]
        %v2618 = vld [vmem:[#allocation2 + $0xea] sm:$0xff]
        %v2619 = vld [vmem:[#allocation2 + $0xf2] sm:$0xff]
        %v2620 = vld [vmem:[#allocation2 + $0xfa] sm:$0xff]
        %v2621 = vld [vmem:[#allocation2 + $0x102] sm:$0xff]
        %v2622 = vld [vmem:[#allocation2 + $0x10a] sm:$0xff]
        %v2623 = vld [vmem:[#allocation2 + $0x112] sm:$0xff]
        %v2624 = vld [vmem:[#allocation2 + $0x11a] sm:$0xff]
        %v2625 = vld [vmem:[#allocation2 + $0x122] sm:$0xff]
        %v2626 = vld [vmem:[#allocation2 + $0x12a] sm:$0xff]
        %v2627 = vld [vmem:[#allocation2 + $0x132] sm:$0xff]
        %v2628 = vld [vmem:[#allocation2 + $0x13a] sm:$0xff]
        %v2629 = vld [vmem:[#allocation2 + $0x142] sm:$0xff]
        %v2630 = vld [vmem:[#allocation2 + $0x14a] sm:$0xff]
        %v2631 = vld [vmem:[#allocation2 + $0x152] sm:$0xff]
        %v2632 = vld [vmem:[#allocation2 + $0x15a] sm:$0xff]
        %v2633 = vld [vmem:[#allocation2 + $0x162] sm:$0xff]
        %v2634 = vld [vmem:[#allocation2 + $0x16a] sm:$0xff]
        %v2635 = vld [vmem:[#allocation2 + $0x172] sm:$0xff]
        %v2636 = vld [vmem:[#allocation2 + $0x17a] sm:$0xff]
        %v2637 = vld [vmem:[#allocation2 + $0x182] sm:$0xff]
        %v2638 = vld [vmem:[#allocation2 + $0x18a] sm:$0xff]
        %v2639 = vld [vmem:[#allocation2 + $0x192] sm:$0xff]
        %s2640 = scalar_lea.vmem %s1, 5
        %v2641 = vld [vmem:[%s2640] sm:$0x1]
        %2643 = vset.pattern.permute.xlu0 0
        %2644 = vperm.xlu0 %2643, %v2592
        %v2645 = vpop.permute.xlu0 %2644
        %2648 = vset.pattern.permute.xlu0 0
        %2649 = vperm.xlu0 %2648, %v2593
        %v2650 = vpop.permute.xlu0 %2649
        %2653 = vset.pattern.permute.xlu0 0
        %2654 = vperm.xlu0 %2653, %v2594
        %v2655 = vpop.permute.xlu0 %2654
        %2658 = vset.pattern.permute.xlu0 0
        %2659 = vperm.xlu0 %2658, %v2595
        %v2660 = vpop.permute.xlu0 %2659
        %2663 = vset.pattern.permute.xlu0 0
        %2664 = vperm.xlu0 %2663, %v2596
        %v2665 = vpop.permute.xlu0 %2664
        %2668 = vset.pattern.permute.xlu0 0
        %2669 = vperm.xlu0 %2668, %v2597
        %v2670 = vpop.permute.xlu0 %2669
        %2673 = vset.pattern.permute.xlu0 0
        %2674 = vperm.xlu0 %2673, %v2598
        %v2675 = vpop.permute.xlu0 %2674
        %2678 = vset.pattern.permute.xlu0 0
        %2679 = vperm.xlu0 %2678, %v2599
        %v2680 = vpop.permute.xlu0 %2679
        %2683 = vset.pattern.permute.xlu0 0
        %2684 = vperm.xlu0 %2683, %v2600
        %v2685 = vpop.permute.xlu0 %2684
        %2688 = vset.pattern.permute.xlu0 0
        %2689 = vperm.xlu0 %2688, %v2601
        %v2690 = vpop.permute.xlu0 %2689
        %2693 = vset.pattern.permute.xlu0 0
        %2694 = vperm.xlu0 %2693, %v2602
        %v2695 = vpop.permute.xlu0 %2694
        %2698 = vset.pattern.permute.xlu0 0
        %2699 = vperm.xlu0 %2698, %v2603
        %v2700 = vpop.permute.xlu0 %2699
        %2703 = vset.pattern.permute.xlu0 0
        %2704 = vperm.xlu0 %2703, %v2604
        %v2705 = vpop.permute.xlu0 %2704
        %2708 = vset.pattern.permute.xlu0 0
        %2709 = vperm.xlu0 %2708, %v2605
        %v2710 = vpop.permute.xlu0 %2709
        %2713 = vset.pattern.permute.xlu0 0
        %2714 = vperm.xlu0 %2713, %v2606
        %v2715 = vpop.permute.xlu0 %2714
        %2718 = vset.pattern.permute.xlu0 0
        %2719 = vperm.xlu0 %2718, %v2607
        %v2720 = vpop.permute.xlu0 %2719
        %2723 = vset.pattern.permute.xlu0 0
        %2724 = vperm.xlu0 %2723, %v2608
        %v2725 = vpop.permute.xlu0 %2724
        %2728 = vset.pattern.permute.xlu0 0
        %2729 = vperm.xlu0 %2728, %v2609
        %v2730 = vpop.permute.xlu0 %2729
        %2733 = vset.pattern.permute.xlu0 0
        %2734 = vperm.xlu0 %2733, %v2610
        %v2735 = vpop.permute.xlu0 %2734
        %2738 = vset.pattern.permute.xlu0 0
        %2739 = vperm.xlu0 %2738, %v2611
        %v2740 = vpop.permute.xlu0 %2739
        %2743 = vset.pattern.permute.xlu0 0
        %2744 = vperm.xlu0 %2743, %v2612
        %v2745 = vpop.permute.xlu0 %2744
        %2748 = vset.pattern.permute.xlu0 0
        %2749 = vperm.xlu0 %2748, %v2613
        %v2750 = vpop.permute.xlu0 %2749
        %2753 = vset.pattern.permute.xlu0 0
        %2754 = vperm.xlu0 %2753, %v2614
        %v2755 = vpop.permute.xlu0 %2754
        %2758 = vset.pattern.permute.xlu0 0
        %2759 = vperm.xlu0 %2758, %v2615
        %v2760 = vpop.permute.xlu0 %2759
        %2763 = vset.pattern.permute.xlu0 0
        %2764 = vperm.xlu0 %2763, %v2616
        %v2765 = vpop.permute.xlu0 %2764
        %2768 = vset.pattern.permute.xlu0 0
        %2769 = vperm.xlu0 %2768, %v2617
        %v2770 = vpop.permute.xlu0 %2769
        %2773 = vset.pattern.permute.xlu0 0
        %2774 = vperm.xlu0 %2773, %v2618
        %v2775 = vpop.permute.xlu0 %2774
        %2778 = vset.pattern.permute.xlu0 0
        %2779 = vperm.xlu0 %2778, %v2619
        %v2780 = vpop.permute.xlu0 %2779
        %2783 = vset.pattern.permute.xlu0 0
        %2784 = vperm.xlu0 %2783, %v2620
        %v2785 = vpop.permute.xlu0 %2784
        %2788 = vset.pattern.permute.xlu0 0
        %2789 = vperm.xlu0 %2788, %v2621
        %v2790 = vpop.permute.xlu0 %2789
        %2793 = vset.pattern.permute.xlu0 0
        %2794 = vperm.xlu0 %2793, %v2622
        %v2795 = vpop.permute.xlu0 %2794
        %2798 = vset.pattern.permute.xlu0 0
        %2799 = vperm.xlu0 %2798, %v2623
        %v2800 = vpop.permute.xlu0 %2799
        %2803 = vset.pattern.permute.xlu0 0
        %2804 = vperm.xlu0 %2803, %v2624
        %v2805 = vpop.permute.xlu0 %2804
        %2808 = vset.pattern.permute.xlu0 0
        %2809 = vperm.xlu0 %2808, %v2625
        %v2810 = vpop.permute.xlu0 %2809
        %2813 = vset.pattern.permute.xlu0 0
        %2814 = vperm.xlu0 %2813, %v2626
        %v2815 = vpop.permute.xlu0 %2814
        %2818 = vset.pattern.permute.xlu0 0
        %2819 = vperm.xlu0 %2818, %v2627
        %v2820 = vpop.permute.xlu0 %2819
        %2823 = vset.pattern.permute.xlu0 0
        %2824 = vperm.xlu0 %2823, %v2628
        %v2825 = vpop.permute.xlu0 %2824
        %2828 = vset.pattern.permute.xlu0 0
        %2829 = vperm.xlu0 %2828, %v2629
        %v2830 = vpop.permute.xlu0 %2829
        %2833 = vset.pattern.permute.xlu0 0
        %2834 = vperm.xlu0 %2833, %v2630
        %v2835 = vpop.permute.xlu0 %2834
        %2838 = vset.pattern.permute.xlu0 0
        %2839 = vperm.xlu0 %2838, %v2631
        %v2840 = vpop.permute.xlu0 %2839
        %2843 = vset.pattern.permute.xlu0 0
        %2844 = vperm.xlu0 %2843, %v2632
        %v2845 = vpop.permute.xlu0 %2844
        %2848 = vset.pattern.permute.xlu0 0
        %2849 = vperm.xlu0 %2848, %v2633
        %v2850 = vpop.permute.xlu0 %2849
        %2853 = vset.pattern.permute.xlu0 0
        %2854 = vperm.xlu0 %2853, %v2634
        %v2855 = vpop.permute.xlu0 %2854
        %2858 = vset.pattern.permute.xlu0 0
        %2859 = vperm.xlu0 %2858, %v2635
        %v2860 = vpop.permute.xlu0 %2859
        %2863 = vset.pattern.permute.xlu0 0
        %2864 = vperm.xlu0 %2863, %v2636
        %v2865 = vpop.permute.xlu0 %2864
        %2868 = vset.pattern.permute.xlu0 0
        %2869 = vperm.xlu0 %2868, %v2637
        %v2870 = vpop.permute.xlu0 %2869
        %2873 = vset.pattern.permute.xlu0 0
        %2874 = vperm.xlu0 %2873, %v2638
        %v2875 = vpop.permute.xlu0 %2874
        %2878 = vset.pattern.permute.xlu0 0
        %2879 = vperm.xlu0 %2878, %v2639
        %v2880 = vpop.permute.xlu0 %2879
        %v2883 = vlaneseq
        %v2884 = vshrl.u32 %v2883, 7
        %v2885 = vsub.s32 0, %v2884
        %v2886 = vrot.slane %v2641, %v2885
        %v2888 = vmul.f32 %v2645, %v2886
        %v2889 = vmul.f32 %v2650, %v2886
        %v2890 = vmul.f32 %v2655, %v2886
        %v2891 = vmul.f32 %v2660, %v2886
        %v2892 = vmul.f32 %v2665, %v2886
        %v2893 = vmul.f32 %v2670, %v2886
        %v2894 = vmul.f32 %v2675, %v2886
        %v2895 = vmul.f32 %v2680, %v2886
        %v2896 = vmul.f32 %v2685, %v2886
        %v2897 = vmul.f32 %v2690, %v2886
        %v2898 = vmul.f32 %v2695, %v2886
        %v2899 = vmul.f32 %v2700, %v2886
        %v2900 = vmul.f32 %v2705, %v2886
        %v2901 = vmul.f32 %v2710, %v2886
        %v2902 = vmul.f32 %v2715, %v2886
        %v2903 = vmul.f32 %v2720, %v2886
        %v2904 = vmul.f32 %v2725, %v2886
        %v2905 = vmul.f32 %v2730, %v2886
        %v2906 = vmul.f32 %v2735, %v2886
        %v2907 = vmul.f32 %v2740, %v2886
        %v2908 = vmul.f32 %v2745, %v2886
        %v2909 = vmul.f32 %v2750, %v2886
        %v2910 = vmul.f32 %v2755, %v2886
        %v2911 = vmul.f32 %v2760, %v2886
        %v2912 = vmul.f32 %v2765, %v2886
        %v2913 = vmul.f32 %v2770, %v2886
        %v2914 = vmul.f32 %v2775, %v2886
        %v2915 = vmul.f32 %v2780, %v2886
        %v2916 = vmul.f32 %v2785, %v2886
        %v2917 = vmul.f32 %v2790, %v2886
        %v2918 = vmul.f32 %v2795, %v2886
        %v2919 = vmul.f32 %v2800, %v2886
        %v2920 = vmul.f32 %v2805, %v2886
        %v2921 = vmul.f32 %v2810, %v2886
        %v2922 = vmul.f32 %v2815, %v2886
        %v2923 = vmul.f32 %v2820, %v2886
        %v2924 = vmul.f32 %v2825, %v2886
        %v2925 = vmul.f32 %v2830, %v2886
        %v2926 = vmul.f32 %v2835, %v2886
        %v2927 = vmul.f32 %v2840, %v2886
        %v2928 = vmul.f32 %v2845, %v2886
        %v2929 = vmul.f32 %v2850, %v2886
        %v2930 = vmul.f32 %v2855, %v2886
        %v2931 = vmul.f32 %v2860, %v2886
        %v2932 = vmul.f32 %v2865, %v2886
        %v2933 = vmul.f32 %v2870, %v2886
        %v2934 = vmul.f32 %v2875, %v2886
        %v2935 = vmul.f32 %v2880, %v2886
        %v2936 = vadd.f32 %v2544, %v2888
        %v2937 = vadd.f32 %v2545, %v2889
        %v2938 = vadd.f32 %v2546, %v2890
        %v2939 = vadd.f32 %v2547, %v2891
        %v2940 = vadd.f32 %v2548, %v2892
        %v2941 = vadd.f32 %v2549, %v2893
        %v2942 = vadd.f32 %v2550, %v2894
        %v2943 = vadd.f32 %v2551, %v2895
        %v2944 = vadd.f32 %v2552, %v2896
        %v2945 = vadd.f32 %v2553, %v2897
        %v2946 = vadd.f32 %v2554, %v2898
        %v2947 = vadd.f32 %v2555, %v2899
        %v2948 = vadd.f32 %v2556, %v2900
        %v2949 = vadd.f32 %v2557, %v2901
        %v2950 = vadd.f32 %v2558, %v2902
        %v2951 = vadd.f32 %v2559, %v2903
        %v2952 = vadd.f32 %v2560, %v2904
        %v2953 = vadd.f32 %v2561, %v2905
        %v2954 = vadd.f32 %v2562, %v2906
        %v2955 = vadd.f32 %v2563, %v2907
        %v2956 = vadd.f32 %v2564, %v2908
        %v2957 = vadd.f32 %v2565, %v2909
        %v2958 = vadd.f32 %v2566, %v2910
        %v2959 = vadd.f32 %v2567, %v2911
        %v2960 = vadd.f32 %v2568, %v2912
        %v2961 = vadd.f32 %v2569, %v2913
        %v2962 = vadd.f32 %v2570, %v2914
        %v2963 = vadd.f32 %v2571, %v2915
        %v2964 = vadd.f32 %v2572, %v2916
        %v2965 = vadd.f32 %v2573, %v2917
        %v2966 = vadd.f32 %v2574, %v2918
        %v2967 = vadd.f32 %v2575, %v2919
        %v2968 = vadd.f32 %v2576, %v2920
        %v2969 = vadd.f32 %v2577, %v2921
        %v2970 = vadd.f32 %v2578, %v2922
        %v2971 = vadd.f32 %v2579, %v2923
        %v2972 = vadd.f32 %v2580, %v2924
        %v2973 = vadd.f32 %v2581, %v2925
        %v2974 = vadd.f32 %v2582, %v2926
        %v2975 = vadd.f32 %v2583, %v2927
        %v2976 = vadd.f32 %v2584, %v2928
        %v2977 = vadd.f32 %v2585, %v2929
        %v2978 = vadd.f32 %v2586, %v2930
        %v2979 = vadd.f32 %v2587, %v2931
        %v2980 = vadd.f32 %v2588, %v2932
        %v2981 = vadd.f32 %v2589, %v2933
        %v2982 = vadd.f32 %v2590, %v2934
        %v2983 = vadd.f32 %v2591, %v2935
        %v2984 = vld [vmem:[#allocation2 + $0x30] sm:$0xff]
        %v2985 = vld [vmem:[#allocation2 + $0x38] sm:$0xff]
        %v2986 = vld [vmem:[#allocation2 + $0x40] sm:$0xff]
        %v2987 = vld [vmem:[#allocation2 + $0x48] sm:$0xff]
        %v2988 = vld [vmem:[#allocation2 + $0x50] sm:$0xff]
        %v2989 = vld [vmem:[#allocation2 + $0x58] sm:$0xff]
        %v2990 = vld [vmem:[#allocation2 + $0x60] sm:$0xff]
        %v2991 = vld [vmem:[#allocation2 + $0x68] sm:$0xff]
        %v2992 = vld [vmem:[#allocation2 + $0x70] sm:$0xff]
        %v2993 = vld [vmem:[#allocation2 + $0x78] sm:$0xff]
        %v2994 = vld [vmem:[#allocation2 + $0x80] sm:$0xff]
        %v2995 = vld [vmem:[#allocation2 + $0x88] sm:$0xff]
        %v2996 = vld [vmem:[#allocation2 + $0x90] sm:$0xff]
        %v2997 = vld [vmem:[#allocation2 + $0x98] sm:$0xff]
        %v2998 = vld [vmem:[#allocation2 + $0xa0] sm:$0xff]
        %v2999 = vld [vmem:[#allocation2 + $0xa8] sm:$0xff]
        %v3000 = vld [vmem:[#allocation2 + $0xb0] sm:$0xff]
        %v3001 = vld [vmem:[#allocation2 + $0xb8] sm:$0xff]
        %v3002 = vld [vmem:[#allocation2 + $0xc0] sm:$0xff]
        %v3003 = vld [vmem:[#allocation2 + $0xc8] sm:$0xff]
        %v3004 = vld [vmem:[#allocation2 + $0xd0] sm:$0xff]
        %v3005 = vld [vmem:[#allocation2 + $0xd8] sm:$0xff]
        %v3006 = vld [vmem:[#allocation2 + $0xe0] sm:$0xff]
        %v3007 = vld [vmem:[#allocation2 + $0xe8] sm:$0xff]
        %v3008 = vld [vmem:[#allocation2 + $0xf0] sm:$0xff]
        %v3009 = vld [vmem:[#allocation2 + $0xf8] sm:$0xff]
        %v3010 = vld [vmem:[#allocation2 + $0x100] sm:$0xff]
        %v3011 = vld [vmem:[#allocation2 + $0x108] sm:$0xff]
        %v3012 = vld [vmem:[#allocation2 + $0x110] sm:$0xff]
        %v3013 = vld [vmem:[#allocation2 + $0x118] sm:$0xff]
        %v3014 = vld [vmem:[#allocation2 + $0x120] sm:$0xff]
        %v3015 = vld [vmem:[#allocation2 + $0x128] sm:$0xff]
        %v3016 = vld [vmem:[#allocation2 + $0x130] sm:$0xff]
        %v3017 = vld [vmem:[#allocation2 + $0x138] sm:$0xff]
        %v3018 = vld [vmem:[#allocation2 + $0x140] sm:$0xff]
        %v3019 = vld [vmem:[#allocation2 + $0x148] sm:$0xff]
        %v3020 = vld [vmem:[#allocation2 + $0x150] sm:$0xff]
        %v3021 = vld [vmem:[#allocation2 + $0x158] sm:$0xff]
        %v3022 = vld [vmem:[#allocation2 + $0x160] sm:$0xff]
        %v3023 = vld [vmem:[#allocation2 + $0x168] sm:$0xff]
        %v3024 = vld [vmem:[#allocation2 + $0x170] sm:$0xff]
        %v3025 = vld [vmem:[#allocation2 + $0x178] sm:$0xff]
        %v3026 = vld [vmem:[#allocation2 + $0x180] sm:$0xff]
        %v3027 = vld [vmem:[#allocation2 + $0x188] sm:$0xff]
        %v3028 = vld [vmem:[#allocation2 + $0x190] sm:$0xff]
        %v3029 = vld [vmem:[#allocation2 + $0x198] sm:$0xff]
        %v3030 = vld [vmem:[#allocation2 + $0x1a0] sm:$0xff]
        %v3031 = vld [vmem:[#allocation2 + $0x1a8] sm:$0xff]
        %s3032 = scalar_lea.vmem %s1, 6
        %v3033 = vld [vmem:[%s3032] sm:$0x1]
        %3035 = vset.pattern.permute.xlu0 0
        %3036 = vperm.xlu0 %3035, %v2984
        %v3037 = vpop.permute.xlu0 %3036
        %3040 = vset.pattern.permute.xlu0 0
        %3041 = vperm.xlu0 %3040, %v2985
        %v3042 = vpop.permute.xlu0 %3041
        %3045 = vset.pattern.permute.xlu0 0
        %3046 = vperm.xlu0 %3045, %v2986
        %v3047 = vpop.permute.xlu0 %3046
        %3050 = vset.pattern.permute.xlu0 0
        %3051 = vperm.xlu0 %3050, %v2987
        %v3052 = vpop.permute.xlu0 %3051
        %3055 = vset.pattern.permute.xlu0 0
        %3056 = vperm.xlu0 %3055, %v2988
        %v3057 = vpop.permute.xlu0 %3056
        %3060 = vset.pattern.permute.xlu0 0
        %3061 = vperm.xlu0 %3060, %v2989
        %v3062 = vpop.permute.xlu0 %3061
        %3065 = vset.pattern.permute.xlu0 0
        %3066 = vperm.xlu0 %3065, %v2990
        %v3067 = vpop.permute.xlu0 %3066
        %3070 = vset.pattern.permute.xlu0 0
        %3071 = vperm.xlu0 %3070, %v2991
        %v3072 = vpop.permute.xlu0 %3071
        %3075 = vset.pattern.permute.xlu0 0
        %3076 = vperm.xlu0 %3075, %v2992
        %v3077 = vpop.permute.xlu0 %3076
        %3080 = vset.pattern.permute.xlu0 0
        %3081 = vperm.xlu0 %3080, %v2993
        %v3082 = vpop.permute.xlu0 %3081
        %3085 = vset.pattern.permute.xlu0 0
        %3086 = vperm.xlu0 %3085, %v2994
        %v3087 = vpop.permute.xlu0 %3086
        %3090 = vset.pattern.permute.xlu0 0
        %3091 = vperm.xlu0 %3090, %v2995
        %v3092 = vpop.permute.xlu0 %3091
        %3095 = vset.pattern.permute.xlu0 0
        %3096 = vperm.xlu0 %3095, %v2996
        %v3097 = vpop.permute.xlu0 %3096
        %3100 = vset.pattern.permute.xlu0 0
        %3101 = vperm.xlu0 %3100, %v2997
        %v3102 = vpop.permute.xlu0 %3101
        %3105 = vset.pattern.permute.xlu0 0
        %3106 = vperm.xlu0 %3105, %v2998
        %v3107 = vpop.permute.xlu0 %3106
        %3110 = vset.pattern.permute.xlu0 0
        %3111 = vperm.xlu0 %3110, %v2999
        %v3112 = vpop.permute.xlu0 %3111
        %3115 = vset.pattern.permute.xlu0 0
        %3116 = vperm.xlu0 %3115, %v3000
        %v3117 = vpop.permute.xlu0 %3116
        %3120 = vset.pattern.permute.xlu0 0
        %3121 = vperm.xlu0 %3120, %v3001
        %v3122 = vpop.permute.xlu0 %3121
        %3125 = vset.pattern.permute.xlu0 0
        %3126 = vperm.xlu0 %3125, %v3002
        %v3127 = vpop.permute.xlu0 %3126
        %3130 = vset.pattern.permute.xlu0 0
        %3131 = vperm.xlu0 %3130, %v3003
        %v3132 = vpop.permute.xlu0 %3131
        %3135 = vset.pattern.permute.xlu0 0
        %3136 = vperm.xlu0 %3135, %v3004
        %v3137 = vpop.permute.xlu0 %3136
        %3140 = vset.pattern.permute.xlu0 0
        %3141 = vperm.xlu0 %3140, %v3005
        %v3142 = vpop.permute.xlu0 %3141
        %3145 = vset.pattern.permute.xlu0 0
        %3146 = vperm.xlu0 %3145, %v3006
        %v3147 = vpop.permute.xlu0 %3146
        %3150 = vset.pattern.permute.xlu0 0
        %3151 = vperm.xlu0 %3150, %v3007
        %v3152 = vpop.permute.xlu0 %3151
        %3155 = vset.pattern.permute.xlu0 0
        %3156 = vperm.xlu0 %3155, %v3008
        %v3157 = vpop.permute.xlu0 %3156
        %3160 = vset.pattern.permute.xlu0 0
        %3161 = vperm.xlu0 %3160, %v3009
        %v3162 = vpop.permute.xlu0 %3161
        %3165 = vset.pattern.permute.xlu0 0
        %3166 = vperm.xlu0 %3165, %v3010
        %v3167 = vpop.permute.xlu0 %3166
        %3170 = vset.pattern.permute.xlu0 0
        %3171 = vperm.xlu0 %3170, %v3011
        %v3172 = vpop.permute.xlu0 %3171
        %3175 = vset.pattern.permute.xlu0 0
        %3176 = vperm.xlu0 %3175, %v3012
        %v3177 = vpop.permute.xlu0 %3176
        %3180 = vset.pattern.permute.xlu0 0
        %3181 = vperm.xlu0 %3180, %v3013
        %v3182 = vpop.permute.xlu0 %3181
        %3185 = vset.pattern.permute.xlu0 0
        %3186 = vperm.xlu0 %3185, %v3014
        %v3187 = vpop.permute.xlu0 %3186
        %3190 = vset.pattern.permute.xlu0 0
        %3191 = vperm.xlu0 %3190, %v3015
        %v3192 = vpop.permute.xlu0 %3191
        %3195 = vset.pattern.permute.xlu0 0
        %3196 = vperm.xlu0 %3195, %v3016
        %v3197 = vpop.permute.xlu0 %3196
        %3200 = vset.pattern.permute.xlu0 0
        %3201 = vperm.xlu0 %3200, %v3017
        %v3202 = vpop.permute.xlu0 %3201
        %3205 = vset.pattern.permute.xlu0 0
        %3206 = vperm.xlu0 %3205, %v3018
        %v3207 = vpop.permute.xlu0 %3206
        %3210 = vset.pattern.permute.xlu0 0
        %3211 = vperm.xlu0 %3210, %v3019
        %v3212 = vpop.permute.xlu0 %3211
        %3215 = vset.pattern.permute.xlu0 0
        %3216 = vperm.xlu0 %3215, %v3020
        %v3217 = vpop.permute.xlu0 %3216
        %3220 = vset.pattern.permute.xlu0 0
        %3221 = vperm.xlu0 %3220, %v3021
        %v3222 = vpop.permute.xlu0 %3221
        %3225 = vset.pattern.permute.xlu0 0
        %3226 = vperm.xlu0 %3225, %v3022
        %v3227 = vpop.permute.xlu0 %3226
        %3230 = vset.pattern.permute.xlu0 0
        %3231 = vperm.xlu0 %3230, %v3023
        %v3232 = vpop.permute.xlu0 %3231
        %3235 = vset.pattern.permute.xlu0 0
        %3236 = vperm.xlu0 %3235, %v3024
        %v3237 = vpop.permute.xlu0 %3236
        %3240 = vset.pattern.permute.xlu0 0
        %3241 = vperm.xlu0 %3240, %v3025
        %v3242 = vpop.permute.xlu0 %3241
        %3245 = vset.pattern.permute.xlu0 0
        %3246 = vperm.xlu0 %3245, %v3026
        %v3247 = vpop.permute.xlu0 %3246
        %3250 = vset.pattern.permute.xlu0 0
        %3251 = vperm.xlu0 %3250, %v3027
        %v3252 = vpop.permute.xlu0 %3251
        %3255 = vset.pattern.permute.xlu0 0
        %3256 = vperm.xlu0 %3255, %v3028
        %v3257 = vpop.permute.xlu0 %3256
        %3260 = vset.pattern.permute.xlu0 0
        %3261 = vperm.xlu0 %3260, %v3029
        %v3262 = vpop.permute.xlu0 %3261
        %3265 = vset.pattern.permute.xlu0 0
        %3266 = vperm.xlu0 %3265, %v3030
        %v3267 = vpop.permute.xlu0 %3266
        %3270 = vset.pattern.permute.xlu0 0
        %3271 = vperm.xlu0 %3270, %v3031
        %v3272 = vpop.permute.xlu0 %3271
        %v3275 = vlaneseq
        %v3276 = vshrl.u32 %v3275, 7
        %v3277 = vsub.s32 0, %v3276
        %v3278 = vrot.slane %v3033, %v3277
        %v3280 = vmul.f32 %v3037, %v3278
        %v3281 = vmul.f32 %v3042, %v3278
        %v3282 = vmul.f32 %v3047, %v3278
        %v3283 = vmul.f32 %v3052, %v3278
        %v3284 = vmul.f32 %v3057, %v3278
        %v3285 = vmul.f32 %v3062, %v3278
        %v3286 = vmul.f32 %v3067, %v3278
        %v3287 = vmul.f32 %v3072, %v3278
        %v3288 = vmul.f32 %v3077, %v3278
        %v3289 = vmul.f32 %v3082, %v3278
        %v3290 = vmul.f32 %v3087, %v3278
        %v3291 = vmul.f32 %v3092, %v3278
        %v3292 = vmul.f32 %v3097, %v3278
        %v3293 = vmul.f32 %v3102, %v3278
        %v3294 = vmul.f32 %v3107, %v3278
        %v3295 = vmul.f32 %v3112, %v3278
        %v3296 = vmul.f32 %v3117, %v3278
        %v3297 = vmul.f32 %v3122, %v3278
        %v3298 = vmul.f32 %v3127, %v3278
        %v3299 = vmul.f32 %v3132, %v3278
        %v3300 = vmul.f32 %v3137, %v3278
        %v3301 = vmul.f32 %v3142, %v3278
        %v3302 = vmul.f32 %v3147, %v3278
        %v3303 = vmul.f32 %v3152, %v3278
        %v3304 = vmul.f32 %v3157, %v3278
        %v3305 = vmul.f32 %v3162, %v3278
        %v3306 = vmul.f32 %v3167, %v3278
        %v3307 = vmul.f32 %v3172, %v3278
        %v3308 = vmul.f32 %v3177, %v3278
        %v3309 = vmul.f32 %v3182, %v3278
        %v3310 = vmul.f32 %v3187, %v3278
        %v3311 = vmul.f32 %v3192, %v3278
        %v3312 = vmul.f32 %v3197, %v3278
        %v3313 = vmul.f32 %v3202, %v3278
        %v3314 = vmul.f32 %v3207, %v3278
        %v3315 = vmul.f32 %v3212, %v3278
        %v3316 = vmul.f32 %v3217, %v3278
        %v3317 = vmul.f32 %v3222, %v3278
        %v3318 = vmul.f32 %v3227, %v3278
        %v3319 = vmul.f32 %v3232, %v3278
        %v3320 = vmul.f32 %v3237, %v3278
        %v3321 = vmul.f32 %v3242, %v3278
        %v3322 = vmul.f32 %v3247, %v3278
        %v3323 = vmul.f32 %v3252, %v3278
        %v3324 = vmul.f32 %v3257, %v3278
        %v3325 = vmul.f32 %v3262, %v3278
        %v3326 = vmul.f32 %v3267, %v3278
        %v3327 = vmul.f32 %v3272, %v3278
        %v3328 = vadd.f32 %v2936, %v3280
        %v3329 = vadd.f32 %v2937, %v3281
        %v3330 = vadd.f32 %v2938, %v3282
        %v3331 = vadd.f32 %v2939, %v3283
        %v3332 = vadd.f32 %v2940, %v3284
        %v3333 = vadd.f32 %v2941, %v3285
        %v3334 = vadd.f32 %v2942, %v3286
        %v3335 = vadd.f32 %v2943, %v3287
        %v3336 = vadd.f32 %v2944, %v3288
        %v3337 = vadd.f32 %v2945, %v3289
        %v3338 = vadd.f32 %v2946, %v3290
        %v3339 = vadd.f32 %v2947, %v3291
        %v3340 = vadd.f32 %v2948, %v3292
        %v3341 = vadd.f32 %v2949, %v3293
        %v3342 = vadd.f32 %v2950, %v3294
        %v3343 = vadd.f32 %v2951, %v3295
        %v3344 = vadd.f32 %v2952, %v3296
        %v3345 = vadd.f32 %v2953, %v3297
        %v3346 = vadd.f32 %v2954, %v3298
        %v3347 = vadd.f32 %v2955, %v3299
        %v3348 = vadd.f32 %v2956, %v3300
        %v3349 = vadd.f32 %v2957, %v3301
        %v3350 = vadd.f32 %v2958, %v3302
        %v3351 = vadd.f32 %v2959, %v3303
        %v3352 = vadd.f32 %v2960, %v3304
        %v3353 = vadd.f32 %v2961, %v3305
        %v3354 = vadd.f32 %v2962, %v3306
        %v3355 = vadd.f32 %v2963, %v3307
        %v3356 = vadd.f32 %v2964, %v3308
        %v3357 = vadd.f32 %v2965, %v3309
        %v3358 = vadd.f32 %v2966, %v3310
        %v3359 = vadd.f32 %v2967, %v3311
        %v3360 = vadd.f32 %v2968, %v3312
        %v3361 = vadd.f32 %v2969, %v3313
        %v3362 = vadd.f32 %v2970, %v3314
        %v3363 = vadd.f32 %v2971, %v3315
        %v3364 = vadd.f32 %v2972, %v3316
        %v3365 = vadd.f32 %v2973, %v3317
        %v3366 = vadd.f32 %v2974, %v3318
        %v3367 = vadd.f32 %v2975, %v3319
        %v3368 = vadd.f32 %v2976, %v3320
        %v3369 = vadd.f32 %v2977, %v3321
        %v3370 = vadd.f32 %v2978, %v3322
        %v3371 = vadd.f32 %v2979, %v3323
        %v3372 = vadd.f32 %v2980, %v3324
        %v3373 = vadd.f32 %v2981, %v3325
        %v3374 = vadd.f32 %v2982, %v3326
        %v3375 = vadd.f32 %v2983, %v3327
        %v3376 = vld [vmem:[#allocation2 + $0x31] sm:$0xff]
        %v3377 = vld [vmem:[#allocation2 + $0x39] sm:$0xff]
        %v3378 = vld [vmem:[#allocation2 + $0x41] sm:$0xff]
        %v3379 = vld [vmem:[#allocation2 + $0x49] sm:$0xff]
        %v3380 = vld [vmem:[#allocation2 + $0x51] sm:$0xff]
        %v3381 = vld [vmem:[#allocation2 + $0x59] sm:$0xff]
        %v3382 = vld [vmem:[#allocation2 + $0x61] sm:$0xff]
        %v3383 = vld [vmem:[#allocation2 + $0x69] sm:$0xff]
        %v3384 = vld [vmem:[#allocation2 + $0x71] sm:$0xff]
        %v3385 = vld [vmem:[#allocation2 + $0x79] sm:$0xff]
        %v3386 = vld [vmem:[#allocation2 + $0x81] sm:$0xff]
        %v3387 = vld [vmem:[#allocation2 + $0x89] sm:$0xff]
        %v3388 = vld [vmem:[#allocation2 + $0x91] sm:$0xff]
        %v3389 = vld [vmem:[#allocation2 + $0x99] sm:$0xff]
        %v3390 = vld [vmem:[#allocation2 + $0xa1] sm:$0xff]
        %v3391 = vld [vmem:[#allocation2 + $0xa9] sm:$0xff]
        %v3392 = vld [vmem:[#allocation2 + $0xb1] sm:$0xff]
        %v3393 = vld [vmem:[#allocation2 + $0xb9] sm:$0xff]
        %v3394 = vld [vmem:[#allocation2 + $0xc1] sm:$0xff]
        %v3395 = vld [vmem:[#allocation2 + $0xc9] sm:$0xff]
        %v3396 = vld [vmem:[#allocation2 + $0xd1] sm:$0xff]
        %v3397 = vld [vmem:[#allocation2 + $0xd9] sm:$0xff]
        %v3398 = vld [vmem:[#allocation2 + $0xe1] sm:$0xff]
        %v3399 = vld [vmem:[#allocation2 + $0xe9] sm:$0xff]
        %v3400 = vld [vmem:[#allocation2 + $0xf1] sm:$0xff]
        %v3401 = vld [vmem:[#allocation2 + $0xf9] sm:$0xff]
        %v3402 = vld [vmem:[#allocation2 + $0x101] sm:$0xff]
        %v3403 = vld [vmem:[#allocation2 + $0x109] sm:$0xff]
        %v3404 = vld [vmem:[#allocation2 + $0x111] sm:$0xff]
        %v3405 = vld [vmem:[#allocation2 + $0x119] sm:$0xff]
        %v3406 = vld [vmem:[#allocation2 + $0x121] sm:$0xff]
        %v3407 = vld [vmem:[#allocation2 + $0x129] sm:$0xff]
        %v3408 = vld [vmem:[#allocation2 + $0x131] sm:$0xff]
        %v3409 = vld [vmem:[#allocation2 + $0x139] sm:$0xff]
        %v3410 = vld [vmem:[#allocation2 + $0x141] sm:$0xff]
        %v3411 = vld [vmem:[#allocation2 + $0x149] sm:$0xff]
        %v3412 = vld [vmem:[#allocation2 + $0x151] sm:$0xff]
        %v3413 = vld [vmem:[#allocation2 + $0x159] sm:$0xff]
        %v3414 = vld [vmem:[#allocation2 + $0x161] sm:$0xff]
        %v3415 = vld [vmem:[#allocation2 + $0x169] sm:$0xff]
        %v3416 = vld [vmem:[#allocation2 + $0x171] sm:$0xff]
        %v3417 = vld [vmem:[#allocation2 + $0x179] sm:$0xff]
        %v3418 = vld [vmem:[#allocation2 + $0x181] sm:$0xff]
        %v3419 = vld [vmem:[#allocation2 + $0x189] sm:$0xff]
        %v3420 = vld [vmem:[#allocation2 + $0x191] sm:$0xff]
        %v3421 = vld [vmem:[#allocation2 + $0x199] sm:$0xff]
        %v3422 = vld [vmem:[#allocation2 + $0x1a1] sm:$0xff]
        %v3423 = vld [vmem:[#allocation2 + $0x1a9] sm:$0xff]
        %s3424 = scalar_lea.vmem %s1, 7
        %v3425 = vld [vmem:[%s3424] sm:$0x1]
        %3427 = vset.pattern.permute.xlu0 0
        %3428 = vperm.xlu0 %3427, %v3376
        %v3429 = vpop.permute.xlu0 %3428
        %3432 = vset.pattern.permute.xlu0 0
        %3433 = vperm.xlu0 %3432, %v3377
        %v3434 = vpop.permute.xlu0 %3433
        %3437 = vset.pattern.permute.xlu0 0
        %3438 = vperm.xlu0 %3437, %v3378
        %v3439 = vpop.permute.xlu0 %3438
        %3442 = vset.pattern.permute.xlu0 0
        %3443 = vperm.xlu0 %3442, %v3379
        %v3444 = vpop.permute.xlu0 %3443
        %3447 = vset.pattern.permute.xlu0 0
        %3448 = vperm.xlu0 %3447, %v3380
        %v3449 = vpop.permute.xlu0 %3448
        %3452 = vset.pattern.permute.xlu0 0
        %3453 = vperm.xlu0 %3452, %v3381
        %v3454 = vpop.permute.xlu0 %3453
        %3457 = vset.pattern.permute.xlu0 0
        %3458 = vperm.xlu0 %3457, %v3382
        %v3459 = vpop.permute.xlu0 %3458
        %3462 = vset.pattern.permute.xlu0 0
        %3463 = vperm.xlu0 %3462, %v3383
        %v3464 = vpop.permute.xlu0 %3463
        %3467 = vset.pattern.permute.xlu0 0
        %3468 = vperm.xlu0 %3467, %v3384
        %v3469 = vpop.permute.xlu0 %3468
        %3472 = vset.pattern.permute.xlu0 0
        %3473 = vperm.xlu0 %3472, %v3385
        %v3474 = vpop.permute.xlu0 %3473
        %3477 = vset.pattern.permute.xlu0 0
        %3478 = vperm.xlu0 %3477, %v3386
        %v3479 = vpop.permute.xlu0 %3478
        %3482 = vset.pattern.permute.xlu0 0
        %3483 = vperm.xlu0 %3482, %v3387
        %v3484 = vpop.permute.xlu0 %3483
        %3487 = vset.pattern.permute.xlu0 0
        %3488 = vperm.xlu0 %3487, %v3388
        %v3489 = vpop.permute.xlu0 %3488
        %3492 = vset.pattern.permute.xlu0 0
        %3493 = vperm.xlu0 %3492, %v3389
        %v3494 = vpop.permute.xlu0 %3493
        %3497 = vset.pattern.permute.xlu0 0
        %3498 = vperm.xlu0 %3497, %v3390
        %v3499 = vpop.permute.xlu0 %3498
        %3502 = vset.pattern.permute.xlu0 0
        %3503 = vperm.xlu0 %3502, %v3391
        %v3504 = vpop.permute.xlu0 %3503
        %3507 = vset.pattern.permute.xlu0 0
        %3508 = vperm.xlu0 %3507, %v3392
        %v3509 = vpop.permute.xlu0 %3508
        %3512 = vset.pattern.permute.xlu0 0
        %3513 = vperm.xlu0 %3512, %v3393
        %v3514 = vpop.permute.xlu0 %3513
        %3517 = vset.pattern.permute.xlu0 0
        %3518 = vperm.xlu0 %3517, %v3394
        %v3519 = vpop.permute.xlu0 %3518
        %3522 = vset.pattern.permute.xlu0 0
        %3523 = vperm.xlu0 %3522, %v3395
        %v3524 = vpop.permute.xlu0 %3523
        %3527 = vset.pattern.permute.xlu0 0
        %3528 = vperm.xlu0 %3527, %v3396
        %v3529 = vpop.permute.xlu0 %3528
        %3532 = vset.pattern.permute.xlu0 0
        %3533 = vperm.xlu0 %3532, %v3397
        %v3534 = vpop.permute.xlu0 %3533
        %3537 = vset.pattern.permute.xlu0 0
        %3538 = vperm.xlu0 %3537, %v3398
        %v3539 = vpop.permute.xlu0 %3538
        %3542 = vset.pattern.permute.xlu0 0
        %3543 = vperm.xlu0 %3542, %v3399
        %v3544 = vpop.permute.xlu0 %3543
        %3547 = vset.pattern.permute.xlu0 0
        %3548 = vperm.xlu0 %3547, %v3400
        %v3549 = vpop.permute.xlu0 %3548
        %3552 = vset.pattern.permute.xlu0 0
        %3553 = vperm.xlu0 %3552, %v3401
        %v3554 = vpop.permute.xlu0 %3553
        %3557 = vset.pattern.permute.xlu0 0
        %3558 = vperm.xlu0 %3557, %v3402
        %v3559 = vpop.permute.xlu0 %3558
        %3562 = vset.pattern.permute.xlu0 0
        %3563 = vperm.xlu0 %3562, %v3403
        %v3564 = vpop.permute.xlu0 %3563
        %3567 = vset.pattern.permute.xlu0 0
        %3568 = vperm.xlu0 %3567, %v3404
        %v3569 = vpop.permute.xlu0 %3568
        %3572 = vset.pattern.permute.xlu0 0
        %3573 = vperm.xlu0 %3572, %v3405
        %v3574 = vpop.permute.xlu0 %3573
        %3577 = vset.pattern.permute.xlu0 0
        %3578 = vperm.xlu0 %3577, %v3406
        %v3579 = vpop.permute.xlu0 %3578
        %3582 = vset.pattern.permute.xlu0 0
        %3583 = vperm.xlu0 %3582, %v3407
        %v3584 = vpop.permute.xlu0 %3583
        %3587 = vset.pattern.permute.xlu0 0
        %3588 = vperm.xlu0 %3587, %v3408
        %v3589 = vpop.permute.xlu0 %3588
        %3592 = vset.pattern.permute.xlu0 0
        %3593 = vperm.xlu0 %3592, %v3409
        %v3594 = vpop.permute.xlu0 %3593
        %3597 = vset.pattern.permute.xlu0 0
        %3598 = vperm.xlu0 %3597, %v3410
        %v3599 = vpop.permute.xlu0 %3598
        %3602 = vset.pattern.permute.xlu0 0
        %3603 = vperm.xlu0 %3602, %v3411
        %v3604 = vpop.permute.xlu0 %3603
        %3607 = vset.pattern.permute.xlu0 0
        %3608 = vperm.xlu0 %3607, %v3412
        %v3609 = vpop.permute.xlu0 %3608
        %3612 = vset.pattern.permute.xlu0 0
        %3613 = vperm.xlu0 %3612, %v3413
        %v3614 = vpop.permute.xlu0 %3613
        %3617 = vset.pattern.permute.xlu0 0
        %3618 = vperm.xlu0 %3617, %v3414
        %v3619 = vpop.permute.xlu0 %3618
        %3622 = vset.pattern.permute.xlu0 0
        %3623 = vperm.xlu0 %3622, %v3415
        %v3624 = vpop.permute.xlu0 %3623
        %3627 = vset.pattern.permute.xlu0 0
        %3628 = vperm.xlu0 %3627, %v3416
        %v3629 = vpop.permute.xlu0 %3628
        %3632 = vset.pattern.permute.xlu0 0
        %3633 = vperm.xlu0 %3632, %v3417
        %v3634 = vpop.permute.xlu0 %3633
        %3637 = vset.pattern.permute.xlu0 0
        %3638 = vperm.xlu0 %3637, %v3418
        %v3639 = vpop.permute.xlu0 %3638
        %3642 = vset.pattern.permute.xlu0 0
        %3643 = vperm.xlu0 %3642, %v3419
        %v3644 = vpop.permute.xlu0 %3643
        %3647 = vset.pattern.permute.xlu0 0
        %3648 = vperm.xlu0 %3647, %v3420
        %v3649 = vpop.permute.xlu0 %3648
        %3652 = vset.pattern.permute.xlu0 0
        %3653 = vperm.xlu0 %3652, %v3421
        %v3654 = vpop.permute.xlu0 %3653
        %3657 = vset.pattern.permute.xlu0 0
        %3658 = vperm.xlu0 %3657, %v3422
        %v3659 = vpop.permute.xlu0 %3658
        %3662 = vset.pattern.permute.xlu0 0
        %3663 = vperm.xlu0 %3662, %v3423
        %v3664 = vpop.permute.xlu0 %3663
        %v3667 = vlaneseq
        %v3668 = vshrl.u32 %v3667, 7
        %v3669 = vsub.s32 0, %v3668
        %v3670 = vrot.slane %v3425, %v3669
        %v3672 = vmul.f32 %v3429, %v3670
        %v3673 = vmul.f32 %v3434, %v3670
        %v3674 = vmul.f32 %v3439, %v3670
        %v3675 = vmul.f32 %v3444, %v3670
        %v3676 = vmul.f32 %v3449, %v3670
        %v3677 = vmul.f32 %v3454, %v3670
        %v3678 = vmul.f32 %v3459, %v3670
        %v3679 = vmul.f32 %v3464, %v3670
        %v3680 = vmul.f32 %v3469, %v3670
        %v3681 = vmul.f32 %v3474, %v3670
        %v3682 = vmul.f32 %v3479, %v3670
        %v3683 = vmul.f32 %v3484, %v3670
        %v3684 = vmul.f32 %v3489, %v3670
        %v3685 = vmul.f32 %v3494, %v3670
        %v3686 = vmul.f32 %v3499, %v3670
        %v3687 = vmul.f32 %v3504, %v3670
        %v3688 = vmul.f32 %v3509, %v3670
        %v3689 = vmul.f32 %v3514, %v3670
        %v3690 = vmul.f32 %v3519, %v3670
        %v3691 = vmul.f32 %v3524, %v3670
        %v3692 = vmul.f32 %v3529, %v3670
        %v3693 = vmul.f32 %v3534, %v3670
        %v3694 = vmul.f32 %v3539, %v3670
        %v3695 = vmul.f32 %v3544, %v3670
        %v3696 = vmul.f32 %v3549, %v3670
        %v3697 = vmul.f32 %v3554, %v3670
        %v3698 = vmul.f32 %v3559, %v3670
        %v3699 = vmul.f32 %v3564, %v3670
        %v3700 = vmul.f32 %v3569, %v3670
        %v3701 = vmul.f32 %v3574, %v3670
        %v3702 = vmul.f32 %v3579, %v3670
        %v3703 = vmul.f32 %v3584, %v3670
        %v3704 = vmul.f32 %v3589, %v3670
        %v3705 = vmul.f32 %v3594, %v3670
        %v3706 = vmul.f32 %v3599, %v3670
        %v3707 = vmul.f32 %v3604, %v3670
        %v3708 = vmul.f32 %v3609, %v3670
        %v3709 = vmul.f32 %v3614, %v3670
        %v3710 = vmul.f32 %v3619, %v3670
        %v3711 = vmul.f32 %v3624, %v3670
        %v3712 = vmul.f32 %v3629, %v3670
        %v3713 = vmul.f32 %v3634, %v3670
        %v3714 = vmul.f32 %v3639, %v3670
        %v3715 = vmul.f32 %v3644, %v3670
        %v3716 = vmul.f32 %v3649, %v3670
        %v3717 = vmul.f32 %v3654, %v3670
        %v3718 = vmul.f32 %v3659, %v3670
        %v3719 = vmul.f32 %v3664, %v3670
        %v3720 = vadd.f32 %v3328, %v3672
        %v3721 = vadd.f32 %v3329, %v3673
        %v3722 = vadd.f32 %v3330, %v3674
        %v3723 = vadd.f32 %v3331, %v3675
        %v3724 = vadd.f32 %v3332, %v3676
        %v3725 = vadd.f32 %v3333, %v3677
        %v3726 = vadd.f32 %v3334, %v3678
        %v3727 = vadd.f32 %v3335, %v3679
        %v3728 = vadd.f32 %v3336, %v3680
        %v3729 = vadd.f32 %v3337, %v3681
        %v3730 = vadd.f32 %v3338, %v3682
        %v3731 = vadd.f32 %v3339, %v3683
        %v3732 = vadd.f32 %v3340, %v3684
        %v3733 = vadd.f32 %v3341, %v3685
        %v3734 = vadd.f32 %v3342, %v3686
        %v3735 = vadd.f32 %v3343, %v3687
        %v3736 = vadd.f32 %v3344, %v3688
        %v3737 = vadd.f32 %v3345, %v3689
        %v3738 = vadd.f32 %v3346, %v3690
        %v3739 = vadd.f32 %v3347, %v3691
        %v3740 = vadd.f32 %v3348, %v3692
        %v3741 = vadd.f32 %v3349, %v3693
        %v3742 = vadd.f32 %v3350, %v3694
        %v3743 = vadd.f32 %v3351, %v3695
        %v3744 = vadd.f32 %v3352, %v3696
        %v3745 = vadd.f32 %v3353, %v3697
        %v3746 = vadd.f32 %v3354, %v3698
        %v3747 = vadd.f32 %v3355, %v3699
        %v3748 = vadd.f32 %v3356, %v3700
        %v3749 = vadd.f32 %v3357, %v3701
        %v3750 = vadd.f32 %v3358, %v3702
        %v3751 = vadd.f32 %v3359, %v3703
        %v3752 = vadd.f32 %v3360, %v3704
        %v3753 = vadd.f32 %v3361, %v3705
        %v3754 = vadd.f32 %v3362, %v3706
        %v3755 = vadd.f32 %v3363, %v3707
        %v3756 = vadd.f32 %v3364, %v3708
        %v3757 = vadd.f32 %v3365, %v3709
        %v3758 = vadd.f32 %v3366, %v3710
        %v3759 = vadd.f32 %v3367, %v3711
        %v3760 = vadd.f32 %v3368, %v3712
        %v3761 = vadd.f32 %v3369, %v3713
        %v3762 = vadd.f32 %v3370, %v3714
        %v3763 = vadd.f32 %v3371, %v3715
        %v3764 = vadd.f32 %v3372, %v3716
        %v3765 = vadd.f32 %v3373, %v3717
        %v3766 = vadd.f32 %v3374, %v3718
        %v3767 = vadd.f32 %v3375, %v3719
        %v3768 = vld [vmem:[#allocation2 + $0x32] sm:$0xff]
        %v3769 = vld [vmem:[#allocation2 + $0x3a] sm:$0xff]
        %v3770 = vld [vmem:[#allocation2 + $0x42] sm:$0xff]
        %v3771 = vld [vmem:[#allocation2 + $0x4a] sm:$0xff]
        %v3772 = vld [vmem:[#allocation2 + $0x52] sm:$0xff]
        %v3773 = vld [vmem:[#allocation2 + $0x5a] sm:$0xff]
        %v3774 = vld [vmem:[#allocation2 + $0x62] sm:$0xff]
        %v3775 = vld [vmem:[#allocation2 + $0x6a] sm:$0xff]
        %v3776 = vld [vmem:[#allocation2 + $0x72] sm:$0xff]
        %v3777 = vld [vmem:[#allocation2 + $0x7a] sm:$0xff]
        %v3778 = vld [vmem:[#allocation2 + $0x82] sm:$0xff]
        %v3779 = vld [vmem:[#allocation2 + $0x8a] sm:$0xff]
        %v3780 = vld [vmem:[#allocation2 + $0x92] sm:$0xff]
        %v3781 = vld [vmem:[#allocation2 + $0x9a] sm:$0xff]
        %v3782 = vld [vmem:[#allocation2 + $0xa2] sm:$0xff]
        %v3783 = vld [vmem:[#allocation2 + $0xaa] sm:$0xff]
        %v3784 = vld [vmem:[#allocation2 + $0xb2] sm:$0xff]
        %v3785 = vld [vmem:[#allocation2 + $0xba] sm:$0xff]
        %v3786 = vld [vmem:[#allocation2 + $0xc2] sm:$0xff]
        %v3787 = vld [vmem:[#allocation2 + $0xca] sm:$0xff]
        %v3788 = vld [vmem:[#allocation2 + $0xd2] sm:$0xff]
        %v3789 = vld [vmem:[#allocation2 + $0xda] sm:$0xff]
        %v3790 = vld [vmem:[#allocation2 + $0xe2] sm:$0xff]
        %v3791 = vld [vmem:[#allocation2 + $0xea] sm:$0xff]
        %v3792 = vld [vmem:[#allocation2 + $0xf2] sm:$0xff]
        %v3793 = vld [vmem:[#allocation2 + $0xfa] sm:$0xff]
        %v3794 = vld [vmem:[#allocation2 + $0x102] sm:$0xff]
        %v3795 = vld [vmem:[#allocation2 + $0x10a] sm:$0xff]
        %v3796 = vld [vmem:[#allocation2 + $0x112] sm:$0xff]
        %v3797 = vld [vmem:[#allocation2 + $0x11a] sm:$0xff]
        %v3798 = vld [vmem:[#allocation2 + $0x122] sm:$0xff]
        %v3799 = vld [vmem:[#allocation2 + $0x12a] sm:$0xff]
        %v3800 = vld [vmem:[#allocation2 + $0x132] sm:$0xff]
        %v3801 = vld [vmem:[#allocation2 + $0x13a] sm:$0xff]
        %v3802 = vld [vmem:[#allocation2 + $0x142] sm:$0xff]
        %v3803 = vld [vmem:[#allocation2 + $0x14a] sm:$0xff]
        %v3804 = vld [vmem:[#allocation2 + $0x152] sm:$0xff]
        %v3805 = vld [vmem:[#allocation2 + $0x15a] sm:$0xff]
        %v3806 = vld [vmem:[#allocation2 + $0x162] sm:$0xff]
        %v3807 = vld [vmem:[#allocation2 + $0x16a] sm:$0xff]
        %v3808 = vld [vmem:[#allocation2 + $0x172] sm:$0xff]
        %v3809 = vld [vmem:[#allocation2 + $0x17a] sm:$0xff]
        %v3810 = vld [vmem:[#allocation2 + $0x182] sm:$0xff]
        %v3811 = vld [vmem:[#allocation2 + $0x18a] sm:$0xff]
        %v3812 = vld [vmem:[#allocation2 + $0x192] sm:$0xff]
        %v3813 = vld [vmem:[#allocation2 + $0x19a] sm:$0xff]
        %v3814 = vld [vmem:[#allocation2 + $0x1a2] sm:$0xff]
        %v3815 = vld [vmem:[#allocation2 + $0x1aa] sm:$0xff]
        %s3816 = scalar_lea.vmem %s1, 8
        %v3817 = vld [vmem:[%s3816] sm:$0x1]
        %3819 = vset.pattern.permute.xlu0 0
        %3820 = vperm.xlu0 %3819, %v3768
        %v3821 = vpop.permute.xlu0 %3820
        %3824 = vset.pattern.permute.xlu0 0
        %3825 = vperm.xlu0 %3824, %v3769
        %v3826 = vpop.permute.xlu0 %3825
        %3829 = vset.pattern.permute.xlu0 0
        %3830 = vperm.xlu0 %3829, %v3770
        %v3831 = vpop.permute.xlu0 %3830
        %3834 = vset.pattern.permute.xlu0 0
        %3835 = vperm.xlu0 %3834, %v3771
        %v3836 = vpop.permute.xlu0 %3835
        %3839 = vset.pattern.permute.xlu0 0
        %3840 = vperm.xlu0 %3839, %v3772
        %v3841 = vpop.permute.xlu0 %3840
        %3844 = vset.pattern.permute.xlu0 0
        %3845 = vperm.xlu0 %3844, %v3773
        %v3846 = vpop.permute.xlu0 %3845
        %3849 = vset.pattern.permute.xlu0 0
        %3850 = vperm.xlu0 %3849, %v3774
        %v3851 = vpop.permute.xlu0 %3850
        %3854 = vset.pattern.permute.xlu0 0
        %3855 = vperm.xlu0 %3854, %v3775
        %v3856 = vpop.permute.xlu0 %3855
        %3859 = vset.pattern.permute.xlu0 0
        %3860 = vperm.xlu0 %3859, %v3776
        %v3861 = vpop.permute.xlu0 %3860
        %3864 = vset.pattern.permute.xlu0 0
        %3865 = vperm.xlu0 %3864, %v3777
        %v3866 = vpop.permute.xlu0 %3865
        %3869 = vset.pattern.permute.xlu0 0
        %3870 = vperm.xlu0 %3869, %v3778
        %v3871 = vpop.permute.xlu0 %3870
        %3874 = vset.pattern.permute.xlu0 0
        %3875 = vperm.xlu0 %3874, %v3779
        %v3876 = vpop.permute.xlu0 %3875
        %3879 = vset.pattern.permute.xlu0 0
        %3880 = vperm.xlu0 %3879, %v3780
        %v3881 = vpop.permute.xlu0 %3880
        %3884 = vset.pattern.permute.xlu0 0
        %3885 = vperm.xlu0 %3884, %v3781
        %v3886 = vpop.permute.xlu0 %3885
        %3889 = vset.pattern.permute.xlu0 0
        %3890 = vperm.xlu0 %3889, %v3782
        %v3891 = vpop.permute.xlu0 %3890
        %3894 = vset.pattern.permute.xlu0 0
        %3895 = vperm.xlu0 %3894, %v3783
        %v3896 = vpop.permute.xlu0 %3895
        %3899 = vset.pattern.permute.xlu0 0
        %3900 = vperm.xlu0 %3899, %v3784
        %v3901 = vpop.permute.xlu0 %3900
        %3904 = vset.pattern.permute.xlu0 0
        %3905 = vperm.xlu0 %3904, %v3785
        %v3906 = vpop.permute.xlu0 %3905
        %3909 = vset.pattern.permute.xlu0 0
        %3910 = vperm.xlu0 %3909, %v3786
        %v3911 = vpop.permute.xlu0 %3910
        %3914 = vset.pattern.permute.xlu0 0
        %3915 = vperm.xlu0 %3914, %v3787
        %v3916 = vpop.permute.xlu0 %3915
        %3919 = vset.pattern.permute.xlu0 0
        %3920 = vperm.xlu0 %3919, %v3788
        %v3921 = vpop.permute.xlu0 %3920
        %3924 = vset.pattern.permute.xlu0 0
        %3925 = vperm.xlu0 %3924, %v3789
        %v3926 = vpop.permute.xlu0 %3925
        %3929 = vset.pattern.permute.xlu0 0
        %3930 = vperm.xlu0 %3929, %v3790
        %v3931 = vpop.permute.xlu0 %3930
        %3934 = vset.pattern.permute.xlu0 0
        %3935 = vperm.xlu0 %3934, %v3791
        %v3936 = vpop.permute.xlu0 %3935
        %3939 = vset.pattern.permute.xlu0 0
        %3940 = vperm.xlu0 %3939, %v3792
        %v3941 = vpop.permute.xlu0 %3940
        %3944 = vset.pattern.permute.xlu0 0
        %3945 = vperm.xlu0 %3944, %v3793
        %v3946 = vpop.permute.xlu0 %3945
        %3949 = vset.pattern.permute.xlu0 0
        %3950 = vperm.xlu0 %3949, %v3794
        %v3951 = vpop.permute.xlu0 %3950
        %3954 = vset.pattern.permute.xlu0 0
        %3955 = vperm.xlu0 %3954, %v3795
        %v3956 = vpop.permute.xlu0 %3955
        %3959 = vset.pattern.permute.xlu0 0
        %3960 = vperm.xlu0 %3959, %v3796
        %v3961 = vpop.permute.xlu0 %3960
        %3964 = vset.pattern.permute.xlu0 0
        %3965 = vperm.xlu0 %3964, %v3797
        %v3966 = vpop.permute.xlu0 %3965
        %3969 = vset.pattern.permute.xlu0 0
        %3970 = vperm.xlu0 %3969, %v3798
        %v3971 = vpop.permute.xlu0 %3970
        %3974 = vset.pattern.permute.xlu0 0
        %3975 = vperm.xlu0 %3974, %v3799
        %v3976 = vpop.permute.xlu0 %3975
        %3979 = vset.pattern.permute.xlu0 0
        %3980 = vperm.xlu0 %3979, %v3800
        %v3981 = vpop.permute.xlu0 %3980
        %3984 = vset.pattern.permute.xlu0 0
        %3985 = vperm.xlu0 %3984, %v3801
        %v3986 = vpop.permute.xlu0 %3985
        %3989 = vset.pattern.permute.xlu0 0
        %3990 = vperm.xlu0 %3989, %v3802
        %v3991 = vpop.permute.xlu0 %3990
        %3994 = vset.pattern.permute.xlu0 0
        %3995 = vperm.xlu0 %3994, %v3803
        %v3996 = vpop.permute.xlu0 %3995
        %3999 = vset.pattern.permute.xlu0 0
        %4000 = vperm.xlu0 %3999, %v3804
        %v4001 = vpop.permute.xlu0 %4000
        %4004 = vset.pattern.permute.xlu0 0
        %4005 = vperm.xlu0 %4004, %v3805
        %v4006 = vpop.permute.xlu0 %4005
        %4009 = vset.pattern.permute.xlu0 0
        %4010 = vperm.xlu0 %4009, %v3806
        %v4011 = vpop.permute.xlu0 %4010
        %4014 = vset.pattern.permute.xlu0 0
        %4015 = vperm.xlu0 %4014, %v3807
        %v4016 = vpop.permute.xlu0 %4015
        %4019 = vset.pattern.permute.xlu0 0
        %4020 = vperm.xlu0 %4019, %v3808
        %v4021 = vpop.permute.xlu0 %4020
        %4024 = vset.pattern.permute.xlu0 0
        %4025 = vperm.xlu0 %4024, %v3809
        %v4026 = vpop.permute.xlu0 %4025
        %4029 = vset.pattern.permute.xlu0 0
        %4030 = vperm.xlu0 %4029, %v3810
        %v4031 = vpop.permute.xlu0 %4030
        %4034 = vset.pattern.permute.xlu0 0
        %4035 = vperm.xlu0 %4034, %v3811
        %v4036 = vpop.permute.xlu0 %4035
        %4039 = vset.pattern.permute.xlu0 0
        %4040 = vperm.xlu0 %4039, %v3812
        %v4041 = vpop.permute.xlu0 %4040
        %4044 = vset.pattern.permute.xlu0 0
        %4045 = vperm.xlu0 %4044, %v3813
        %v4046 = vpop.permute.xlu0 %4045
        %4049 = vset.pattern.permute.xlu0 0
        %4050 = vperm.xlu0 %4049, %v3814
        %v4051 = vpop.permute.xlu0 %4050
        %4054 = vset.pattern.permute.xlu0 0
        %4055 = vperm.xlu0 %4054, %v3815
        %v4056 = vpop.permute.xlu0 %4055
        %v4059 = vlaneseq
        %v4060 = vshrl.u32 %v4059, 7
        %v4061 = vsub.s32 0, %v4060
        %v4062 = vrot.slane %v3817, %v4061
        %v4064 = vmul.f32 %v3821, %v4062
        %v4065 = vmul.f32 %v3826, %v4062
        %v4066 = vmul.f32 %v3831, %v4062
        %v4067 = vmul.f32 %v3836, %v4062
        %v4068 = vmul.f32 %v3841, %v4062
        %v4069 = vmul.f32 %v3846, %v4062
        %v4070 = vmul.f32 %v3851, %v4062
        %v4071 = vmul.f32 %v3856, %v4062
        %v4072 = vmul.f32 %v3861, %v4062
        %v4073 = vmul.f32 %v3866, %v4062
        %v4074 = vmul.f32 %v3871, %v4062
        %v4075 = vmul.f32 %v3876, %v4062
        %v4076 = vmul.f32 %v3881, %v4062
        %v4077 = vmul.f32 %v3886, %v4062
        %v4078 = vmul.f32 %v3891, %v4062
        %v4079 = vmul.f32 %v3896, %v4062
        %v4080 = vmul.f32 %v3901, %v4062
        %v4081 = vmul.f32 %v3906, %v4062
        %v4082 = vmul.f32 %v3911, %v4062
        %v4083 = vmul.f32 %v3916, %v4062
        %v4084 = vmul.f32 %v3921, %v4062
        %v4085 = vmul.f32 %v3926, %v4062
        %v4086 = vmul.f32 %v3931, %v4062
        %v4087 = vmul.f32 %v3936, %v4062
        %v4088 = vmul.f32 %v3941, %v4062
        %v4089 = vmul.f32 %v3946, %v4062
        %v4090 = vmul.f32 %v3951, %v4062
        %v4091 = vmul.f32 %v3956, %v4062
        %v4092 = vmul.f32 %v3961, %v4062
        %v4093 = vmul.f32 %v3966, %v4062
        %v4094 = vmul.f32 %v3971, %v4062
        %v4095 = vmul.f32 %v3976, %v4062
        %v4096 = vmul.f32 %v3981, %v4062
        %v4097 = vmul.f32 %v3986, %v4062
        %v4098 = vmul.f32 %v3991, %v4062
        %v4099 = vmul.f32 %v3996, %v4062
        %v4100 = vmul.f32 %v4001, %v4062
        %v4101 = vmul.f32 %v4006, %v4062
        %v4102 = vmul.f32 %v4011, %v4062
        %v4103 = vmul.f32 %v4016, %v4062
        %v4104 = vmul.f32 %v4021, %v4062
        %v4105 = vmul.f32 %v4026, %v4062
        %v4106 = vmul.f32 %v4031, %v4062
        %v4107 = vmul.f32 %v4036, %v4062
        %v4108 = vmul.f32 %v4041, %v4062
        %v4109 = vmul.f32 %v4046, %v4062
        %v4110 = vmul.f32 %v4051, %v4062
        %v4111 = vmul.f32 %v4056, %v4062
        %v4112 = vadd.f32 %v3720, %v4064
        %v4113 = vadd.f32 %v3721, %v4065
        %v4114 = vadd.f32 %v3722, %v4066
        %v4115 = vadd.f32 %v3723, %v4067
        %v4116 = vadd.f32 %v3724, %v4068
        %v4117 = vadd.f32 %v3725, %v4069
        %v4118 = vadd.f32 %v3726, %v4070
        %v4119 = vadd.f32 %v3727, %v4071
        %v4120 = vadd.f32 %v3728, %v4072
        %v4121 = vadd.f32 %v3729, %v4073
        %v4122 = vadd.f32 %v3730, %v4074
        %v4123 = vadd.f32 %v3731, %v4075
        %v4124 = vadd.f32 %v3732, %v4076
        %v4125 = vadd.f32 %v3733, %v4077
        %v4126 = vadd.f32 %v3734, %v4078
        %v4127 = vadd.f32 %v3735, %v4079
        %v4128 = vadd.f32 %v3736, %v4080
        %v4129 = vadd.f32 %v3737, %v4081
        %v4130 = vadd.f32 %v3738, %v4082
        %v4131 = vadd.f32 %v3739, %v4083
        %v4132 = vadd.f32 %v3740, %v4084
        %v4133 = vadd.f32 %v3741, %v4085
        %v4134 = vadd.f32 %v3742, %v4086
        %v4135 = vadd.f32 %v3743, %v4087
        %v4136 = vadd.f32 %v3744, %v4088
        %v4137 = vadd.f32 %v3745, %v4089
        %v4138 = vadd.f32 %v3746, %v4090
        %v4139 = vadd.f32 %v3747, %v4091
        %v4140 = vadd.f32 %v3748, %v4092
        %v4141 = vadd.f32 %v3749, %v4093
        %v4142 = vadd.f32 %v3750, %v4094
        %v4143 = vadd.f32 %v3751, %v4095
        %v4144 = vadd.f32 %v3752, %v4096
        %v4145 = vadd.f32 %v3753, %v4097
        %v4146 = vadd.f32 %v3754, %v4098
        %v4147 = vadd.f32 %v3755, %v4099
        %v4148 = vadd.f32 %v3756, %v4100
        %v4149 = vadd.f32 %v3757, %v4101
        %v4150 = vadd.f32 %v3758, %v4102
        %v4151 = vadd.f32 %v3759, %v4103
        %v4152 = vadd.f32 %v3760, %v4104
        %v4153 = vadd.f32 %v3761, %v4105
        %v4154 = vadd.f32 %v3762, %v4106
        %v4155 = vadd.f32 %v3763, %v4107
        %v4156 = vadd.f32 %v3764, %v4108
        %v4157 = vadd.f32 %v3765, %v4109
        %v4158 = vadd.f32 %v3766, %v4110
        %v4159 = vadd.f32 %v3767, %v4111
        %v4160 = vld [vmem:[%s2] sm:$0x1]
        %v4162 = vlaneseq
        %v4163 = vshrl.u32 %v4162, 7
        %v4164 = vsub.s32 0, %v4163
        %v4165 = vrot.slane %v4160, %v4164
        %v4167 = vadd.f32 %v4112, %v4165
        %v4168 = vadd.f32 %v4113, %v4165
        %v4169 = vadd.f32 %v4114, %v4165
        %v4170 = vadd.f32 %v4115, %v4165
        %v4171 = vadd.f32 %v4116, %v4165
        %v4172 = vadd.f32 %v4117, %v4165
        %v4173 = vadd.f32 %v4118, %v4165
        %v4174 = vadd.f32 %v4119, %v4165
        %v4175 = vadd.f32 %v4120, %v4165
        %v4176 = vadd.f32 %v4121, %v4165
        %v4177 = vadd.f32 %v4122, %v4165
        %v4178 = vadd.f32 %v4123, %v4165
        %v4179 = vadd.f32 %v4124, %v4165
        %v4180 = vadd.f32 %v4125, %v4165
        %v4181 = vadd.f32 %v4126, %v4165
        %v4182 = vadd.f32 %v4127, %v4165
        %v4183 = vadd.f32 %v4128, %v4165
        %v4184 = vadd.f32 %v4129, %v4165
        %v4185 = vadd.f32 %v4130, %v4165
        %v4186 = vadd.f32 %v4131, %v4165
        %v4187 = vadd.f32 %v4132, %v4165
        %v4188 = vadd.f32 %v4133, %v4165
        %v4189 = vadd.f32 %v4134, %v4165
        %v4190 = vadd.f32 %v4135, %v4165
        %v4191 = vadd.f32 %v4136, %v4165
        %v4192 = vadd.f32 %v4137, %v4165
        %v4193 = vadd.f32 %v4138, %v4165
        %v4194 = vadd.f32 %v4139, %v4165
        %v4195 = vadd.f32 %v4140, %v4165
        %v4196 = vadd.f32 %v4141, %v4165
        %v4197 = vadd.f32 %v4142, %v4165
        %v4198 = vadd.f32 %v4143, %v4165
        %v4199 = vadd.f32 %v4144, %v4165
        %v4200 = vadd.f32 %v4145, %v4165
        %v4201 = vadd.f32 %v4146, %v4165
        %v4202 = vadd.f32 %v4147, %v4165
        %v4203 = vadd.f32 %v4148, %v4165
        %v4204 = vadd.f32 %v4149, %v4165
        %v4205 = vadd.f32 %v4150, %v4165
        %v4206 = vadd.f32 %v4151, %v4165
        %v4207 = vadd.f32 %v4152, %v4165
        %v4208 = vadd.f32 %v4153, %v4165
        %v4209 = vadd.f32 %v4154, %v4165
        %v4210 = vadd.f32 %v4155, %v4165
        %v4211 = vadd.f32 %v4156, %v4165
        %v4212 = vadd.f32 %v4157, %v4165
        %v4213 = vadd.f32 %v4158, %v4165
        %v4214 = vadd.f32 %v4159, %v4165
        %v4215 = vmax.f32 %v4167, 0.0
        %v4216 = vmax.f32 %v4168, 0.0
        %v4217 = vmax.f32 %v4169, 0.0
        %v4218 = vmax.f32 %v4170, 0.0
        %v4219 = vmax.f32 %v4171, 0.0
        %v4220 = vmax.f32 %v4172, 0.0
        %v4221 = vmax.f32 %v4173, 0.0
        %v4222 = vmax.f32 %v4174, 0.0
        %v4223 = vmax.f32 %v4175, 0.0
        %v4224 = vmax.f32 %v4176, 0.0
        %v4225 = vmax.f32 %v4177, 0.0
        %v4226 = vmax.f32 %v4178, 0.0
        %v4227 = vmax.f32 %v4179, 0.0
        %v4228 = vmax.f32 %v4180, 0.0
        %v4229 = vmax.f32 %v4181, 0.0
        %v4230 = vmax.f32 %v4182, 0.0
        %v4231 = vmax.f32 %v4183, 0.0
        %v4232 = vmax.f32 %v4184, 0.0
        %v4233 = vmax.f32 %v4185, 0.0
        %v4234 = vmax.f32 %v4186, 0.0
        %v4235 = vmax.f32 %v4187, 0.0
        %v4236 = vmax.f32 %v4188, 0.0
        %v4237 = vmax.f32 %v4189, 0.0
        %v4238 = vmax.f32 %v4190, 0.0
        %v4239 = vmax.f32 %v4191, 0.0
        %v4240 = vmax.f32 %v4192, 0.0
        %v4241 = vmax.f32 %v4193, 0.0
        %v4242 = vmax.f32 %v4194, 0.0
        %v4243 = vmax.f32 %v4195, 0.0
        %v4244 = vmax.f32 %v4196, 0.0
        %v4245 = vmax.f32 %v4197, 0.0
        %v4246 = vmax.f32 %v4198, 0.0
        %v4247 = vmax.f32 %v4199, 0.0
        %v4248 = vmax.f32 %v4200, 0.0
        %v4249 = vmax.f32 %v4201, 0.0
        %v4250 = vmax.f32 %v4202, 0.0
        %v4251 = vmax.f32 %v4203, 0.0
        %v4252 = vmax.f32 %v4204, 0.0
        %v4253 = vmax.f32 %v4205, 0.0
        %v4254 = vmax.f32 %v4206, 0.0
        %v4255 = vmax.f32 %v4207, 0.0
        %v4256 = vmax.f32 %v4208, 0.0
        %v4257 = vmax.f32 %v4209, 0.0
        %v4258 = vmax.f32 %v4210, 0.0
        %v4259 = vmax.f32 %v4211, 0.0
        %v4260 = vmax.f32 %v4212, 0.0
        %v4261 = vmax.f32 %v4213, 0.0
        %v4262 = vmax.f32 %v4214, 0.0
        %v4263 = vld [vmem:[%s11] sm:$0xff]
        %v4264 = vld [vmem:[%s11 + $0x8] sm:$0xff]
        %v4265 = vld [vmem:[%s11 + $0x10] sm:$0xff]
        %v4266 = vld [vmem:[%s11 + $0x18] sm:$0xff]
        %v4267 = vld [vmem:[%s11 + $0x20] sm:$0xff]
        %v4268 = vld [vmem:[%s11 + $0x28] sm:$0xff]
        %v4269 = vld [vmem:[%s11 + $0x30] sm:$0xff]
        %v4270 = vld [vmem:[%s11 + $0x38] sm:$0xff]
        %v4271 = vld [vmem:[%s11 + $0x40] sm:$0xff]
        %v4272 = vld [vmem:[%s11 + $0x48] sm:$0xff]
        %v4273 = vld [vmem:[%s11 + $0x50] sm:$0xff]
        %v4274 = vld [vmem:[%s11 + $0x58] sm:$0xff]
        %v4275 = vld [vmem:[%s11 + $0x60] sm:$0xff]
        %v4276 = vld [vmem:[%s11 + $0x68] sm:$0xff]
        %v4277 = vld [vmem:[%s11 + $0x70] sm:$0xff]
        %v4278 = vld [vmem:[%s11 + $0x78] sm:$0xff]
        %v4279 = vld [vmem:[%s11 + $0x80] sm:$0xff]
        %v4280 = vld [vmem:[%s11 + $0x88] sm:$0xff]
        %v4281 = vld [vmem:[%s11 + $0x90] sm:$0xff]
        %v4282 = vld [vmem:[%s11 + $0x98] sm:$0xff]
        %v4283 = vld [vmem:[%s11 + $0xa0] sm:$0xff]
        %v4284 = vld [vmem:[%s11 + $0xa8] sm:$0xff]
        %v4285 = vld [vmem:[%s11 + $0xb0] sm:$0xff]
        %v4286 = vld [vmem:[%s11 + $0xb8] sm:$0xff]
        %4287 = vmatprep.subr.mxu0 0.0
        %4288 = vmatpush1.msra.mxu0 %v4215
        %4289 = vmatprep.subr.mxu0 0.0
        %4290 = vmatpush1.msra.mxu0 %v4216
        %4291 = vmatprep.subr.mxu0 0.0
        %4292 = vmatpush1.msra.mxu0 %v4217
        %4293 = vmatprep.subr.mxu0 0.0
        %4294 = vmatpush1.msra.mxu0 %v4218
        %4295 = vmatprep.subr.mxu0 0.0
        %4296 = vmatpush1.msra.mxu0 %v4219
        %4297 = vmatprep.subr.mxu0 0.0
        %4298 = vmatpush1.msra.mxu0 %v4220
        %4299 = vmatprep.subr.mxu0 0.0
        %4300 = vmatpush1.msra.mxu0 %v4221
        %4301 = vmatprep.subr.mxu0 0.0
        %4302 = vmatpush1.msra.mxu0 %v4222
        %4303 = vmatprep.subr.mxu0 0.0
        %4304 = vmatpush1.msra.mxu0 %v4223
        %4305 = vmatprep.subr.mxu0 0.0
        %4306 = vmatpush1.msra.mxu0 %v4224
        %4307 = vmatprep.subr.mxu0 0.0
        %4308 = vmatpush1.msra.mxu0 %v4225
        %4309 = vmatprep.subr.mxu0 0.0
        %4310 = vmatpush1.msra.mxu0 %v4226
        %4311 = vmatprep.subr.mxu0 0.0
        %4312 = vmatpush1.msra.mxu0 %v4227
        %4313 = vmatprep.subr.mxu0 0.0
        %4314 = vmatpush1.msra.mxu0 %v4228
        %4315 = vmatprep.subr.mxu0 0.0
        %4316 = vmatpush1.msra.mxu0 %v4229
        %4317 = vmatprep.subr.mxu0 0.0
        %4318 = vmatpush1.msra.mxu0 %v4230
        %4319 = vmatprep.subr.mxu0 0.0
        %4320 = vmatpush1.msra.mxu0 %v4231
        %4321 = vmatprep.subr.mxu0 0.0
        %4322 = vmatpush1.msra.mxu0 %v4232
        %4323 = vmatprep.subr.mxu0 0.0
        %4324 = vmatpush1.msra.mxu0 %v4233
        %4325 = vmatprep.subr.mxu0 0.0
        %4326 = vmatpush1.msra.mxu0 %v4234
        %4327 = vmatprep.subr.mxu0 0.0
        %4328 = vmatpush1.msra.mxu0 %v4235
        %4329 = vmatprep.subr.mxu0 0.0
        %4330 = vmatpush1.msra.mxu0 %v4236
        %4331 = vmatprep.subr.mxu0 0.0
        %4332 = vmatpush1.msra.mxu0 %v4237
        %4333 = vmatprep.subr.mxu0 0.0
        %4334 = vmatpush1.msra.mxu0 %v4238
        %4335 = vmatprep.subr.mxu0 0.0
        %4336 = vmatpush1.msra.mxu0 %v4239
        %4337 = vmatprep.subr.mxu0 0.0
        %4338 = vmatpush1.msra.mxu0 %v4240
        %4339 = vmatprep.subr.mxu0 0.0
        %4340 = vmatpush1.msra.mxu0 %v4241
        %4341 = vmatprep.subr.mxu0 0.0
        %4342 = vmatpush1.msra.mxu0 %v4242
        %4343 = vmatprep.subr.mxu0 0.0
        %4344 = vmatpush1.msra.mxu0 %v4243
        %4345 = vmatprep.subr.mxu0 0.0
        %4346 = vmatpush1.msra.mxu0 %v4244
        %4347 = vmatprep.subr.mxu0 0.0
        %4348 = vmatpush1.msra.mxu0 %v4245
        %4349 = vmatprep.subr.mxu0 0.0
        %4350 = vmatpush1.msra.mxu0 %v4246
        %4351 = vmatprep.mubr.f32.mxu0 %v4264
        %4352 = vmatmul.mubr.f32.gmra.mrb[0].mxu0 %v4263
        %v4353 = vpop.f32.mrb[0].mxu0
        %v4354 = vadd.f32 0.0, %v4353
        %v4355 = vpop.f32.mrb[0].mxu0
        %4356 = vmatprep.mubr.f32.mxu0 %v4267
        %4357 = vmatmul.mubr.f32.gmra.mrb[0].mxu0 %v4266
        %v4358 = vpop.f32.mrb[0].mxu0
        %v4359 = vadd.f32 0.0, %v4358
        %v4360 = vpop.f32.mrb[0].mxu0
        %4361 = vmatprep.mubr.f32.mxu0 %v4270
        %4362 = vmatmul.mubr.f32.gmra.mrb[0].mxu0 %v4269
        %v4363 = vpop.f32.mrb[0].mxu0
        %v4364 = vadd.f32 0.0, %v4363
        %v4365 = vpop.f32.mrb[0].mxu0
        %4366 = vmatprep.mubr.f32.mxu0 %v4273
        %4367 = vmatmul.mubr.f32.gmra.mrb[0].mxu0 %v4272
        %v4368 = vpop.f32.mrb[0].mxu0
        %v4369 = vadd.f32 0.0, %v4368
        %v4370 = vpop.f32.mrb[0].mxu0
        %4371 = vmatprep.mubr.f32.mxu0 %v4276
        %4372 = vmatmul.mubr.f32.gmra.mrb[0].mxu0 %v4275
        %v4373 = vpop.f32.mrb[0].mxu0
        %v4374 = vadd.f32 0.0, %v4373
        %v4375 = vpop.f32.mrb[0].mxu0
        %4376 = vmatprep.mubr.f32.mxu0 %v4279
        %4377 = vmatmul.mubr.f32.gmra.mrb[0].mxu0 %v4278
        %v4378 = vpop.f32.mrb[0].mxu0
        %v4379 = vadd.f32 0.0, %v4378
        %v4380 = vpop.f32.mrb[0].mxu0
        %4381 = vmatprep.mubr.f32.mxu0 %v4282
        %4382 = vmatmul.mubr.f32.gmra.mrb[0].mxu0 %v4281
        %v4383 = vpop.f32.mrb[0].mxu0
        %v4384 = vadd.f32 0.0, %v4383
        %v4385 = vpop.f32.mrb[0].mxu0
        %4386 = vmatprep.mubr.f32.mxu0 %v4285
        %4387 = vmatmul.mubr.f32.gmra.mrb[0].mxu0 %v4284
        %v4388 = vpop.f32.mrb[0].mxu0
        %v4389 = vadd.f32 0.0, %v4388
        %v4390 = vpop.f32.mrb[0].mxu0
        %4391 = vdwg.mxu0
        %4392 = vmatprep.subr.mxu0 0.0
        %4393 = vmatpush1.msra.mxu0 %v4247
        %4394 = vmatprep.subr.mxu0 0.0
        %4395 = vmatpush1.msra.mxu0 %v4248
        %4396 = vmatprep.subr.mxu0 0.0
        %4397 = vmatpush1.msra.mxu0 %v4249
        %4398 = vmatprep.subr.mxu0 0.0
        %4399 = vmatpush1.msra.mxu0 %v4250
        %4400 = vmatprep.subr.mxu0 0.0
        %4401 = vmatpush1.msra.mxu0 %v4251
        %4402 = vmatprep.subr.mxu0 0.0
        %4403 = vmatpush1.msra.mxu0 %v4252
        %4404 = vmatprep.subr.mxu0 0.0
        %4405 = vmatpush1.msra.mxu0 %v4253
        %4406 = vmatprep.subr.mxu0 0.0
        %4407 = vmatpush1.msra.mxu0 %v4254
        %4408 = vmatprep.subr.mxu0 0.0
        %4409 = vmatpush1.msra.mxu0 %v4255
        %4410 = vmatprep.subr.mxu0 0.0
        %4411 = vmatpush1.msra.mxu0 %v4256
        %4412 = vmatprep.subr.mxu0 0.0
        %4413 = vmatpush1.msra.mxu0 %v4257
        %4414 = vmatprep.subr.mxu0 0.0
        %4415 = vmatpush1.msra.mxu0 %v4258
        %4416 = vmatprep.subr.mxu0 0.0
        %4417 = vmatpush1.msra.mxu0 %v4259
        %4418 = vmatprep.subr.mxu0 0.0
        %4419 = vmatpush1.msra.mxu0 %v4260
        %4420 = vmatprep.subr.mxu0 0.0
        %4421 = vmatpush1.msra.mxu0 %v4261
        %4422 = vmatprep.subr.mxu0 0.0
        %4423 = vmatpush1.msra.mxu0 %v4262
        %4424 = vmatprep.subr.mxu0 0.0
        %4425 = vmatpush1.msra.mxu0 0.0
        %4426 = vmatprep.subr.mxu0 0.0
        %4427 = vmatpush1.msra.mxu0 0.0
        %4428 = vmatprep.subr.mxu0 0.0
        %4429 = vmatpush1.msra.mxu0 0.0
        %4430 = vmatprep.subr.mxu0 0.0
        %4431 = vmatpush1.msra.mxu0 0.0
        %4432 = vmatprep.subr.mxu0 0.0
        %4433 = vmatpush1.msra.mxu0 0.0
        %4434 = vmatprep.subr.mxu0 0.0
        %4435 = vmatpush1.msra.mxu0 0.0
        %4436 = vmatprep.subr.mxu0 0.0
        %4437 = vmatpush1.msra.mxu0 0.0
        %4438 = vmatprep.subr.mxu0 0.0
        %4439 = vmatpush1.msra.mxu0 0.0
        %4440 = vmatprep.subr.mxu0 0.0
        %4441 = vmatpush1.msra.mxu0 0.0
        %4442 = vmatprep.subr.mxu0 0.0
        %4443 = vmatpush1.msra.mxu0 0.0
        %4444 = vmatprep.subr.mxu0 0.0
        %4445 = vmatpush1.msra.mxu0 0.0
        %4446 = vmatprep.subr.mxu0 0.0
        %4447 = vmatpush1.msra.mxu0 0.0
        %4448 = vmatprep.subr.mxu0 0.0
        %4449 = vmatpush1.msra.mxu0 0.0
        %4450 = vmatprep.subr.mxu0 0.0
        %4451 = vmatpush1.msra.mxu0 0.0
        %4452 = vmatprep.subr.mxu0 0.0
        %4453 = vmatpush1.msra.mxu0 0.0
        %4454 = vmatprep.subr.mxu0 0.0
        %4455 = vmatpush1.msra.mxu0 0.0
        %4456 = vmatprep.mubr.f32.mxu0 0.0
        %4457 = vmatmul.mubr.f32.gmra.mrb[0].mxu0 %v4265
        %v4458 = vpop.f32.mrb[0].mxu0
        %v4459 = vadd.f32 %v4354, %v4458
        %v4460 = vpop.f32.mrb[0].mxu0
        %4461 = vmatprep.mubr.f32.mxu0 0.0
        %4462 = vmatmul.mubr.f32.gmra.mrb[0].mxu0 %v4268
        %v4463 = vpop.f32.mrb[0].mxu0
        %v4464 = vadd.f32 %v4359, %v4463
        %v4465 = vpop.f32.mrb[0].mxu0
        %4466 = vmatprep.mubr.f32.mxu0 0.0
        %4467 = vmatmul.mubr.f32.gmra.mrb[0].mxu0 %v4271
        %v4468 = vpop.f32.mrb[0].mxu0
        %v4469 = vadd.f32 %v4364, %v4468
        %v4470 = vpop.f32.mrb[0].mxu0
        %4471 = vmatprep.mubr.f32.mxu0 0.0
        %4472 = vmatmul.mubr.f32.gmra.mrb[0].mxu0 %v4274
        %v4473 = vpop.f32.mrb[0].mxu0
        %v4474 = vadd.f32 %v4369, %v4473
        %v4475 = vpop.f32.mrb[0].mxu0
        %4476 = vmatprep.mubr.f32.mxu0 0.0
        %4477 = vmatmul.mubr.f32.gmra.mrb[0].mxu0 %v4277
        %v4478 = vpop.f32.mrb[0].mxu0
        %v4479 = vadd.f32 %v4374, %v4478
        %v4480 = vpop.f32.mrb[0].mxu0
        %4481 = vmatprep.mubr.f32.mxu0 0.0
        %4482 = vmatmul.mubr.f32.gmra.mrb[0].mxu0 %v4280
        %v4483 = vpop.f32.mrb[0].mxu0
        %v4484 = vadd.f32 %v4379, %v4483
        %v4485 = vpop.f32.mrb[0].mxu0
        %4486 = vmatprep.mubr.f32.mxu0 0.0
        %4487 = vmatmul.mubr.f32.gmra.mrb[0].mxu0 %v4283
        %v4488 = vpop.f32.mrb[0].mxu0
        %v4489 = vadd.f32 %v4384, %v4488
        %v4490 = vpop.f32.mrb[0].mxu0
        %4491 = vmatprep.mubr.f32.mxu0 0.0
        %4492 = vmatmul.mubr.f32.gmra.mrb[0].mxu0 %v4286
        %v4493 = vpop.f32.mrb[0].mxu0
        %v4494 = vadd.f32 %v4389, %v4493
        %v4495 = vpop.f32.mrb[0].mxu0
        %4496 = vdwg.mxu0
        %s4497 = scalar_lea.vmem %s11, 192
        %v4498 = vld [vmem:[%s4497] sm:$0xff]
        %v4499 = vld [vmem:[%s4497 + $0x8] sm:$0xff]
        %v4500 = vld [vmem:[%s4497 + $0x10] sm:$0xff]
        %v4501 = vld [vmem:[%s4497 + $0x18] sm:$0xff]
        %v4502 = vld [vmem:[%s4497 + $0x20] sm:$0xff]
        %v4503 = vld [vmem:[%s4497 + $0x28] sm:$0xff]
        %v4504 = vld [vmem:[%s4497 + $0x30] sm:$0xff]
        %v4505 = vld [vmem:[%s4497 + $0x38] sm:$0xff]
        %v4506 = vld [vmem:[%s4497 + $0x40] sm:$0xff]
        %v4507 = vld [vmem:[%s4497 + $0x48] sm:$0xff]
        %v4508 = vld [vmem:[%s4497 + $0x50] sm:$0xff]
        %v4509 = vld [vmem:[%s4497 + $0x58] sm:$0xff]
        %v4510 = vld [vmem:[%s4497 + $0x60] sm:$0xff]
        %v4511 = vld [vmem:[%s4497 + $0x68] sm:$0xff]
        %v4512 = vld [vmem:[%s4497 + $0x70] sm:$0xff]
        %v4513 = vld [vmem:[%s4497 + $0x78] sm:$0xff]
        %v4514 = vld [vmem:[%s4497 + $0x80] sm:$0xff]
        %v4515 = vld [vmem:[%s4497 + $0x88] sm:$0xff]
        %v4516 = vld [vmem:[%s4497 + $0x90] sm:$0xff]
        %v4517 = vld [vmem:[%s4497 + $0x98] sm:$0xff]
        %v4518 = vld [vmem:[%s4497 + $0xa0] sm:$0xff]
        %v4519 = vld [vmem:[%s4497 + $0xa8] sm:$0xff]
        %v4520 = vld [vmem:[%s4497 + $0xb0] sm:$0xff]
        %v4521 = vld [vmem:[%s4497 + $0xb8] sm:$0xff]
        %4522 = vmatprep.subr.mxu0 0.0
        %4523 = vmatpush1.msra.mxu0 %v4215
        %4524 = vmatprep.subr.mxu0 0.0
        %4525 = vmatpush1.msra.mxu0 %v4216
        %4526 = vmatprep.subr.mxu0 0.0
        %4527 = vmatpush1.msra.mxu0 %v4217
        %4528 = vmatprep.subr.mxu0 0.0
        %4529 = vmatpush1.msra.mxu0 %v4218
        %4530 = vmatprep.subr.mxu0 0.0
        %4531 = vmatpush1.msra.mxu0 %v4219
        %4532 = vmatprep.subr.mxu0 0.0
        %4533 = vmatpush1.msra.mxu0 %v4220
        %4534 = vmatprep.subr.mxu0 0.0
        %4535 = vmatpush1.msra.mxu0 %v4221
        %4536 = vmatprep.subr.mxu0 0.0
        %4537 = vmatpush1.msra.mxu0 %v4222
        %4538 = vmatprep.subr.mxu0 0.0
        %4539 = vmatpush1.msra.mxu0 %v4223
        %4540 = vmatprep.subr.mxu0 0.0
        %4541 = vmatpush1.msra.mxu0 %v4224
        %4542 = vmatprep.subr.mxu0 0.0
        %4543 = vmatpush1.msra.mxu0 %v4225
        %4544 = vmatprep.subr.mxu0 0.0
        %4545 = vmatpush1.msra.mxu0 %v4226
        %4546 = vmatprep.subr.mxu0 0.0
        %4547 = vmatpush1.msra.mxu0 %v4227
        %4548 = vmatprep.subr.mxu0 0.0
        %4549 = vmatpush1.msra.mxu0 %v4228
        %4550 = vmatprep.subr.mxu0 0.0
        %4551 = vmatpush1.msra.mxu0 %v4229
        %4552 = vmatprep.subr.mxu0 0.0
        %4553 = vmatpush1.msra.mxu0 %v4230
        %4554 = vmatprep.subr.mxu0 0.0
        %4555 = vmatpush1.msra.mxu0 %v4231
        %4556 = vmatprep.subr.mxu0 0.0
        %4557 = vmatpush1.msra.mxu0 %v4232
        %4558 = vmatprep.subr.mxu0 0.0
        %4559 = vmatpush1.msra.mxu0 %v4233
        %4560 = vmatprep.subr.mxu0 0.0
        %4561 = vmatpush1.msra.mxu0 %v4234
        %4562 = vmatprep.subr.mxu0 0.0
        %4563 = vmatpush1.msra.mxu0 %v4235
        %4564 = vmatprep.subr.mxu0 0.0
        %4565 = vmatpush1.msra.mxu0 %v4236
        %4566 = vmatprep.subr.mxu0 0.0
        %4567 = vmatpush1.msra.mxu0 %v4237
        %4568 = vmatprep.subr.mxu0 0.0
        %4569 = vmatpush1.msra.mxu0 %v4238
        %4570 = vmatprep.subr.mxu0 0.0
        %4571 = vmatpush1.msra.mxu0 %v4239
        %4572 = vmatprep.subr.mxu0 0.0
        %4573 = vmatpush1.msra.mxu0 %v4240
        %4574 = vmatprep.subr.mxu0 0.0
        %4575 = vmatpush1.msra.mxu0 %v4241
        %4576 = vmatprep.subr.mxu0 0.0
        %4577 = vmatpush1.msra.mxu0 %v4242
        %4578 = vmatprep.subr.mxu0 0.0
        %4579 = vmatpush1.msra.mxu0 %v4243
        %4580 = vmatprep.subr.mxu0 0.0
        %4581 = vmatpush1.msra.mxu0 %v4244
        %4582 = vmatprep.subr.mxu0 0.0
        %4583 = vmatpush1.msra.mxu0 %v4245
        %4584 = vmatprep.subr.mxu0 0.0
        %4585 = vmatpush1.msra.mxu0 %v4246
        %4586 = vmatprep.mubr.f32.mxu0 %v4499
        %4587 = vmatmul.mubr.f32.gmra.mrb[0].mxu0 %v4498
        %v4588 = vpop.f32.mrb[0].mxu0
        %v4589 = vadd.f32 0.0, %v4588
        %v4590 = vpop.f32.mrb[0].mxu0
        %4591 = vmatprep.mubr.f32.mxu0 %v4502
        %4592 = vmatmul.mubr.f32.gmra.mrb[0].mxu0 %v4501
        %v4593 = vpop.f32.mrb[0].mxu0
        %v4594 = vadd.f32 0.0, %v4593
        %v4595 = vpop.f32.mrb[0].mxu0
        %4596 = vmatprep.mubr.f32.mxu0 %v4505
        %4597 = vmatmul.mubr.f32.gmra.mrb[0].mxu0 %v4504
        %v4598 = vpop.f32.mrb[0].mxu0
        %v4599 = vadd.f32 0.0, %v4598
        %v4600 = vpop.f32.mrb[0].mxu0
        %4601 = vmatprep.mubr.f32.mxu0 %v4508
        %4602 = vmatmul.mubr.f32.gmra.mrb[0].mxu0 %v4507
        %v4603 = vpop.f32.mrb[0].mxu0
        %v4604 = vadd.f32 0.0, %v4603
        %v4605 = vpop.f32.mrb[0].mxu0
        %4606 = vmatprep.mubr.f32.mxu0 %v4511
        %4607 = vmatmul.mubr.f32.gmra.mrb[0].mxu0 %v4510
        %v4608 = vpop.f32.mrb[0].mxu0
        %v4609 = vadd.f32 0.0, %v4608
        %v4610 = vpop.f32.mrb[0].mxu0
        %4611 = vmatprep.mubr.f32.mxu0 %v4514
        %4612 = vmatmul.mubr.f32.gmra.mrb[0].mxu0 %v4513
        %v4613 = vpop.f32.mrb[0].mxu0
        %v4614 = vadd.f32 0.0, %v4613
        %v4615 = vpop.f32.mrb[0].mxu0
        %4616 = vmatprep.mubr.f32.mxu0 %v4517
        %4617 = vmatmul.mubr.f32.gmra.mrb[0].mxu0 %v4516
        %v4618 = vpop.f32.mrb[0].mxu0
        %v4619 = vadd.f32 0.0, %v4618
        %v4620 = vpop.f32.mrb[0].mxu0
        %4621 = vmatprep.mubr.f32.mxu0 %v4520
        %4622 = vmatmul.mubr.f32.gmra.mrb[0].mxu0 %v4519
        %v4623 = vpop.f32.mrb[0].mxu0
        %v4624 = vadd.f32 0.0, %v4623
        %v4625 = vpop.f32.mrb[0].mxu0
        %4626 = vdwg.mxu0
        %4627 = vmatprep.subr.mxu0 0.0
        %4628 = vmatpush1.msra.mxu0 %v4247
        %4629 = vmatprep.subr.mxu0 0.0
        %4630 = vmatpush1.msra.mxu0 %v4248
        %4631 = vmatprep.subr.mxu0 0.0
        %4632 = vmatpush1.msra.mxu0 %v4249
        %4633 = vmatprep.subr.mxu0 0.0
        %4634 = vmatpush1.msra.mxu0 %v4250
        %4635 = vmatprep.subr.mxu0 0.0
        %4636 = vmatpush1.msra.mxu0 %v4251
        %4637 = vmatprep.subr.mxu0 0.0
        %4638 = vmatpush1.msra.mxu0 %v4252
        %4639 = vmatprep.subr.mxu0 0.0
        %4640 = vmatpush1.msra.mxu0 %v4253
        %4641 = vmatprep.subr.mxu0 0.0
        %4642 = vmatpush1.msra.mxu0 %v4254
        %4643 = vmatprep.subr.mxu0 0.0
        %4644 = vmatpush1.msra.mxu0 %v4255
        %4645 = vmatprep.subr.mxu0 0.0
        %4646 = vmatpush1.msra.mxu0 %v4256
        %4647 = vmatprep.subr.mxu0 0.0
        %4648 = vmatpush1.msra.mxu0 %v4257
        %4649 = vmatprep.subr.mxu0 0.0
        %4650 = vmatpush1.msra.mxu0 %v4258
        %4651 = vmatprep.subr.mxu0 0.0
        %4652 = vmatpush1.msra.mxu0 %v4259
        %4653 = vmatprep.subr.mxu0 0.0
        %4654 = vmatpush1.msra.mxu0 %v4260
        %4655 = vmatprep.subr.mxu0 0.0
        %4656 = vmatpush1.msra.mxu0 %v4261
        %4657 = vmatprep.subr.mxu0 0.0
        %4658 = vmatpush1.msra.mxu0 %v4262
        %4659 = vmatprep.subr.mxu0 0.0
        %4660 = vmatpush1.msra.mxu0 0.0
        %4661 = vmatprep.subr.mxu0 0.0
        %4662 = vmatpush1.msra.mxu0 0.0
        %4663 = vmatprep.subr.mxu0 0.0
        %4664 = vmatpush1.msra.mxu0 0.0
        %4665 = vmatprep.subr.mxu0 0.0
        %4666 = vmatpush1.msra.mxu0 0.0
        %4667 = vmatprep.subr.mxu0 0.0
        %4668 = vmatpush1.msra.mxu0 0.0
        %4669 = vmatprep.subr.mxu0 0.0
        %4670 = vmatpush1.msra.mxu0 0.0
        %4671 = vmatprep.subr.mxu0 0.0
        %4672 = vmatpush1.msra.mxu0 0.0
        %4673 = vmatprep.subr.mxu0 0.0
        %4674 = vmatpush1.msra.mxu0 0.0
        %4675 = vmatprep.subr.mxu0 0.0
        %4676 = vmatpush1.msra.mxu0 0.0
        %4677 = vmatprep.subr.mxu0 0.0
        %4678 = vmatpush1.msra.mxu0 0.0
        %4679 = vmatprep.subr.mxu0 0.0
        %4680 = vmatpush1.msra.mxu0 0.0
        %4681 = vmatprep.subr.mxu0 0.0
        %4682 = vmatpush1.msra.mxu0 0.0
        %4683 = vmatprep.subr.mxu0 0.0
        %4684 = vmatpush1.msra.mxu0 0.0
        %4685 = vmatprep.subr.mxu0 0.0
        %4686 = vmatpush1.msra.mxu0 0.0
        %4687 = vmatprep.subr.mxu0 0.0
        %4688 = vmatpush1.msra.mxu0 0.0
        %4689 = vmatprep.subr.mxu0 0.0
        %4690 = vmatpush1.msra.mxu0 0.0
        %4691 = vmatprep.mubr.f32.mxu0 0.0
        %4692 = vmatmul.mubr.f32.gmra.mrb[0].mxu0 %v4500
        %v4693 = vpop.f32.mrb[0].mxu0
        %v4694 = vadd.f32 %v4589, %v4693
        %v4695 = vpop.f32.mrb[0].mxu0
        %4696 = vmatprep.mubr.f32.mxu0 0.0
        %4697 = vmatmul.mubr.f32.gmra.mrb[0].mxu0 %v4503
        %v4698 = vpop.f32.mrb[0].mxu0
        %v4699 = vadd.f32 %v4594, %v4698
        %v4700 = vpop.f32.mrb[0].mxu0
        %4701 = vmatprep.mubr.f32.mxu0 0.0
        %4702 = vmatmul.mubr.f32.gmra.mrb[0].mxu0 %v4506
        %v4703 = vpop.f32.mrb[0].mxu0
        %v4704 = vadd.f32 %v4599, %v4703
        %v4705 = vpop.f32.mrb[0].mxu0
        %4706 = vmatprep.mubr.f32.mxu0 0.0
        %4707 = vmatmul.mubr.f32.gmra.mrb[0].mxu0 %v4509
        %v4708 = vpop.f32.mrb[0].mxu0
        %v4709 = vadd.f32 %v4604, %v4708
        %v4710 = vpop.f32.mrb[0].mxu0
        %4711 = vmatprep.mubr.f32.mxu0 0.0
        %4712 = vmatmul.mubr.f32.gmra.mrb[0].mxu0 %v4512
        %v4713 = vpop.f32.mrb[0].mxu0
        %v4714 = vadd.f32 %v4609, %v4713
        %v4715 = vpop.f32.mrb[0].mxu0
        %4716 = vmatprep.mubr.f32.mxu0 0.0
        %4717 = vmatmul.mubr.f32.gmra.mrb[0].mxu0 %v4515
        %v4718 = vpop.f32.mrb[0].mxu0
        %v4719 = vadd.f32 %v4614, %v4718
        %v4720 = vpop.f32.mrb[0].mxu0
        %4721 = vmatprep.mubr.f32.mxu0 0.0
        %4722 = vmatmul.mubr.f32.gmra.mrb[0].mxu0 %v4518
        %v4723 = vpop.f32.mrb[0].mxu0
        %v4724 = vadd.f32 %v4619, %v4723
        %v4725 = vpop.f32.mrb[0].mxu0
        %4726 = vmatprep.mubr.f32.mxu0 0.0
        %4727 = vmatmul.mubr.f32.gmra.mrb[0].mxu0 %v4521
        %v4728 = vpop.f32.mrb[0].mxu0
        %v4729 = vadd.f32 %v4624, %v4728
        %v4730 = vpop.f32.mrb[0].mxu0
        %4731 = vdwg.mxu0
        %v4732 = vmax.f32 %v4459, %v4694
        %v4733 = vmax.f32 %v4464, %v4699
        %v4734 = vmax.f32 %v4469, %v4704
        %v4735 = vmax.f32 %v4474, %v4709
        %v4736 = vmax.f32 %v4479, %v4714
        %v4737 = vmax.f32 %v4484, %v4719
        %v4738 = vmax.f32 %v4489, %v4724
        %v4739 = vmax.f32 %v4494, %v4729
        %s4740 = scalar_lea.vmem %s11, 384
        %v4741 = vld [vmem:[%s4740] sm:$0xff]
        %v4742 = vld [vmem:[%s4740 + $0x8] sm:$0xff]
        %v4743 = vld [vmem:[%s4740 + $0x10] sm:$0xff]
        %v4744 = vld [vmem:[%s4740 + $0x18] sm:$0xff]
        %v4745 = vld [vmem:[%s4740 + $0x20] sm:$0xff]
        %v4746 = vld [vmem:[%s4740 + $0x28] sm:$0xff]
        %v4747 = vld [vmem:[%s4740 + $0x30] sm:$0xff]
        %v4748 = vld [vmem:[%s4740 + $0x38] sm:$0xff]
        %v4749 = vld [vmem:[%s4740 + $0x40] sm:$0xff]
        %v4750 = vld [vmem:[%s4740 + $0x48] sm:$0xff]
        %v4751 = vld [vmem:[%s4740 + $0x50] sm:$0xff]
        %v4752 = vld [vmem:[%s4740 + $0x58] sm:$0xff]
        %v4753 = vld [vmem:[%s4740 + $0x60] sm:$0xff]
        %v4754 = vld [vmem:[%s4740 + $0x68] sm:$0xff]
        %v4755 = vld [vmem:[%s4740 + $0x70] sm:$0xff]
        %v4756 = vld [vmem:[%s4740 + $0x78] sm:$0xff]
        %v4757 = vld [vmem:[%s4740 + $0x80] sm:$0xff]
        %v4758 = vld [vmem:[%s4740 + $0x88] sm:$0xff]
        %v4759 = vld [vmem:[%s4740 + $0x90] sm:$0xff]
        %v4760 = vld [vmem:[%s4740 + $0x98] sm:$0xff]
        %v4761 = vld [vmem:[%s4740 + $0xa0] sm:$0xff]
        %v4762 = vld [vmem:[%s4740 + $0xa8] sm:$0xff]
        %v4763 = vld [vmem:[%s4740 + $0xb0] sm:$0xff]
        %v4764 = vld [vmem:[%s4740 + $0xb8] sm:$0xff]
        %4765 = vmatprep.subr.mxu0 0.0
        %4766 = vmatpush1.msra.mxu0 %v4215
        %4767 = vmatprep.subr.mxu0 0.0
        %4768 = vmatpush1.msra.mxu0 %v4216
        %4769 = vmatprep.subr.mxu0 0.0
        %4770 = vmatpush1.msra.mxu0 %v4217
        %4771 = vmatprep.subr.mxu0 0.0
        %4772 = vmatpush1.msra.mxu0 %v4218
        %4773 = vmatprep.subr.mxu0 0.0
        %4774 = vmatpush1.msra.mxu0 %v4219
        %4775 = vmatprep.subr.mxu0 0.0
        %4776 = vmatpush1.msra.mxu0 %v4220
        %4777 = vmatprep.subr.mxu0 0.0
        %4778 = vmatpush1.msra.mxu0 %v4221
        %4779 = vmatprep.subr.mxu0 0.0
        %4780 = vmatpush1.msra.mxu0 %v4222
        %4781 = vmatprep.subr.mxu0 0.0
        %4782 = vmatpush1.msra.mxu0 %v4223
        %4783 = vmatprep.subr.mxu0 0.0
        %4784 = vmatpush1.msra.mxu0 %v4224
        %4785 = vmatprep.subr.mxu0 0.0
        %4786 = vmatpush1.msra.mxu0 %v4225
        %4787 = vmatprep.subr.mxu0 0.0
        %4788 = vmatpush1.msra.mxu0 %v4226
        %4789 = vmatprep.subr.mxu0 0.0
        %4790 = vmatpush1.msra.mxu0 %v4227
        %4791 = vmatprep.subr.mxu0 0.0
        %4792 = vmatpush1.msra.mxu0 %v4228
        %4793 = vmatprep.subr.mxu0 0.0
        %4794 = vmatpush1.msra.mxu0 %v4229
        %4795 = vmatprep.subr.mxu0 0.0
        %4796 = vmatpush1.msra.mxu0 %v4230
        %4797 = vmatprep.subr.mxu0 0.0
        %4798 = vmatpush1.msra.mxu0 %v4231
        %4799 = vmatprep.subr.mxu0 0.0
        %4800 = vmatpush1.msra.mxu0 %v4232
        %4801 = vmatprep.subr.mxu0 0.0
        %4802 = vmatpush1.msra.mxu0 %v4233
        %4803 = vmatprep.subr.mxu0 0.0
        %4804 = vmatpush1.msra.mxu0 %v4234
        %4805 = vmatprep.subr.mxu0 0.0
        %4806 = vmatpush1.msra.mxu0 %v4235
        %4807 = vmatprep.subr.mxu0 0.0
        %4808 = vmatpush1.msra.mxu0 %v4236
        %4809 = vmatprep.subr.mxu0 0.0
        %4810 = vmatpush1.msra.mxu0 %v4237
        %4811 = vmatprep.subr.mxu0 0.0
        %4812 = vmatpush1.msra.mxu0 %v4238
        %4813 = vmatprep.subr.mxu0 0.0
        %4814 = vmatpush1.msra.mxu0 %v4239
        %4815 = vmatprep.subr.mxu0 0.0
        %4816 = vmatpush1.msra.mxu0 %v4240
        %4817 = vmatprep.subr.mxu0 0.0
        %4818 = vmatpush1.msra.mxu0 %v4241
        %4819 = vmatprep.subr.mxu0 0.0
        %4820 = vmatpush1.msra.mxu0 %v4242
        %4821 = vmatprep.subr.mxu0 0.0
        %4822 = vmatpush1.msra.mxu0 %v4243
        %4823 = vmatprep.subr.mxu0 0.0
        %4824 = vmatpush1.msra.mxu0 %v4244
        %4825 = vmatprep.subr.mxu0 0.0
        %4826 = vmatpush1.msra.mxu0 %v4245
        %4827 = vmatprep.subr.mxu0 0.0
        %4828 = vmatpush1.msra.mxu0 %v4246
        %4829 = vmatprep.mubr.f32.mxu0 %v4742
        %4830 = vmatmul.mubr.f32.gmra.mrb[0].mxu0 %v4741
        %v4831 = vpop.f32.mrb[0].mxu0
        %v4832 = vadd.f32 0.0, %v4831
        %v4833 = vpop.f32.mrb[0].mxu0
        %4834 = vmatprep.mubr.f32.mxu0 %v4745
        %4835 = vmatmul.mubr.f32.gmra.mrb[0].mxu0 %v4744
        %v4836 = vpop.f32.mrb[0].mxu0
        %v4837 = vadd.f32 0.0, %v4836
        %v4838 = vpop.f32.mrb[0].mxu0
        %4839 = vmatprep.mubr.f32.mxu0 %v4748
        %4840 = vmatmul.mubr.f32.gmra.mrb[0].mxu0 %v4747
        %v4841 = vpop.f32.mrb[0].mxu0
        %v4842 = vadd.f32 0.0, %v4841
        %v4843 = vpop.f32.mrb[0].mxu0
        %4844 = vmatprep.mubr.f32.mxu0 %v4751
        %4845 = vmatmul.mubr.f32.gmra.mrb[0].mxu0 %v4750
        %v4846 = vpop.f32.mrb[0].mxu0
        %v4847 = vadd.f32 0.0, %v4846
        %v4848 = vpop.f32.mrb[0].mxu0
        %4849 = vmatprep.mubr.f32.mxu0 %v4754
        %4850 = vmatmul.mubr.f32.gmra.mrb[0].mxu0 %v4753
        %v4851 = vpop.f32.mrb[0].mxu0
        %v4852 = vadd.f32 0.0, %v4851
        %v4853 = vpop.f32.mrb[0].mxu0
        %4854 = vmatprep.mubr.f32.mxu0 %v4757
        %4855 = vmatmul.mubr.f32.gmra.mrb[0].mxu0 %v4756
        %v4856 = vpop.f32.mrb[0].mxu0
        %v4857 = vadd.f32 0.0, %v4856
        %v4858 = vpop.f32.mrb[0].mxu0
        %4859 = vmatprep.mubr.f32.mxu0 %v4760
        %4860 = vmatmul.mubr.f32.gmra.mrb[0].mxu0 %v4759
        %v4861 = vpop.f32.mrb[0].mxu0
        %v4862 = vadd.f32 0.0, %v4861
        %v4863 = vpop.f32.mrb[0].mxu0
        %4864 = vmatprep.mubr.f32.mxu0 %v4763
        %4865 = vmatmul.mubr.f32.gmra.mrb[0].mxu0 %v4762
        %v4866 = vpop.f32.mrb[0].mxu0
        %v4867 = vadd.f32 0.0, %v4866
        %v4868 = vpop.f32.mrb[0].mxu0
        %4869 = vdwg.mxu0
        %4870 = vmatprep.subr.mxu0 0.0
        %4871 = vmatpush1.msra.mxu0 %v4247
        %4872 = vmatprep.subr.mxu0 0.0
        %4873 = vmatpush1.msra.mxu0 %v4248
        %4874 = vmatprep.subr.mxu0 0.0
        %4875 = vmatpush1.msra.mxu0 %v4249
        %4876 = vmatprep.subr.mxu0 0.0
        %4877 = vmatpush1.msra.mxu0 %v4250
        %4878 = vmatprep.subr.mxu0 0.0
        %4879 = vmatpush1.msra.mxu0 %v4251
        %4880 = vmatprep.subr.mxu0 0.0
        %4881 = vmatpush1.msra.mxu0 %v4252
        %4882 = vmatprep.subr.mxu0 0.0
        %4883 = vmatpush1.msra.mxu0 %v4253
        %4884 = vmatprep.subr.mxu0 0.0
        %4885 = vmatpush1.msra.mxu0 %v4254
        %4886 = vmatprep.subr.mxu0 0.0
        %4887 = vmatpush1.msra.mxu0 %v4255
        %4888 = vmatprep.subr.mxu0 0.0
        %4889 = vmatpush1.msra.mxu0 %v4256
        %4890 = vmatprep.subr.mxu0 0.0
        %4891 = vmatpush1.msra.mxu0 %v4257
        %4892 = vmatprep.subr.mxu0 0.0
        %4893 = vmatpush1.msra.mxu0 %v4258
        %4894 = vmatprep.subr.mxu0 0.0
        %4895 = vmatpush1.msra.mxu0 %v4259
        %4896 = vmatprep.subr.mxu0 0.0
        %4897 = vmatpush1.msra.mxu0 %v4260
        %4898 = vmatprep.subr.mxu0 0.0
        %4899 = vmatpush1.msra.mxu0 %v4261
        %4900 = vmatprep.subr.mxu0 0.0
        %4901 = vmatpush1.msra.mxu0 %v4262
        %4902 = vmatprep.subr.mxu0 0.0
        %4903 = vmatpush1.msra.mxu0 0.0
        %4904 = vmatprep.subr.mxu0 0.0
        %4905 = vmatpush1.msra.mxu0 0.0
        %4906 = vmatprep.subr.mxu0 0.0
        %4907 = vmatpush1.msra.mxu0 0.0
        %4908 = vmatprep.subr.mxu0 0.0
        %4909 = vmatpush1.msra.mxu0 0.0
        %4910 = vmatprep.subr.mxu0 0.0
        %4911 = vmatpush1.msra.mxu0 0.0
        %4912 = vmatprep.subr.mxu0 0.0
        %4913 = vmatpush1.msra.mxu0 0.0
        %4914 = vmatprep.subr.mxu0 0.0
        %4915 = vmatpush1.msra.mxu0 0.0
        %4916 = vmatprep.subr.mxu0 0.0
        %4917 = vmatpush1.msra.mxu0 0.0
        %4918 = vmatprep.subr.mxu0 0.0
        %4919 = vmatpush1.msra.mxu0 0.0
        %4920 = vmatprep.subr.mxu0 0.0
        %4921 = vmatpush1.msra.mxu0 0.0
        %4922 = vmatprep.subr.mxu0 0.0
        %4923 = vmatpush1.msra.mxu0 0.0
        %4924 = vmatprep.subr.mxu0 0.0
        %4925 = vmatpush1.msra.mxu0 0.0
        %4926 = vmatprep.subr.mxu0 0.0
        %4927 = vmatpush1.msra.mxu0 0.0
        %4928 = vmatprep.subr.mxu0 0.0
        %4929 = vmatpush1.msra.mxu0 0.0
        %4930 = vmatprep.subr.mxu0 0.0
        %4931 = vmatpush1.msra.mxu0 0.0
        %4932 = vmatprep.subr.mxu0 0.0
        %4933 = vmatpush1.msra.mxu0 0.0
        %4934 = vmatprep.mubr.f32.mxu0 0.0
        %4935 = vmatmul.mubr.f32.gmra.mrb[0].mxu0 %v4743
        %v4936 = vpop.f32.mrb[0].mxu0
        %v4937 = vadd.f32 %v4832, %v4936
        %v4938 = vpop.f32.mrb[0].mxu0
        %4939 = vmatprep.mubr.f32.mxu0 0.0
        %4940 = vmatmul.mubr.f32.gmra.mrb[0].mxu0 %v4746
        %v4941 = vpop.f32.mrb[0].mxu0
        %v4942 = vadd.f32 %v4837, %v4941
        %v4943 = vpop.f32.mrb[0].mxu0
        %4944 = vmatprep.mubr.f32.mxu0 0.0
        %4945 = vmatmul.mubr.f32.gmra.mrb[0].mxu0 %v4749
        %v4946 = vpop.f32.mrb[0].mxu0
        %v4947 = vadd.f32 %v4842, %v4946
        %v4948 = vpop.f32.mrb[0].mxu0
        %4949 = vmatprep.mubr.f32.mxu0 0.0
        %4950 = vmatmul.mubr.f32.gmra.mrb[0].mxu0 %v4752
        %v4951 = vpop.f32.mrb[0].mxu0
        %v4952 = vadd.f32 %v4847, %v4951
        %v4953 = vpop.f32.mrb[0].mxu0
        %4954 = vmatprep.mubr.f32.mxu0 0.0
        %4955 = vmatmul.mubr.f32.gmra.mrb[0].mxu0 %v4755
        %v4956 = vpop.f32.mrb[0].mxu0
        %v4957 = vadd.f32 %v4852, %v4956
        %v4958 = vpop.f32.mrb[0].mxu0
        %4959 = vmatprep.mubr.f32.mxu0 0.0
        %4960 = vmatmul.mubr.f32.gmra.mrb[0].mxu0 %v4758
        %v4961 = vpop.f32.mrb[0].mxu0
        %v4962 = vadd.f32 %v4857, %v4961
        %v4963 = vpop.f32.mrb[0].mxu0
        %4964 = vmatprep.mubr.f32.mxu0 0.0
        %4965 = vmatmul.mubr.f32.gmra.mrb[0].mxu0 %v4761
        %v4966 = vpop.f32.mrb[0].mxu0
        %v4967 = vadd.f32 %v4862, %v4966
        %v4968 = vpop.f32.mrb[0].mxu0
        %4969 = vmatprep.mubr.f32.mxu0 0.0
        %4970 = vmatmul.mubr.f32.gmra.mrb[0].mxu0 %v4764
        %v4971 = vpop.f32.mrb[0].mxu0
        %v4972 = vadd.f32 %v4867, %v4971
        %v4973 = vpop.f32.mrb[0].mxu0
        %4974 = vdwg.mxu0
        %v4975 = vmax.f32 %v4732, %v4937
        %v4976 = vmax.f32 %v4733, %v4942
        %v4977 = vmax.f32 %v4734, %v4947
        %v4978 = vmax.f32 %v4735, %v4952
        %v4979 = vmax.f32 %v4736, %v4957
        %v4980 = vmax.f32 %v4737, %v4962
        %v4981 = vmax.f32 %v4738, %v4967
        %v4982 = vmax.f32 %v4739, %v4972
        %s4983 = scalar_lea.vmem %s11, 576
        %v4984 = vld [vmem:[%s4983] sm:$0xff]
        %v4985 = vld [vmem:[%s4983 + $0x8] sm:$0xff]
        %v4986 = vld [vmem:[%s4983 + $0x10] sm:$0xff]
        %v4987 = vld [vmem:[%s4983 + $0x18] sm:$0xff]
        %v4988 = vld [vmem:[%s4983 + $0x20] sm:$0xff]
        %v4989 = vld [vmem:[%s4983 + $0x28] sm:$0xff]
        %v4990 = vld [vmem:[%s4983 + $0x30] sm:$0xff]
        %v4991 = vld [vmem:[%s4983 + $0x38] sm:$0xff]
        %v4992 = vld [vmem:[%s4983 + $0x40] sm:$0xff]
        %v4993 = vld [vmem:[%s4983 + $0x48] sm:$0xff]
        %v4994 = vld [vmem:[%s4983 + $0x50] sm:$0xff]
        %v4995 = vld [vmem:[%s4983 + $0x58] sm:$0xff]
        %v4996 = vld [vmem:[%s4983 + $0x60] sm:$0xff]
        %v4997 = vld [vmem:[%s4983 + $0x68] sm:$0xff]
        %v4998 = vld [vmem:[%s4983 + $0x70] sm:$0xff]
        %v4999 = vld [vmem:[%s4983 + $0x78] sm:$0xff]
        %v5000 = vld [vmem:[%s4983 + $0x80] sm:$0xff]
        %v5001 = vld [vmem:[%s4983 + $0x88] sm:$0xff]
        %v5002 = vld [vmem:[%s4983 + $0x90] sm:$0xff]
        %v5003 = vld [vmem:[%s4983 + $0x98] sm:$0xff]
        %v5004 = vld [vmem:[%s4983 + $0xa0] sm:$0xff]
        %v5005 = vld [vmem:[%s4983 + $0xa8] sm:$0xff]
        %v5006 = vld [vmem:[%s4983 + $0xb0] sm:$0xff]
        %v5007 = vld [vmem:[%s4983 + $0xb8] sm:$0xff]
        %5008 = vmatprep.subr.mxu0 0.0
        %5009 = vmatpush1.msra.mxu0 %v4215
        %5010 = vmatprep.subr.mxu0 0.0
        %5011 = vmatpush1.msra.mxu0 %v4216
        %5012 = vmatprep.subr.mxu0 0.0
        %5013 = vmatpush1.msra.mxu0 %v4217
        %5014 = vmatprep.subr.mxu0 0.0
        %5015 = vmatpush1.msra.mxu0 %v4218
        %5016 = vmatprep.subr.mxu0 0.0
        %5017 = vmatpush1.msra.mxu0 %v4219
        %5018 = vmatprep.subr.mxu0 0.0
        %5019 = vmatpush1.msra.mxu0 %v4220
        %5020 = vmatprep.subr.mxu0 0.0
        %5021 = vmatpush1.msra.mxu0 %v4221
        %5022 = vmatprep.subr.mxu0 0.0
        %5023 = vmatpush1.msra.mxu0 %v4222
        %5024 = vmatprep.subr.mxu0 0.0
        %5025 = vmatpush1.msra.mxu0 %v4223
        %5026 = vmatprep.subr.mxu0 0.0
        %5027 = vmatpush1.msra.mxu0 %v4224
        %5028 = vmatprep.subr.mxu0 0.0
        %5029 = vmatpush1.msra.mxu0 %v4225
        %5030 = vmatprep.subr.mxu0 0.0
        %5031 = vmatpush1.msra.mxu0 %v4226
        %5032 = vmatprep.subr.mxu0 0.0
        %5033 = vmatpush1.msra.mxu0 %v4227
        %5034 = vmatprep.subr.mxu0 0.0
        %5035 = vmatpush1.msra.mxu0 %v4228
        %5036 = vmatprep.subr.mxu0 0.0
        %5037 = vmatpush1.msra.mxu0 %v4229
        %5038 = vmatprep.subr.mxu0 0.0
        %5039 = vmatpush1.msra.mxu0 %v4230
        %5040 = vmatprep.subr.mxu0 0.0
        %5041 = vmatpush1.msra.mxu0 %v4231
        %5042 = vmatprep.subr.mxu0 0.0
        %5043 = vmatpush1.msra.mxu0 %v4232
        %5044 = vmatprep.subr.mxu0 0.0
        %5045 = vmatpush1.msra.mxu0 %v4233
        %5046 = vmatprep.subr.mxu0 0.0
        %5047 = vmatpush1.msra.mxu0 %v4234
        %5048 = vmatprep.subr.mxu0 0.0
        %5049 = vmatpush1.msra.mxu0 %v4235
        %5050 = vmatprep.subr.mxu0 0.0
        %5051 = vmatpush1.msra.mxu0 %v4236
        %5052 = vmatprep.subr.mxu0 0.0
        %5053 = vmatpush1.msra.mxu0 %v4237
        %5054 = vmatprep.subr.mxu0 0.0
        %5055 = vmatpush1.msra.mxu0 %v4238
        %5056 = vmatprep.subr.mxu0 0.0
        %5057 = vmatpush1.msra.mxu0 %v4239
        %5058 = vmatprep.subr.mxu0 0.0
        %5059 = vmatpush1.msra.mxu0 %v4240
        %5060 = vmatprep.subr.mxu0 0.0
        %5061 = vmatpush1.msra.mxu0 %v4241
        %5062 = vmatprep.subr.mxu0 0.0
        %5063 = vmatpush1.msra.mxu0 %v4242
        %5064 = vmatprep.subr.mxu0 0.0
        %5065 = vmatpush1.msra.mxu0 %v4243
        %5066 = vmatprep.subr.mxu0 0.0
        %5067 = vmatpush1.msra.mxu0 %v4244
        %5068 = vmatprep.subr.mxu0 0.0
        %5069 = vmatpush1.msra.mxu0 %v4245
        %5070 = vmatprep.subr.mxu0 0.0
        %5071 = vmatpush1.msra.mxu0 %v4246
        %5072 = vmatprep.mubr.f32.mxu0 %v4985
        %5073 = vmatmul.mubr.f32.gmra.mrb[0].mxu0 %v4984
        %v5074 = vpop.f32.mrb[0].mxu0
        %v5075 = vadd.f32 0.0, %v5074
        %v5076 = vpop.f32.mrb[0].mxu0
        %5077 = vmatprep.mubr.f32.mxu0 %v4988
        %5078 = vmatmul.mubr.f32.gmra.mrb[0].mxu0 %v4987
        %v5079 = vpop.f32.mrb[0].mxu0
        %v5080 = vadd.f32 0.0, %v5079
        %v5081 = vpop.f32.mrb[0].mxu0
        %5082 = vmatprep.mubr.f32.mxu0 %v4991
        %5083 = vmatmul.mubr.f32.gmra.mrb[0].mxu0 %v4990
        %v5084 = vpop.f32.mrb[0].mxu0
        %v5085 = vadd.f32 0.0, %v5084
        %v5086 = vpop.f32.mrb[0].mxu0
        %5087 = vmatprep.mubr.f32.mxu0 %v4994
        %5088 = vmatmul.mubr.f32.gmra.mrb[0].mxu0 %v4993
        %v5089 = vpop.f32.mrb[0].mxu0
        %v5090 = vadd.f32 0.0, %v5089
        %v5091 = vpop.f32.mrb[0].mxu0
        %5092 = vmatprep.mubr.f32.mxu0 %v4997
        %5093 = vmatmul.mubr.f32.gmra.mrb[0].mxu0 %v4996
        %v5094 = vpop.f32.mrb[0].mxu0
        %v5095 = vadd.f32 0.0, %v5094
        %v5096 = vpop.f32.mrb[0].mxu0
        %5097 = vmatprep.mubr.f32.mxu0 %v5000
        %5098 = vmatmul.mubr.f32.gmra.mrb[0].mxu0 %v4999
        %v5099 = vpop.f32.mrb[0].mxu0
        %v5100 = vadd.f32 0.0, %v5099
        %v5101 = vpop.f32.mrb[0].mxu0
        %5102 = vmatprep.mubr.f32.mxu0 %v5003
        %5103 = vmatmul.mubr.f32.gmra.mrb[0].mxu0 %v5002
        %v5104 = vpop.f32.mrb[0].mxu0
        %v5105 = vadd.f32 0.0, %v5104
        %v5106 = vpop.f32.mrb[0].mxu0
        %5107 = vmatprep.mubr.f32.mxu0 %v5006
        %5108 = vmatmul.mubr.f32.gmra.mrb[0].mxu0 %v5005
        %v5109 = vpop.f32.mrb[0].mxu0
        %v5110 = vadd.f32 0.0, %v5109
        %v5111 = vpop.f32.mrb[0].mxu0
        %5112 = vdwg.mxu0
        %5113 = vmatprep.subr.mxu0 0.0
        %5114 = vmatpush1.msra.mxu0 %v4247
        %5115 = vmatprep.subr.mxu0 0.0
        %5116 = vmatpush1.msra.mxu0 %v4248
        %5117 = vmatprep.subr.mxu0 0.0
        %5118 = vmatpush1.msra.mxu0 %v4249
        %5119 = vmatprep.subr.mxu0 0.0
        %5120 = vmatpush1.msra.mxu0 %v4250
        %5121 = vmatprep.subr.mxu0 0.0
        %5122 = vmatpush1.msra.mxu0 %v4251
        %5123 = vmatprep.subr.mxu0 0.0
        %5124 = vmatpush1.msra.mxu0 %v4252
        %5125 = vmatprep.subr.mxu0 0.0
        %5126 = vmatpush1.msra.mxu0 %v4253
        %5127 = vmatprep.subr.mxu0 0.0
        %5128 = vmatpush1.msra.mxu0 %v4254
        %5129 = vmatprep.subr.mxu0 0.0
        %5130 = vmatpush1.msra.mxu0 %v4255
        %5131 = vmatprep.subr.mxu0 0.0
        %5132 = vmatpush1.msra.mxu0 %v4256
        %5133 = vmatprep.subr.mxu0 0.0
        %5134 = vmatpush1.msra.mxu0 %v4257
        %5135 = vmatprep.subr.mxu0 0.0
        %5136 = vmatpush1.msra.mxu0 %v4258
        %5137 = vmatprep.subr.mxu0 0.0
        %5138 = vmatpush1.msra.mxu0 %v4259
        %5139 = vmatprep.subr.mxu0 0.0
        %5140 = vmatpush1.msra.mxu0 %v4260
        %5141 = vmatprep.subr.mxu0 0.0
        %5142 = vmatpush1.msra.mxu0 %v4261
        %5143 = vmatprep.subr.mxu0 0.0
        %5144 = vmatpush1.msra.mxu0 %v4262
        %5145 = vmatprep.subr.mxu0 0.0
        %5146 = vmatpush1.msra.mxu0 0.0
        %5147 = vmatprep.subr.mxu0 0.0
        %5148 = vmatpush1.msra.mxu0 0.0
        %5149 = vmatprep.subr.mxu0 0.0
        %5150 = vmatpush1.msra.mxu0 0.0
        %5151 = vmatprep.subr.mxu0 0.0
        %5152 = vmatpush1.msra.mxu0 0.0
        %5153 = vmatprep.subr.mxu0 0.0
        %5154 = vmatpush1.msra.mxu0 0.0
        %5155 = vmatprep.subr.mxu0 0.0
        %5156 = vmatpush1.msra.mxu0 0.0
        %5157 = vmatprep.subr.mxu0 0.0
        %5158 = vmatpush1.msra.mxu0 0.0
        %5159 = vmatprep.subr.mxu0 0.0
        %5160 = vmatpush1.msra.mxu0 0.0
        %5161 = vmatprep.subr.mxu0 0.0
        %5162 = vmatpush1.msra.mxu0 0.0
        %5163 = vmatprep.subr.mxu0 0.0
        %5164 = vmatpush1.msra.mxu0 0.0
        %5165 = vmatprep.subr.mxu0 0.0
        %5166 = vmatpush1.msra.mxu0 0.0
        %5167 = vmatprep.subr.mxu0 0.0
        %5168 = vmatpush1.msra.mxu0 0.0
        %5169 = vmatprep.subr.mxu0 0.0
        %5170 = vmatpush1.msra.mxu0 0.0
        %5171 = vmatprep.subr.mxu0 0.0
        %5172 = vmatpush1.msra.mxu0 0.0
        %5173 = vmatprep.subr.mxu0 0.0
        %5174 = vmatpush1.msra.mxu0 0.0
        %5175 = vmatprep.subr.mxu0 0.0
        %5176 = vmatpush1.msra.mxu0 0.0
        %5177 = vmatprep.mubr.f32.mxu0 0.0
        %5178 = vmatmul.mubr.f32.gmra.mrb[0].mxu0 %v4986
        %v5179 = vpop.f32.mrb[0].mxu0
        %v5180 = vadd.f32 %v5075, %v5179
        %v5181 = vpop.f32.mrb[0].mxu0
        %5182 = vmatprep.mubr.f32.mxu0 0.0
        %5183 = vmatmul.mubr.f32.gmra.mrb[0].mxu0 %v4989
        %v5184 = vpop.f32.mrb[0].mxu0
        %v5185 = vadd.f32 %v5080, %v5184
        %v5186 = vpop.f32.mrb[0].mxu0
        %5187 = vmatprep.mubr.f32.mxu0 0.0
        %5188 = vmatmul.mubr.f32.gmra.mrb[0].mxu0 %v4992
        %v5189 = vpop.f32.mrb[0].mxu0
        %v5190 = vadd.f32 %v5085, %v5189
        %v5191 = vpop.f32.mrb[0].mxu0
        %5192 = vmatprep.mubr.f32.mxu0 0.0
        %5193 = vmatmul.mubr.f32.gmra.mrb[0].mxu0 %v4995
        %v5194 = vpop.f32.mrb[0].mxu0
        %v5195 = vadd.f32 %v5090, %v5194
        %v5196 = vpop.f32.mrb[0].mxu0
        %5197 = vmatprep.mubr.f32.mxu0 0.0
        %5198 = vmatmul.mubr.f32.gmra.mrb[0].mxu0 %v4998
        %v5199 = vpop.f32.mrb[0].mxu0
        %v5200 = vadd.f32 %v5095, %v5199
        %v5201 = vpop.f32.mrb[0].mxu0
        %5202 = vmatprep.mubr.f32.mxu0 0.0
        %5203 = vmatmul.mubr.f32.gmra.mrb[0].mxu0 %v5001
        %v5204 = vpop.f32.mrb[0].mxu0
        %v5205 = vadd.f32 %v5100, %v5204
        %v5206 = vpop.f32.mrb[0].mxu0
        %5207 = vmatprep.mubr.f32.mxu0 0.0
        %5208 = vmatmul.mubr.f32.gmra.mrb[0].mxu0 %v5004
        %v5209 = vpop.f32.mrb[0].mxu0
        %v5210 = vadd.f32 %v5105, %v5209
        %v5211 = vpop.f32.mrb[0].mxu0
        %5212 = vmatprep.mubr.f32.mxu0 0.0
        %5213 = vmatmul.mubr.f32.gmra.mrb[0].mxu0 %v5007
        %v5214 = vpop.f32.mrb[0].mxu0
        %v5215 = vadd.f32 %v5110, %v5214
        %v5216 = vpop.f32.mrb[0].mxu0
        %5217 = vdwg.mxu0
        %v5218 = vmax.f32 %v4975, %v5180
        %v5219 = vmax.f32 %v4976, %v5185
        %v5220 = vmax.f32 %v4977, %v5190
        %v5221 = vmax.f32 %v4978, %v5195
        %v5222 = vmax.f32 %v4979, %v5200
        %v5223 = vmax.f32 %v4980, %v5205
        %v5224 = vmax.f32 %v4981, %v5210
        %v5225 = vmax.f32 %v4982, %v5215
        %5226 = vst.msk [vmem:[#allocation3 + $0x11] sm:$0xff] %vm523, %v5218
        %5227 = vst.msk [vmem:[#allocation3 + $0x21] sm:$0xff] %vm523, %v5219
        %5228 = vst.msk [vmem:[#allocation3 + $0x31] sm:$0xff] %vm523, %v5220
        %5229 = vst.msk [vmem:[#allocation3 + $0x41] sm:$0xff] %vm523, %v5221
        %5230 = vst.msk [vmem:[#allocation3 + $0x51] sm:$0xff] %vm523, %v5222
        %5231 = vst.msk [vmem:[#allocation3 + $0x61] sm:$0xff] %vm523, %v5223
        %5232 = vst.msk [vmem:[#allocation3 + $0x71] sm:$0xff] %vm523, %v5224
        %5233 = vst.msk [vmem:[#allocation3 + $0x81] sm:$0xff] %vm523, %v5225
        %v5234 = vld [vmem:[#allocation3] sm:$0xff]
        %v5235 = vld [vmem:[#allocation3 + $0x8] sm:$0xff]
        %v5236 = vld [vmem:[#allocation3 + $0x10] sm:$0xff]
        %v5237 = vld [vmem:[#allocation3 + $0x18] sm:$0xff]
        %v5238 = vld [vmem:[#allocation3 + $0x20] sm:$0xff]
        %v5239 = vld [vmem:[#allocation3 + $0x28] sm:$0xff]
        %v5240 = vld [vmem:[#allocation3 + $0x30] sm:$0xff]
        %v5241 = vld [vmem:[#allocation3 + $0x38] sm:$0xff]
        %v5242 = vld [vmem:[#allocation3 + $0x40] sm:$0xff]
        %v5243 = vld [vmem:[#allocation3 + $0x48] sm:$0xff]
        %v5244 = vld [vmem:[#allocation3 + $0x50] sm:$0xff]
        %v5245 = vld [vmem:[#allocation3 + $0x58] sm:$0xff]
        %v5246 = vld [vmem:[#allocation3 + $0x60] sm:$0xff]
        %v5247 = vld [vmem:[#allocation3 + $0x68] sm:$0xff]
        %v5248 = vld [vmem:[#allocation3 + $0x70] sm:$0xff]
        %v5249 = vld [vmem:[#allocation3 + $0x78] sm:$0xff]
        %v5250 = vld [vmem:[%s3] sm:$0xff]
        %v5251 = vld [vmem:[%s3 + $0x8] sm:$0xff]
        %v5252 = vld [vmem:[%s3 + $0x10] sm:$0xff]
        %v5253 = vld [vmem:[%s3 + $0x18] sm:$0xff]
        %v5254 = vld [vmem:[#allocation3 + $0x1] sm:$0xff]
        %v5255 = vld [vmem:[#allocation3 + $0x9] sm:$0xff]
        %v5256 = vld [vmem:[#allocation3 + $0x11] sm:$0xff]
        %v5257 = vld [vmem:[#allocation3 + $0x19] sm:$0xff]
        %v5258 = vld [vmem:[#allocation3 + $0x21] sm:$0xff]
        %v5259 = vld [vmem:[#allocation3 + $0x29] sm:$0xff]
        %v5260 = vld [vmem:[#allocation3 + $0x31] sm:$0xff]
        %v5261 = vld [vmem:[#allocation3 + $0x39] sm:$0xff]
        %v5262 = vld [vmem:[#allocation3 + $0x41] sm:$0xff]
        %v5263 = vld [vmem:[#allocation3 + $0x49] sm:$0xff]
        %v5264 = vld [vmem:[#allocation3 + $0x51] sm:$0xff]
        %v5265 = vld [vmem:[#allocation3 + $0x59] sm:$0xff]
        %v5266 = vld [vmem:[#allocation3 + $0x61] sm:$0xff]
        %v5267 = vld [vmem:[#allocation3 + $0x69] sm:$0xff]
        %v5268 = vld [vmem:[#allocation3 + $0x71] sm:$0xff]
        %v5269 = vld [vmem:[#allocation3 + $0x79] sm:$0xff]
        %s5270 = scalar_lea.vmem %s3, 32
        %v5271 = vld [vmem:[%s5270] sm:$0xff]
        %v5272 = vld [vmem:[%s5270 + $0x8] sm:$0xff]
        %v5273 = vld [vmem:[%s5270 + $0x10] sm:$0xff]
        %v5274 = vld [vmem:[%s5270 + $0x18] sm:$0xff]
        %v5276 = vsel %vm523, %v5254, 0
        %v5279 = vsel %vm523, %v5255, 0
        %v5282 = vsel %vm523, %v5256, 0
        %v5285 = vsel %vm523, %v5257, 0
        %v5288 = vsel %vm523, %v5258, 0
        %v5291 = vsel %vm523, %v5259, 0
        %v5294 = vsel %vm523, %v5260, 0
        %v5297 = vsel %vm523, %v5261, 0
        %v5300 = vsel %vm523, %v5262, 0
        %v5303 = vsel %vm523, %v5263, 0
        %v5306 = vsel %vm523, %v5264, 0
        %v5309 = vsel %vm523, %v5265, 0
        %v5312 = vsel %vm523, %v5266, 0
        %v5315 = vsel %vm523, %v5267, 0
        %v5318 = vsel %vm523, %v5268, 0
        %v5321 = vsel %vm523, %v5269, 0
        %5323 = vmatprep.subr.mxu0 0.0
        %5324 = vmatpush1.msra.mxu0 %v5271
        %5325 = vmatprep.subr.mxu0 0.0
        %5326 = vmatpush1.msra.mxu0 %v5272
        %5327 = vmatprep.subr.mxu0 0.0
        %5328 = vmatpush1.msra.mxu0 %v5273
        %5329 = vmatprep.subr.mxu0 0.0
        %5330 = vmatpush1.msra.mxu0 %v5274
        %5331 = vmatprep.subr.mxu0 0.0
        %5332 = vmatpush1.msra.mxu0 0.0
        %5333 = vmatprep.subr.mxu0 0.0
        %5334 = vmatpush1.msra.mxu0 0.0
        %5335 = vmatprep.subr.mxu0 0.0
        %5336 = vmatpush1.msra.mxu0 0.0
        %5337 = vmatprep.subr.mxu0 0.0
        %5338 = vmatpush1.msra.mxu0 0.0
        %5339 = vmatprep.subr.mxu0 0.0
        %5340 = vmatpush1.msra.mxu0 0.0
        %5341 = vmatprep.subr.mxu0 0.0
        %5342 = vmatpush1.msra.mxu0 0.0
        %5343 = vmatprep.subr.mxu0 0.0
        %5344 = vmatpush1.msra.mxu0 0.0
        %5345 = vmatprep.subr.mxu0 0.0
        %5346 = vmatpush1.msra.mxu0 0.0
        %5347 = vmatprep.subr.mxu0 0.0
        %5348 = vmatpush1.msra.mxu0 0.0
        %5349 = vmatprep.subr.mxu0 0.0
        %5350 = vmatpush1.msra.mxu0 0.0
        %5351 = vmatprep.subr.mxu0 0.0
        %5352 = vmatpush1.msra.mxu0 0.0
        %5353 = vmatprep.subr.mxu0 0.0
        %5354 = vmatpush1.msra.mxu0 0.0
        %5355 = vmatprep.subr.mxu0 0.0
        %5356 = vmatpush1.msra.mxu0 0.0
        %5357 = vmatprep.subr.mxu0 0.0
        %5358 = vmatpush1.msra.mxu0 0.0
        %5359 = vmatprep.subr.mxu0 0.0
        %5360 = vmatpush1.msra.mxu0 0.0
        %5361 = vmatprep.subr.mxu0 0.0
        %5362 = vmatpush1.msra.mxu0 0.0
        %5363 = vmatprep.subr.mxu0 0.0
        %5364 = vmatpush1.msra.mxu0 0.0
        %5365 = vmatprep.subr.mxu0 0.0
        %5366 = vmatpush1.msra.mxu0 0.0
        %5367 = vmatprep.subr.mxu0 0.0
        %5368 = vmatpush1.msra.mxu0 0.0
        %5369 = vmatprep.subr.mxu0 0.0
        %5370 = vmatpush1.msra.mxu0 0.0
        %5371 = vmatprep.subr.mxu0 0.0
        %5372 = vmatpush1.msra.mxu0 0.0
        %5373 = vmatprep.subr.mxu0 0.0
        %5374 = vmatpush1.msra.mxu0 0.0
        %5375 = vmatprep.subr.mxu0 0.0
        %5376 = vmatpush1.msra.mxu0 0.0
        %5377 = vmatprep.subr.mxu0 0.0
        %5378 = vmatpush1.msra.mxu0 0.0
        %5379 = vmatprep.subr.mxu0 0.0
        %5380 = vmatpush1.msra.mxu0 0.0
        %5381 = vmatprep.subr.mxu0 0.0
        %5382 = vmatpush1.msra.mxu0 0.0
        %5383 = vmatprep.subr.mxu0 0.0
        %5384 = vmatpush1.msra.mxu0 0.0
        %5385 = vmatprep.subr.mxu0 0.0
        %5386 = vmatpush1.msra.mxu0 0.0
        %5387 = vmatprep.mubr.f32.mxu0 0.0
        %5388 = vmatmul.mubr.f32.gmra.mrb[0].mxu0 %v5276
        %v5389 = vpop.f32.mrb[0].mxu0
        %v5390 = vadd.f32 0.0, %v5389
        %v5391 = vpop.f32.mrb[0].mxu0
        %5392 = vmatprep.mubr.f32.mxu0 0.0
        %5393 = vmatmul.mubr.f32.gmra.mrb[0].mxu0 %v5279
        %v5394 = vpop.f32.mrb[0].mxu0
        %v5395 = vadd.f32 0.0, %v5394
        %v5396 = vpop.f32.mrb[0].mxu0
        %5397 = vmatprep.mubr.f32.mxu0 0.0
        %5398 = vmatmul.mubr.f32.gmra.mrb[0].mxu0 %v5282
        %v5399 = vpop.f32.mrb[0].mxu0
        %v5400 = vadd.f32 0.0, %v5399
        %v5401 = vpop.f32.mrb[0].mxu0
        %5402 = vmatprep.mubr.f32.mxu0 0.0
        %5403 = vmatmul.mubr.f32.gmra.mrb[0].mxu0 %v5285
        %v5404 = vpop.f32.mrb[0].mxu0
        %v5405 = vadd.f32 0.0, %v5404
        %v5406 = vpop.f32.mrb[0].mxu0
        %5407 = vmatprep.mubr.f32.mxu0 0.0
        %5408 = vmatmul.mubr.f32.gmra.mrb[0].mxu0 %v5288
        %v5409 = vpop.f32.mrb[0].mxu0
        %v5410 = vadd.f32 0.0, %v5409
        %v5411 = vpop.f32.mrb[0].mxu0
        %5412 = vmatprep.mubr.f32.mxu0 0.0
        %5413 = vmatmul.mubr.f32.gmra.mrb[0].mxu0 %v5291
        %v5414 = vpop.f32.mrb[0].mxu0
        %v5415 = vadd.f32 0.0, %v5414
        %v5416 = vpop.f32.mrb[0].mxu0
        %5417 = vmatprep.mubr.f32.mxu0 0.0
        %5418 = vmatmul.mubr.f32.gmra.mrb[0].mxu0 %v5294
        %v5419 = vpop.f32.mrb[0].mxu0
        %v5420 = vadd.f32 0.0, %v5419
        %v5421 = vpop.f32.mrb[0].mxu0
        %5422 = vmatprep.mubr.f32.mxu0 0.0
        %5423 = vmatmul.mubr.f32.gmra.mrb[0].mxu0 %v5297
        %v5424 = vpop.f32.mrb[0].mxu0
        %v5425 = vadd.f32 0.0, %v5424
        %v5426 = vpop.f32.mrb[0].mxu0
        %5427 = vmatprep.mubr.f32.mxu0 0.0
        %5428 = vmatmul.mubr.f32.gmra.mrb[0].mxu0 %v5300
        %v5429 = vpop.f32.mrb[0].mxu0
        %v5430 = vadd.f32 0.0, %v5429
        %v5431 = vpop.f32.mrb[0].mxu0
        %5432 = vmatprep.mubr.f32.mxu0 0.0
        %5433 = vmatmul.mubr.f32.gmra.mrb[0].mxu0 %v5303
        %v5434 = vpop.f32.mrb[0].mxu0
        %v5435 = vadd.f32 0.0, %v5434
        %v5436 = vpop.f32.mrb[0].mxu0
        %5437 = vmatprep.mubr.f32.mxu0 0.0
        %5438 = vmatmul.mubr.f32.gmra.mrb[0].mxu0 %v5306
        %v5439 = vpop.f32.mrb[0].mxu0
        %v5440 = vadd.f32 0.0, %v5439
        %v5441 = vpop.f32.mrb[0].mxu0
        %5442 = vmatprep.mubr.f32.mxu0 0.0
        %5443 = vmatmul.mubr.f32.gmra.mrb[0].mxu0 %v5309
        %v5444 = vpop.f32.mrb[0].mxu0
        %v5445 = vadd.f32 0.0, %v5444
        %v5446 = vpop.f32.mrb[0].mxu0
        %5447 = vmatprep.mubr.f32.mxu0 0.0
        %5448 = vmatmul.mubr.f32.gmra.mrb[0].mxu0 %v5312
        %v5449 = vpop.f32.mrb[0].mxu0
        %v5450 = vadd.f32 0.0, %v5449
        %v5451 = vpop.f32.mrb[0].mxu0
        %5452 = vmatprep.mubr.f32.mxu0 0.0
        %5453 = vmatmul.mubr.f32.gmra.mrb[0].mxu0 %v5315
        %v5454 = vpop.f32.mrb[0].mxu0
        %v5455 = vadd.f32 0.0, %v5454
        %v5456 = vpop.f32.mrb[0].mxu0
        %5457 = vmatprep.mubr.f32.mxu0 0.0
        %5458 = vmatmul.mubr.f32.gmra.mrb[0].mxu0 %v5318
        %v5459 = vpop.f32.mrb[0].mxu0
        %v5460 = vadd.f32 0.0, %v5459
        %v5461 = vpop.f32.mrb[0].mxu0
        %5462 = vmatprep.mubr.f32.mxu0 0.0
        %5463 = vmatmul.mubr.f32.gmra.mrb[0].mxu0 %v5321
        %v5464 = vpop.f32.mrb[0].mxu0
        %v5465 = vadd.f32 0.0, %v5464
        %v5466 = vpop.f32.mrb[0].mxu0
        %5467 = vdwg.mxu0
        %v5469 = vsel %vm523, %v5234, 0
        %v5472 = vsel %vm523, %v5235, 0
        %v5475 = vsel %vm523, %v5236, 0
        %v5478 = vsel %vm523, %v5237, 0
        %v5481 = vsel %vm523, %v5238, 0
        %v5484 = vsel %vm523, %v5239, 0
        %v5487 = vsel %vm523, %v5240, 0
        %v5490 = vsel %vm523, %v5241, 0
        %v5493 = vsel %vm523, %v5242, 0
        %v5496 = vsel %vm523, %v5243, 0
        %v5499 = vsel %vm523, %v5244, 0
        %v5502 = vsel %vm523, %v5245, 0
        %v5505 = vsel %vm523, %v5246, 0
        %v5508 = vsel %vm523, %v5247, 0
        %v5511 = vsel %vm523, %v5248, 0
        %v5514 = vsel %vm523, %v5249, 0
        %5516 = vmatprep.subr.mxu0 0.0
        %5517 = vmatpush1.msra.mxu0 %v5250
        %5518 = vmatprep.subr.mxu0 0.0
        %5519 = vmatpush1.msra.mxu0 %v5251
        %5520 = vmatprep.subr.mxu0 0.0
        %5521 = vmatpush1.msra.mxu0 %v5252
        %5522 = vmatprep.subr.mxu0 0.0
        %5523 = vmatpush1.msra.mxu0 %v5253
        %5524 = vmatprep.subr.mxu0 0.0
        %5525 = vmatpush1.msra.mxu0 0.0
        %5526 = vmatprep.subr.mxu0 0.0
        %5527 = vmatpush1.msra.mxu0 0.0
        %5528 = vmatprep.subr.mxu0 0.0
        %5529 = vmatpush1.msra.mxu0 0.0
        %5530 = vmatprep.subr.mxu0 0.0
        %5531 = vmatpush1.msra.mxu0 0.0
        %5532 = vmatprep.subr.mxu0 0.0
        %5533 = vmatpush1.msra.mxu0 0.0
        %5534 = vmatprep.subr.mxu0 0.0
        %5535 = vmatpush1.msra.mxu0 0.0
        %5536 = vmatprep.subr.mxu0 0.0
        %5537 = vmatpush1.msra.mxu0 0.0
        %5538 = vmatprep.subr.mxu0 0.0
        %5539 = vmatpush1.msra.mxu0 0.0
        %5540 = vmatprep.subr.mxu0 0.0
        %5541 = vmatpush1.msra.mxu0 0.0
        %5542 = vmatprep.subr.mxu0 0.0
        %5543 = vmatpush1.msra.mxu0 0.0
        %5544 = vmatprep.subr.mxu0 0.0
        %5545 = vmatpush1.msra.mxu0 0.0
        %5546 = vmatprep.subr.mxu0 0.0
        %5547 = vmatpush1.msra.mxu0 0.0
        %5548 = vmatprep.subr.mxu0 0.0
        %5549 = vmatpush1.msra.mxu0 0.0
        %5550 = vmatprep.subr.mxu0 0.0
        %5551 = vmatpush1.msra.mxu0 0.0
        %5552 = vmatprep.subr.mxu0 0.0
        %5553 = vmatpush1.msra.mxu0 0.0
        %5554 = vmatprep.subr.mxu0 0.0
        %5555 = vmatpush1.msra.mxu0 0.0
        %5556 = vmatprep.subr.mxu0 0.0
        %5557 = vmatpush1.msra.mxu0 0.0
        %5558 = vmatprep.subr.mxu0 0.0
        %5559 = vmatpush1.msra.mxu0 0.0
        %5560 = vmatprep.subr.mxu0 0.0
        %5561 = vmatpush1.msra.mxu0 0.0
        %5562 = vmatprep.subr.mxu0 0.0
        %5563 = vmatpush1.msra.mxu0 0.0
        %5564 = vmatprep.subr.mxu0 0.0
        %5565 = vmatpush1.msra.mxu0 0.0
        %5566 = vmatprep.subr.mxu0 0.0
        %5567 = vmatpush1.msra.mxu0 0.0
        %5568 = vmatprep.subr.mxu0 0.0
        %5569 = vmatpush1.msra.mxu0 0.0
        %5570 = vmatprep.subr.mxu0 0.0
        %5571 = vmatpush1.msra.mxu0 0.0
        %5572 = vmatprep.subr.mxu0 0.0
        %5573 = vmatpush1.msra.mxu0 0.0
        %5574 = vmatprep.subr.mxu0 0.0
        %5575 = vmatpush1.msra.mxu0 0.0
        %5576 = vmatprep.subr.mxu0 0.0
        %5577 = vmatpush1.msra.mxu0 0.0
        %5578 = vmatprep.subr.mxu0 0.0
        %5579 = vmatpush1.msra.mxu0 0.0
        %5580 = vmatprep.mubr.f32.mxu0 0.0
        %5581 = vmatmul.mubr.f32.gmra.mrb[0].mxu0 %v5469
        %v5582 = vpop.f32.mrb[0].mxu0
        %v5583 = vadd.f32 %v5390, %v5582
        %v5584 = vpop.f32.mrb[0].mxu0
        %5585 = vmatprep.mubr.f32.mxu0 0.0
        %5586 = vmatmul.mubr.f32.gmra.mrb[0].mxu0 %v5472
        %v5587 = vpop.f32.mrb[0].mxu0
        %v5588 = vadd.f32 %v5395, %v5587
        %v5589 = vpop.f32.mrb[0].mxu0
        %5590 = vmatprep.mubr.f32.mxu0 0.0
        %5591 = vmatmul.mubr.f32.gmra.mrb[0].mxu0 %v5475
        %v5592 = vpop.f32.mrb[0].mxu0
        %v5593 = vadd.f32 %v5400, %v5592
        %v5594 = vpop.f32.mrb[0].mxu0
        %5595 = vmatprep.mubr.f32.mxu0 0.0
        %5596 = vmatmul.mubr.f32.gmra.mrb[0].mxu0 %v5478
        %v5597 = vpop.f32.mrb[0].mxu0
        %v5598 = vadd.f32 %v5405, %v5597
        %v5599 = vpop.f32.mrb[0].mxu0
        %5600 = vmatprep.mubr.f32.mxu0 0.0
        %5601 = vmatmul.mubr.f32.gmra.mrb[0].mxu0 %v5481
        %v5602 = vpop.f32.mrb[0].mxu0
        %v5603 = vadd.f32 %v5410, %v5602
        %v5604 = vpop.f32.mrb[0].mxu0
        %5605 = vmatprep.mubr.f32.mxu0 0.0
        %5606 = vmatmul.mubr.f32.gmra.mrb[0].mxu0 %v5484
        %v5607 = vpop.f32.mrb[0].mxu0
        %v5608 = vadd.f32 %v5415, %v5607
        %v5609 = vpop.f32.mrb[0].mxu0
        %5610 = vmatprep.mubr.f32.mxu0 0.0
        %5611 = vmatmul.mubr.f32.gmra.mrb[0].mxu0 %v5487
        %v5612 = vpop.f32.mrb[0].mxu0
        %v5613 = vadd.f32 %v5420, %v5612
        %v5614 = vpop.f32.mrb[0].mxu0
        %5615 = vmatprep.mubr.f32.mxu0 0.0
        %5616 = vmatmul.mubr.f32.gmra.mrb[0].mxu0 %v5490
        %v5617 = vpop.f32.mrb[0].mxu0
        %v5618 = vadd.f32 %v5425, %v5617
        %v5619 = vpop.f32.mrb[0].mxu0
        %5620 = vmatprep.mubr.f32.mxu0 0.0
        %5621 = vmatmul.mubr.f32.gmra.mrb[0].mxu0 %v5493
        %v5622 = vpop.f32.mrb[0].mxu0
        %v5623 = vadd.f32 %v5430, %v5622
        %v5624 = vpop.f32.mrb[0].mxu0
        %5625 = vmatprep.mubr.f32.mxu0 0.0
        %5626 = vmatmul.mubr.f32.gmra.mrb[0].mxu0 %v5496
        %v5627 = vpop.f32.mrb[0].mxu0
        %v5628 = vadd.f32 %v5435, %v5627
        %v5629 = vpop.f32.mrb[0].mxu0
        %5630 = vmatprep.mubr.f32.mxu0 0.0
        %5631 = vmatmul.mubr.f32.gmra.mrb[0].mxu0 %v5499
        %v5632 = vpop.f32.mrb[0].mxu0
        %v5633 = vadd.f32 %v5440, %v5632
        %v5634 = vpop.f32.mrb[0].mxu0
        %5635 = vmatprep.mubr.f32.mxu0 0.0
        %5636 = vmatmul.mubr.f32.gmra.mrb[0].mxu0 %v5502
        %v5637 = vpop.f32.mrb[0].mxu0
        %v5638 = vadd.f32 %v5445, %v5637
        %v5639 = vpop.f32.mrb[0].mxu0
        %5640 = vmatprep.mubr.f32.mxu0 0.0
        %5641 = vmatmul.mubr.f32.gmra.mrb[0].mxu0 %v5505
        %v5642 = vpop.f32.mrb[0].mxu0
        %v5643 = vadd.f32 %v5450, %v5642
        %v5644 = vpop.f32.mrb[0].mxu0
        %5645 = vmatprep.mubr.f32.mxu0 0.0
        %5646 = vmatmul.mubr.f32.gmra.mrb[0].mxu0 %v5508
        %v5647 = vpop.f32.mrb[0].mxu0
        %v5648 = vadd.f32 %v5455, %v5647
        %v5649 = vpop.f32.mrb[0].mxu0
        %5650 = vmatprep.mubr.f32.mxu0 0.0
        %5651 = vmatmul.mubr.f32.gmra.mrb[0].mxu0 %v5511
        %v5652 = vpop.f32.mrb[0].mxu0
        %v5653 = vadd.f32 %v5460, %v5652
        %v5654 = vpop.f32.mrb[0].mxu0
        %5655 = vmatprep.mubr.f32.mxu0 0.0
        %5656 = vmatmul.mubr.f32.gmra.mrb[0].mxu0 %v5514
        %v5657 = vpop.f32.mrb[0].mxu0
        %v5658 = vadd.f32 %v5465, %v5657
        %v5659 = vpop.f32.mrb[0].mxu0
        %5660 = vdwg.mxu0
        %v5661 = vld [vmem:[#allocation3 + $0x2] sm:$0xff]
        %v5662 = vld [vmem:[#allocation3 + $0xa] sm:$0xff]
        %v5663 = vld [vmem:[#allocation3 + $0x12] sm:$0xff]
        %v5664 = vld [vmem:[#allocation3 + $0x1a] sm:$0xff]
        %v5665 = vld [vmem:[#allocation3 + $0x22] sm:$0xff]
        %v5666 = vld [vmem:[#allocation3 + $0x2a] sm:$0xff]
        %v5667 = vld [vmem:[#allocation3 + $0x32] sm:$0xff]
        %v5668 = vld [vmem:[#allocation3 + $0x3a] sm:$0xff]
        %v5669 = vld [vmem:[#allocation3 + $0x42] sm:$0xff]
        %v5670 = vld [vmem:[#allocation3 + $0x4a] sm:$0xff]
        %v5671 = vld [vmem:[#allocation3 + $0x52] sm:$0xff]
        %v5672 = vld [vmem:[#allocation3 + $0x5a] sm:$0xff]
        %v5673 = vld [vmem:[#allocation3 + $0x62] sm:$0xff]
        %v5674 = vld [vmem:[#allocation3 + $0x6a] sm:$0xff]
        %v5675 = vld [vmem:[#allocation3 + $0x72] sm:$0xff]
        %v5676 = vld [vmem:[#allocation3 + $0x7a] sm:$0xff]
        %s5677 = scalar_lea.vmem %s3, 64
        %v5678 = vld [vmem:[%s5677] sm:$0xff]
        %v5679 = vld [vmem:[%s5677 + $0x8] sm:$0xff]
        %v5680 = vld [vmem:[%s5677 + $0x10] sm:$0xff]
        %v5681 = vld [vmem:[%s5677 + $0x18] sm:$0xff]
        %v5683 = vsel %vm523, %v5661, 0
        %v5686 = vsel %vm523, %v5662, 0
        %v5689 = vsel %vm523, %v5663, 0
        %v5692 = vsel %vm523, %v5664, 0
        %v5695 = vsel %vm523, %v5665, 0
        %v5698 = vsel %vm523, %v5666, 0
        %v5701 = vsel %vm523, %v5667, 0
        %v5704 = vsel %vm523, %v5668, 0
        %v5707 = vsel %vm523, %v5669, 0
        %v5710 = vsel %vm523, %v5670, 0
        %v5713 = vsel %vm523, %v5671, 0
        %v5716 = vsel %vm523, %v5672, 0
        %v5719 = vsel %vm523, %v5673, 0
        %v5722 = vsel %vm523, %v5674, 0
        %v5725 = vsel %vm523, %v5675, 0
        %v5728 = vsel %vm523, %v5676, 0
        %5730 = vmatprep.subr.mxu0 0.0
        %5731 = vmatpush1.msra.mxu0 %v5678
        %5732 = vmatprep.subr.mxu0 0.0
        %5733 = vmatpush1.msra.mxu0 %v5679
        %5734 = vmatprep.subr.mxu0 0.0
        %5735 = vmatpush1.msra.mxu0 %v5680
        %5736 = vmatprep.subr.mxu0 0.0
        %5737 = vmatpush1.msra.mxu0 %v5681
        %5738 = vmatprep.subr.mxu0 0.0
        %5739 = vmatpush1.msra.mxu0 0.0
        %5740 = vmatprep.subr.mxu0 0.0
        %5741 = vmatpush1.msra.mxu0 0.0
        %5742 = vmatprep.subr.mxu0 0.0
        %5743 = vmatpush1.msra.mxu0 0.0
        %5744 = vmatprep.subr.mxu0 0.0
        %5745 = vmatpush1.msra.mxu0 0.0
        %5746 = vmatprep.subr.mxu0 0.0
        %5747 = vmatpush1.msra.mxu0 0.0
        %5748 = vmatprep.subr.mxu0 0.0
        %5749 = vmatpush1.msra.mxu0 0.0
        %5750 = vmatprep.subr.mxu0 0.0
        %5751 = vmatpush1.msra.mxu0 0.0
        %5752 = vmatprep.subr.mxu0 0.0
        %5753 = vmatpush1.msra.mxu0 0.0
        %5754 = vmatprep.subr.mxu0 0.0
        %5755 = vmatpush1.msra.mxu0 0.0
        %5756 = vmatprep.subr.mxu0 0.0
        %5757 = vmatpush1.msra.mxu0 0.0
        %5758 = vmatprep.subr.mxu0 0.0
        %5759 = vmatpush1.msra.mxu0 0.0
        %5760 = vmatprep.subr.mxu0 0.0
        %5761 = vmatpush1.msra.mxu0 0.0
        %5762 = vmatprep.subr.mxu0 0.0
        %5763 = vmatpush1.msra.mxu0 0.0
        %5764 = vmatprep.subr.mxu0 0.0
        %5765 = vmatpush1.msra.mxu0 0.0
        %5766 = vmatprep.subr.mxu0 0.0
        %5767 = vmatpush1.msra.mxu0 0.0
        %5768 = vmatprep.subr.mxu0 0.0
        %5769 = vmatpush1.msra.mxu0 0.0
        %5770 = vmatprep.subr.mxu0 0.0
        %5771 = vmatpush1.msra.mxu0 0.0
        %5772 = vmatprep.subr.mxu0 0.0
        %5773 = vmatpush1.msra.mxu0 0.0
        %5774 = vmatprep.subr.mxu0 0.0
        %5775 = vmatpush1.msra.mxu0 0.0
        %5776 = vmatprep.subr.mxu0 0.0
        %5777 = vmatpush1.msra.mxu0 0.0
        %5778 = vmatprep.subr.mxu0 0.0
        %5779 = vmatpush1.msra.mxu0 0.0
        %5780 = vmatprep.subr.mxu0 0.0
        %5781 = vmatpush1.msra.mxu0 0.0
        %5782 = vmatprep.subr.mxu0 0.0
        %5783 = vmatpush1.msra.mxu0 0.0
        %5784 = vmatprep.subr.mxu0 0.0
        %5785 = vmatpush1.msra.mxu0 0.0
        %5786 = vmatprep.subr.mxu0 0.0
        %5787 = vmatpush1.msra.mxu0 0.0
        %5788 = vmatprep.subr.mxu0 0.0
        %5789 = vmatpush1.msra.mxu0 0.0
        %5790 = vmatprep.subr.mxu0 0.0
        %5791 = vmatpush1.msra.mxu0 0.0
        %5792 = vmatprep.subr.mxu0 0.0
        %5793 = vmatpush1.msra.mxu0 0.0
        %5794 = vmatprep.mubr.f32.mxu0 0.0
        %5795 = vmatmul.mubr.f32.gmra.mrb[0].mxu0 %v5683
        %v5796 = vpop.f32.mrb[0].mxu0
        %v5797 = vadd.f32 0.0, %v5796
        %v5798 = vpop.f32.mrb[0].mxu0
        %5799 = vmatprep.mubr.f32.mxu0 0.0
        %5800 = vmatmul.mubr.f32.gmra.mrb[0].mxu0 %v5686
        %v5801 = vpop.f32.mrb[0].mxu0
        %v5802 = vadd.f32 0.0, %v5801
        %v5803 = vpop.f32.mrb[0].mxu0
        %5804 = vmatprep.mubr.f32.mxu0 0.0
        %5805 = vmatmul.mubr.f32.gmra.mrb[0].mxu0 %v5689
        %v5806 = vpop.f32.mrb[0].mxu0
        %v5807 = vadd.f32 0.0, %v5806
        %v5808 = vpop.f32.mrb[0].mxu0
        %5809 = vmatprep.mubr.f32.mxu0 0.0
        %5810 = vmatmul.mubr.f32.gmra.mrb[0].mxu0 %v5692
        %v5811 = vpop.f32.mrb[0].mxu0
        %v5812 = vadd.f32 0.0, %v5811
        %v5813 = vpop.f32.mrb[0].mxu0
        %5814 = vmatprep.mubr.f32.mxu0 0.0
        %5815 = vmatmul.mubr.f32.gmra.mrb[0].mxu0 %v5695
        %v5816 = vpop.f32.mrb[0].mxu0
        %v5817 = vadd.f32 0.0, %v5816
        %v5818 = vpop.f32.mrb[0].mxu0
        %5819 = vmatprep.mubr.f32.mxu0 0.0
        %5820 = vmatmul.mubr.f32.gmra.mrb[0].mxu0 %v5698
        %v5821 = vpop.f32.mrb[0].mxu0
        %v5822 = vadd.f32 0.0, %v5821
        %v5823 = vpop.f32.mrb[0].mxu0
        %5824 = vmatprep.mubr.f32.mxu0 0.0
        %5825 = vmatmul.mubr.f32.gmra.mrb[0].mxu0 %v5701
        %v5826 = vpop.f32.mrb[0].mxu0
        %v5827 = vadd.f32 0.0, %v5826
        %v5828 = vpop.f32.mrb[0].mxu0
        %5829 = vmatprep.mubr.f32.mxu0 0.0
        %5830 = vmatmul.mubr.f32.gmra.mrb[0].mxu0 %v5704
        %v5831 = vpop.f32.mrb[0].mxu0
        %v5832 = vadd.f32 0.0, %v5831
        %v5833 = vpop.f32.mrb[0].mxu0
        %5834 = vmatprep.mubr.f32.mxu0 0.0
        %5835 = vmatmul.mubr.f32.gmra.mrb[0].mxu0 %v5707
        %v5836 = vpop.f32.mrb[0].mxu0
        %v5837 = vadd.f32 0.0, %v5836
        %v5838 = vpop.f32.mrb[0].mxu0
        %5839 = vmatprep.mubr.f32.mxu0 0.0
        %5840 = vmatmul.mubr.f32.gmra.mrb[0].mxu0 %v5710
        %v5841 = vpop.f32.mrb[0].mxu0
        %v5842 = vadd.f32 0.0, %v5841
        %v5843 = vpop.f32.mrb[0].mxu0
        %5844 = vmatprep.mubr.f32.mxu0 0.0
        %5845 = vmatmul.mubr.f32.gmra.mrb[0].mxu0 %v5713
        %v5846 = vpop.f32.mrb[0].mxu0
        %v5847 = vadd.f32 0.0, %v5846
        %v5848 = vpop.f32.mrb[0].mxu0
        %5849 = vmatprep.mubr.f32.mxu0 0.0
        %5850 = vmatmul.mubr.f32.gmra.mrb[0].mxu0 %v5716
        %v5851 = vpop.f32.mrb[0].mxu0
        %v5852 = vadd.f32 0.0, %v5851
        %v5853 = vpop.f32.mrb[0].mxu0
        %5854 = vmatprep.mubr.f32.mxu0 0.0
        %5855 = vmatmul.mubr.f32.gmra.mrb[0].mxu0 %v5719
        %v5856 = vpop.f32.mrb[0].mxu0
        %v5857 = vadd.f32 0.0, %v5856
        %v5858 = vpop.f32.mrb[0].mxu0
        %5859 = vmatprep.mubr.f32.mxu0 0.0
        %5860 = vmatmul.mubr.f32.gmra.mrb[0].mxu0 %v5722
        %v5861 = vpop.f32.mrb[0].mxu0
        %v5862 = vadd.f32 0.0, %v5861
        %v5863 = vpop.f32.mrb[0].mxu0
        %5864 = vmatprep.mubr.f32.mxu0 0.0
        %5865 = vmatmul.mubr.f32.gmra.mrb[0].mxu0 %v5725
        %v5866 = vpop.f32.mrb[0].mxu0
        %v5867 = vadd.f32 0.0, %v5866
        %v5868 = vpop.f32.mrb[0].mxu0
        %5869 = vmatprep.mubr.f32.mxu0 0.0
        %5870 = vmatmul.mubr.f32.gmra.mrb[0].mxu0 %v5728
        %v5871 = vpop.f32.mrb[0].mxu0
        %v5872 = vadd.f32 0.0, %v5871
        %v5873 = vpop.f32.mrb[0].mxu0
        %5874 = vdwg.mxu0
        %v5875 = vadd.f32 %v5583, %v5797
        %v5876 = vadd.f32 %v5588, %v5802
        %v5877 = vadd.f32 %v5593, %v5807
        %v5878 = vadd.f32 %v5598, %v5812
        %v5879 = vadd.f32 %v5603, %v5817
        %v5880 = vadd.f32 %v5608, %v5822
        %v5881 = vadd.f32 %v5613, %v5827
        %v5882 = vadd.f32 %v5618, %v5832
        %v5883 = vadd.f32 %v5623, %v5837
        %v5884 = vadd.f32 %v5628, %v5842
        %v5885 = vadd.f32 %v5633, %v5847
        %v5886 = vadd.f32 %v5638, %v5852
        %v5887 = vadd.f32 %v5643, %v5857
        %v5888 = vadd.f32 %v5648, %v5862
        %v5889 = vadd.f32 %v5653, %v5867
        %v5890 = vadd.f32 %v5658, %v5872
        %v5891 = vld [vmem:[#allocation3 + $0x10] sm:$0xff]
        %v5892 = vld [vmem:[#allocation3 + $0x18] sm:$0xff]
        %v5893 = vld [vmem:[#allocation3 + $0x20] sm:$0xff]
        %v5894 = vld [vmem:[#allocation3 + $0x28] sm:$0xff]
        %v5895 = vld [vmem:[#allocation3 + $0x30] sm:$0xff]
        %v5896 = vld [vmem:[#allocation3 + $0x38] sm:$0xff]
        %v5897 = vld [vmem:[#allocation3 + $0x40] sm:$0xff]
        %v5898 = vld [vmem:[#allocation3 + $0x48] sm:$0xff]
        %v5899 = vld [vmem:[#allocation3 + $0x50] sm:$0xff]
        %v5900 = vld [vmem:[#allocation3 + $0x58] sm:$0xff]
        %v5901 = vld [vmem:[#allocation3 + $0x60] sm:$0xff]
        %v5902 = vld [vmem:[#allocation3 + $0x68] sm:$0xff]
        %v5903 = vld [vmem:[#allocation3 + $0x70] sm:$0xff]
        %v5904 = vld [vmem:[#allocation3 + $0x78] sm:$0xff]
        %v5905 = vld [vmem:[#allocation3 + $0x80] sm:$0xff]
        %v5906 = vld [vmem:[#allocation3 + $0x88] sm:$0xff]
        %s5907 = scalar_lea.vmem %s3, 96
        %v5908 = vld [vmem:[%s5907] sm:$0xff]
        %v5909 = vld [vmem:[%s5907 + $0x8] sm:$0xff]
        %v5910 = vld [vmem:[%s5907 + $0x10] sm:$0xff]
        %v5911 = vld [vmem:[%s5907 + $0x18] sm:$0xff]
        %v5913 = vsel %vm523, %v5891, 0
        %v5916 = vsel %vm523, %v5892, 0
        %v5919 = vsel %vm523, %v5893, 0
        %v5922 = vsel %vm523, %v5894, 0
        %v5925 = vsel %vm523, %v5895, 0
        %v5928 = vsel %vm523, %v5896, 0
        %v5931 = vsel %vm523, %v5897, 0
        %v5934 = vsel %vm523, %v5898, 0
        %v5937 = vsel %vm523, %v5899, 0
        %v5940 = vsel %vm523, %v5900, 0
        %v5943 = vsel %vm523, %v5901, 0
        %v5946 = vsel %vm523, %v5902, 0
        %v5949 = vsel %vm523, %v5903, 0
        %v5952 = vsel %vm523, %v5904, 0
        %v5955 = vsel %vm523, %v5905, 0
        %v5958 = vsel %vm523, %v5906, 0
        %5960 = vmatprep.subr.mxu0 0.0
        %5961 = vmatpush1.msra.mxu0 %v5908
        %5962 = vmatprep.subr.mxu0 0.0
        %5963 = vmatpush1.msra.mxu0 %v5909
        %5964 = vmatprep.subr.mxu0 0.0
        %5965 = vmatpush1.msra.mxu0 %v5910
        %5966 = vmatprep.subr.mxu0 0.0
        %5967 = vmatpush1.msra.mxu0 %v5911
        %5968 = vmatprep.subr.mxu0 0.0
        %5969 = vmatpush1.msra.mxu0 0.0
        %5970 = vmatprep.subr.mxu0 0.0
        %5971 = vmatpush1.msra.mxu0 0.0
        %5972 = vmatprep.subr.mxu0 0.0
        %5973 = vmatpush1.msra.mxu0 0.0
        %5974 = vmatprep.subr.mxu0 0.0
        %5975 = vmatpush1.msra.mxu0 0.0
        %5976 = vmatprep.subr.mxu0 0.0
        %5977 = vmatpush1.msra.mxu0 0.0
        %5978 = vmatprep.subr.mxu0 0.0
        %5979 = vmatpush1.msra.mxu0 0.0
        %5980 = vmatprep.subr.mxu0 0.0
        %5981 = vmatpush1.msra.mxu0 0.0
        %5982 = vmatprep.subr.mxu0 0.0
        %5983 = vmatpush1.msra.mxu0 0.0
        %5984 = vmatprep.subr.mxu0 0.0
        %5985 = vmatpush1.msra.mxu0 0.0
        %5986 = vmatprep.subr.mxu0 0.0
        %5987 = vmatpush1.msra.mxu0 0.0
        %5988 = vmatprep.subr.mxu0 0.0
        %5989 = vmatpush1.msra.mxu0 0.0
        %5990 = vmatprep.subr.mxu0 0.0
        %5991 = vmatpush1.msra.mxu0 0.0
        %5992 = vmatprep.subr.mxu0 0.0
        %5993 = vmatpush1.msra.mxu0 0.0
        %5994 = vmatprep.subr.mxu0 0.0
        %5995 = vmatpush1.msra.mxu0 0.0
        %5996 = vmatprep.subr.mxu0 0.0
        %5997 = vmatpush1.msra.mxu0 0.0
        %5998 = vmatprep.subr.mxu0 0.0
        %5999 = vmatpush1.msra.mxu0 0.0
        %6000 = vmatprep.subr.mxu0 0.0
        %6001 = vmatpush1.msra.mxu0 0.0
        %6002 = vmatprep.subr.mxu0 0.0
        %6003 = vmatpush1.msra.mxu0 0.0
        %6004 = vmatprep.subr.mxu0 0.0
        %6005 = vmatpush1.msra.mxu0 0.0
        %6006 = vmatprep.subr.mxu0 0.0
        %6007 = vmatpush1.msra.mxu0 0.0
        %6008 = vmatprep.subr.mxu0 0.0
        %6009 = vmatpush1.msra.mxu0 0.0
        %6010 = vmatprep.subr.mxu0 0.0
        %6011 = vmatpush1.msra.mxu0 0.0
        %6012 = vmatprep.subr.mxu0 0.0
        %6013 = vmatpush1.msra.mxu0 0.0
        %6014 = vmatprep.subr.mxu0 0.0
        %6015 = vmatpush1.msra.mxu0 0.0
        %6016 = vmatprep.subr.mxu0 0.0
        %6017 = vmatpush1.msra.mxu0 0.0
        %6018 = vmatprep.subr.mxu0 0.0
        %6019 = vmatpush1.msra.mxu0 0.0
        %6020 = vmatprep.subr.mxu0 0.0
        %6021 = vmatpush1.msra.mxu0 0.0
        %6022 = vmatprep.subr.mxu0 0.0
        %6023 = vmatpush1.msra.mxu0 0.0
        %6024 = vmatprep.mubr.f32.mxu0 0.0
        %6025 = vmatmul.mubr.f32.gmra.mrb[0].mxu0 %v5913
        %v6026 = vpop.f32.mrb[0].mxu0
        %v6027 = vadd.f32 0.0, %v6026
        %v6028 = vpop.f32.mrb[0].mxu0
        %6029 = vmatprep.mubr.f32.mxu0 0.0
        %6030 = vmatmul.mubr.f32.gmra.mrb[0].mxu0 %v5916
        %v6031 = vpop.f32.mrb[0].mxu0
        %v6032 = vadd.f32 0.0, %v6031
        %v6033 = vpop.f32.mrb[0].mxu0
        %6034 = vmatprep.mubr.f32.mxu0 0.0
        %6035 = vmatmul.mubr.f32.gmra.mrb[0].mxu0 %v5919
        %v6036 = vpop.f32.mrb[0].mxu0
        %v6037 = vadd.f32 0.0, %v6036
        %v6038 = vpop.f32.mrb[0].mxu0
        %6039 = vmatprep.mubr.f32.mxu0 0.0
        %6040 = vmatmul.mubr.f32.gmra.mrb[0].mxu0 %v5922
        %v6041 = vpop.f32.mrb[0].mxu0
        %v6042 = vadd.f32 0.0, %v6041
        %v6043 = vpop.f32.mrb[0].mxu0
        %6044 = vmatprep.mubr.f32.mxu0 0.0
        %6045 = vmatmul.mubr.f32.gmra.mrb[0].mxu0 %v5925
        %v6046 = vpop.f32.mrb[0].mxu0
        %v6047 = vadd.f32 0.0, %v6046
        %v6048 = vpop.f32.mrb[0].mxu0
        %6049 = vmatprep.mubr.f32.mxu0 0.0
        %6050 = vmatmul.mubr.f32.gmra.mrb[0].mxu0 %v5928
        %v6051 = vpop.f32.mrb[0].mxu0
        %v6052 = vadd.f32 0.0, %v6051
        %v6053 = vpop.f32.mrb[0].mxu0
        %6054 = vmatprep.mubr.f32.mxu0 0.0
        %6055 = vmatmul.mubr.f32.gmra.mrb[0].mxu0 %v5931
        %v6056 = vpop.f32.mrb[0].mxu0
        %v6057 = vadd.f32 0.0, %v6056
        %v6058 = vpop.f32.mrb[0].mxu0
        %6059 = vmatprep.mubr.f32.mxu0 0.0
        %6060 = vmatmul.mubr.f32.gmra.mrb[0].mxu0 %v5934
        %v6061 = vpop.f32.mrb[0].mxu0
        %v6062 = vadd.f32 0.0, %v6061
        %v6063 = vpop.f32.mrb[0].mxu0
        %6064 = vmatprep.mubr.f32.mxu0 0.0
        %6065 = vmatmul.mubr.f32.gmra.mrb[0].mxu0 %v5937
        %v6066 = vpop.f32.mrb[0].mxu0
        %v6067 = vadd.f32 0.0, %v6066
        %v6068 = vpop.f32.mrb[0].mxu0
        %6069 = vmatprep.mubr.f32.mxu0 0.0
        %6070 = vmatmul.mubr.f32.gmra.mrb[0].mxu0 %v5940
        %v6071 = vpop.f32.mrb[0].mxu0
        %v6072 = vadd.f32 0.0, %v6071
        %v6073 = vpop.f32.mrb[0].mxu0
        %6074 = vmatprep.mubr.f32.mxu0 0.0
        %6075 = vmatmul.mubr.f32.gmra.mrb[0].mxu0 %v5943
        %v6076 = vpop.f32.mrb[0].mxu0
        %v6077 = vadd.f32 0.0, %v6076
        %v6078 = vpop.f32.mrb[0].mxu0
        %6079 = vmatprep.mubr.f32.mxu0 0.0
        %6080 = vmatmul.mubr.f32.gmra.mrb[0].mxu0 %v5946
        %v6081 = vpop.f32.mrb[0].mxu0
        %v6082 = vadd.f32 0.0, %v6081
        %v6083 = vpop.f32.mrb[0].mxu0
        %6084 = vmatprep.mubr.f32.mxu0 0.0
        %6085 = vmatmul.mubr.f32.gmra.mrb[0].mxu0 %v5949
        %v6086 = vpop.f32.mrb[0].mxu0
        %v6087 = vadd.f32 0.0, %v6086
        %v6088 = vpop.f32.mrb[0].mxu0
        %6089 = vmatprep.mubr.f32.mxu0 0.0
        %6090 = vmatmul.mubr.f32.gmra.mrb[0].mxu0 %v5952
        %v6091 = vpop.f32.mrb[0].mxu0
        %v6092 = vadd.f32 0.0, %v6091
        %v6093 = vpop.f32.mrb[0].mxu0
        %6094 = vmatprep.mubr.f32.mxu0 0.0
        %6095 = vmatmul.mubr.f32.gmra.mrb[0].mxu0 %v5955
        %v6096 = vpop.f32.mrb[0].mxu0
        %v6097 = vadd.f32 0.0, %v6096
        %v6098 = vpop.f32.mrb[0].mxu0
        %6099 = vmatprep.mubr.f32.mxu0 0.0
        %6100 = vmatmul.mubr.f32.gmra.mrb[0].mxu0 %v5958
        %v6101 = vpop.f32.mrb[0].mxu0
        %v6102 = vadd.f32 0.0, %v6101
        %v6103 = vpop.f32.mrb[0].mxu0
        %6104 = vdwg.mxu0
        %v6105 = vadd.f32 %v5875, %v6027
        %v6106 = vadd.f32 %v5876, %v6032
        %v6107 = vadd.f32 %v5877, %v6037
        %v6108 = vadd.f32 %v5878, %v6042
        %v6109 = vadd.f32 %v5879, %v6047
        %v6110 = vadd.f32 %v5880, %v6052
        %v6111 = vadd.f32 %v5881, %v6057
        %v6112 = vadd.f32 %v5882, %v6062
        %v6113 = vadd.f32 %v5883, %v6067
        %v6114 = vadd.f32 %v5884, %v6072
        %v6115 = vadd.f32 %v5885, %v6077
        %v6116 = vadd.f32 %v5886, %v6082
        %v6117 = vadd.f32 %v5887, %v6087
        %v6118 = vadd.f32 %v5888, %v6092
        %v6119 = vadd.f32 %v5889, %v6097
        %v6120 = vadd.f32 %v5890, %v6102
        %v6121 = vld [vmem:[#allocation3 + $0x11] sm:$0xff]
        %v6122 = vld [vmem:[#allocation3 + $0x19] sm:$0xff]
        %v6123 = vld [vmem:[#allocation3 + $0x21] sm:$0xff]
        %v6124 = vld [vmem:[#allocation3 + $0x29] sm:$0xff]
        %v6125 = vld [vmem:[#allocation3 + $0x31] sm:$0xff]
        %v6126 = vld [vmem:[#allocation3 + $0x39] sm:$0xff]
        %v6127 = vld [vmem:[#allocation3 + $0x41] sm:$0xff]
        %v6128 = vld [vmem:[#allocation3 + $0x49] sm:$0xff]
        %v6129 = vld [vmem:[#allocation3 + $0x51] sm:$0xff]
        %v6130 = vld [vmem:[#allocation3 + $0x59] sm:$0xff]
        %v6131 = vld [vmem:[#allocation3 + $0x61] sm:$0xff]
        %v6132 = vld [vmem:[#allocation3 + $0x69] sm:$0xff]
        %v6133 = vld [vmem:[#allocation3 + $0x71] sm:$0xff]
        %v6134 = vld [vmem:[#allocation3 + $0x79] sm:$0xff]
        %v6135 = vld [vmem:[#allocation3 + $0x81] sm:$0xff]
        %v6136 = vld [vmem:[#allocation3 + $0x89] sm:$0xff]
        %s6137 = scalar_lea.vmem %s3, 128
        %v6138 = vld [vmem:[%s6137] sm:$0xff]
        %v6139 = vld [vmem:[%s6137 + $0x8] sm:$0xff]
        %v6140 = vld [vmem:[%s6137 + $0x10] sm:$0xff]
        %v6141 = vld [vmem:[%s6137 + $0x18] sm:$0xff]
        %v6143 = vsel %vm523, %v6121, 0
        %v6146 = vsel %vm523, %v6122, 0
        %v6149 = vsel %vm523, %v6123, 0
        %v6152 = vsel %vm523, %v6124, 0
        %v6155 = vsel %vm523, %v6125, 0
        %v6158 = vsel %vm523, %v6126, 0
        %v6161 = vsel %vm523, %v6127, 0
        %v6164 = vsel %vm523, %v6128, 0
        %v6167 = vsel %vm523, %v6129, 0
        %v6170 = vsel %vm523, %v6130, 0
        %v6173 = vsel %vm523, %v6131, 0
        %v6176 = vsel %vm523, %v6132, 0
        %v6179 = vsel %vm523, %v6133, 0
        %v6182 = vsel %vm523, %v6134, 0
        %v6185 = vsel %vm523, %v6135, 0
        %v6188 = vsel %vm523, %v6136, 0
        %6190 = vmatprep.subr.mxu0 0.0
        %6191 = vmatpush1.msra.mxu0 %v6138
        %6192 = vmatprep.subr.mxu0 0.0
        %6193 = vmatpush1.msra.mxu0 %v6139
        %6194 = vmatprep.subr.mxu0 0.0
        %6195 = vmatpush1.msra.mxu0 %v6140
        %6196 = vmatprep.subr.mxu0 0.0
        %6197 = vmatpush1.msra.mxu0 %v6141
        %6198 = vmatprep.subr.mxu0 0.0
        %6199 = vmatpush1.msra.mxu0 0.0
        %6200 = vmatprep.subr.mxu0 0.0
        %6201 = vmatpush1.msra.mxu0 0.0
        %6202 = vmatprep.subr.mxu0 0.0
        %6203 = vmatpush1.msra.mxu0 0.0
        %6204 = vmatprep.subr.mxu0 0.0
        %6205 = vmatpush1.msra.mxu0 0.0
        %6206 = vmatprep.subr.mxu0 0.0
        %6207 = vmatpush1.msra.mxu0 0.0
        %6208 = vmatprep.subr.mxu0 0.0
        %6209 = vmatpush1.msra.mxu0 0.0
        %6210 = vmatprep.subr.mxu0 0.0
        %6211 = vmatpush1.msra.mxu0 0.0
        %6212 = vmatprep.subr.mxu0 0.0
        %6213 = vmatpush1.msra.mxu0 0.0
        %6214 = vmatprep.subr.mxu0 0.0
        %6215 = vmatpush1.msra.mxu0 0.0
        %6216 = vmatprep.subr.mxu0 0.0
        %6217 = vmatpush1.msra.mxu0 0.0
        %6218 = vmatprep.subr.mxu0 0.0
        %6219 = vmatpush1.msra.mxu0 0.0
        %6220 = vmatprep.subr.mxu0 0.0
        %6221 = vmatpush1.msra.mxu0 0.0
        %6222 = vmatprep.subr.mxu0 0.0
        %6223 = vmatpush1.msra.mxu0 0.0
        %6224 = vmatprep.subr.mxu0 0.0
        %6225 = vmatpush1.msra.mxu0 0.0
        %6226 = vmatprep.subr.mxu0 0.0
        %6227 = vmatpush1.msra.mxu0 0.0
        %6228 = vmatprep.subr.mxu0 0.0
        %6229 = vmatpush1.msra.mxu0 0.0
        %6230 = vmatprep.subr.mxu0 0.0
        %6231 = vmatpush1.msra.mxu0 0.0
        %6232 = vmatprep.subr.mxu0 0.0
        %6233 = vmatpush1.msra.mxu0 0.0
        %6234 = vmatprep.subr.mxu0 0.0
        %6235 = vmatpush1.msra.mxu0 0.0
        %6236 = vmatprep.subr.mxu0 0.0
        %6237 = vmatpush1.msra.mxu0 0.0
        %6238 = vmatprep.subr.mxu0 0.0
        %6239 = vmatpush1.msra.mxu0 0.0
        %6240 = vmatprep.subr.mxu0 0.0
        %6241 = vmatpush1.msra.mxu0 0.0
        %6242 = vmatprep.subr.mxu0 0.0
        %6243 = vmatpush1.msra.mxu0 0.0
        %6244 = vmatprep.subr.mxu0 0.0
        %6245 = vmatpush1.msra.mxu0 0.0
        %6246 = vmatprep.subr.mxu0 0.0
        %6247 = vmatpush1.msra.mxu0 0.0
        %6248 = vmatprep.subr.mxu0 0.0
        %6249 = vmatpush1.msra.mxu0 0.0
        %6250 = vmatprep.subr.mxu0 0.0
        %6251 = vmatpush1.msra.mxu0 0.0
        %6252 = vmatprep.subr.mxu0 0.0
        %6253 = vmatpush1.msra.mxu0 0.0
        %6254 = vmatprep.mubr.f32.mxu0 0.0
        %6255 = vmatmul.mubr.f32.gmra.mrb[0].mxu0 %v6143
        %v6256 = vpop.f32.mrb[0].mxu0
        %v6257 = vadd.f32 0.0, %v6256
        %v6258 = vpop.f32.mrb[0].mxu0
        %6259 = vmatprep.mubr.f32.mxu0 0.0
        %6260 = vmatmul.mubr.f32.gmra.mrb[0].mxu0 %v6146
        %v6261 = vpop.f32.mrb[0].mxu0
        %v6262 = vadd.f32 0.0, %v6261
        %v6263 = vpop.f32.mrb[0].mxu0
        %6264 = vmatprep.mubr.f32.mxu0 0.0
        %6265 = vmatmul.mubr.f32.gmra.mrb[0].mxu0 %v6149
        %v6266 = vpop.f32.mrb[0].mxu0
        %v6267 = vadd.f32 0.0, %v6266
        %v6268 = vpop.f32.mrb[0].mxu0
        %6269 = vmatprep.mubr.f32.mxu0 0.0
        %6270 = vmatmul.mubr.f32.gmra.mrb[0].mxu0 %v6152
        %v6271 = vpop.f32.mrb[0].mxu0
        %v6272 = vadd.f32 0.0, %v6271
        %v6273 = vpop.f32.mrb[0].mxu0
        %6274 = vmatprep.mubr.f32.mxu0 0.0
        %6275 = vmatmul.mubr.f32.gmra.mrb[0].mxu0 %v6155
        %v6276 = vpop.f32.mrb[0].mxu0
        %v6277 = vadd.f32 0.0, %v6276
        %v6278 = vpop.f32.mrb[0].mxu0
        %6279 = vmatprep.mubr.f32.mxu0 0.0
        %6280 = vmatmul.mubr.f32.gmra.mrb[0].mxu0 %v6158
        %v6281 = vpop.f32.mrb[0].mxu0
        %v6282 = vadd.f32 0.0, %v6281
        %v6283 = vpop.f32.mrb[0].mxu0
        %6284 = vmatprep.mubr.f32.mxu0 0.0
        %6285 = vmatmul.mubr.f32.gmra.mrb[0].mxu0 %v6161
        %v6286 = vpop.f32.mrb[0].mxu0
        %v6287 = vadd.f32 0.0, %v6286
        %v6288 = vpop.f32.mrb[0].mxu0
        %6289 = vmatprep.mubr.f32.mxu0 0.0
        %6290 = vmatmul.mubr.f32.gmra.mrb[0].mxu0 %v6164
        %v6291 = vpop.f32.mrb[0].mxu0
        %v6292 = vadd.f32 0.0, %v6291
        %v6293 = vpop.f32.mrb[0].mxu0
        %6294 = vmatprep.mubr.f32.mxu0 0.0
        %6295 = vmatmul.mubr.f32.gmra.mrb[0].mxu0 %v6167
        %v6296 = vpop.f32.mrb[0].mxu0
        %v6297 = vadd.f32 0.0, %v6296
        %v6298 = vpop.f32.mrb[0].mxu0
        %6299 = vmatprep.mubr.f32.mxu0 0.0
        %6300 = vmatmul.mubr.f32.gmra.mrb[0].mxu0 %v6170
        %v6301 = vpop.f32.mrb[0].mxu0
        %v6302 = vadd.f32 0.0, %v6301
        %v6303 = vpop.f32.mrb[0].mxu0
        %6304 = vmatprep.mubr.f32.mxu0 0.0
        %6305 = vmatmul.mubr.f32.gmra.mrb[0].mxu0 %v6173
        %v6306 = vpop.f32.mrb[0].mxu0
        %v6307 = vadd.f32 0.0, %v6306
        %v6308 = vpop.f32.mrb[0].mxu0
        %6309 = vmatprep.mubr.f32.mxu0 0.0
        %6310 = vmatmul.mubr.f32.gmra.mrb[0].mxu0 %v6176
        %v6311 = vpop.f32.mrb[0].mxu0
        %v6312 = vadd.f32 0.0, %v6311
        %v6313 = vpop.f32.mrb[0].mxu0
        %6314 = vmatprep.mubr.f32.mxu0 0.0
        %6315 = vmatmul.mubr.f32.gmra.mrb[0].mxu0 %v6179
        %v6316 = vpop.f32.mrb[0].mxu0
        %v6317 = vadd.f32 0.0, %v6316
        %v6318 = vpop.f32.mrb[0].mxu0
        %6319 = vmatprep.mubr.f32.mxu0 0.0
        %6320 = vmatmul.mubr.f32.gmra.mrb[0].mxu0 %v6182
        %v6321 = vpop.f32.mrb[0].mxu0
        %v6322 = vadd.f32 0.0, %v6321
        %v6323 = vpop.f32.mrb[0].mxu0
        %6324 = vmatprep.mubr.f32.mxu0 0.0
        %6325 = vmatmul.mubr.f32.gmra.mrb[0].mxu0 %v6185
        %v6326 = vpop.f32.mrb[0].mxu0
        %v6327 = vadd.f32 0.0, %v6326
        %v6328 = vpop.f32.mrb[0].mxu0
        %6329 = vmatprep.mubr.f32.mxu0 0.0
        %6330 = vmatmul.mubr.f32.gmra.mrb[0].mxu0 %v6188
        %v6331 = vpop.f32.mrb[0].mxu0
        %v6332 = vadd.f32 0.0, %v6331
        %v6333 = vpop.f32.mrb[0].mxu0
        %6334 = vdwg.mxu0
        %v6335 = vadd.f32 %v6105, %v6257
        %v6336 = vadd.f32 %v6106, %v6262
        %v6337 = vadd.f32 %v6107, %v6267
        %v6338 = vadd.f32 %v6108, %v6272
        %v6339 = vadd.f32 %v6109, %v6277
        %v6340 = vadd.f32 %v6110, %v6282
        %v6341 = vadd.f32 %v6111, %v6287
        %v6342 = vadd.f32 %v6112, %v6292
        %v6343 = vadd.f32 %v6113, %v6297
        %v6344 = vadd.f32 %v6114, %v6302
        %v6345 = vadd.f32 %v6115, %v6307
        %v6346 = vadd.f32 %v6116, %v6312
        %v6347 = vadd.f32 %v6117, %v6317
        %v6348 = vadd.f32 %v6118, %v6322
        %v6349 = vadd.f32 %v6119, %v6327
        %v6350 = vadd.f32 %v6120, %v6332
        %v6351 = vld [vmem:[#allocation3 + $0x12] sm:$0xff]
        %v6352 = vld [vmem:[#allocation3 + $0x1a] sm:$0xff]
        %v6353 = vld [vmem:[#allocation3 + $0x22] sm:$0xff]
        %v6354 = vld [vmem:[#allocation3 + $0x2a] sm:$0xff]
        %v6355 = vld [vmem:[#allocation3 + $0x32] sm:$0xff]
        %v6356 = vld [vmem:[#allocation3 + $0x3a] sm:$0xff]
        %v6357 = vld [vmem:[#allocation3 + $0x42] sm:$0xff]
        %v6358 = vld [vmem:[#allocation3 + $0x4a] sm:$0xff]
        %v6359 = vld [vmem:[#allocation3 + $0x52] sm:$0xff]
        %v6360 = vld [vmem:[#allocation3 + $0x5a] sm:$0xff]
        %v6361 = vld [vmem:[#allocation3 + $0x62] sm:$0xff]
        %v6362 = vld [vmem:[#allocation3 + $0x6a] sm:$0xff]
        %v6363 = vld [vmem:[#allocation3 + $0x72] sm:$0xff]
        %v6364 = vld [vmem:[#allocation3 + $0x7a] sm:$0xff]
        %v6365 = vld [vmem:[#allocation3 + $0x82] sm:$0xff]
        %v6366 = vld [vmem:[#allocation3 + $0x8a] sm:$0xff]
        %s6367 = scalar_lea.vmem %s3, 160
        %v6368 = vld [vmem:[%s6367] sm:$0xff]
        %v6369 = vld [vmem:[%s6367 + $0x8] sm:$0xff]
        %v6370 = vld [vmem:[%s6367 + $0x10] sm:$0xff]
        %v6371 = vld [vmem:[%s6367 + $0x18] sm:$0xff]
        %v6373 = vsel %vm523, %v6351, 0
        %v6376 = vsel %vm523, %v6352, 0
        %v6379 = vsel %vm523, %v6353, 0
        %v6382 = vsel %vm523, %v6354, 0
        %v6385 = vsel %vm523, %v6355, 0
        %v6388 = vsel %vm523, %v6356, 0
        %v6391 = vsel %vm523, %v6357, 0
        %v6394 = vsel %vm523, %v6358, 0
        %v6397 = vsel %vm523, %v6359, 0
        %v6400 = vsel %vm523, %v6360, 0
        %v6403 = vsel %vm523, %v6361, 0
        %v6406 = vsel %vm523, %v6362, 0
        %v6409 = vsel %vm523, %v6363, 0
        %v6412 = vsel %vm523, %v6364, 0
        %v6415 = vsel %vm523, %v6365, 0
        %v6418 = vsel %vm523, %v6366, 0
        %6420 = vmatprep.subr.mxu0 0.0
        %6421 = vmatpush1.msra.mxu0 %v6368
        %6422 = vmatprep.subr.mxu0 0.0
        %6423 = vmatpush1.msra.mxu0 %v6369
        %6424 = vmatprep.subr.mxu0 0.0
        %6425 = vmatpush1.msra.mxu0 %v6370
        %6426 = vmatprep.subr.mxu0 0.0
        %6427 = vmatpush1.msra.mxu0 %v6371
        %6428 = vmatprep.subr.mxu0 0.0
        %6429 = vmatpush1.msra.mxu0 0.0
        %6430 = vmatprep.subr.mxu0 0.0
        %6431 = vmatpush1.msra.mxu0 0.0
        %6432 = vmatprep.subr.mxu0 0.0
        %6433 = vmatpush1.msra.mxu0 0.0
        %6434 = vmatprep.subr.mxu0 0.0
        %6435 = vmatpush1.msra.mxu0 0.0
        %6436 = vmatprep.subr.mxu0 0.0
        %6437 = vmatpush1.msra.mxu0 0.0
        %6438 = vmatprep.subr.mxu0 0.0
        %6439 = vmatpush1.msra.mxu0 0.0
        %6440 = vmatprep.subr.mxu0 0.0
        %6441 = vmatpush1.msra.mxu0 0.0
        %6442 = vmatprep.subr.mxu0 0.0
        %6443 = vmatpush1.msra.mxu0 0.0
        %6444 = vmatprep.subr.mxu0 0.0
        %6445 = vmatpush1.msra.mxu0 0.0
        %6446 = vmatprep.subr.mxu0 0.0
        %6447 = vmatpush1.msra.mxu0 0.0
        %6448 = vmatprep.subr.mxu0 0.0
        %6449 = vmatpush1.msra.mxu0 0.0
        %6450 = vmatprep.subr.mxu0 0.0
        %6451 = vmatpush1.msra.mxu0 0.0
        %6452 = vmatprep.subr.mxu0 0.0
        %6453 = vmatpush1.msra.mxu0 0.0
        %6454 = vmatprep.subr.mxu0 0.0
        %6455 = vmatpush1.msra.mxu0 0.0
        %6456 = vmatprep.subr.mxu0 0.0
        %6457 = vmatpush1.msra.mxu0 0.0
        %6458 = vmatprep.subr.mxu0 0.0
        %6459 = vmatpush1.msra.mxu0 0.0
        %6460 = vmatprep.subr.mxu0 0.0
        %6461 = vmatpush1.msra.mxu0 0.0
        %6462 = vmatprep.subr.mxu0 0.0
        %6463 = vmatpush1.msra.mxu0 0.0
        %6464 = vmatprep.subr.mxu0 0.0
        %6465 = vmatpush1.msra.mxu0 0.0
        %6466 = vmatprep.subr.mxu0 0.0
        %6467 = vmatpush1.msra.mxu0 0.0
        %6468 = vmatprep.subr.mxu0 0.0
        %6469 = vmatpush1.msra.mxu0 0.0
        %6470 = vmatprep.subr.mxu0 0.0
        %6471 = vmatpush1.msra.mxu0 0.0
        %6472 = vmatprep.subr.mxu0 0.0
        %6473 = vmatpush1.msra.mxu0 0.0
        %6474 = vmatprep.subr.mxu0 0.0
        %6475 = vmatpush1.msra.mxu0 0.0
        %6476 = vmatprep.subr.mxu0 0.0
        %6477 = vmatpush1.msra.mxu0 0.0
        %6478 = vmatprep.subr.mxu0 0.0
        %6479 = vmatpush1.msra.mxu0 0.0
        %6480 = vmatprep.subr.mxu0 0.0
        %6481 = vmatpush1.msra.mxu0 0.0
        %6482 = vmatprep.subr.mxu0 0.0
        %6483 = vmatpush1.msra.mxu0 0.0
        %6484 = vmatprep.mubr.f32.mxu0 0.0
        %6485 = vmatmul.mubr.f32.gmra.mrb[0].mxu0 %v6373
        %v6486 = vpop.f32.mrb[0].mxu0
        %v6487 = vadd.f32 0.0, %v6486
        %v6488 = vpop.f32.mrb[0].mxu0
        %6489 = vmatprep.mubr.f32.mxu0 0.0
        %6490 = vmatmul.mubr.f32.gmra.mrb[0].mxu0 %v6376
        %v6491 = vpop.f32.mrb[0].mxu0
        %v6492 = vadd.f32 0.0, %v6491
        %v6493 = vpop.f32.mrb[0].mxu0
        %6494 = vmatprep.mubr.f32.mxu0 0.0
        %6495 = vmatmul.mubr.f32.gmra.mrb[0].mxu0 %v6379
        %v6496 = vpop.f32.mrb[0].mxu0
        %v6497 = vadd.f32 0.0, %v6496
        %v6498 = vpop.f32.mrb[0].mxu0
        %6499 = vmatprep.mubr.f32.mxu0 0.0
        %6500 = vmatmul.mubr.f32.gmra.mrb[0].mxu0 %v6382
        %v6501 = vpop.f32.mrb[0].mxu0
        %v6502 = vadd.f32 0.0, %v6501
        %v6503 = vpop.f32.mrb[0].mxu0
        %6504 = vmatprep.mubr.f32.mxu0 0.0
        %6505 = vmatmul.mubr.f32.gmra.mrb[0].mxu0 %v6385
        %v6506 = vpop.f32.mrb[0].mxu0
        %v6507 = vadd.f32 0.0, %v6506
        %v6508 = vpop.f32.mrb[0].mxu0
        %6509 = vmatprep.mubr.f32.mxu0 0.0
        %6510 = vmatmul.mubr.f32.gmra.mrb[0].mxu0 %v6388
        %v6511 = vpop.f32.mrb[0].mxu0
        %v6512 = vadd.f32 0.0, %v6511
        %v6513 = vpop.f32.mrb[0].mxu0
        %6514 = vmatprep.mubr.f32.mxu0 0.0
        %6515 = vmatmul.mubr.f32.gmra.mrb[0].mxu0 %v6391
        %v6516 = vpop.f32.mrb[0].mxu0
        %v6517 = vadd.f32 0.0, %v6516
        %v6518 = vpop.f32.mrb[0].mxu0
        %6519 = vmatprep.mubr.f32.mxu0 0.0
        %6520 = vmatmul.mubr.f32.gmra.mrb[0].mxu0 %v6394
        %v6521 = vpop.f32.mrb[0].mxu0
        %v6522 = vadd.f32 0.0, %v6521
        %v6523 = vpop.f32.mrb[0].mxu0
        %6524 = vmatprep.mubr.f32.mxu0 0.0
        %6525 = vmatmul.mubr.f32.gmra.mrb[0].mxu0 %v6397
        %v6526 = vpop.f32.mrb[0].mxu0
        %v6527 = vadd.f32 0.0, %v6526
        %v6528 = vpop.f32.mrb[0].mxu0
        %6529 = vmatprep.mubr.f32.mxu0 0.0
        %6530 = vmatmul.mubr.f32.gmra.mrb[0].mxu0 %v6400
        %v6531 = vpop.f32.mrb[0].mxu0
        %v6532 = vadd.f32 0.0, %v6531
        %v6533 = vpop.f32.mrb[0].mxu0
        %6534 = vmatprep.mubr.f32.mxu0 0.0
        %6535 = vmatmul.mubr.f32.gmra.mrb[0].mxu0 %v6403
        %v6536 = vpop.f32.mrb[0].mxu0
        %v6537 = vadd.f32 0.0, %v6536
        %v6538 = vpop.f32.mrb[0].mxu0
        %6539 = vmatprep.mubr.f32.mxu0 0.0
        %6540 = vmatmul.mubr.f32.gmra.mrb[0].mxu0 %v6406
        %v6541 = vpop.f32.mrb[0].mxu0
        %v6542 = vadd.f32 0.0, %v6541
        %v6543 = vpop.f32.mrb[0].mxu0
        %6544 = vmatprep.mubr.f32.mxu0 0.0
        %6545 = vmatmul.mubr.f32.gmra.mrb[0].mxu0 %v6409
        %v6546 = vpop.f32.mrb[0].mxu0
        %v6547 = vadd.f32 0.0, %v6546
        %v6548 = vpop.f32.mrb[0].mxu0
        %6549 = vmatprep.mubr.f32.mxu0 0.0
        %6550 = vmatmul.mubr.f32.gmra.mrb[0].mxu0 %v6412
        %v6551 = vpop.f32.mrb[0].mxu0
        %v6552 = vadd.f32 0.0, %v6551
        %v6553 = vpop.f32.mrb[0].mxu0
        %6554 = vmatprep.mubr.f32.mxu0 0.0
        %6555 = vmatmul.mubr.f32.gmra.mrb[0].mxu0 %v6415
        %v6556 = vpop.f32.mrb[0].mxu0
        %v6557 = vadd.f32 0.0, %v6556
        %v6558 = vpop.f32.mrb[0].mxu0
        %6559 = vmatprep.mubr.f32.mxu0 0.0
        %6560 = vmatmul.mubr.f32.gmra.mrb[0].mxu0 %v6418
        %v6561 = vpop.f32.mrb[0].mxu0
        %v6562 = vadd.f32 0.0, %v6561
        %v6563 = vpop.f32.mrb[0].mxu0
        %6564 = vdwg.mxu0
        %v6565 = vadd.f32 %v6335, %v6487
        %v6566 = vadd.f32 %v6336, %v6492
        %v6567 = vadd.f32 %v6337, %v6497
        %v6568 = vadd.f32 %v6338, %v6502
        %v6569 = vadd.f32 %v6339, %v6507
        %v6570 = vadd.f32 %v6340, %v6512
        %v6571 = vadd.f32 %v6341, %v6517
        %v6572 = vadd.f32 %v6342, %v6522
        %v6573 = vadd.f32 %v6343, %v6527
        %v6574 = vadd.f32 %v6344, %v6532
        %v6575 = vadd.f32 %v6345, %v6537
        %v6576 = vadd.f32 %v6346, %v6542
        %v6577 = vadd.f32 %v6347, %v6547
        %v6578 = vadd.f32 %v6348, %v6552
        %v6579 = vadd.f32 %v6349, %v6557
        %v6580 = vadd.f32 %v6350, %v6562
        %v6581 = vld [vmem:[#allocation3 + $0x20] sm:$0xff]
        %v6582 = vld [vmem:[#allocation3 + $0x28] sm:$0xff]
        %v6583 = vld [vmem:[#allocation3 + $0x30] sm:$0xff]
        %v6584 = vld [vmem:[#allocation3 + $0x38] sm:$0xff]
        %v6585 = vld [vmem:[#allocation3 + $0x40] sm:$0xff]
        %v6586 = vld [vmem:[#allocation3 + $0x48] sm:$0xff]
        %v6587 = vld [vmem:[#allocation3 + $0x50] sm:$0xff]
        %v6588 = vld [vmem:[#allocation3 + $0x58] sm:$0xff]
        %v6589 = vld [vmem:[#allocation3 + $0x60] sm:$0xff]
        %v6590 = vld [vmem:[#allocation3 + $0x68] sm:$0xff]
        %v6591 = vld [vmem:[#allocation3 + $0x70] sm:$0xff]
        %v6592 = vld [vmem:[#allocation3 + $0x78] sm:$0xff]
        %v6593 = vld [vmem:[#allocation3 + $0x80] sm:$0xff]
        %v6594 = vld [vmem:[#allocation3 + $0x88] sm:$0xff]
        %v6595 = vld [vmem:[#allocation3 + $0x90] sm:$0xff]
        %v6596 = vld [vmem:[#allocation3 + $0x98] sm:$0xff]
        %s6597 = scalar_lea.vmem %s3, 192
        %v6598 = vld [vmem:[%s6597] sm:$0xff]
        %v6599 = vld [vmem:[%s6597 + $0x8] sm:$0xff]
        %v6600 = vld [vmem:[%s6597 + $0x10] sm:$0xff]
        %v6601 = vld [vmem:[%s6597 + $0x18] sm:$0xff]
        %v6603 = vsel %vm523, %v6581, 0
        %v6606 = vsel %vm523, %v6582, 0
        %v6609 = vsel %vm523, %v6583, 0
        %v6612 = vsel %vm523, %v6584, 0
        %v6615 = vsel %vm523, %v6585, 0
        %v6618 = vsel %vm523, %v6586, 0
        %v6621 = vsel %vm523, %v6587, 0
        %v6624 = vsel %vm523, %v6588, 0
        %v6627 = vsel %vm523, %v6589, 0
        %v6630 = vsel %vm523, %v6590, 0
        %v6633 = vsel %vm523, %v6591, 0
        %v6636 = vsel %vm523, %v6592, 0
        %v6639 = vsel %vm523, %v6593, 0
        %v6642 = vsel %vm523, %v6594, 0
        %v6645 = vsel %vm523, %v6595, 0
        %v6648 = vsel %vm523, %v6596, 0
        %6650 = vmatprep.subr.mxu0 0.0
        %6651 = vmatpush1.msra.mxu0 %v6598
        %6652 = vmatprep.subr.mxu0 0.0
        %6653 = vmatpush1.msra.mxu0 %v6599
        %6654 = vmatprep.subr.mxu0 0.0
        %6655 = vmatpush1.msra.mxu0 %v6600
        %6656 = vmatprep.subr.mxu0 0.0
        %6657 = vmatpush1.msra.mxu0 %v6601
        %6658 = vmatprep.subr.mxu0 0.0
        %6659 = vmatpush1.msra.mxu0 0.0
        %6660 = vmatprep.subr.mxu0 0.0
        %6661 = vmatpush1.msra.mxu0 0.0
        %6662 = vmatprep.subr.mxu0 0.0
        %6663 = vmatpush1.msra.mxu0 0.0
        %6664 = vmatprep.subr.mxu0 0.0
        %6665 = vmatpush1.msra.mxu0 0.0
        %6666 = vmatprep.subr.mxu0 0.0
        %6667 = vmatpush1.msra.mxu0 0.0
        %6668 = vmatprep.subr.mxu0 0.0
        %6669 = vmatpush1.msra.mxu0 0.0
        %6670 = vmatprep.subr.mxu0 0.0
        %6671 = vmatpush1.msra.mxu0 0.0
        %6672 = vmatprep.subr.mxu0 0.0
        %6673 = vmatpush1.msra.mxu0 0.0
        %6674 = vmatprep.subr.mxu0 0.0
        %6675 = vmatpush1.msra.mxu0 0.0
        %6676 = vmatprep.subr.mxu0 0.0
        %6677 = vmatpush1.msra.mxu0 0.0
        %6678 = vmatprep.subr.mxu0 0.0
        %6679 = vmatpush1.msra.mxu0 0.0
        %6680 = vmatprep.subr.mxu0 0.0
        %6681 = vmatpush1.msra.mxu0 0.0
        %6682 = vmatprep.subr.mxu0 0.0
        %6683 = vmatpush1.msra.mxu0 0.0
        %6684 = vmatprep.subr.mxu0 0.0
        %6685 = vmatpush1.msra.mxu0 0.0
        %6686 = vmatprep.subr.mxu0 0.0
        %6687 = vmatpush1.msra.mxu0 0.0
        %6688 = vmatprep.subr.mxu0 0.0
        %6689 = vmatpush1.msra.mxu0 0.0
        %6690 = vmatprep.subr.mxu0 0.0
        %6691 = vmatpush1.msra.mxu0 0.0
        %6692 = vmatprep.subr.mxu0 0.0
        %6693 = vmatpush1.msra.mxu0 0.0
        %6694 = vmatprep.subr.mxu0 0.0
        %6695 = vmatpush1.msra.mxu0 0.0
        %6696 = vmatprep.subr.mxu0 0.0
        %6697 = vmatpush1.msra.mxu0 0.0
        %6698 = vmatprep.subr.mxu0 0.0
        %6699 = vmatpush1.msra.mxu0 0.0
        %6700 = vmatprep.subr.mxu0 0.0
        %6701 = vmatpush1.msra.mxu0 0.0
        %6702 = vmatprep.subr.mxu0 0.0
        %6703 = vmatpush1.msra.mxu0 0.0
        %6704 = vmatprep.subr.mxu0 0.0
        %6705 = vmatpush1.msra.mxu0 0.0
        %6706 = vmatprep.subr.mxu0 0.0
        %6707 = vmatpush1.msra.mxu0 0.0
        %6708 = vmatprep.subr.mxu0 0.0
        %6709 = vmatpush1.msra.mxu0 0.0
        %6710 = vmatprep.subr.mxu0 0.0
        %6711 = vmatpush1.msra.mxu0 0.0
        %6712 = vmatprep.subr.mxu0 0.0
        %6713 = vmatpush1.msra.mxu0 0.0
        %6714 = vmatprep.mubr.f32.mxu0 0.0
        %6715 = vmatmul.mubr.f32.gmra.mrb[0].mxu0 %v6603
        %v6716 = vpop.f32.mrb[0].mxu0
        %v6717 = vadd.f32 0.0, %v6716
        %v6718 = vpop.f32.mrb[0].mxu0
        %6719 = vmatprep.mubr.f32.mxu0 0.0
        %6720 = vmatmul.mubr.f32.gmra.mrb[0].mxu0 %v6606
        %v6721 = vpop.f32.mrb[0].mxu0
        %v6722 = vadd.f32 0.0, %v6721
        %v6723 = vpop.f32.mrb[0].mxu0
        %6724 = vmatprep.mubr.f32.mxu0 0.0
        %6725 = vmatmul.mubr.f32.gmra.mrb[0].mxu0 %v6609
        %v6726 = vpop.f32.mrb[0].mxu0
        %v6727 = vadd.f32 0.0, %v6726
        %v6728 = vpop.f32.mrb[0].mxu0
        %6729 = vmatprep.mubr.f32.mxu0 0.0
        %6730 = vmatmul.mubr.f32.gmra.mrb[0].mxu0 %v6612
        %v6731 = vpop.f32.mrb[0].mxu0
        %v6732 = vadd.f32 0.0, %v6731
        %v6733 = vpop.f32.mrb[0].mxu0
        %6734 = vmatprep.mubr.f32.mxu0 0.0
        %6735 = vmatmul.mubr.f32.gmra.mrb[0].mxu0 %v6615
        %v6736 = vpop.f32.mrb[0].mxu0
        %v6737 = vadd.f32 0.0, %v6736
        %v6738 = vpop.f32.mrb[0].mxu0
        %6739 = vmatprep.mubr.f32.mxu0 0.0
        %6740 = vmatmul.mubr.f32.gmra.mrb[0].mxu0 %v6618
        %v6741 = vpop.f32.mrb[0].mxu0
        %v6742 = vadd.f32 0.0, %v6741
        %v6743 = vpop.f32.mrb[0].mxu0
        %6744 = vmatprep.mubr.f32.mxu0 0.0
        %6745 = vmatmul.mubr.f32.gmra.mrb[0].mxu0 %v6621
        %v6746 = vpop.f32.mrb[0].mxu0
        %v6747 = vadd.f32 0.0, %v6746
        %v6748 = vpop.f32.mrb[0].mxu0
        %6749 = vmatprep.mubr.f32.mxu0 0.0
        %6750 = vmatmul.mubr.f32.gmra.mrb[0].mxu0 %v6624
        %v6751 = vpop.f32.mrb[0].mxu0
        %v6752 = vadd.f32 0.0, %v6751
        %v6753 = vpop.f32.mrb[0].mxu0
        %6754 = vmatprep.mubr.f32.mxu0 0.0
        %6755 = vmatmul.mubr.f32.gmra.mrb[0].mxu0 %v6627
        %v6756 = vpop.f32.mrb[0].mxu0
        %v6757 = vadd.f32 0.0, %v6756
        %v6758 = vpop.f32.mrb[0].mxu0
        %6759 = vmatprep.mubr.f32.mxu0 0.0
        %6760 = vmatmul.mubr.f32.gmra.mrb[0].mxu0 %v6630
        %v6761 = vpop.f32.mrb[0].mxu0
        %v6762 = vadd.f32 0.0, %v6761
        %v6763 = vpop.f32.mrb[0].mxu0
        %6764 = vmatprep.mubr.f32.mxu0 0.0
        %6765 = vmatmul.mubr.f32.gmra.mrb[0].mxu0 %v6633
        %v6766 = vpop.f32.mrb[0].mxu0
        %v6767 = vadd.f32 0.0, %v6766
        %v6768 = vpop.f32.mrb[0].mxu0
        %6769 = vmatprep.mubr.f32.mxu0 0.0
        %6770 = vmatmul.mubr.f32.gmra.mrb[0].mxu0 %v6636
        %v6771 = vpop.f32.mrb[0].mxu0
        %v6772 = vadd.f32 0.0, %v6771
        %v6773 = vpop.f32.mrb[0].mxu0
        %6774 = vmatprep.mubr.f32.mxu0 0.0
        %6775 = vmatmul.mubr.f32.gmra.mrb[0].mxu0 %v6639
        %v6776 = vpop.f32.mrb[0].mxu0
        %v6777 = vadd.f32 0.0, %v6776
        %v6778 = vpop.f32.mrb[0].mxu0
        %6779 = vmatprep.mubr.f32.mxu0 0.0
        %6780 = vmatmul.mubr.f32.gmra.mrb[0].mxu0 %v6642
        %v6781 = vpop.f32.mrb[0].mxu0
        %v6782 = vadd.f32 0.0, %v6781
        %v6783 = vpop.f32.mrb[0].mxu0
        %6784 = vmatprep.mubr.f32.mxu0 0.0
        %6785 = vmatmul.mubr.f32.gmra.mrb[0].mxu0 %v6645
        %v6786 = vpop.f32.mrb[0].mxu0
        %v6787 = vadd.f32 0.0, %v6786
        %v6788 = vpop.f32.mrb[0].mxu0
        %6789 = vmatprep.mubr.f32.mxu0 0.0
        %6790 = vmatmul.mubr.f32.gmra.mrb[0].mxu0 %v6648
        %v6791 = vpop.f32.mrb[0].mxu0
        %v6792 = vadd.f32 0.0, %v6791
        %v6793 = vpop.f32.mrb[0].mxu0
        %6794 = vdwg.mxu0
        %v6795 = vadd.f32 %v6565, %v6717
        %v6796 = vadd.f32 %v6566, %v6722
        %v6797 = vadd.f32 %v6567, %v6727
        %v6798 = vadd.f32 %v6568, %v6732
        %v6799 = vadd.f32 %v6569, %v6737
        %v6800 = vadd.f32 %v6570, %v6742
        %v6801 = vadd.f32 %v6571, %v6747
        %v6802 = vadd.f32 %v6572, %v6752
        %v6803 = vadd.f32 %v6573, %v6757
        %v6804 = vadd.f32 %v6574, %v6762
        %v6805 = vadd.f32 %v6575, %v6767
        %v6806 = vadd.f32 %v6576, %v6772
        %v6807 = vadd.f32 %v6577, %v6777
        %v6808 = vadd.f32 %v6578, %v6782
        %v6809 = vadd.f32 %v6579, %v6787
        %v6810 = vadd.f32 %v6580, %v6792
        %v6811 = vld [vmem:[#allocation3 + $0x21] sm:$0xff]
        %v6812 = vld [vmem:[#allocation3 + $0x29] sm:$0xff]
        %v6813 = vld [vmem:[#allocation3 + $0x31] sm:$0xff]
        %v6814 = vld [vmem:[#allocation3 + $0x39] sm:$0xff]
        %v6815 = vld [vmem:[#allocation3 + $0x41] sm:$0xff]
        %v6816 = vld [vmem:[#allocation3 + $0x49] sm:$0xff]
        %v6817 = vld [vmem:[#allocation3 + $0x51] sm:$0xff]
        %v6818 = vld [vmem:[#allocation3 + $0x59] sm:$0xff]
        %v6819 = vld [vmem:[#allocation3 + $0x61] sm:$0xff]
        %v6820 = vld [vmem:[#allocation3 + $0x69] sm:$0xff]
        %v6821 = vld [vmem:[#allocation3 + $0x71] sm:$0xff]
        %v6822 = vld [vmem:[#allocation3 + $0x79] sm:$0xff]
        %v6823 = vld [vmem:[#allocation3 + $0x81] sm:$0xff]
        %v6824 = vld [vmem:[#allocation3 + $0x89] sm:$0xff]
        %v6825 = vld [vmem:[#allocation3 + $0x91] sm:$0xff]
        %v6826 = vld [vmem:[#allocation3 + $0x99] sm:$0xff]
        %s6827 = scalar_lea.vmem %s3, 224
        %v6828 = vld [vmem:[%s6827] sm:$0xff]
        %v6829 = vld [vmem:[%s6827 + $0x8] sm:$0xff]
        %v6830 = vld [vmem:[%s6827 + $0x10] sm:$0xff]
        %v6831 = vld [vmem:[%s6827 + $0x18] sm:$0xff]
        %v6833 = vsel %vm523, %v6811, 0
        %v6836 = vsel %vm523, %v6812, 0
        %v6839 = vsel %vm523, %v6813, 0
        %v6842 = vsel %vm523, %v6814, 0
        %v6845 = vsel %vm523, %v6815, 0
        %v6848 = vsel %vm523, %v6816, 0
        %v6851 = vsel %vm523, %v6817, 0
        %v6854 = vsel %vm523, %v6818, 0
        %v6857 = vsel %vm523, %v6819, 0
        %v6860 = vsel %vm523, %v6820, 0
        %v6863 = vsel %vm523, %v6821, 0
        %v6866 = vsel %vm523, %v6822, 0
        %v6869 = vsel %vm523, %v6823, 0
        %v6872 = vsel %vm523, %v6824, 0
        %v6875 = vsel %vm523, %v6825, 0
        %v6878 = vsel %vm523, %v6826, 0
        %6880 = vmatprep.subr.mxu0 0.0
        %6881 = vmatpush1.msra.mxu0 %v6828
        %6882 = vmatprep.subr.mxu0 0.0
        %6883 = vmatpush1.msra.mxu0 %v6829
        %6884 = vmatprep.subr.mxu0 0.0
        %6885 = vmatpush1.msra.mxu0 %v6830
        %6886 = vmatprep.subr.mxu0 0.0
        %6887 = vmatpush1.msra.mxu0 %v6831
        %6888 = vmatprep.subr.mxu0 0.0
        %6889 = vmatpush1.msra.mxu0 0.0
        %6890 = vmatprep.subr.mxu0 0.0
        %6891 = vmatpush1.msra.mxu0 0.0
        %6892 = vmatprep.subr.mxu0 0.0
        %6893 = vmatpush1.msra.mxu0 0.0
        %6894 = vmatprep.subr.mxu0 0.0
        %6895 = vmatpush1.msra.mxu0 0.0
        %6896 = vmatprep.subr.mxu0 0.0
        %6897 = vmatpush1.msra.mxu0 0.0
        %6898 = vmatprep.subr.mxu0 0.0
        %6899 = vmatpush1.msra.mxu0 0.0
        %6900 = vmatprep.subr.mxu0 0.0
        %6901 = vmatpush1.msra.mxu0 0.0
        %6902 = vmatprep.subr.mxu0 0.0
        %6903 = vmatpush1.msra.mxu0 0.0
        %6904 = vmatprep.subr.mxu0 0.0
        %6905 = vmatpush1.msra.mxu0 0.0
        %6906 = vmatprep.subr.mxu0 0.0
        %6907 = vmatpush1.msra.mxu0 0.0
        %6908 = vmatprep.subr.mxu0 0.0
        %6909 = vmatpush1.msra.mxu0 0.0
        %6910 = vmatprep.subr.mxu0 0.0
        %6911 = vmatpush1.msra.mxu0 0.0
        %6912 = vmatprep.subr.mxu0 0.0
        %6913 = vmatpush1.msra.mxu0 0.0
        %6914 = vmatprep.subr.mxu0 0.0
        %6915 = vmatpush1.msra.mxu0 0.0
        %6916 = vmatprep.subr.mxu0 0.0
        %6917 = vmatpush1.msra.mxu0 0.0
        %6918 = vmatprep.subr.mxu0 0.0
        %6919 = vmatpush1.msra.mxu0 0.0
        %6920 = vmatprep.subr.mxu0 0.0
        %6921 = vmatpush1.msra.mxu0 0.0
        %6922 = vmatprep.subr.mxu0 0.0
        %6923 = vmatpush1.msra.mxu0 0.0
        %6924 = vmatprep.subr.mxu0 0.0
        %6925 = vmatpush1.msra.mxu0 0.0
        %6926 = vmatprep.subr.mxu0 0.0
        %6927 = vmatpush1.msra.mxu0 0.0
        %6928 = vmatprep.subr.mxu0 0.0
        %6929 = vmatpush1.msra.mxu0 0.0
        %6930 = vmatprep.subr.mxu0 0.0
        %6931 = vmatpush1.msra.mxu0 0.0
        %6932 = vmatprep.subr.mxu0 0.0
        %6933 = vmatpush1.msra.mxu0 0.0
        %6934 = vmatprep.subr.mxu0 0.0
        %6935 = vmatpush1.msra.mxu0 0.0
        %6936 = vmatprep.subr.mxu0 0.0
        %6937 = vmatpush1.msra.mxu0 0.0
        %6938 = vmatprep.subr.mxu0 0.0
        %6939 = vmatpush1.msra.mxu0 0.0
        %6940 = vmatprep.subr.mxu0 0.0
        %6941 = vmatpush1.msra.mxu0 0.0
        %6942 = vmatprep.subr.mxu0 0.0
        %6943 = vmatpush1.msra.mxu0 0.0
        %6944 = vmatprep.mubr.f32.mxu0 0.0
        %6945 = vmatmul.mubr.f32.gmra.mrb[0].mxu0 %v6833
        %v6946 = vpop.f32.mrb[0].mxu0
        %v6947 = vadd.f32 0.0, %v6946
        %v6948 = vpop.f32.mrb[0].mxu0
        %6949 = vmatprep.mubr.f32.mxu0 0.0
        %6950 = vmatmul.mubr.f32.gmra.mrb[0].mxu0 %v6836
        %v6951 = vpop.f32.mrb[0].mxu0
        %v6952 = vadd.f32 0.0, %v6951
        %v6953 = vpop.f32.mrb[0].mxu0
        %6954 = vmatprep.mubr.f32.mxu0 0.0
        %6955 = vmatmul.mubr.f32.gmra.mrb[0].mxu0 %v6839
        %v6956 = vpop.f32.mrb[0].mxu0
        %v6957 = vadd.f32 0.0, %v6956
        %v6958 = vpop.f32.mrb[0].mxu0
        %6959 = vmatprep.mubr.f32.mxu0 0.0
        %6960 = vmatmul.mubr.f32.gmra.mrb[0].mxu0 %v6842
        %v6961 = vpop.f32.mrb[0].mxu0
        %v6962 = vadd.f32 0.0, %v6961
        %v6963 = vpop.f32.mrb[0].mxu0
        %6964 = vmatprep.mubr.f32.mxu0 0.0
        %6965 = vmatmul.mubr.f32.gmra.mrb[0].mxu0 %v6845
        %v6966 = vpop.f32.mrb[0].mxu0
        %v6967 = vadd.f32 0.0, %v6966
        %v6968 = vpop.f32.mrb[0].mxu0
        %6969 = vmatprep.mubr.f32.mxu0 0.0
        %6970 = vmatmul.mubr.f32.gmra.mrb[0].mxu0 %v6848
        %v6971 = vpop.f32.mrb[0].mxu0
        %v6972 = vadd.f32 0.0, %v6971
        %v6973 = vpop.f32.mrb[0].mxu0
        %6974 = vmatprep.mubr.f32.mxu0 0.0
        %6975 = vmatmul.mubr.f32.gmra.mrb[0].mxu0 %v6851
        %v6976 = vpop.f32.mrb[0].mxu0
        %v6977 = vadd.f32 0.0, %v6976
        %v6978 = vpop.f32.mrb[0].mxu0
        %6979 = vmatprep.mubr.f32.mxu0 0.0
        %6980 = vmatmul.mubr.f32.gmra.mrb[0].mxu0 %v6854
        %v6981 = vpop.f32.mrb[0].mxu0
        %v6982 = vadd.f32 0.0, %v6981
        %v6983 = vpop.f32.mrb[0].mxu0
        %6984 = vmatprep.mubr.f32.mxu0 0.0
        %6985 = vmatmul.mubr.f32.gmra.mrb[0].mxu0 %v6857
        %v6986 = vpop.f32.mrb[0].mxu0
        %v6987 = vadd.f32 0.0, %v6986
        %v6988 = vpop.f32.mrb[0].mxu0
        %6989 = vmatprep.mubr.f32.mxu0 0.0
        %6990 = vmatmul.mubr.f32.gmra.mrb[0].mxu0 %v6860
        %v6991 = vpop.f32.mrb[0].mxu0
        %v6992 = vadd.f32 0.0, %v6991
        %v6993 = vpop.f32.mrb[0].mxu0
        %6994 = vmatprep.mubr.f32.mxu0 0.0
        %6995 = vmatmul.mubr.f32.gmra.mrb[0].mxu0 %v6863
        %v6996 = vpop.f32.mrb[0].mxu0
        %v6997 = vadd.f32 0.0, %v6996
        %v6998 = vpop.f32.mrb[0].mxu0
        %6999 = vmatprep.mubr.f32.mxu0 0.0
        %7000 = vmatmul.mubr.f32.gmra.mrb[0].mxu0 %v6866
        %v7001 = vpop.f32.mrb[0].mxu0
        %v7002 = vadd.f32 0.0, %v7001
        %v7003 = vpop.f32.mrb[0].mxu0
        %7004 = vmatprep.mubr.f32.mxu0 0.0
        %7005 = vmatmul.mubr.f32.gmra.mrb[0].mxu0 %v6869
        %v7006 = vpop.f32.mrb[0].mxu0
        %v7007 = vadd.f32 0.0, %v7006
        %v7008 = vpop.f32.mrb[0].mxu0
        %7009 = vmatprep.mubr.f32.mxu0 0.0
        %7010 = vmatmul.mubr.f32.gmra.mrb[0].mxu0 %v6872
        %v7011 = vpop.f32.mrb[0].mxu0
        %v7012 = vadd.f32 0.0, %v7011
        %v7013 = vpop.f32.mrb[0].mxu0
        %7014 = vmatprep.mubr.f32.mxu0 0.0
        %7015 = vmatmul.mubr.f32.gmra.mrb[0].mxu0 %v6875
        %v7016 = vpop.f32.mrb[0].mxu0
        %v7017 = vadd.f32 0.0, %v7016
        %v7018 = vpop.f32.mrb[0].mxu0
        %7019 = vmatprep.mubr.f32.mxu0 0.0
        %7020 = vmatmul.mubr.f32.gmra.mrb[0].mxu0 %v6878
        %v7021 = vpop.f32.mrb[0].mxu0
        %v7022 = vadd.f32 0.0, %v7021
        %v7023 = vpop.f32.mrb[0].mxu0
        %7024 = vdwg.mxu0
        %v7025 = vadd.f32 %v6795, %v6947
        %v7026 = vadd.f32 %v6796, %v6952
        %v7027 = vadd.f32 %v6797, %v6957
        %v7028 = vadd.f32 %v6798, %v6962
        %v7029 = vadd.f32 %v6799, %v6967
        %v7030 = vadd.f32 %v6800, %v6972
        %v7031 = vadd.f32 %v6801, %v6977
        %v7032 = vadd.f32 %v6802, %v6982
        %v7033 = vadd.f32 %v6803, %v6987
        %v7034 = vadd.f32 %v6804, %v6992
        %v7035 = vadd.f32 %v6805, %v6997
        %v7036 = vadd.f32 %v6806, %v7002
        %v7037 = vadd.f32 %v6807, %v7007
        %v7038 = vadd.f32 %v6808, %v7012
        %v7039 = vadd.f32 %v6809, %v7017
        %v7040 = vadd.f32 %v6810, %v7022
        %v7041 = vld [vmem:[#allocation3 + $0x22] sm:$0xff]
        %v7042 = vld [vmem:[#allocation3 + $0x2a] sm:$0xff]
        %v7043 = vld [vmem:[#allocation3 + $0x32] sm:$0xff]
        %v7044 = vld [vmem:[#allocation3 + $0x3a] sm:$0xff]
        %v7045 = vld [vmem:[#allocation3 + $0x42] sm:$0xff]
        %v7046 = vld [vmem:[#allocation3 + $0x4a] sm:$0xff]
        %v7047 = vld [vmem:[#allocation3 + $0x52] sm:$0xff]
        %v7048 = vld [vmem:[#allocation3 + $0x5a] sm:$0xff]
        %v7049 = vld [vmem:[#allocation3 + $0x62] sm:$0xff]
        %v7050 = vld [vmem:[#allocation3 + $0x6a] sm:$0xff]
        %v7051 = vld [vmem:[#allocation3 + $0x72] sm:$0xff]
        %v7052 = vld [vmem:[#allocation3 + $0x7a] sm:$0xff]
        %v7053 = vld [vmem:[#allocation3 + $0x82] sm:$0xff]
        %v7054 = vld [vmem:[#allocation3 + $0x8a] sm:$0xff]
        %v7055 = vld [vmem:[#allocation3 + $0x92] sm:$0xff]
        %v7056 = vld [vmem:[#allocation3 + $0x9a] sm:$0xff]
        %s7057 = scalar_lea.vmem %s3, 256
        %v7058 = vld [vmem:[%s7057] sm:$0xff]
        %v7059 = vld [vmem:[%s7057 + $0x8] sm:$0xff]
        %v7060 = vld [vmem:[%s7057 + $0x10] sm:$0xff]
        %v7061 = vld [vmem:[%s7057 + $0x18] sm:$0xff]
        %v7063 = vsel %vm523, %v7041, 0
        %v7066 = vsel %vm523, %v7042, 0
        %v7069 = vsel %vm523, %v7043, 0
        %v7072 = vsel %vm523, %v7044, 0
        %v7075 = vsel %vm523, %v7045, 0
        %v7078 = vsel %vm523, %v7046, 0
        %v7081 = vsel %vm523, %v7047, 0
        %v7084 = vsel %vm523, %v7048, 0
        %v7087 = vsel %vm523, %v7049, 0
        %v7090 = vsel %vm523, %v7050, 0
        %v7093 = vsel %vm523, %v7051, 0
        %v7096 = vsel %vm523, %v7052, 0
        %v7099 = vsel %vm523, %v7053, 0
        %v7102 = vsel %vm523, %v7054, 0
        %v7105 = vsel %vm523, %v7055, 0
        %v7108 = vsel %vm523, %v7056, 0
        %7110 = vmatprep.subr.mxu0 0.0
        %7111 = vmatpush1.msra.mxu0 %v7058
        %7112 = vmatprep.subr.mxu0 0.0
        %7113 = vmatpush1.msra.mxu0 %v7059
        %7114 = vmatprep.subr.mxu0 0.0
        %7115 = vmatpush1.msra.mxu0 %v7060
        %7116 = vmatprep.subr.mxu0 0.0
        %7117 = vmatpush1.msra.mxu0 %v7061
        %7118 = vmatprep.subr.mxu0 0.0
        %7119 = vmatpush1.msra.mxu0 0.0
        %7120 = vmatprep.subr.mxu0 0.0
        %7121 = vmatpush1.msra.mxu0 0.0
        %7122 = vmatprep.subr.mxu0 0.0
        %7123 = vmatpush1.msra.mxu0 0.0
        %7124 = vmatprep.subr.mxu0 0.0
        %7125 = vmatpush1.msra.mxu0 0.0
        %7126 = vmatprep.subr.mxu0 0.0
        %7127 = vmatpush1.msra.mxu0 0.0
        %7128 = vmatprep.subr.mxu0 0.0
        %7129 = vmatpush1.msra.mxu0 0.0
        %7130 = vmatprep.subr.mxu0 0.0
        %7131 = vmatpush1.msra.mxu0 0.0
        %7132 = vmatprep.subr.mxu0 0.0
        %7133 = vmatpush1.msra.mxu0 0.0
        %7134 = vmatprep.subr.mxu0 0.0
        %7135 = vmatpush1.msra.mxu0 0.0
        %7136 = vmatprep.subr.mxu0 0.0
        %7137 = vmatpush1.msra.mxu0 0.0
        %7138 = vmatprep.subr.mxu0 0.0
        %7139 = vmatpush1.msra.mxu0 0.0
        %7140 = vmatprep.subr.mxu0 0.0
        %7141 = vmatpush1.msra.mxu0 0.0
        %7142 = vmatprep.subr.mxu0 0.0
        %7143 = vmatpush1.msra.mxu0 0.0
        %7144 = vmatprep.subr.mxu0 0.0
        %7145 = vmatpush1.msra.mxu0 0.0
        %7146 = vmatprep.subr.mxu0 0.0
        %7147 = vmatpush1.msra.mxu0 0.0
        %7148 = vmatprep.subr.mxu0 0.0
        %7149 = vmatpush1.msra.mxu0 0.0
        %7150 = vmatprep.subr.mxu0 0.0
        %7151 = vmatpush1.msra.mxu0 0.0
        %7152 = vmatprep.subr.mxu0 0.0
        %7153 = vmatpush1.msra.mxu0 0.0
        %7154 = vmatprep.subr.mxu0 0.0
        %7155 = vmatpush1.msra.mxu0 0.0
        %7156 = vmatprep.subr.mxu0 0.0
        %7157 = vmatpush1.msra.mxu0 0.0
        %7158 = vmatprep.subr.mxu0 0.0
        %7159 = vmatpush1.msra.mxu0 0.0
        %7160 = vmatprep.subr.mxu0 0.0
        %7161 = vmatpush1.msra.mxu0 0.0
        %7162 = vmatprep.subr.mxu0 0.0
        %7163 = vmatpush1.msra.mxu0 0.0
        %7164 = vmatprep.subr.mxu0 0.0
        %7165 = vmatpush1.msra.mxu0 0.0
        %7166 = vmatprep.subr.mxu0 0.0
        %7167 = vmatpush1.msra.mxu0 0.0
        %7168 = vmatprep.subr.mxu0 0.0
        %7169 = vmatpush1.msra.mxu0 0.0
        %7170 = vmatprep.subr.mxu0 0.0
        %7171 = vmatpush1.msra.mxu0 0.0
        %7172 = vmatprep.subr.mxu0 0.0
        %7173 = vmatpush1.msra.mxu0 0.0
        %7174 = vmatprep.mubr.f32.mxu0 0.0
        %7175 = vmatmul.mubr.f32.gmra.mrb[0].mxu0 %v7063
        %v7176 = vpop.f32.mrb[0].mxu0
        %v7177 = vadd.f32 0.0, %v7176
        %v7178 = vpop.f32.mrb[0].mxu0
        %7179 = vmatprep.mubr.f32.mxu0 0.0
        %7180 = vmatmul.mubr.f32.gmra.mrb[0].mxu0 %v7066
        %v7181 = vpop.f32.mrb[0].mxu0
        %v7182 = vadd.f32 0.0, %v7181
        %v7183 = vpop.f32.mrb[0].mxu0
        %7184 = vmatprep.mubr.f32.mxu0 0.0
        %7185 = vmatmul.mubr.f32.gmra.mrb[0].mxu0 %v7069
        %v7186 = vpop.f32.mrb[0].mxu0
        %v7187 = vadd.f32 0.0, %v7186
        %v7188 = vpop.f32.mrb[0].mxu0
        %7189 = vmatprep.mubr.f32.mxu0 0.0
        %7190 = vmatmul.mubr.f32.gmra.mrb[0].mxu0 %v7072
        %v7191 = vpop.f32.mrb[0].mxu0
        %v7192 = vadd.f32 0.0, %v7191
        %v7193 = vpop.f32.mrb[0].mxu0
        %7194 = vmatprep.mubr.f32.mxu0 0.0
        %7195 = vmatmul.mubr.f32.gmra.mrb[0].mxu0 %v7075
        %v7196 = vpop.f32.mrb[0].mxu0
        %v7197 = vadd.f32 0.0, %v7196
        %v7198 = vpop.f32.mrb[0].mxu0
        %7199 = vmatprep.mubr.f32.mxu0 0.0
        %7200 = vmatmul.mubr.f32.gmra.mrb[0].mxu0 %v7078
        %v7201 = vpop.f32.mrb[0].mxu0
        %v7202 = vadd.f32 0.0, %v7201
        %v7203 = vpop.f32.mrb[0].mxu0
        %7204 = vmatprep.mubr.f32.mxu0 0.0
        %7205 = vmatmul.mubr.f32.gmra.mrb[0].mxu0 %v7081
        %v7206 = vpop.f32.mrb[0].mxu0
        %v7207 = vadd.f32 0.0, %v7206
        %v7208 = vpop.f32.mrb[0].mxu0
        %7209 = vmatprep.mubr.f32.mxu0 0.0
        %7210 = vmatmul.mubr.f32.gmra.mrb[0].mxu0 %v7084
        %v7211 = vpop.f32.mrb[0].mxu0
        %v7212 = vadd.f32 0.0, %v7211
        %v7213 = vpop.f32.mrb[0].mxu0
        %7214 = vmatprep.mubr.f32.mxu0 0.0
        %7215 = vmatmul.mubr.f32.gmra.mrb[0].mxu0 %v7087
        %v7216 = vpop.f32.mrb[0].mxu0
        %v7217 = vadd.f32 0.0, %v7216
        %v7218 = vpop.f32.mrb[0].mxu0
        %7219 = vmatprep.mubr.f32.mxu0 0.0
        %7220 = vmatmul.mubr.f32.gmra.mrb[0].mxu0 %v7090
        %v7221 = vpop.f32.mrb[0].mxu0
        %v7222 = vadd.f32 0.0, %v7221
        %v7223 = vpop.f32.mrb[0].mxu0
        %7224 = vmatprep.mubr.f32.mxu0 0.0
        %7225 = vmatmul.mubr.f32.gmra.mrb[0].mxu0 %v7093
        %v7226 = vpop.f32.mrb[0].mxu0
        %v7227 = vadd.f32 0.0, %v7226
        %v7228 = vpop.f32.mrb[0].mxu0
        %7229 = vmatprep.mubr.f32.mxu0 0.0
        %7230 = vmatmul.mubr.f32.gmra.mrb[0].mxu0 %v7096
        %v7231 = vpop.f32.mrb[0].mxu0
        %v7232 = vadd.f32 0.0, %v7231
        %v7233 = vpop.f32.mrb[0].mxu0
        %7234 = vmatprep.mubr.f32.mxu0 0.0
        %7235 = vmatmul.mubr.f32.gmra.mrb[0].mxu0 %v7099
        %v7236 = vpop.f32.mrb[0].mxu0
        %v7237 = vadd.f32 0.0, %v7236
        %v7238 = vpop.f32.mrb[0].mxu0
        %7239 = vmatprep.mubr.f32.mxu0 0.0
        %7240 = vmatmul.mubr.f32.gmra.mrb[0].mxu0 %v7102
        %v7241 = vpop.f32.mrb[0].mxu0
        %v7242 = vadd.f32 0.0, %v7241
        %v7243 = vpop.f32.mrb[0].mxu0
        %7244 = vmatprep.mubr.f32.mxu0 0.0
        %7245 = vmatmul.mubr.f32.gmra.mrb[0].mxu0 %v7105
        %v7246 = vpop.f32.mrb[0].mxu0
        %v7247 = vadd.f32 0.0, %v7246
        %v7248 = vpop.f32.mrb[0].mxu0
        %7249 = vmatprep.mubr.f32.mxu0 0.0
        %7250 = vmatmul.mubr.f32.gmra.mrb[0].mxu0 %v7108
        %v7251 = vpop.f32.mrb[0].mxu0
        %v7252 = vadd.f32 0.0, %v7251
        %v7253 = vpop.f32.mrb[0].mxu0
        %7254 = vdwg.mxu0
        %v7255 = vadd.f32 %v7025, %v7177
        %v7256 = vadd.f32 %v7026, %v7182
        %v7257 = vadd.f32 %v7027, %v7187
        %v7258 = vadd.f32 %v7028, %v7192
        %v7259 = vadd.f32 %v7029, %v7197
        %v7260 = vadd.f32 %v7030, %v7202
        %v7261 = vadd.f32 %v7031, %v7207
        %v7262 = vadd.f32 %v7032, %v7212
        %v7263 = vadd.f32 %v7033, %v7217
        %v7264 = vadd.f32 %v7034, %v7222
        %v7265 = vadd.f32 %v7035, %v7227
        %v7266 = vadd.f32 %v7036, %v7232
        %v7267 = vadd.f32 %v7037, %v7237
        %v7268 = vadd.f32 %v7038, %v7242
        %v7269 = vadd.f32 %v7039, %v7247
        %v7270 = vadd.f32 %v7040, %v7252
        %v7271 = vld [vmem:[%s4] sm:$0x1]
        %v7273 = vlaneseq
        %v7274 = vshrl.u32 %v7273, 7
        %v7275 = vsub.s32 0, %v7274
        %v7276 = vrot.slane %v7271, %v7275
        %v7278 = vadd.f32 %v7255, %v7276
        %v7279 = vadd.f32 %v7256, %v7276
        %v7280 = vadd.f32 %v7257, %v7276
        %v7281 = vadd.f32 %v7258, %v7276
        %v7282 = vadd.f32 %v7259, %v7276
        %v7283 = vadd.f32 %v7260, %v7276
        %v7284 = vadd.f32 %v7261, %v7276
        %v7285 = vadd.f32 %v7262, %v7276
        %v7286 = vadd.f32 %v7263, %v7276
        %v7287 = vadd.f32 %v7264, %v7276
        %v7288 = vadd.f32 %v7265, %v7276
        %v7289 = vadd.f32 %v7266, %v7276
        %v7290 = vadd.f32 %v7267, %v7276
        %v7291 = vadd.f32 %v7268, %v7276
        %v7292 = vadd.f32 %v7269, %v7276
        %v7293 = vadd.f32 %v7270, %v7276
        %v7294 = vmax.f32 %v7278, 0.0
        %v7295 = vmax.f32 %v7279, 0.0
        %v7296 = vmax.f32 %v7280, 0.0
        %v7297 = vmax.f32 %v7281, 0.0
        %v7298 = vmax.f32 %v7282, 0.0
        %v7299 = vmax.f32 %v7283, 0.0
        %v7300 = vmax.f32 %v7284, 0.0
        %v7301 = vmax.f32 %v7285, 0.0
        %v7302 = vmax.f32 %v7286, 0.0
        %v7303 = vmax.f32 %v7287, 0.0
        %v7304 = vmax.f32 %v7288, 0.0
        %v7305 = vmax.f32 %v7289, 0.0
        %v7306 = vmax.f32 %v7290, 0.0
        %v7307 = vmax.f32 %v7291, 0.0
        %v7308 = vmax.f32 %v7292, 0.0
        %v7309 = vmax.f32 %v7293, 0.0
        %v7310 = vld [vmem:[%s12] sm:$0xff]
        %v7311 = vld [vmem:[%s12 + $0x8] sm:$0xff]
        %7312 = vmatprep.subr.mxu0 0.0
        %7313 = vmatpush1.msra.mxu0 %v7294
        %7314 = vmatprep.subr.mxu0 0.0
        %7315 = vmatpush1.msra.mxu0 %v7295
        %7316 = vmatprep.subr.mxu0 0.0
        %7317 = vmatpush1.msra.mxu0 %v7296
        %7318 = vmatprep.subr.mxu0 0.0
        %7319 = vmatpush1.msra.mxu0 %v7297
        %7320 = vmatprep.subr.mxu0 0.0
        %7321 = vmatpush1.msra.mxu0 %v7298
        %7322 = vmatprep.subr.mxu0 0.0
        %7323 = vmatpush1.msra.mxu0 %v7299
        %7324 = vmatprep.subr.mxu0 0.0
        %7325 = vmatpush1.msra.mxu0 %v7300
        %7326 = vmatprep.subr.mxu0 0.0
        %7327 = vmatpush1.msra.mxu0 %v7301
        %7328 = vmatprep.subr.mxu0 0.0
        %7329 = vmatpush1.msra.mxu0 %v7302
        %7330 = vmatprep.subr.mxu0 0.0
        %7331 = vmatpush1.msra.mxu0 %v7303
        %7332 = vmatprep.subr.mxu0 0.0
        %7333 = vmatpush1.msra.mxu0 %v7304
        %7334 = vmatprep.subr.mxu0 0.0
        %7335 = vmatpush1.msra.mxu0 %v7305
        %7336 = vmatprep.subr.mxu0 0.0
        %7337 = vmatpush1.msra.mxu0 %v7306
        %7338 = vmatprep.subr.mxu0 0.0
        %7339 = vmatpush1.msra.mxu0 %v7307
        %7340 = vmatprep.subr.mxu0 0.0
        %7341 = vmatpush1.msra.mxu0 %v7308
        %7342 = vmatprep.subr.mxu0 0.0
        %7343 = vmatpush1.msra.mxu0 %v7309
        %7344 = vmatprep.subr.mxu0 0.0
        %7345 = vmatpush1.msra.mxu0 0.0
        %7346 = vmatprep.subr.mxu0 0.0
        %7347 = vmatpush1.msra.mxu0 0.0
        %7348 = vmatprep.subr.mxu0 0.0
        %7349 = vmatpush1.msra.mxu0 0.0
        %7350 = vmatprep.subr.mxu0 0.0
        %7351 = vmatpush1.msra.mxu0 0.0
        %7352 = vmatprep.subr.mxu0 0.0
        %7353 = vmatpush1.msra.mxu0 0.0
        %7354 = vmatprep.subr.mxu0 0.0
        %7355 = vmatpush1.msra.mxu0 0.0
        %7356 = vmatprep.subr.mxu0 0.0
        %7357 = vmatpush1.msra.mxu0 0.0
        %7358 = vmatprep.subr.mxu0 0.0
        %7359 = vmatpush1.msra.mxu0 0.0
        %7360 = vmatprep.subr.mxu0 0.0
        %7361 = vmatpush1.msra.mxu0 0.0
        %7362 = vmatprep.subr.mxu0 0.0
        %7363 = vmatpush1.msra.mxu0 0.0
        %7364 = vmatprep.subr.mxu0 0.0
        %7365 = vmatpush1.msra.mxu0 0.0
        %7366 = vmatprep.subr.mxu0 0.0
        %7367 = vmatpush1.msra.mxu0 0.0
        %7368 = vmatprep.subr.mxu0 0.0
        %7369 = vmatpush1.msra.mxu0 0.0
        %7370 = vmatprep.subr.mxu0 0.0
        %7371 = vmatpush1.msra.mxu0 0.0
        %7372 = vmatprep.subr.mxu0 0.0
        %7373 = vmatpush1.msra.mxu0 0.0
        %7374 = vmatprep.subr.mxu0 0.0
        %7375 = vmatpush1.msra.mxu0 0.0
        %7376 = vmatprep.mubr.f32.mxu0 0.0
        %7377 = vmatmul.mubr.f32.gmra.mrb[0].mxu0 %v7310
        %v7378 = vpop.f32.mrb[0].mxu0
        %v7379 = vadd.f32 0.0, %v7378
        %v7380 = vpop.f32.mrb[0].mxu0
        %7381 = vmatprep.mubr.f32.mxu0 0.0
        %7382 = vmatmul.mubr.f32.gmra.mrb[0].mxu0 %v7311
        %v7383 = vpop.f32.mrb[0].mxu0
        %v7384 = vadd.f32 0.0, %v7383
        %v7385 = vpop.f32.mrb[0].mxu0
        %7386 = vdwg.mxu0
        %s7387 = scalar_lea.vmem %s12, 16
        %v7388 = vld [vmem:[%s7387] sm:$0xff]
        %v7389 = vld [vmem:[%s7387 + $0x8] sm:$0xff]
        %7390 = vmatprep.subr.mxu0 0.0
        %7391 = vmatpush1.msra.mxu0 %v7294
        %7392 = vmatprep.subr.mxu0 0.0
        %7393 = vmatpush1.msra.mxu0 %v7295
        %7394 = vmatprep.subr.mxu0 0.0
        %7395 = vmatpush1.msra.mxu0 %v7296
        %7396 = vmatprep.subr.mxu0 0.0
        %7397 = vmatpush1.msra.mxu0 %v7297
        %7398 = vmatprep.subr.mxu0 0.0
        %7399 = vmatpush1.msra.mxu0 %v7298
        %7400 = vmatprep.subr.mxu0 0.0
        %7401 = vmatpush1.msra.mxu0 %v7299
        %7402 = vmatprep.subr.mxu0 0.0
        %7403 = vmatpush1.msra.mxu0 %v7300
        %7404 = vmatprep.subr.mxu0 0.0
        %7405 = vmatpush1.msra.mxu0 %v7301
        %7406 = vmatprep.subr.mxu0 0.0
        %7407 = vmatpush1.msra.mxu0 %v7302
        %7408 = vmatprep.subr.mxu0 0.0
        %7409 = vmatpush1.msra.mxu0 %v7303
        %7410 = vmatprep.subr.mxu0 0.0
        %7411 = vmatpush1.msra.mxu0 %v7304
        %7412 = vmatprep.subr.mxu0 0.0
        %7413 = vmatpush1.msra.mxu0 %v7305
        %7414 = vmatprep.subr.mxu0 0.0
        %7415 = vmatpush1.msra.mxu0 %v7306
        %7416 = vmatprep.subr.mxu0 0.0
        %7417 = vmatpush1.msra.mxu0 %v7307
        %7418 = vmatprep.subr.mxu0 0.0
        %7419 = vmatpush1.msra.mxu0 %v7308
        %7420 = vmatprep.subr.mxu0 0.0
        %7421 = vmatpush1.msra.mxu0 %v7309
        %7422 = vmatprep.subr.mxu0 0.0
        %7423 = vmatpush1.msra.mxu0 0.0
        %7424 = vmatprep.subr.mxu0 0.0
        %7425 = vmatpush1.msra.mxu0 0.0
        %7426 = vmatprep.subr.mxu0 0.0
        %7427 = vmatpush1.msra.mxu0 0.0
        %7428 = vmatprep.subr.mxu0 0.0
        %7429 = vmatpush1.msra.mxu0 0.0
        %7430 = vmatprep.subr.mxu0 0.0
        %7431 = vmatpush1.msra.mxu0 0.0
        %7432 = vmatprep.subr.mxu0 0.0
        %7433 = vmatpush1.msra.mxu0 0.0
        %7434 = vmatprep.subr.mxu0 0.0
        %7435 = vmatpush1.msra.mxu0 0.0
        %7436 = vmatprep.subr.mxu0 0.0
        %7437 = vmatpush1.msra.mxu0 0.0
        %7438 = vmatprep.subr.mxu0 0.0
        %7439 = vmatpush1.msra.mxu0 0.0
        %7440 = vmatprep.subr.mxu0 0.0
        %7441 = vmatpush1.msra.mxu0 0.0
        %7442 = vmatprep.subr.mxu0 0.0
        %7443 = vmatpush1.msra.mxu0 0.0
        %7444 = vmatprep.subr.mxu0 0.0
        %7445 = vmatpush1.msra.mxu0 0.0
        %7446 = vmatprep.subr.mxu0 0.0
        %7447 = vmatpush1.msra.mxu0 0.0
        %7448 = vmatprep.subr.mxu0 0.0
        %7449 = vmatpush1.msra.mxu0 0.0
        %7450 = vmatprep.subr.mxu0 0.0
        %7451 = vmatpush1.msra.mxu0 0.0
        %7452 = vmatprep.subr.mxu0 0.0
        %7453 = vmatpush1.msra.mxu0 0.0
        %7454 = vmatprep.mubr.f32.mxu0 0.0
        %7455 = vmatmul.mubr.f32.gmra.mrb[0].mxu0 %v7388
        %v7456 = vpop.f32.mrb[0].mxu0
        %v7457 = vadd.f32 0.0, %v7456
        %v7458 = vpop.f32.mrb[0].mxu0
        %7459 = vmatprep.mubr.f32.mxu0 0.0
        %7460 = vmatmul.mubr.f32.gmra.mrb[0].mxu0 %v7389
        %v7461 = vpop.f32.mrb[0].mxu0
        %v7462 = vadd.f32 0.0, %v7461
        %v7463 = vpop.f32.mrb[0].mxu0
        %7464 = vdwg.mxu0
        %v7465 = vmax.f32 %v7379, %v7457
        %v7466 = vmax.f32 %v7384, %v7462
        %s7467 = scalar_lea.vmem %s12, 32
        %v7468 = vld [vmem:[%s7467] sm:$0xff]
        %v7469 = vld [vmem:[%s7467 + $0x8] sm:$0xff]
        %7470 = vmatprep.subr.mxu0 0.0
        %7471 = vmatpush1.msra.mxu0 %v7294
        %7472 = vmatprep.subr.mxu0 0.0
        %7473 = vmatpush1.msra.mxu0 %v7295
        %7474 = vmatprep.subr.mxu0 0.0
        %7475 = vmatpush1.msra.mxu0 %v7296
        %7476 = vmatprep.subr.mxu0 0.0
        %7477 = vmatpush1.msra.mxu0 %v7297
        %7478 = vmatprep.subr.mxu0 0.0
        %7479 = vmatpush1.msra.mxu0 %v7298
        %7480 = vmatprep.subr.mxu0 0.0
        %7481 = vmatpush1.msra.mxu0 %v7299
        %7482 = vmatprep.subr.mxu0 0.0
        %7483 = vmatpush1.msra.mxu0 %v7300
        %7484 = vmatprep.subr.mxu0 0.0
        %7485 = vmatpush1.msra.mxu0 %v7301
        %7486 = vmatprep.subr.mxu0 0.0
        %7487 = vmatpush1.msra.mxu0 %v7302
        %7488 = vmatprep.subr.mxu0 0.0
        %7489 = vmatpush1.msra.mxu0 %v7303
        %7490 = vmatprep.subr.mxu0 0.0
        %7491 = vmatpush1.msra.mxu0 %v7304
        %7492 = vmatprep.subr.mxu0 0.0
        %7493 = vmatpush1.msra.mxu0 %v7305
        %7494 = vmatprep.subr.mxu0 0.0
        %7495 = vmatpush1.msra.mxu0 %v7306
        %7496 = vmatprep.subr.mxu0 0.0
        %7497 = vmatpush1.msra.mxu0 %v7307
        %7498 = vmatprep.subr.mxu0 0.0
        %7499 = vmatpush1.msra.mxu0 %v7308
        %7500 = vmatprep.subr.mxu0 0.0
        %7501 = vmatpush1.msra.mxu0 %v7309
        %7502 = vmatprep.subr.mxu0 0.0
        %7503 = vmatpush1.msra.mxu0 0.0
        %7504 = vmatprep.subr.mxu0 0.0
        %7505 = vmatpush1.msra.mxu0 0.0
        %7506 = vmatprep.subr.mxu0 0.0
        %7507 = vmatpush1.msra.mxu0 0.0
        %7508 = vmatprep.subr.mxu0 0.0
        %7509 = vmatpush1.msra.mxu0 0.0
        %7510 = vmatprep.subr.mxu0 0.0
        %7511 = vmatpush1.msra.mxu0 0.0
        %7512 = vmatprep.subr.mxu0 0.0
        %7513 = vmatpush1.msra.mxu0 0.0
        %7514 = vmatprep.subr.mxu0 0.0
        %7515 = vmatpush1.msra.mxu0 0.0
        %7516 = vmatprep.subr.mxu0 0.0
        %7517 = vmatpush1.msra.mxu0 0.0
        %7518 = vmatprep.subr.mxu0 0.0
        %7519 = vmatpush1.msra.mxu0 0.0
        %7520 = vmatprep.subr.mxu0 0.0
        %7521 = vmatpush1.msra.mxu0 0.0
        %7522 = vmatprep.subr.mxu0 0.0
        %7523 = vmatpush1.msra.mxu0 0.0
        %7524 = vmatprep.subr.mxu0 0.0
        %7525 = vmatpush1.msra.mxu0 0.0
        %7526 = vmatprep.subr.mxu0 0.0
        %7527 = vmatpush1.msra.mxu0 0.0
        %7528 = vmatprep.subr.mxu0 0.0
        %7529 = vmatpush1.msra.mxu0 0.0
        %7530 = vmatprep.subr.mxu0 0.0
        %7531 = vmatpush1.msra.mxu0 0.0
        %7532 = vmatprep.subr.mxu0 0.0
        %7533 = vmatpush1.msra.mxu0 0.0
        %7534 = vmatprep.mubr.f32.mxu0 0.0
        %7535 = vmatmul.mubr.f32.gmra.mrb[0].mxu0 %v7468
        %v7536 = vpop.f32.mrb[0].mxu0
        %v7537 = vadd.f32 0.0, %v7536
        %v7538 = vpop.f32.mrb[0].mxu0
        %7539 = vmatprep.mubr.f32.mxu0 0.0
        %7540 = vmatmul.mubr.f32.gmra.mrb[0].mxu0 %v7469
        %v7541 = vpop.f32.mrb[0].mxu0
        %v7542 = vadd.f32 0.0, %v7541
        %v7543 = vpop.f32.mrb[0].mxu0
        %7544 = vdwg.mxu0
        %v7545 = vmax.f32 %v7465, %v7537
        %v7546 = vmax.f32 %v7466, %v7542
        %s7547 = scalar_lea.vmem %s12, 48
        %v7548 = vld [vmem:[%s7547] sm:$0xff]
        %v7549 = vld [vmem:[%s7547 + $0x8] sm:$0xff]
        %7550 = vmatprep.subr.mxu0 0.0
        %7551 = vmatpush1.msra.mxu0 %v7294
        %7552 = vmatprep.subr.mxu0 0.0
        %7553 = vmatpush1.msra.mxu0 %v7295
        %7554 = vmatprep.subr.mxu0 0.0
        %7555 = vmatpush1.msra.mxu0 %v7296
        %7556 = vmatprep.subr.mxu0 0.0
        %7557 = vmatpush1.msra.mxu0 %v7297
        %7558 = vmatprep.subr.mxu0 0.0
        %7559 = vmatpush1.msra.mxu0 %v7298
        %7560 = vmatprep.subr.mxu0 0.0
        %7561 = vmatpush1.msra.mxu0 %v7299
        %7562 = vmatprep.subr.mxu0 0.0
        %7563 = vmatpush1.msra.mxu0 %v7300
        %7564 = vmatprep.subr.mxu0 0.0
        %7565 = vmatpush1.msra.mxu0 %v7301
        %7566 = vmatprep.subr.mxu0 0.0
        %7567 = vmatpush1.msra.mxu0 %v7302
        %7568 = vmatprep.subr.mxu0 0.0
        %7569 = vmatpush1.msra.mxu0 %v7303
        %7570 = vmatprep.subr.mxu0 0.0
        %7571 = vmatpush1.msra.mxu0 %v7304
        %7572 = vmatprep.subr.mxu0 0.0
        %7573 = vmatpush1.msra.mxu0 %v7305
        %7574 = vmatprep.subr.mxu0 0.0
        %7575 = vmatpush1.msra.mxu0 %v7306
        %7576 = vmatprep.subr.mxu0 0.0
        %7577 = vmatpush1.msra.mxu0 %v7307
        %7578 = vmatprep.subr.mxu0 0.0
        %7579 = vmatpush1.msra.mxu0 %v7308
        %7580 = vmatprep.subr.mxu0 0.0
        %7581 = vmatpush1.msra.mxu0 %v7309
        %7582 = vmatprep.subr.mxu0 0.0
        %7583 = vmatpush1.msra.mxu0 0.0
        %7584 = vmatprep.subr.mxu0 0.0
        %7585 = vmatpush1.msra.mxu0 0.0
        %7586 = vmatprep.subr.mxu0 0.0
        %7587 = vmatpush1.msra.mxu0 0.0
        %7588 = vmatprep.subr.mxu0 0.0
        %7589 = vmatpush1.msra.mxu0 0.0
        %7590 = vmatprep.subr.mxu0 0.0
        %7591 = vmatpush1.msra.mxu0 0.0
        %7592 = vmatprep.subr.mxu0 0.0
        %7593 = vmatpush1.msra.mxu0 0.0
        %7594 = vmatprep.subr.mxu0 0.0
        %7595 = vmatpush1.msra.mxu0 0.0
        %7596 = vmatprep.subr.mxu0 0.0
        %7597 = vmatpush1.msra.mxu0 0.0
        %7598 = vmatprep.subr.mxu0 0.0
        %7599 = vmatpush1.msra.mxu0 0.0
        %7600 = vmatprep.subr.mxu0 0.0
        %7601 = vmatpush1.msra.mxu0 0.0
        %7602 = vmatprep.subr.mxu0 0.0
        %7603 = vmatpush1.msra.mxu0 0.0
        %7604 = vmatprep.subr.mxu0 0.0
        %7605 = vmatpush1.msra.mxu0 0.0
        %7606 = vmatprep.subr.mxu0 0.0
        %7607 = vmatpush1.msra.mxu0 0.0
        %7608 = vmatprep.subr.mxu0 0.0
        %7609 = vmatpush1.msra.mxu0 0.0
        %7610 = vmatprep.subr.mxu0 0.0
        %7611 = vmatpush1.msra.mxu0 0.0
        %7612 = vmatprep.subr.mxu0 0.0
        %7613 = vmatpush1.msra.mxu0 0.0
        %7614 = vmatprep.mubr.f32.mxu0 0.0
        %7615 = vmatmul.mubr.f32.gmra.mrb[0].mxu0 %v7548
        %v7616 = vpop.f32.mrb[0].mxu0
        %v7617 = vadd.f32 0.0, %v7616
        %v7618 = vpop.f32.mrb[0].mxu0
        %7619 = vmatprep.mubr.f32.mxu0 0.0
        %7620 = vmatmul.mubr.f32.gmra.mrb[0].mxu0 %v7549
        %v7621 = vpop.f32.mrb[0].mxu0
        %v7622 = vadd.f32 0.0, %v7621
        %v7623 = vpop.f32.mrb[0].mxu0
        %7624 = vdwg.mxu0
        %v7625 = vmax.f32 %v7545, %v7617
        %v7626 = vmax.f32 %v7546, %v7622
        %vm7627 = vcmask 125952
        %7628 = vst.msk [vmem:[#allocation4 + $0x9] sm:$0xf] %vm7627, %v7625
        %vm7629 = vcmask 130052
        %7630 = vst.msk [vmem:[#allocation4 + $0xd] sm:$0xf0] %vm7629, %v7625
        %7631 = vst.msk [vmem:[#allocation4 + $0x19] sm:$0xf] %vm7627, %v7626
        %7632 = vst.msk [vmem:[#allocation4 + $0x1d] sm:$0xf0] %vm7629, %v7626
        %v7633 = vld [vmem:[#allocation4] sm:$0xff]
        %v7634 = vld [vmem:[#allocation4 + $0x8] sm:$0xff]
        %v7635 = vld [vmem:[#allocation4 + $0x10] sm:$0xff]
        %v7636 = vld [vmem:[#allocation4 + $0x18] sm:$0xff]
        %v7637 = vld [vmem:[%s5] sm:$0xff]
        %v7638 = vld [vmem:[%s5 + $0x8] sm:$0xff]
        %v7639 = vld [vmem:[#allocation4 + $0x1] sm:$0xff]
        %v7640 = vld [vmem:[#allocation4 + $0x9] sm:$0xff]
        %v7641 = vld [vmem:[#allocation4 + $0x11] sm:$0xff]
        %v7642 = vld [vmem:[#allocation4 + $0x19] sm:$0xff]
        %s7643 = scalar_lea.vmem %s5, 16
        %v7644 = vld [vmem:[%s7643] sm:$0xff]
        %v7645 = vld [vmem:[%s7643 + $0x8] sm:$0xff]
        %v7647 = vsel %vm546, %v7639, 0
        %v7650 = vsel %vm546, %v7640, 0
        %v7653 = vsel %vm546, %v7641, 0
        %v7656 = vsel %vm546, %v7642, 0
        %7658 = vmatprep.subr.mxu0 0.0
        %7659 = vmatpush1.msra.mxu0 %v7644
        %7660 = vmatprep.subr.mxu0 0.0
        %7661 = vmatpush1.msra.mxu0 %v7645
        %7662 = vmatprep.subr.mxu0 0.0
        %7663 = vmatpush1.msra.mxu0 0.0
        %7664 = vmatprep.subr.mxu0 0.0
        %7665 = vmatpush1.msra.mxu0 0.0
        %7666 = vmatprep.subr.mxu0 0.0
        %7667 = vmatpush1.msra.mxu0 0.0
        %7668 = vmatprep.subr.mxu0 0.0
        %7669 = vmatpush1.msra.mxu0 0.0
        %7670 = vmatprep.subr.mxu0 0.0
        %7671 = vmatpush1.msra.mxu0 0.0
        %7672 = vmatprep.subr.mxu0 0.0
        %7673 = vmatpush1.msra.mxu0 0.0
        %7674 = vmatprep.subr.mxu0 0.0
        %7675 = vmatpush1.msra.mxu0 0.0
        %7676 = vmatprep.subr.mxu0 0.0
        %7677 = vmatpush1.msra.mxu0 0.0
        %7678 = vmatprep.subr.mxu0 0.0
        %7679 = vmatpush1.msra.mxu0 0.0
        %7680 = vmatprep.subr.mxu0 0.0
        %7681 = vmatpush1.msra.mxu0 0.0
        %7682 = vmatprep.subr.mxu0 0.0
        %7683 = vmatpush1.msra.mxu0 0.0
        %7684 = vmatprep.subr.mxu0 0.0
        %7685 = vmatpush1.msra.mxu0 0.0
        %7686 = vmatprep.subr.mxu0 0.0
        %7687 = vmatpush1.msra.mxu0 0.0
        %7688 = vmatprep.subr.mxu0 0.0
        %7689 = vmatpush1.msra.mxu0 0.0
        %7690 = vmatprep.subr.mxu0 0.0
        %7691 = vmatpush1.msra.mxu0 0.0
        %7692 = vmatprep.subr.mxu0 0.0
        %7693 = vmatpush1.msra.mxu0 0.0
        %7694 = vmatprep.subr.mxu0 0.0
        %7695 = vmatpush1.msra.mxu0 0.0
        %7696 = vmatprep.subr.mxu0 0.0
        %7697 = vmatpush1.msra.mxu0 0.0
        %7698 = vmatprep.subr.mxu0 0.0
        %7699 = vmatpush1.msra.mxu0 0.0
        %7700 = vmatprep.subr.mxu0 0.0
        %7701 = vmatpush1.msra.mxu0 0.0
        %7702 = vmatprep.subr.mxu0 0.0
        %7703 = vmatpush1.msra.mxu0 0.0
        %7704 = vmatprep.subr.mxu0 0.0
        %7705 = vmatpush1.msra.mxu0 0.0
        %7706 = vmatprep.subr.mxu0 0.0
        %7707 = vmatpush1.msra.mxu0 0.0
        %7708 = vmatprep.subr.mxu0 0.0
        %7709 = vmatpush1.msra.mxu0 0.0
        %7710 = vmatprep.subr.mxu0 0.0
        %7711 = vmatpush1.msra.mxu0 0.0
        %7712 = vmatprep.subr.mxu0 0.0
        %7713 = vmatpush1.msra.mxu0 0.0
        %7714 = vmatprep.subr.mxu0 0.0
        %7715 = vmatpush1.msra.mxu0 0.0
        %7716 = vmatprep.subr.mxu0 0.0
        %7717 = vmatpush1.msra.mxu0 0.0
        %7718 = vmatprep.subr.mxu0 0.0
        %7719 = vmatpush1.msra.mxu0 0.0
        %7720 = vmatprep.subr.mxu0 0.0
        %7721 = vmatpush1.msra.mxu0 0.0
        %7722 = vmatprep.mubr.f32.mxu0 0.0
        %7723 = vmatmul.mubr.f32.gmra.mrb[0].mxu0 %v7647
        %v7724 = vpop.f32.mrb[0].mxu0
        %v7725 = vadd.f32 0.0, %v7724
        %v7726 = vpop.f32.mrb[0].mxu0
        %7727 = vmatprep.mubr.f32.mxu0 0.0
        %7728 = vmatmul.mubr.f32.gmra.mrb[0].mxu0 %v7650
        %v7729 = vpop.f32.mrb[0].mxu0
        %v7730 = vadd.f32 0.0, %v7729
        %v7731 = vpop.f32.mrb[0].mxu0
        %7732 = vmatprep.mubr.f32.mxu0 0.0
        %7733 = vmatmul.mubr.f32.gmra.mrb[0].mxu0 %v7653
        %v7734 = vpop.f32.mrb[0].mxu0
        %v7735 = vadd.f32 0.0, %v7734
        %v7736 = vpop.f32.mrb[0].mxu0
        %7737 = vmatprep.mubr.f32.mxu0 0.0
        %7738 = vmatmul.mubr.f32.gmra.mrb[0].mxu0 %v7656
        %v7739 = vpop.f32.mrb[0].mxu0
        %v7740 = vadd.f32 0.0, %v7739
        %v7741 = vpop.f32.mrb[0].mxu0
        %7742 = vdwg.mxu0
        %v7744 = vsel %vm546, %v7633, 0
        %v7747 = vsel %vm546, %v7634, 0
        %v7750 = vsel %vm546, %v7635, 0
        %v7753 = vsel %vm546, %v7636, 0
        %7755 = vmatprep.subr.mxu0 0.0
        %7756 = vmatpush1.msra.mxu0 %v7637
        %7757 = vmatprep.subr.mxu0 0.0
        %7758 = vmatpush1.msra.mxu0 %v7638
        %7759 = vmatprep.subr.mxu0 0.0
        %7760 = vmatpush1.msra.mxu0 0.0
        %7761 = vmatprep.subr.mxu0 0.0
        %7762 = vmatpush1.msra.mxu0 0.0
        %7763 = vmatprep.subr.mxu0 0.0
        %7764 = vmatpush1.msra.mxu0 0.0
        %7765 = vmatprep.subr.mxu0 0.0
        %7766 = vmatpush1.msra.mxu0 0.0
        %7767 = vmatprep.subr.mxu0 0.0
        %7768 = vmatpush1.msra.mxu0 0.0
        %7769 = vmatprep.subr.mxu0 0.0
        %7770 = vmatpush1.msra.mxu0 0.0
        %7771 = vmatprep.subr.mxu0 0.0
        %7772 = vmatpush1.msra.mxu0 0.0
        %7773 = vmatprep.subr.mxu0 0.0
        %7774 = vmatpush1.msra.mxu0 0.0
        %7775 = vmatprep.subr.mxu0 0.0
        %7776 = vmatpush1.msra.mxu0 0.0
        %7777 = vmatprep.subr.mxu0 0.0
        %7778 = vmatpush1.msra.mxu0 0.0
        %7779 = vmatprep.subr.mxu0 0.0
        %7780 = vmatpush1.msra.mxu0 0.0
        %7781 = vmatprep.subr.mxu0 0.0
        %7782 = vmatpush1.msra.mxu0 0.0
        %7783 = vmatprep.subr.mxu0 0.0
        %7784 = vmatpush1.msra.mxu0 0.0
        %7785 = vmatprep.subr.mxu0 0.0
        %7786 = vmatpush1.msra.mxu0 0.0
        %7787 = vmatprep.subr.mxu0 0.0
        %7788 = vmatpush1.msra.mxu0 0.0
        %7789 = vmatprep.subr.mxu0 0.0
        %7790 = vmatpush1.msra.mxu0 0.0
        %7791 = vmatprep.subr.mxu0 0.0
        %7792 = vmatpush1.msra.mxu0 0.0
        %7793 = vmatprep.subr.mxu0 0.0
        %7794 = vmatpush1.msra.mxu0 0.0
        %7795 = vmatprep.subr.mxu0 0.0
        %7796 = vmatpush1.msra.mxu0 0.0
        %7797 = vmatprep.subr.mxu0 0.0
        %7798 = vmatpush1.msra.mxu0 0.0
        %7799 = vmatprep.subr.mxu0 0.0
        %7800 = vmatpush1.msra.mxu0 0.0
        %7801 = vmatprep.subr.mxu0 0.0
        %7802 = vmatpush1.msra.mxu0 0.0
        %7803 = vmatprep.subr.mxu0 0.0
        %7804 = vmatpush1.msra.mxu0 0.0
        %7805 = vmatprep.subr.mxu0 0.0
        %7806 = vmatpush1.msra.mxu0 0.0
        %7807 = vmatprep.subr.mxu0 0.0
        %7808 = vmatpush1.msra.mxu0 0.0
        %7809 = vmatprep.subr.mxu0 0.0
        %7810 = vmatpush1.msra.mxu0 0.0
        %7811 = vmatprep.subr.mxu0 0.0
        %7812 = vmatpush1.msra.mxu0 0.0
        %7813 = vmatprep.subr.mxu0 0.0
        %7814 = vmatpush1.msra.mxu0 0.0
        %7815 = vmatprep.subr.mxu0 0.0
        %7816 = vmatpush1.msra.mxu0 0.0
        %7817 = vmatprep.subr.mxu0 0.0
        %7818 = vmatpush1.msra.mxu0 0.0
        %7819 = vmatprep.mubr.f32.mxu0 0.0
        %7820 = vmatmul.mubr.f32.gmra.mrb[0].mxu0 %v7744
        %v7821 = vpop.f32.mrb[0].mxu0
        %v7822 = vadd.f32 %v7725, %v7821
        %v7823 = vpop.f32.mrb[0].mxu0
        %7824 = vmatprep.mubr.f32.mxu0 0.0
        %7825 = vmatmul.mubr.f32.gmra.mrb[0].mxu0 %v7747
        %v7826 = vpop.f32.mrb[0].mxu0
        %v7827 = vadd.f32 %v7730, %v7826
        %v7828 = vpop.f32.mrb[0].mxu0
        %7829 = vmatprep.mubr.f32.mxu0 0.0
        %7830 = vmatmul.mubr.f32.gmra.mrb[0].mxu0 %v7750
        %v7831 = vpop.f32.mrb[0].mxu0
        %v7832 = vadd.f32 %v7735, %v7831
        %v7833 = vpop.f32.mrb[0].mxu0
        %7834 = vmatprep.mubr.f32.mxu0 0.0
        %7835 = vmatmul.mubr.f32.gmra.mrb[0].mxu0 %v7753
        %v7836 = vpop.f32.mrb[0].mxu0
        %v7837 = vadd.f32 %v7740, %v7836
        %v7838 = vpop.f32.mrb[0].mxu0
        %7839 = vdwg.mxu0
        %v7840 = vld [vmem:[#allocation4 + $0x2] sm:$0xff]
        %v7841 = vld [vmem:[#allocation4 + $0xa] sm:$0xff]
        %v7842 = vld [vmem:[#allocation4 + $0x12] sm:$0xff]
        %v7843 = vld [vmem:[#allocation4 + $0x1a] sm:$0xff]
        %s7844 = scalar_lea.vmem %s5, 32
        %v7845 = vld [vmem:[%s7844] sm:$0xff]
        %v7846 = vld [vmem:[%s7844 + $0x8] sm:$0xff]
        %v7848 = vsel %vm546, %v7840, 0
        %v7851 = vsel %vm546, %v7841, 0
        %v7854 = vsel %vm546, %v7842, 0
        %v7857 = vsel %vm546, %v7843, 0
        %7859 = vmatprep.subr.mxu0 0.0
        %7860 = vmatpush1.msra.mxu0 %v7845
        %7861 = vmatprep.subr.mxu0 0.0
        %7862 = vmatpush1.msra.mxu0 %v7846
        %7863 = vmatprep.subr.mxu0 0.0
        %7864 = vmatpush1.msra.mxu0 0.0
        %7865 = vmatprep.subr.mxu0 0.0
        %7866 = vmatpush1.msra.mxu0 0.0
        %7867 = vmatprep.subr.mxu0 0.0
        %7868 = vmatpush1.msra.mxu0 0.0
        %7869 = vmatprep.subr.mxu0 0.0
        %7870 = vmatpush1.msra.mxu0 0.0
        %7871 = vmatprep.subr.mxu0 0.0
        %7872 = vmatpush1.msra.mxu0 0.0
        %7873 = vmatprep.subr.mxu0 0.0
        %7874 = vmatpush1.msra.mxu0 0.0
        %7875 = vmatprep.subr.mxu0 0.0
        %7876 = vmatpush1.msra.mxu0 0.0
        %7877 = vmatprep.subr.mxu0 0.0
        %7878 = vmatpush1.msra.mxu0 0.0
        %7879 = vmatprep.subr.mxu0 0.0
        %7880 = vmatpush1.msra.mxu0 0.0
        %7881 = vmatprep.subr.mxu0 0.0
        %7882 = vmatpush1.msra.mxu0 0.0
        %7883 = vmatprep.subr.mxu0 0.0
        %7884 = vmatpush1.msra.mxu0 0.0
        %7885 = vmatprep.subr.mxu0 0.0
        %7886 = vmatpush1.msra.mxu0 0.0
        %7887 = vmatprep.subr.mxu0 0.0
        %7888 = vmatpush1.msra.mxu0 0.0
        %7889 = vmatprep.subr.mxu0 0.0
        %7890 = vmatpush1.msra.mxu0 0.0
        %7891 = vmatprep.subr.mxu0 0.0
        %7892 = vmatpush1.msra.mxu0 0.0
        %7893 = vmatprep.subr.mxu0 0.0
        %7894 = vmatpush1.msra.mxu0 0.0
        %7895 = vmatprep.subr.mxu0 0.0
        %7896 = vmatpush1.msra.mxu0 0.0
        %7897 = vmatprep.subr.mxu0 0.0
        %7898 = vmatpush1.msra.mxu0 0.0
        %7899 = vmatprep.subr.mxu0 0.0
        %7900 = vmatpush1.msra.mxu0 0.0
        %7901 = vmatprep.subr.mxu0 0.0
        %7902 = vmatpush1.msra.mxu0 0.0
        %7903 = vmatprep.subr.mxu0 0.0
        %7904 = vmatpush1.msra.mxu0 0.0
        %7905 = vmatprep.subr.mxu0 0.0
        %7906 = vmatpush1.msra.mxu0 0.0
        %7907 = vmatprep.subr.mxu0 0.0
        %7908 = vmatpush1.msra.mxu0 0.0
        %7909 = vmatprep.subr.mxu0 0.0
        %7910 = vmatpush1.msra.mxu0 0.0
        %7911 = vmatprep.subr.mxu0 0.0
        %7912 = vmatpush1.msra.mxu0 0.0
        %7913 = vmatprep.subr.mxu0 0.0
        %7914 = vmatpush1.msra.mxu0 0.0
        %7915 = vmatprep.subr.mxu0 0.0
        %7916 = vmatpush1.msra.mxu0 0.0
        %7917 = vmatprep.subr.mxu0 0.0
        %7918 = vmatpush1.msra.mxu0 0.0
        %7919 = vmatprep.subr.mxu0 0.0
        %7920 = vmatpush1.msra.mxu0 0.0
        %7921 = vmatprep.subr.mxu0 0.0
        %7922 = vmatpush1.msra.mxu0 0.0
        %7923 = vmatprep.mubr.f32.mxu0 0.0
        %7924 = vmatmul.mubr.f32.gmra.mrb[0].mxu0 %v7848
        %v7925 = vpop.f32.mrb[0].mxu0
        %v7926 = vadd.f32 0.0, %v7925
        %v7927 = vpop.f32.mrb[0].mxu0
        %7928 = vmatprep.mubr.f32.mxu0 0.0
        %7929 = vmatmul.mubr.f32.gmra.mrb[0].mxu0 %v7851
        %v7930 = vpop.f32.mrb[0].mxu0
        %v7931 = vadd.f32 0.0, %v7930
        %v7932 = vpop.f32.mrb[0].mxu0
        %7933 = vmatprep.mubr.f32.mxu0 0.0
        %7934 = vmatmul.mubr.f32.gmra.mrb[0].mxu0 %v7854
        %v7935 = vpop.f32.mrb[0].mxu0
        %v7936 = vadd.f32 0.0, %v7935
        %v7937 = vpop.f32.mrb[0].mxu0
        %7938 = vmatprep.mubr.f32.mxu0 0.0
        %7939 = vmatmul.mubr.f32.gmra.mrb[0].mxu0 %v7857
        %v7940 = vpop.f32.mrb[0].mxu0
        %v7941 = vadd.f32 0.0, %v7940
        %v7942 = vpop.f32.mrb[0].mxu0
        %7943 = vdwg.mxu0
        %v7944 = vadd.f32 %v7822, %v7926
        %v7945 = vadd.f32 %v7827, %v7931
        %v7946 = vadd.f32 %v7832, %v7936
        %v7947 = vadd.f32 %v7837, %v7941
        %v7948 = vld [vmem:[#allocation4 + $0x8] sm:$0xff]
        %v7949 = vld [vmem:[#allocation4 + $0x10] sm:$0xff]
        %v7950 = vld [vmem:[#allocation4 + $0x18] sm:$0xff]
        %v7951 = vld [vmem:[#allocation4 + $0x20] sm:$0xff]
        %s7952 = scalar_lea.vmem %s5, 48
        %v7953 = vld [vmem:[%s7952] sm:$0xff]
        %v7954 = vld [vmem:[%s7952 + $0x8] sm:$0xff]
        %v7956 = vsel %vm546, %v7948, 0
        %v7959 = vsel %vm546, %v7949, 0
        %v7962 = vsel %vm546, %v7950, 0
        %v7965 = vsel %vm546, %v7951, 0
        %7967 = vmatprep.subr.mxu0 0.0
        %7968 = vmatpush1.msra.mxu0 %v7953
        %7969 = vmatprep.subr.mxu0 0.0
        %7970 = vmatpush1.msra.mxu0 %v7954
        %7971 = vmatprep.subr.mxu0 0.0
        %7972 = vmatpush1.msra.mxu0 0.0
        %7973 = vmatprep.subr.mxu0 0.0
        %7974 = vmatpush1.msra.mxu0 0.0
        %7975 = vmatprep.subr.mxu0 0.0
        %7976 = vmatpush1.msra.mxu0 0.0
        %7977 = vmatprep.subr.mxu0 0.0
        %7978 = vmatpush1.msra.mxu0 0.0
        %7979 = vmatprep.subr.mxu0 0.0
        %7980 = vmatpush1.msra.mxu0 0.0
        %7981 = vmatprep.subr.mxu0 0.0
        %7982 = vmatpush1.msra.mxu0 0.0
        %7983 = vmatprep.subr.mxu0 0.0
        %7984 = vmatpush1.msra.mxu0 0.0
        %7985 = vmatprep.subr.mxu0 0.0
        %7986 = vmatpush1.msra.mxu0 0.0
        %7987 = vmatprep.subr.mxu0 0.0
        %7988 = vmatpush1.msra.mxu0 0.0
        %7989 = vmatprep.subr.mxu0 0.0
        %7990 = vmatpush1.msra.mxu0 0.0
        %7991 = vmatprep.subr.mxu0 0.0
        %7992 = vmatpush1.msra.mxu0 0.0
        %7993 = vmatprep.subr.mxu0 0.0
        %7994 = vmatpush1.msra.mxu0 0.0
        %7995 = vmatprep.subr.mxu0 0.0
        %7996 = vmatpush1.msra.mxu0 0.0
        %7997 = vmatprep.subr.mxu0 0.0
        %7998 = vmatpush1.msra.mxu0 0.0
        %7999 = vmatprep.subr.mxu0 0.0
        %8000 = vmatpush1.msra.mxu0 0.0
        %8001 = vmatprep.subr.mxu0 0.0
        %8002 = vmatpush1.msra.mxu0 0.0
        %8003 = vmatprep.subr.mxu0 0.0
        %8004 = vmatpush1.msra.mxu0 0.0
        %8005 = vmatprep.subr.mxu0 0.0
        %8006 = vmatpush1.msra.mxu0 0.0
        %8007 = vmatprep.subr.mxu0 0.0
        %8008 = vmatpush1.msra.mxu0 0.0
        %8009 = vmatprep.subr.mxu0 0.0
        %8010 = vmatpush1.msra.mxu0 0.0
        %8011 = vmatprep.subr.mxu0 0.0
        %8012 = vmatpush1.msra.mxu0 0.0
        %8013 = vmatprep.subr.mxu0 0.0
        %8014 = vmatpush1.msra.mxu0 0.0
        %8015 = vmatprep.subr.mxu0 0.0
        %8016 = vmatpush1.msra.mxu0 0.0
        %8017 = vmatprep.subr.mxu0 0.0
        %8018 = vmatpush1.msra.mxu0 0.0
        %8019 = vmatprep.subr.mxu0 0.0
        %8020 = vmatpush1.msra.mxu0 0.0
        %8021 = vmatprep.subr.mxu0 0.0
        %8022 = vmatpush1.msra.mxu0 0.0
        %8023 = vmatprep.subr.mxu0 0.0
        %8024 = vmatpush1.msra.mxu0 0.0
        %8025 = vmatprep.subr.mxu0 0.0
        %8026 = vmatpush1.msra.mxu0 0.0
        %8027 = vmatprep.subr.mxu0 0.0
        %8028 = vmatpush1.msra.mxu0 0.0
        %8029 = vmatprep.subr.mxu0 0.0
        %8030 = vmatpush1.msra.mxu0 0.0
        %8031 = vmatprep.mubr.f32.mxu0 0.0
        %8032 = vmatmul.mubr.f32.gmra.mrb[0].mxu0 %v7956
        %v8033 = vpop.f32.mrb[0].mxu0
        %v8034 = vadd.f32 0.0, %v8033
        %v8035 = vpop.f32.mrb[0].mxu0
        %8036 = vmatprep.mubr.f32.mxu0 0.0
        %8037 = vmatmul.mubr.f32.gmra.mrb[0].mxu0 %v7959
        %v8038 = vpop.f32.mrb[0].mxu0
        %v8039 = vadd.f32 0.0, %v8038
        %v8040 = vpop.f32.mrb[0].mxu0
        %8041 = vmatprep.mubr.f32.mxu0 0.0
        %8042 = vmatmul.mubr.f32.gmra.mrb[0].mxu0 %v7962
        %v8043 = vpop.f32.mrb[0].mxu0
        %v8044 = vadd.f32 0.0, %v8043
        %v8045 = vpop.f32.mrb[0].mxu0
        %8046 = vmatprep.mubr.f32.mxu0 0.0
        %8047 = vmatmul.mubr.f32.gmra.mrb[0].mxu0 %v7965
        %v8048 = vpop.f32.mrb[0].mxu0
        %v8049 = vadd.f32 0.0, %v8048
        %v8050 = vpop.f32.mrb[0].mxu0
        %8051 = vdwg.mxu0
        %v8052 = vadd.f32 %v7944, %v8034
        %v8053 = vadd.f32 %v7945, %v8039
        %v8054 = vadd.f32 %v7946, %v8044
        %v8055 = vadd.f32 %v7947, %v8049
        %v8056 = vld [vmem:[#allocation4 + $0x9] sm:$0xff]
        %v8057 = vld [vmem:[#allocation4 + $0x11] sm:$0xff]
        %v8058 = vld [vmem:[#allocation4 + $0x19] sm:$0xff]
        %v8059 = vld [vmem:[#allocation4 + $0x21] sm:$0xff]
        %s8060 = scalar_lea.vmem %s5, 64
        %v8061 = vld [vmem:[%s8060] sm:$0xff]
        %v8062 = vld [vmem:[%s8060 + $0x8] sm:$0xff]
        %v8064 = vsel %vm546, %v8056, 0
        %v8067 = vsel %vm546, %v8057, 0
        %v8070 = vsel %vm546, %v8058, 0
        %v8073 = vsel %vm546, %v8059, 0
        %8075 = vmatprep.subr.mxu0 0.0
        %8076 = vmatpush1.msra.mxu0 %v8061
        %8077 = vmatprep.subr.mxu0 0.0
        %8078 = vmatpush1.msra.mxu0 %v8062
        %8079 = vmatprep.subr.mxu0 0.0
        %8080 = vmatpush1.msra.mxu0 0.0
        %8081 = vmatprep.subr.mxu0 0.0
        %8082 = vmatpush1.msra.mxu0 0.0
        %8083 = vmatprep.subr.mxu0 0.0
        %8084 = vmatpush1.msra.mxu0 0.0
        %8085 = vmatprep.subr.mxu0 0.0
        %8086 = vmatpush1.msra.mxu0 0.0
        %8087 = vmatprep.subr.mxu0 0.0
        %8088 = vmatpush1.msra.mxu0 0.0
        %8089 = vmatprep.subr.mxu0 0.0
        %8090 = vmatpush1.msra.mxu0 0.0
        %8091 = vmatprep.subr.mxu0 0.0
        %8092 = vmatpush1.msra.mxu0 0.0
        %8093 = vmatprep.subr.mxu0 0.0
        %8094 = vmatpush1.msra.mxu0 0.0
        %8095 = vmatprep.subr.mxu0 0.0
        %8096 = vmatpush1.msra.mxu0 0.0
        %8097 = vmatprep.subr.mxu0 0.0
        %8098 = vmatpush1.msra.mxu0 0.0
        %8099 = vmatprep.subr.mxu0 0.0
        %8100 = vmatpush1.msra.mxu0 0.0
        %8101 = vmatprep.subr.mxu0 0.0
        %8102 = vmatpush1.msra.mxu0 0.0
        %8103 = vmatprep.subr.mxu0 0.0
        %8104 = vmatpush1.msra.mxu0 0.0
        %8105 = vmatprep.subr.mxu0 0.0
        %8106 = vmatpush1.msra.mxu0 0.0
        %8107 = vmatprep.subr.mxu0 0.0
        %8108 = vmatpush1.msra.mxu0 0.0
        %8109 = vmatprep.subr.mxu0 0.0
        %8110 = vmatpush1.msra.mxu0 0.0
        %8111 = vmatprep.subr.mxu0 0.0
        %8112 = vmatpush1.msra.mxu0 0.0
        %8113 = vmatprep.subr.mxu0 0.0
        %8114 = vmatpush1.msra.mxu0 0.0
        %8115 = vmatprep.subr.mxu0 0.0
        %8116 = vmatpush1.msra.mxu0 0.0
        %8117 = vmatprep.subr.mxu0 0.0
        %8118 = vmatpush1.msra.mxu0 0.0
        %8119 = vmatprep.subr.mxu0 0.0
        %8120 = vmatpush1.msra.mxu0 0.0
        %8121 = vmatprep.subr.mxu0 0.0
        %8122 = vmatpush1.msra.mxu0 0.0
        %8123 = vmatprep.subr.mxu0 0.0
        %8124 = vmatpush1.msra.mxu0 0.0
        %8125 = vmatprep.subr.mxu0 0.0
        %8126 = vmatpush1.msra.mxu0 0.0
        %8127 = vmatprep.subr.mxu0 0.0
        %8128 = vmatpush1.msra.mxu0 0.0
        %8129 = vmatprep.subr.mxu0 0.0
        %8130 = vmatpush1.msra.mxu0 0.0
        %8131 = vmatprep.subr.mxu0 0.0
        %8132 = vmatpush1.msra.mxu0 0.0
        %8133 = vmatprep.subr.mxu0 0.0
        %8134 = vmatpush1.msra.mxu0 0.0
        %8135 = vmatprep.subr.mxu0 0.0
        %8136 = vmatpush1.msra.mxu0 0.0
        %8137 = vmatprep.subr.mxu0 0.0
        %8138 = vmatpush1.msra.mxu0 0.0
        %8139 = vmatprep.mubr.f32.mxu0 0.0
        %8140 = vmatmul.mubr.f32.gmra.mrb[0].mxu0 %v8064
        %v8141 = vpop.f32.mrb[0].mxu0
        %v8142 = vadd.f32 0.0, %v8141
        %v8143 = vpop.f32.mrb[0].mxu0
        %8144 = vmatprep.mubr.f32.mxu0 0.0
        %8145 = vmatmul.mubr.f32.gmra.mrb[0].mxu0 %v8067
        %v8146 = vpop.f32.mrb[0].mxu0
        %v8147 = vadd.f32 0.0, %v8146
        %v8148 = vpop.f32.mrb[0].mxu0
        %8149 = vmatprep.mubr.f32.mxu0 0.0
        %8150 = vmatmul.mubr.f32.gmra.mrb[0].mxu0 %v8070
        %v8151 = vpop.f32.mrb[0].mxu0
        %v8152 = vadd.f32 0.0, %v8151
        %v8153 = vpop.f32.mrb[0].mxu0
        %8154 = vmatprep.mubr.f32.mxu0 0.0
        %8155 = vmatmul.mubr.f32.gmra.mrb[0].mxu0 %v8073
        %v8156 = vpop.f32.mrb[0].mxu0
        %v8157 = vadd.f32 0.0, %v8156
        %v8158 = vpop.f32.mrb[0].mxu0
        %8159 = vdwg.mxu0
        %v8160 = vadd.f32 %v8052, %v8142
        %v8161 = vadd.f32 %v8053, %v8147
        %v8162 = vadd.f32 %v8054, %v8152
        %v8163 = vadd.f32 %v8055, %v8157
        %v8164 = vld [vmem:[#allocation4 + $0xa] sm:$0xff]
        %v8165 = vld [vmem:[#allocation4 + $0x12] sm:$0xff]
        %v8166 = vld [vmem:[#allocation4 + $0x1a] sm:$0xff]
        %v8167 = vld [vmem:[#allocation4 + $0x22] sm:$0xff]
        %s8168 = scalar_lea.vmem %s5, 80
        %v8169 = vld [vmem:[%s8168] sm:$0xff]
        %v8170 = vld [vmem:[%s8168 + $0x8] sm:$0xff]
        %v8172 = vsel %vm546, %v8164, 0
        %v8175 = vsel %vm546, %v8165, 0
        %v8178 = vsel %vm546, %v8166, 0
        %v8181 = vsel %vm546, %v8167, 0
        %8183 = vmatprep.subr.mxu0 0.0
        %8184 = vmatpush1.msra.mxu0 %v8169
        %8185 = vmatprep.subr.mxu0 0.0
        %8186 = vmatpush1.msra.mxu0 %v8170
        %8187 = vmatprep.subr.mxu0 0.0
        %8188 = vmatpush1.msra.mxu0 0.0
        %8189 = vmatprep.subr.mxu0 0.0
        %8190 = vmatpush1.msra.mxu0 0.0
        %8191 = vmatprep.subr.mxu0 0.0
        %8192 = vmatpush1.msra.mxu0 0.0
        %8193 = vmatprep.subr.mxu0 0.0
        %8194 = vmatpush1.msra.mxu0 0.0
        %8195 = vmatprep.subr.mxu0 0.0
        %8196 = vmatpush1.msra.mxu0 0.0
        %8197 = vmatprep.subr.mxu0 0.0
        %8198 = vmatpush1.msra.mxu0 0.0
        %8199 = vmatprep.subr.mxu0 0.0
        %8200 = vmatpush1.msra.mxu0 0.0
        %8201 = vmatprep.subr.mxu0 0.0
        %8202 = vmatpush1.msra.mxu0 0.0
        %8203 = vmatprep.subr.mxu0 0.0
        %8204 = vmatpush1.msra.mxu0 0.0
        %8205 = vmatprep.subr.mxu0 0.0
        %8206 = vmatpush1.msra.mxu0 0.0
        %8207 = vmatprep.subr.mxu0 0.0
        %8208 = vmatpush1.msra.mxu0 0.0
        %8209 = vmatprep.subr.mxu0 0.0
        %8210 = vmatpush1.msra.mxu0 0.0
        %8211 = vmatprep.subr.mxu0 0.0
        %8212 = vmatpush1.msra.mxu0 0.0
        %8213 = vmatprep.subr.mxu0 0.0
        %8214 = vmatpush1.msra.mxu0 0.0
        %8215 = vmatprep.subr.mxu0 0.0
        %8216 = vmatpush1.msra.mxu0 0.0
        %8217 = vmatprep.subr.mxu0 0.0
        %8218 = vmatpush1.msra.mxu0 0.0
        %8219 = vmatprep.subr.mxu0 0.0
        %8220 = vmatpush1.msra.mxu0 0.0
        %8221 = vmatprep.subr.mxu0 0.0
        %8222 = vmatpush1.msra.mxu0 0.0
        %8223 = vmatprep.subr.mxu0 0.0
        %8224 = vmatpush1.msra.mxu0 0.0
        %8225 = vmatprep.subr.mxu0 0.0
        %8226 = vmatpush1.msra.mxu0 0.0
        %8227 = vmatprep.subr.mxu0 0.0
        %8228 = vmatpush1.msra.mxu0 0.0
        %8229 = vmatprep.subr.mxu0 0.0
        %8230 = vmatpush1.msra.mxu0 0.0
        %8231 = vmatprep.subr.mxu0 0.0
        %8232 = vmatpush1.msra.mxu0 0.0
        %8233 = vmatprep.subr.mxu0 0.0
        %8234 = vmatpush1.msra.mxu0 0.0
        %8235 = vmatprep.subr.mxu0 0.0
        %8236 = vmatpush1.msra.mxu0 0.0
        %8237 = vmatprep.subr.mxu0 0.0
        %8238 = vmatpush1.msra.mxu0 0.0
        %8239 = vmatprep.subr.mxu0 0.0
        %8240 = vmatpush1.msra.mxu0 0.0
        %8241 = vmatprep.subr.mxu0 0.0
        %8242 = vmatpush1.msra.mxu0 0.0
        %8243 = vmatprep.subr.mxu0 0.0
        %8244 = vmatpush1.msra.mxu0 0.0
        %8245 = vmatprep.subr.mxu0 0.0
        %8246 = vmatpush1.msra.mxu0 0.0
        %8247 = vmatprep.mubr.f32.mxu0 0.0
        %8248 = vmatmul.mubr.f32.gmra.mrb[0].mxu0 %v8172
        %v8249 = vpop.f32.mrb[0].mxu0
        %v8250 = vadd.f32 0.0, %v8249
        %v8251 = vpop.f32.mrb[0].mxu0
        %8252 = vmatprep.mubr.f32.mxu0 0.0
        %8253 = vmatmul.mubr.f32.gmra.mrb[0].mxu0 %v8175
        %v8254 = vpop.f32.mrb[0].mxu0
        %v8255 = vadd.f32 0.0, %v8254
        %v8256 = vpop.f32.mrb[0].mxu0
        %8257 = vmatprep.mubr.f32.mxu0 0.0
        %8258 = vmatmul.mubr.f32.gmra.mrb[0].mxu0 %v8178
        %v8259 = vpop.f32.mrb[0].mxu0
        %v8260 = vadd.f32 0.0, %v8259
        %v8261 = vpop.f32.mrb[0].mxu0
        %8262 = vmatprep.mubr.f32.mxu0 0.0
        %8263 = vmatmul.mubr.f32.gmra.mrb[0].mxu0 %v8181
        %v8264 = vpop.f32.mrb[0].mxu0
        %v8265 = vadd.f32 0.0, %v8264
        %v8266 = vpop.f32.mrb[0].mxu0
        %8267 = vdwg.mxu0
        %v8268 = vadd.f32 %v8160, %v8250
        %v8269 = vadd.f32 %v8161, %v8255
        %v8270 = vadd.f32 %v8162, %v8260
        %v8271 = vadd.f32 %v8163, %v8265
        %v8272 = vld [vmem:[#allocation4 + $0x10] sm:$0xff]
        %v8273 = vld [vmem:[#allocation4 + $0x18] sm:$0xff]
        %v8274 = vld [vmem:[#allocation4 + $0x20] sm:$0xff]
        %v8275 = vld [vmem:[#allocation4 + $0x28] sm:$0xff]
        %s8276 = scalar_lea.vmem %s5, 96
        %v8277 = vld [vmem:[%s8276] sm:$0xff]
        %v8278 = vld [vmem:[%s8276 + $0x8] sm:$0xff]
        %v8280 = vsel %vm546, %v8272, 0
        %v8283 = vsel %vm546, %v8273, 0
        %v8286 = vsel %vm546, %v8274, 0
        %v8289 = vsel %vm546, %v8275, 0
        %8291 = vmatprep.subr.mxu0 0.0
        %8292 = vmatpush1.msra.mxu0 %v8277
        %8293 = vmatprep.subr.mxu0 0.0
        %8294 = vmatpush1.msra.mxu0 %v8278
        %8295 = vmatprep.subr.mxu0 0.0
        %8296 = vmatpush1.msra.mxu0 0.0
        %8297 = vmatprep.subr.mxu0 0.0
        %8298 = vmatpush1.msra.mxu0 0.0
        %8299 = vmatprep.subr.mxu0 0.0
        %8300 = vmatpush1.msra.mxu0 0.0
        %8301 = vmatprep.subr.mxu0 0.0
        %8302 = vmatpush1.msra.mxu0 0.0
        %8303 = vmatprep.subr.mxu0 0.0
        %8304 = vmatpush1.msra.mxu0 0.0
        %8305 = vmatprep.subr.mxu0 0.0
        %8306 = vmatpush1.msra.mxu0 0.0
        %8307 = vmatprep.subr.mxu0 0.0
        %8308 = vmatpush1.msra.mxu0 0.0
        %8309 = vmatprep.subr.mxu0 0.0
        %8310 = vmatpush1.msra.mxu0 0.0
        %8311 = vmatprep.subr.mxu0 0.0
        %8312 = vmatpush1.msra.mxu0 0.0
        %8313 = vmatprep.subr.mxu0 0.0
        %8314 = vmatpush1.msra.mxu0 0.0
        %8315 = vmatprep.subr.mxu0 0.0
        %8316 = vmatpush1.msra.mxu0 0.0
        %8317 = vmatprep.subr.mxu0 0.0
        %8318 = vmatpush1.msra.mxu0 0.0
        %8319 = vmatprep.subr.mxu0 0.0
        %8320 = vmatpush1.msra.mxu0 0.0
        %8321 = vmatprep.subr.mxu0 0.0
        %8322 = vmatpush1.msra.mxu0 0.0
        %8323 = vmatprep.subr.mxu0 0.0
        %8324 = vmatpush1.msra.mxu0 0.0
        %8325 = vmatprep.subr.mxu0 0.0
        %8326 = vmatpush1.msra.mxu0 0.0
        %8327 = vmatprep.subr.mxu0 0.0
        %8328 = vmatpush1.msra.mxu0 0.0
        %8329 = vmatprep.subr.mxu0 0.0
        %8330 = vmatpush1.msra.mxu0 0.0
        %8331 = vmatprep.subr.mxu0 0.0
        %8332 = vmatpush1.msra.mxu0 0.0
        %8333 = vmatprep.subr.mxu0 0.0
        %8334 = vmatpush1.msra.mxu0 0.0
        %8335 = vmatprep.subr.mxu0 0.0
        %8336 = vmatpush1.msra.mxu0 0.0
        %8337 = vmatprep.subr.mxu0 0.0
        %8338 = vmatpush1.msra.mxu0 0.0
        %8339 = vmatprep.subr.mxu0 0.0
        %8340 = vmatpush1.msra.mxu0 0.0
        %8341 = vmatprep.subr.mxu0 0.0
        %8342 = vmatpush1.msra.mxu0 0.0
        %8343 = vmatprep.subr.mxu0 0.0
        %8344 = vmatpush1.msra.mxu0 0.0
        %8345 = vmatprep.subr.mxu0 0.0
        %8346 = vmatpush1.msra.mxu0 0.0
        %8347 = vmatprep.subr.mxu0 0.0
        %8348 = vmatpush1.msra.mxu0 0.0
        %8349 = vmatprep.subr.mxu0 0.0
        %8350 = vmatpush1.msra.mxu0 0.0
        %8351 = vmatprep.subr.mxu0 0.0
        %8352 = vmatpush1.msra.mxu0 0.0
        %8353 = vmatprep.subr.mxu0 0.0
        %8354 = vmatpush1.msra.mxu0 0.0
        %8355 = vmatprep.mubr.f32.mxu0 0.0
        %8356 = vmatmul.mubr.f32.gmra.mrb[0].mxu0 %v8280
        %v8357 = vpop.f32.mrb[0].mxu0
        %v8358 = vadd.f32 0.0, %v8357
        %v8359 = vpop.f32.mrb[0].mxu0
        %8360 = vmatprep.mubr.f32.mxu0 0.0
        %8361 = vmatmul.mubr.f32.gmra.mrb[0].mxu0 %v8283
        %v8362 = vpop.f32.mrb[0].mxu0
        %v8363 = vadd.f32 0.0, %v8362
        %v8364 = vpop.f32.mrb[0].mxu0
        %8365 = vmatprep.mubr.f32.mxu0 0.0
        %8366 = vmatmul.mubr.f32.gmra.mrb[0].mxu0 %v8286
        %v8367 = vpop.f32.mrb[0].mxu0
        %v8368 = vadd.f32 0.0, %v8367
        %v8369 = vpop.f32.mrb[0].mxu0
        %8370 = vmatprep.mubr.f32.mxu0 0.0
        %8371 = vmatmul.mubr.f32.gmra.mrb[0].mxu0 %v8289
        %v8372 = vpop.f32.mrb[0].mxu0
        %v8373 = vadd.f32 0.0, %v8372
        %v8374 = vpop.f32.mrb[0].mxu0
        %8375 = vdwg.mxu0
        %v8376 = vadd.f32 %v8268, %v8358
        %v8377 = vadd.f32 %v8269, %v8363
        %v8378 = vadd.f32 %v8270, %v8368
        %v8379 = vadd.f32 %v8271, %v8373
        %v8380 = vld [vmem:[#allocation4 + $0x11] sm:$0xff]
        %v8381 = vld [vmem:[#allocation4 + $0x19] sm:$0xff]
        %v8382 = vld [vmem:[#allocation4 + $0x21] sm:$0xff]
        %v8383 = vld [vmem:[#allocation4 + $0x29] sm:$0xff]
        %s8384 = scalar_lea.vmem %s5, 112
        %v8385 = vld [vmem:[%s8384] sm:$0xff]
        %v8386 = vld [vmem:[%s8384 + $0x8] sm:$0xff]
        %v8388 = vsel %vm546, %v8380, 0
        %v8391 = vsel %vm546, %v8381, 0
        %v8394 = vsel %vm546, %v8382, 0
        %v8397 = vsel %vm546, %v8383, 0
        %8399 = vmatprep.subr.mxu0 0.0
        %8400 = vmatpush1.msra.mxu0 %v8385
        %8401 = vmatprep.subr.mxu0 0.0
        %8402 = vmatpush1.msra.mxu0 %v8386
        %8403 = vmatprep.subr.mxu0 0.0
        %8404 = vmatpush1.msra.mxu0 0.0
        %8405 = vmatprep.subr.mxu0 0.0
        %8406 = vmatpush1.msra.mxu0 0.0
        %8407 = vmatprep.subr.mxu0 0.0
        %8408 = vmatpush1.msra.mxu0 0.0
        %8409 = vmatprep.subr.mxu0 0.0
        %8410 = vmatpush1.msra.mxu0 0.0
        %8411 = vmatprep.subr.mxu0 0.0
        %8412 = vmatpush1.msra.mxu0 0.0
        %8413 = vmatprep.subr.mxu0 0.0
        %8414 = vmatpush1.msra.mxu0 0.0
        %8415 = vmatprep.subr.mxu0 0.0
        %8416 = vmatpush1.msra.mxu0 0.0
        %8417 = vmatprep.subr.mxu0 0.0
        %8418 = vmatpush1.msra.mxu0 0.0
        %8419 = vmatprep.subr.mxu0 0.0
        %8420 = vmatpush1.msra.mxu0 0.0
        %8421 = vmatprep.subr.mxu0 0.0
        %8422 = vmatpush1.msra.mxu0 0.0
        %8423 = vmatprep.subr.mxu0 0.0
        %8424 = vmatpush1.msra.mxu0 0.0
        %8425 = vmatprep.subr.mxu0 0.0
        %8426 = vmatpush1.msra.mxu0 0.0
        %8427 = vmatprep.subr.mxu0 0.0
        %8428 = vmatpush1.msra.mxu0 0.0
        %8429 = vmatprep.subr.mxu0 0.0
        %8430 = vmatpush1.msra.mxu0 0.0
        %8431 = vmatprep.subr.mxu0 0.0
        %8432 = vmatpush1.msra.mxu0 0.0
        %8433 = vmatprep.subr.mxu0 0.0
        %8434 = vmatpush1.msra.mxu0 0.0
        %8435 = vmatprep.subr.mxu0 0.0
        %8436 = vmatpush1.msra.mxu0 0.0
        %8437 = vmatprep.subr.mxu0 0.0
        %8438 = vmatpush1.msra.mxu0 0.0
        %8439 = vmatprep.subr.mxu0 0.0
        %8440 = vmatpush1.msra.mxu0 0.0
        %8441 = vmatprep.subr.mxu0 0.0
        %8442 = vmatpush1.msra.mxu0 0.0
        %8443 = vmatprep.subr.mxu0 0.0
        %8444 = vmatpush1.msra.mxu0 0.0
        %8445 = vmatprep.subr.mxu0 0.0
        %8446 = vmatpush1.msra.mxu0 0.0
        %8447 = vmatprep.subr.mxu0 0.0
        %8448 = vmatpush1.msra.mxu0 0.0
        %8449 = vmatprep.subr.mxu0 0.0
        %8450 = vmatpush1.msra.mxu0 0.0
        %8451 = vmatprep.subr.mxu0 0.0
        %8452 = vmatpush1.msra.mxu0 0.0
        %8453 = vmatprep.subr.mxu0 0.0
        %8454 = vmatpush1.msra.mxu0 0.0
        %8455 = vmatprep.subr.mxu0 0.0
        %8456 = vmatpush1.msra.mxu0 0.0
        %8457 = vmatprep.subr.mxu0 0.0
        %8458 = vmatpush1.msra.mxu0 0.0
        %8459 = vmatprep.subr.mxu0 0.0
        %8460 = vmatpush1.msra.mxu0 0.0
        %8461 = vmatprep.subr.mxu0 0.0
        %8462 = vmatpush1.msra.mxu0 0.0
        %8463 = vmatprep.mubr.f32.mxu0 0.0
        %8464 = vmatmul.mubr.f32.gmra.mrb[0].mxu0 %v8388
        %v8465 = vpop.f32.mrb[0].mxu0
        %v8466 = vadd.f32 0.0, %v8465
        %v8467 = vpop.f32.mrb[0].mxu0
        %8468 = vmatprep.mubr.f32.mxu0 0.0
        %8469 = vmatmul.mubr.f32.gmra.mrb[0].mxu0 %v8391
        %v8470 = vpop.f32.mrb[0].mxu0
        %v8471 = vadd.f32 0.0, %v8470
        %v8472 = vpop.f32.mrb[0].mxu0
        %8473 = vmatprep.mubr.f32.mxu0 0.0
        %8474 = vmatmul.mubr.f32.gmra.mrb[0].mxu0 %v8394
        %v8475 = vpop.f32.mrb[0].mxu0
        %v8476 = vadd.f32 0.0, %v8475
        %v8477 = vpop.f32.mrb[0].mxu0
        %8478 = vmatprep.mubr.f32.mxu0 0.0
        %8479 = vmatmul.mubr.f32.gmra.mrb[0].mxu0 %v8397
        %v8480 = vpop.f32.mrb[0].mxu0
        %v8481 = vadd.f32 0.0, %v8480
        %v8482 = vpop.f32.mrb[0].mxu0
        %8483 = vdwg.mxu0
        %v8484 = vadd.f32 %v8376, %v8466
        %v8485 = vadd.f32 %v8377, %v8471
        %v8486 = vadd.f32 %v8378, %v8476
        %v8487 = vadd.f32 %v8379, %v8481
        %v8488 = vld [vmem:[#allocation4 + $0x12] sm:$0xff]
        %v8489 = vld [vmem:[#allocation4 + $0x1a] sm:$0xff]
        %v8490 = vld [vmem:[#allocation4 + $0x22] sm:$0xff]
        %v8491 = vld [vmem:[#allocation4 + $0x2a] sm:$0xff]
        %s8492 = scalar_lea.vmem %s5, 128
        %v8493 = vld [vmem:[%s8492] sm:$0xff]
        %v8494 = vld [vmem:[%s8492 + $0x8] sm:$0xff]
        %v8496 = vsel %vm546, %v8488, 0
        %v8499 = vsel %vm546, %v8489, 0
        %v8502 = vsel %vm546, %v8490, 0
        %v8505 = vsel %vm546, %v8491, 0
        %8507 = vmatprep.subr.mxu0 0.0
        %8508 = vmatpush1.msra.mxu0 %v8493
        %8509 = vmatprep.subr.mxu0 0.0
        %8510 = vmatpush1.msra.mxu0 %v8494
        %8511 = vmatprep.subr.mxu0 0.0
        %8512 = vmatpush1.msra.mxu0 0.0
        %8513 = vmatprep.subr.mxu0 0.0
        %8514 = vmatpush1.msra.mxu0 0.0
        %8515 = vmatprep.subr.mxu0 0.0
        %8516 = vmatpush1.msra.mxu0 0.0
        %8517 = vmatprep.subr.mxu0 0.0
        %8518 = vmatpush1.msra.mxu0 0.0
        %8519 = vmatprep.subr.mxu0 0.0
        %8520 = vmatpush1.msra.mxu0 0.0
        %8521 = vmatprep.subr.mxu0 0.0
        %8522 = vmatpush1.msra.mxu0 0.0
        %8523 = vmatprep.subr.mxu0 0.0
        %8524 = vmatpush1.msra.mxu0 0.0
        %8525 = vmatprep.subr.mxu0 0.0
        %8526 = vmatpush1.msra.mxu0 0.0
        %8527 = vmatprep.subr.mxu0 0.0
        %8528 = vmatpush1.msra.mxu0 0.0
        %8529 = vmatprep.subr.mxu0 0.0
        %8530 = vmatpush1.msra.mxu0 0.0
        %8531 = vmatprep.subr.mxu0 0.0
        %8532 = vmatpush1.msra.mxu0 0.0
        %8533 = vmatprep.subr.mxu0 0.0
        %8534 = vmatpush1.msra.mxu0 0.0
        %8535 = vmatprep.subr.mxu0 0.0
        %8536 = vmatpush1.msra.mxu0 0.0
        %8537 = vmatprep.subr.mxu0 0.0
        %8538 = vmatpush1.msra.mxu0 0.0
        %8539 = vmatprep.subr.mxu0 0.0
        %8540 = vmatpush1.msra.mxu0 0.0
        %8541 = vmatprep.subr.mxu0 0.0
        %8542 = vmatpush1.msra.mxu0 0.0
        %8543 = vmatprep.subr.mxu0 0.0
        %8544 = vmatpush1.msra.mxu0 0.0
        %8545 = vmatprep.subr.mxu0 0.0
        %8546 = vmatpush1.msra.mxu0 0.0
        %8547 = vmatprep.subr.mxu0 0.0
        %8548 = vmatpush1.msra.mxu0 0.0
        %8549 = vmatprep.subr.mxu0 0.0
        %8550 = vmatpush1.msra.mxu0 0.0
        %8551 = vmatprep.subr.mxu0 0.0
        %8552 = vmatpush1.msra.mxu0 0.0
        %8553 = vmatprep.subr.mxu0 0.0
        %8554 = vmatpush1.msra.mxu0 0.0
        %8555 = vmatprep.subr.mxu0 0.0
        %8556 = vmatpush1.msra.mxu0 0.0
        %8557 = vmatprep.subr.mxu0 0.0
        %8558 = vmatpush1.msra.mxu0 0.0
        %8559 = vmatprep.subr.mxu0 0.0
        %8560 = vmatpush1.msra.mxu0 0.0
        %8561 = vmatprep.subr.mxu0 0.0
        %8562 = vmatpush1.msra.mxu0 0.0
        %8563 = vmatprep.subr.mxu0 0.0
        %8564 = vmatpush1.msra.mxu0 0.0
        %8565 = vmatprep.subr.mxu0 0.0
        %8566 = vmatpush1.msra.mxu0 0.0
        %8567 = vmatprep.subr.mxu0 0.0
        %8568 = vmatpush1.msra.mxu0 0.0
        %8569 = vmatprep.subr.mxu0 0.0
        %8570 = vmatpush1.msra.mxu0 0.0
        %8571 = vmatprep.mubr.f32.mxu0 0.0
        %8572 = vmatmul.mubr.f32.gmra.mrb[0].mxu0 %v8496
        %v8573 = vpop.f32.mrb[0].mxu0
        %v8574 = vadd.f32 0.0, %v8573
        %v8575 = vpop.f32.mrb[0].mxu0
        %8576 = vmatprep.mubr.f32.mxu0 0.0
        %8577 = vmatmul.mubr.f32.gmra.mrb[0].mxu0 %v8499
        %v8578 = vpop.f32.mrb[0].mxu0
        %v8579 = vadd.f32 0.0, %v8578
        %v8580 = vpop.f32.mrb[0].mxu0
        %8581 = vmatprep.mubr.f32.mxu0 0.0
        %8582 = vmatmul.mubr.f32.gmra.mrb[0].mxu0 %v8502
        %v8583 = vpop.f32.mrb[0].mxu0
        %v8584 = vadd.f32 0.0, %v8583
        %v8585 = vpop.f32.mrb[0].mxu0
        %8586 = vmatprep.mubr.f32.mxu0 0.0
        %8587 = vmatmul.mubr.f32.gmra.mrb[0].mxu0 %v8505
        %v8588 = vpop.f32.mrb[0].mxu0
        %v8589 = vadd.f32 0.0, %v8588
        %v8590 = vpop.f32.mrb[0].mxu0
        %8591 = vdwg.mxu0
        %v8592 = vadd.f32 %v8484, %v8574
        %v8593 = vadd.f32 %v8485, %v8579
        %v8594 = vadd.f32 %v8486, %v8584
        %v8595 = vadd.f32 %v8487, %v8589
        %v8596 = vld [vmem:[%s6] sm:$0x1]
        %v8598 = vlaneseq
        %v8599 = vshrl.u32 %v8598, 7
        %v8600 = vsub.s32 0, %v8599
        %v8601 = vrot.slane %v8596, %v8600
        %v8603 = vadd.f32 %v8592, %v8601
        %v8604 = vadd.f32 %v8593, %v8601
        %v8605 = vadd.f32 %v8594, %v8601
        %v8606 = vadd.f32 %v8595, %v8601
        %v8607 = vmax.f32 %v8603, 0.0
        %v8608 = vmax.f32 %v8604, 0.0
        %v8609 = vmax.f32 %v8605, 0.0
        %v8610 = vmax.f32 %v8606, 0.0
        %v8611 = vld [vmem:[%s13] sm:$0xf]
        %v8613 = vsel %vm523, %v8611, 0
        %8615 = vmatprep.subr.mxu0 0.0
        %8616 = vmatpush1.msra.mxu0 %v8607
        %8617 = vmatprep.subr.mxu0 0.0
        %8618 = vmatpush1.msra.mxu0 %v8608
        %8619 = vmatprep.subr.mxu0 0.0
        %8620 = vmatpush1.msra.mxu0 %v8609
        %8621 = vmatprep.subr.mxu0 0.0
        %8622 = vmatpush1.msra.mxu0 %v8610
        %8623 = vmatprep.subr.mxu0 0.0
        %8624 = vmatpush1.msra.mxu0 0.0
        %8625 = vmatprep.subr.mxu0 0.0
        %8626 = vmatpush1.msra.mxu0 0.0
        %8627 = vmatprep.subr.mxu0 0.0
        %8628 = vmatpush1.msra.mxu0 0.0
        %8629 = vmatprep.subr.mxu0 0.0
        %8630 = vmatpush1.msra.mxu0 0.0
        %8631 = vmatprep.subr.mxu0 0.0
        %8632 = vmatpush1.msra.mxu0 0.0
        %8633 = vmatprep.subr.mxu0 0.0
        %8634 = vmatpush1.msra.mxu0 0.0
        %8635 = vmatprep.subr.mxu0 0.0
        %8636 = vmatpush1.msra.mxu0 0.0
        %8637 = vmatprep.subr.mxu0 0.0
        %8638 = vmatpush1.msra.mxu0 0.0
        %8639 = vmatprep.subr.mxu0 0.0
        %8640 = vmatpush1.msra.mxu0 0.0
        %8641 = vmatprep.subr.mxu0 0.0
        %8642 = vmatpush1.msra.mxu0 0.0
        %8643 = vmatprep.subr.mxu0 0.0
        %8644 = vmatpush1.msra.mxu0 0.0
        %8645 = vmatprep.subr.mxu0 0.0
        %8646 = vmatpush1.msra.mxu0 0.0
        %8647 = vmatprep.subr.mxu0 0.0
        %8648 = vmatpush1.msra.mxu0 0.0
        %8649 = vmatprep.subr.mxu0 0.0
        %8650 = vmatpush1.msra.mxu0 0.0
        %8651 = vmatprep.subr.mxu0 0.0
        %8652 = vmatpush1.msra.mxu0 0.0
        %8653 = vmatprep.subr.mxu0 0.0
        %8654 = vmatpush1.msra.mxu0 0.0
        %8655 = vmatprep.subr.mxu0 0.0
        %8656 = vmatpush1.msra.mxu0 0.0
        %8657 = vmatprep.subr.mxu0 0.0
        %8658 = vmatpush1.msra.mxu0 0.0
        %8659 = vmatprep.subr.mxu0 0.0
        %8660 = vmatpush1.msra.mxu0 0.0
        %8661 = vmatprep.subr.mxu0 0.0
        %8662 = vmatpush1.msra.mxu0 0.0
        %8663 = vmatprep.subr.mxu0 0.0
        %8664 = vmatpush1.msra.mxu0 0.0
        %8665 = vmatprep.subr.mxu0 0.0
        %8666 = vmatpush1.msra.mxu0 0.0
        %8667 = vmatprep.subr.mxu0 0.0
        %8668 = vmatpush1.msra.mxu0 0.0
        %8669 = vmatprep.subr.mxu0 0.0
        %8670 = vmatpush1.msra.mxu0 0.0
        %8671 = vmatprep.subr.mxu0 0.0
        %8672 = vmatpush1.msra.mxu0 0.0
        %8673 = vmatprep.subr.mxu0 0.0
        %8674 = vmatpush1.msra.mxu0 0.0
        %8675 = vmatprep.subr.mxu0 0.0
        %8676 = vmatpush1.msra.mxu0 0.0
        %8677 = vmatprep.subr.mxu0 0.0
        %8678 = vmatpush1.msra.mxu0 0.0
        %8679 = vmatprep.mubr.f32.mxu0 0.0
        %8680 = vmatmul.mubr.f32.gmra.mrb[0].mxu0 %v8613
        %v8681 = vpop.f32.mrb[0].mxu0
        %v8682 = vadd.f32 0.0, %v8681
        %v8683 = vpop.f32.mrb[0].mxu0
        %8684 = vdwg.mxu0
        %s8685 = scalar_lea.vmem %s13, 4
        %v8686 = vld [vmem:[%s8685] sm:$0xf]
        %v8688 = vsel %vm523, %v8686, 0
        %8690 = vmatprep.subr.mxu0 0.0
        %8691 = vmatpush1.msra.mxu0 %v8607
        %8692 = vmatprep.subr.mxu0 0.0
        %8693 = vmatpush1.msra.mxu0 %v8608
        %8694 = vmatprep.subr.mxu0 0.0
        %8695 = vmatpush1.msra.mxu0 %v8609
        %8696 = vmatprep.subr.mxu0 0.0
        %8697 = vmatpush1.msra.mxu0 %v8610
        %8698 = vmatprep.subr.mxu0 0.0
        %8699 = vmatpush1.msra.mxu0 0.0
        %8700 = vmatprep.subr.mxu0 0.0
        %8701 = vmatpush1.msra.mxu0 0.0
        %8702 = vmatprep.subr.mxu0 0.0
        %8703 = vmatpush1.msra.mxu0 0.0
        %8704 = vmatprep.subr.mxu0 0.0
        %8705 = vmatpush1.msra.mxu0 0.0
        %8706 = vmatprep.subr.mxu0 0.0
        %8707 = vmatpush1.msra.mxu0 0.0
        %8708 = vmatprep.subr.mxu0 0.0
        %8709 = vmatpush1.msra.mxu0 0.0
        %8710 = vmatprep.subr.mxu0 0.0
        %8711 = vmatpush1.msra.mxu0 0.0
        %8712 = vmatprep.subr.mxu0 0.0
        %8713 = vmatpush1.msra.mxu0 0.0
        %8714 = vmatprep.subr.mxu0 0.0
        %8715 = vmatpush1.msra.mxu0 0.0
        %8716 = vmatprep.subr.mxu0 0.0
        %8717 = vmatpush1.msra.mxu0 0.0
        %8718 = vmatprep.subr.mxu0 0.0
        %8719 = vmatpush1.msra.mxu0 0.0
        %8720 = vmatprep.subr.mxu0 0.0
        %8721 = vmatpush1.msra.mxu0 0.0
        %8722 = vmatprep.subr.mxu0 0.0
        %8723 = vmatpush1.msra.mxu0 0.0
        %8724 = vmatprep.subr.mxu0 0.0
        %8725 = vmatpush1.msra.mxu0 0.0
        %8726 = vmatprep.subr.mxu0 0.0
        %8727 = vmatpush1.msra.mxu0 0.0
        %8728 = vmatprep.subr.mxu0 0.0
        %8729 = vmatpush1.msra.mxu0 0.0
        %8730 = vmatprep.subr.mxu0 0.0
        %8731 = vmatpush1.msra.mxu0 0.0
        %8732 = vmatprep.subr.mxu0 0.0
        %8733 = vmatpush1.msra.mxu0 0.0
        %8734 = vmatprep.subr.mxu0 0.0
        %8735 = vmatpush1.msra.mxu0 0.0
        %8736 = vmatprep.subr.mxu0 0.0
        %8737 = vmatpush1.msra.mxu0 0.0
        %8738 = vmatprep.subr.mxu0 0.0
        %8739 = vmatpush1.msra.mxu0 0.0
        %8740 = vmatprep.subr.mxu0 0.0
        %8741 = vmatpush1.msra.mxu0 0.0
        %8742 = vmatprep.subr.mxu0 0.0
        %8743 = vmatpush1.msra.mxu0 0.0
        %8744 = vmatprep.subr.mxu0 0.0
        %8745 = vmatpush1.msra.mxu0 0.0
        %8746 = vmatprep.subr.mxu0 0.0
        %8747 = vmatpush1.msra.mxu0 0.0
        %8748 = vmatprep.subr.mxu0 0.0
        %8749 = vmatpush1.msra.mxu0 0.0
        %8750 = vmatprep.subr.mxu0 0.0
        %8751 = vmatpush1.msra.mxu0 0.0
        %8752 = vmatprep.subr.mxu0 0.0
        %8753 = vmatpush1.msra.mxu0 0.0
        %8754 = vmatprep.mubr.f32.mxu0 0.0
        %8755 = vmatmul.mubr.f32.gmra.mrb[0].mxu0 %v8688
        %v8756 = vpop.f32.mrb[0].mxu0
        %v8757 = vadd.f32 0.0, %v8756
        %v8758 = vpop.f32.mrb[0].mxu0
        %8759 = vdwg.mxu0
        %v8760 = vmax.f32 %v8682, %v8757
        %s8761 = scalar_lea.vmem %s13, 8
        %v8762 = vld [vmem:[%s8761] sm:$0xf]
        %v8764 = vsel %vm523, %v8762, 0
        %8766 = vmatprep.subr.mxu0 0.0
        %8767 = vmatpush1.msra.mxu0 %v8607
        %8768 = vmatprep.subr.mxu0 0.0
        %8769 = vmatpush1.msra.mxu0 %v8608
        %8770 = vmatprep.subr.mxu0 0.0
        %8771 = vmatpush1.msra.mxu0 %v8609
        %8772 = vmatprep.subr.mxu0 0.0
        %8773 = vmatpush1.msra.mxu0 %v8610
        %8774 = vmatprep.subr.mxu0 0.0
        %8775 = vmatpush1.msra.mxu0 0.0
        %8776 = vmatprep.subr.mxu0 0.0
        %8777 = vmatpush1.msra.mxu0 0.0
        %8778 = vmatprep.subr.mxu0 0.0
        %8779 = vmatpush1.msra.mxu0 0.0
        %8780 = vmatprep.subr.mxu0 0.0
        %8781 = vmatpush1.msra.mxu0 0.0
        %8782 = vmatprep.subr.mxu0 0.0
        %8783 = vmatpush1.msra.mxu0 0.0
        %8784 = vmatprep.subr.mxu0 0.0
        %8785 = vmatpush1.msra.mxu0 0.0
        %8786 = vmatprep.subr.mxu0 0.0
        %8787 = vmatpush1.msra.mxu0 0.0
        %8788 = vmatprep.subr.mxu0 0.0
        %8789 = vmatpush1.msra.mxu0 0.0
        %8790 = vmatprep.subr.mxu0 0.0
        %8791 = vmatpush1.msra.mxu0 0.0
        %8792 = vmatprep.subr.mxu0 0.0
        %8793 = vmatpush1.msra.mxu0 0.0
        %8794 = vmatprep.subr.mxu0 0.0
        %8795 = vmatpush1.msra.mxu0 0.0
        %8796 = vmatprep.subr.mxu0 0.0
        %8797 = vmatpush1.msra.mxu0 0.0
        %8798 = vmatprep.subr.mxu0 0.0
        %8799 = vmatpush1.msra.mxu0 0.0
        %8800 = vmatprep.subr.mxu0 0.0
        %8801 = vmatpush1.msra.mxu0 0.0
        %8802 = vmatprep.subr.mxu0 0.0
        %8803 = vmatpush1.msra.mxu0 0.0
        %8804 = vmatprep.subr.mxu0 0.0
        %8805 = vmatpush1.msra.mxu0 0.0
        %8806 = vmatprep.subr.mxu0 0.0
        %8807 = vmatpush1.msra.mxu0 0.0
        %8808 = vmatprep.subr.mxu0 0.0
        %8809 = vmatpush1.msra.mxu0 0.0
        %8810 = vmatprep.subr.mxu0 0.0
        %8811 = vmatpush1.msra.mxu0 0.0
        %8812 = vmatprep.subr.mxu0 0.0
        %8813 = vmatpush1.msra.mxu0 0.0
        %8814 = vmatprep.subr.mxu0 0.0
        %8815 = vmatpush1.msra.mxu0 0.0
        %8816 = vmatprep.subr.mxu0 0.0
        %8817 = vmatpush1.msra.mxu0 0.0
        %8818 = vmatprep.subr.mxu0 0.0
        %8819 = vmatpush1.msra.mxu0 0.0
        %8820 = vmatprep.subr.mxu0 0.0
        %8821 = vmatpush1.msra.mxu0 0.0
        %8822 = vmatprep.subr.mxu0 0.0
        %8823 = vmatpush1.msra.mxu0 0.0
        %8824 = vmatprep.subr.mxu0 0.0
        %8825 = vmatpush1.msra.mxu0 0.0
        %8826 = vmatprep.subr.mxu0 0.0
        %8827 = vmatpush1.msra.mxu0 0.0
        %8828 = vmatprep.subr.mxu0 0.0
        %8829 = vmatpush1.msra.mxu0 0.0
        %8830 = vmatprep.mubr.f32.mxu0 0.0
        %8831 = vmatmul.mubr.f32.gmra.mrb[0].mxu0 %v8764
        %v8832 = vpop.f32.mrb[0].mxu0
        %v8833 = vadd.f32 0.0, %v8832
        %v8834 = vpop.f32.mrb[0].mxu0
        %8835 = vdwg.mxu0
        %v8836 = vmax.f32 %v8760, %v8833
        %s8837 = scalar_lea.vmem %s13, 12
        %v8838 = vld [vmem:[%s8837] sm:$0xf]
        %v8840 = vsel %vm523, %v8838, 0
        %8842 = vmatprep.subr.mxu0 0.0
        %8843 = vmatpush1.msra.mxu0 %v8607
        %8844 = vmatprep.subr.mxu0 0.0
        %8845 = vmatpush1.msra.mxu0 %v8608
        %8846 = vmatprep.subr.mxu0 0.0
        %8847 = vmatpush1.msra.mxu0 %v8609
        %8848 = vmatprep.subr.mxu0 0.0
        %8849 = vmatpush1.msra.mxu0 %v8610
        %8850 = vmatprep.subr.mxu0 0.0
        %8851 = vmatpush1.msra.mxu0 0.0
        %8852 = vmatprep.subr.mxu0 0.0
        %8853 = vmatpush1.msra.mxu0 0.0
        %8854 = vmatprep.subr.mxu0 0.0
        %8855 = vmatpush1.msra.mxu0 0.0
        %8856 = vmatprep.subr.mxu0 0.0
        %8857 = vmatpush1.msra.mxu0 0.0
        %8858 = vmatprep.subr.mxu0 0.0
        %8859 = vmatpush1.msra.mxu0 0.0
        %8860 = vmatprep.subr.mxu0 0.0
        %8861 = vmatpush1.msra.mxu0 0.0
        %8862 = vmatprep.subr.mxu0 0.0
        %8863 = vmatpush1.msra.mxu0 0.0
        %8864 = vmatprep.subr.mxu0 0.0
        %8865 = vmatpush1.msra.mxu0 0.0
        %8866 = vmatprep.subr.mxu0 0.0
        %8867 = vmatpush1.msra.mxu0 0.0
        %8868 = vmatprep.subr.mxu0 0.0
        %8869 = vmatpush1.msra.mxu0 0.0
        %8870 = vmatprep.subr.mxu0 0.0
        %8871 = vmatpush1.msra.mxu0 0.0
        %8872 = vmatprep.subr.mxu0 0.0
        %8873 = vmatpush1.msra.mxu0 0.0
        %8874 = vmatprep.subr.mxu0 0.0
        %8875 = vmatpush1.msra.mxu0 0.0
        %8876 = vmatprep.subr.mxu0 0.0
        %8877 = vmatpush1.msra.mxu0 0.0
        %8878 = vmatprep.subr.mxu0 0.0
        %8879 = vmatpush1.msra.mxu0 0.0
        %8880 = vmatprep.subr.mxu0 0.0
        %8881 = vmatpush1.msra.mxu0 0.0
        %8882 = vmatprep.subr.mxu0 0.0
        %8883 = vmatpush1.msra.mxu0 0.0
        %8884 = vmatprep.subr.mxu0 0.0
        %8885 = vmatpush1.msra.mxu0 0.0
        %8886 = vmatprep.subr.mxu0 0.0
        %8887 = vmatpush1.msra.mxu0 0.0
        %8888 = vmatprep.subr.mxu0 0.0
        %8889 = vmatpush1.msra.mxu0 0.0
        %8890 = vmatprep.subr.mxu0 0.0
        %8891 = vmatpush1.msra.mxu0 0.0
        %8892 = vmatprep.subr.mxu0 0.0
        %8893 = vmatpush1.msra.mxu0 0.0
        %8894 = vmatprep.subr.mxu0 0.0
        %8895 = vmatpush1.msra.mxu0 0.0
        %8896 = vmatprep.subr.mxu0 0.0
        %8897 = vmatpush1.msra.mxu0 0.0
        %8898 = vmatprep.subr.mxu0 0.0
        %8899 = vmatpush1.msra.mxu0 0.0
        %8900 = vmatprep.subr.mxu0 0.0
        %8901 = vmatpush1.msra.mxu0 0.0
        %8902 = vmatprep.subr.mxu0 0.0
        %8903 = vmatpush1.msra.mxu0 0.0
        %8904 = vmatprep.subr.mxu0 0.0
        %8905 = vmatpush1.msra.mxu0 0.0
        %8906 = vmatprep.mubr.f32.mxu0 0.0
        %8907 = vmatmul.mubr.f32.gmra.mrb[0].mxu0 %v8840
        %v8908 = vpop.f32.mrb[0].mxu0
        %v8909 = vadd.f32 0.0, %v8908
        %v8910 = vpop.f32.mrb[0].mxu0
        %8911 = vdwg.mxu0
        %v8912 = vmax.f32 %v8836, %v8909
        %v8913 = vld [vmem:[%s8] sm:$0x1]
        %v8914 = vld [vmem:[%s7] sm:$0xff]
        %v8915 = vld [vmem:[%s7 + $0x8] sm:$0xff]
        %v8917 = vsel %vm546, %v8912, 0
        %8919 = vmatprep.subr.mxu0 0.0
        %8920 = vmatpush1.msra.mxu0 %v8914
        %8921 = vmatprep.subr.mxu0 0.0
        %8922 = vmatpush1.msra.mxu0 %v8915
        %8923 = vmatprep.subr.mxu0 0.0
        %8924 = vmatpush1.msra.mxu0 0.0
        %8925 = vmatprep.subr.mxu0 0.0
        %8926 = vmatpush1.msra.mxu0 0.0
        %8927 = vmatprep.subr.mxu0 0.0
        %8928 = vmatpush1.msra.mxu0 0.0
        %8929 = vmatprep.subr.mxu0 0.0
        %8930 = vmatpush1.msra.mxu0 0.0
        %8931 = vmatprep.subr.mxu0 0.0
        %8932 = vmatpush1.msra.mxu0 0.0
        %8933 = vmatprep.subr.mxu0 0.0
        %8934 = vmatpush1.msra.mxu0 0.0
        %8935 = vmatprep.subr.mxu0 0.0
        %8936 = vmatpush1.msra.mxu0 0.0
        %8937 = vmatprep.subr.mxu0 0.0
        %8938 = vmatpush1.msra.mxu0 0.0
        %8939 = vmatprep.subr.mxu0 0.0
        %8940 = vmatpush1.msra.mxu0 0.0
        %8941 = vmatprep.subr.mxu0 0.0
        %8942 = vmatpush1.msra.mxu0 0.0
        %8943 = vmatprep.subr.mxu0 0.0
        %8944 = vmatpush1.msra.mxu0 0.0
        %8945 = vmatprep.subr.mxu0 0.0
        %8946 = vmatpush1.msra.mxu0 0.0
        %8947 = vmatprep.subr.mxu0 0.0
        %8948 = vmatpush1.msra.mxu0 0.0
        %8949 = vmatprep.subr.mxu0 0.0
        %8950 = vmatpush1.msra.mxu0 0.0
        %8951 = vmatprep.subr.mxu0 0.0
        %8952 = vmatpush1.msra.mxu0 0.0
        %8953 = vmatprep.subr.mxu0 0.0
        %8954 = vmatpush1.msra.mxu0 0.0
        %8955 = vmatprep.subr.mxu0 0.0
        %8956 = vmatpush1.msra.mxu0 0.0
        %8957 = vmatprep.subr.mxu0 0.0
        %8958 = vmatpush1.msra.mxu0 0.0
        %8959 = vmatprep.subr.mxu0 0.0
        %8960 = vmatpush1.msra.mxu0 0.0
        %8961 = vmatprep.subr.mxu0 0.0
        %8962 = vmatpush1.msra.mxu0 0.0
        %8963 = vmatprep.subr.mxu0 0.0
        %8964 = vmatpush1.msra.mxu0 0.0
        %8965 = vmatprep.subr.mxu0 0.0
        %8966 = vmatpush1.msra.mxu0 0.0
        %8967 = vmatprep.subr.mxu0 0.0
        %8968 = vmatpush1.msra.mxu0 0.0
        %8969 = vmatprep.subr.mxu0 0.0
        %8970 = vmatpush1.msra.mxu0 0.0
        %8971 = vmatprep.subr.mxu0 0.0
        %8972 = vmatpush1.msra.mxu0 0.0
        %8973 = vmatprep.subr.mxu0 0.0
        %8974 = vmatpush1.msra.mxu0 0.0
        %8975 = vmatprep.subr.mxu0 0.0
        %8976 = vmatpush1.msra.mxu0 0.0
        %8977 = vmatprep.subr.mxu0 0.0
        %8978 = vmatpush1.msra.mxu0 0.0
        %8979 = vmatprep.subr.mxu0 0.0
        %8980 = vmatpush1.msra.mxu0 0.0
        %8981 = vmatprep.subr.mxu0 0.0
        %8982 = vmatpush1.msra.mxu0 0.0
        %8983 = vmatprep.mubr.f32.mxu0 0.0
        %8984 = vmatmul.mubr.f32.gmra.mrb[0].mxu0 %v8917
        %v8985 = vpop.f32.mrb[0].mxu0
        %v8986 = vadd.f32 0.0, %v8985
        %v8987 = vpop.f32.mrb[0].mxu0
        %8988 = vdwg.mxu0
        %v8989 = vadd.f32 %v8913, %v8986
        %s8990 = scalar_lea.vmem %s7, 16
        %v8991 = vld [vmem:[%s8990] sm:$0xff]
        %v8992 = vld [vmem:[%s8990 + $0x8] sm:$0xff]
        %v8993 = vrot.slane %v8912, 1
        %v8994 = vsel %vm546, %v8993, 0
        %8996 = vmatprep.subr.mxu0 0.0
        %8997 = vmatpush1.msra.mxu0 %v8991
        %8998 = vmatprep.subr.mxu0 0.0
        %8999 = vmatpush1.msra.mxu0 %v8992
        %9000 = vmatprep.subr.mxu0 0.0
        %9001 = vmatpush1.msra.mxu0 0.0
        %9002 = vmatprep.subr.mxu0 0.0
        %9003 = vmatpush1.msra.mxu0 0.0
        %9004 = vmatprep.subr.mxu0 0.0
        %9005 = vmatpush1.msra.mxu0 0.0
        %9006 = vmatprep.subr.mxu0 0.0
        %9007 = vmatpush1.msra.mxu0 0.0
        %9008 = vmatprep.subr.mxu0 0.0
        %9009 = vmatpush1.msra.mxu0 0.0
        %9010 = vmatprep.subr.mxu0 0.0
        %9011 = vmatpush1.msra.mxu0 0.0
        %9012 = vmatprep.subr.mxu0 0.0
        %9013 = vmatpush1.msra.mxu0 0.0
        %9014 = vmatprep.subr.mxu0 0.0
        %9015 = vmatpush1.msra.mxu0 0.0
        %9016 = vmatprep.subr.mxu0 0.0
        %9017 = vmatpush1.msra.mxu0 0.0
        %9018 = vmatprep.subr.mxu0 0.0
        %9019 = vmatpush1.msra.mxu0 0.0
        %9020 = vmatprep.subr.mxu0 0.0
        %9021 = vmatpush1.msra.mxu0 0.0
        %9022 = vmatprep.subr.mxu0 0.0
        %9023 = vmatpush1.msra.mxu0 0.0
        %9024 = vmatprep.subr.mxu0 0.0
        %9025 = vmatpush1.msra.mxu0 0.0
        %9026 = vmatprep.subr.mxu0 0.0
        %9027 = vmatpush1.msra.mxu0 0.0
        %9028 = vmatprep.subr.mxu0 0.0
        %9029 = vmatpush1.msra.mxu0 0.0
        %9030 = vmatprep.subr.mxu0 0.0
        %9031 = vmatpush1.msra.mxu0 0.0
        %9032 = vmatprep.subr.mxu0 0.0
        %9033 = vmatpush1.msra.mxu0 0.0
        %9034 = vmatprep.subr.mxu0 0.0
        %9035 = vmatpush1.msra.mxu0 0.0
        %9036 = vmatprep.subr.mxu0 0.0
        %9037 = vmatpush1.msra.mxu0 0.0
        %9038 = vmatprep.subr.mxu0 0.0
        %9039 = vmatpush1.msra.mxu0 0.0
        %9040 = vmatprep.subr.mxu0 0.0
        %9041 = vmatpush1.msra.mxu0 0.0
        %9042 = vmatprep.subr.mxu0 0.0
        %9043 = vmatpush1.msra.mxu0 0.0
        %9044 = vmatprep.subr.mxu0 0.0
        %9045 = vmatpush1.msra.mxu0 0.0
        %9046 = vmatprep.subr.mxu0 0.0
        %9047 = vmatpush1.msra.mxu0 0.0
        %9048 = vmatprep.subr.mxu0 0.0
        %9049 = vmatpush1.msra.mxu0 0.0
        %9050 = vmatprep.subr.mxu0 0.0
        %9051 = vmatpush1.msra.mxu0 0.0
        %9052 = vmatprep.subr.mxu0 0.0
        %9053 = vmatpush1.msra.mxu0 0.0
        %9054 = vmatprep.subr.mxu0 0.0
        %9055 = vmatpush1.msra.mxu0 0.0
        %9056 = vmatprep.subr.mxu0 0.0
        %9057 = vmatpush1.msra.mxu0 0.0
        %9058 = vmatprep.subr.mxu0 0.0
        %9059 = vmatpush1.msra.mxu0 0.0
        %9060 = vmatprep.mubr.f32.mxu0 0.0
        %9061 = vmatmul.mubr.f32.gmra.mrb[0].mxu0 %v8994
        %v9062 = vpop.f32.mrb[0].mxu0
        %v9063 = vadd.f32 0.0, %v9062
        %v9064 = vpop.f32.mrb[0].mxu0
        %9065 = vdwg.mxu0
        %v9066 = vadd.f32 %v8989, %v9063
        %s9067 = scalar_lea.vmem %s7, 32
        %v9068 = vld [vmem:[%s9067] sm:$0xff]
        %v9069 = vld [vmem:[%s9067 + $0x8] sm:$0xff]
        %v9070 = vrot.slane %v8912, 2
        %v9071 = vsel %vm546, %v9070, 0
        %9073 = vmatprep.subr.mxu0 0.0
        %9074 = vmatpush1.msra.mxu0 %v9068
        %9075 = vmatprep.subr.mxu0 0.0
        %9076 = vmatpush1.msra.mxu0 %v9069
        %9077 = vmatprep.subr.mxu0 0.0
        %9078 = vmatpush1.msra.mxu0 0.0
        %9079 = vmatprep.subr.mxu0 0.0
        %9080 = vmatpush1.msra.mxu0 0.0
        %9081 = vmatprep.subr.mxu0 0.0
        %9082 = vmatpush1.msra.mxu0 0.0
        %9083 = vmatprep.subr.mxu0 0.0
        %9084 = vmatpush1.msra.mxu0 0.0
        %9085 = vmatprep.subr.mxu0 0.0
        %9086 = vmatpush1.msra.mxu0 0.0
        %9087 = vmatprep.subr.mxu0 0.0
        %9088 = vmatpush1.msra.mxu0 0.0
        %9089 = vmatprep.subr.mxu0 0.0
        %9090 = vmatpush1.msra.mxu0 0.0
        %9091 = vmatprep.subr.mxu0 0.0
        %9092 = vmatpush1.msra.mxu0 0.0
        %9093 = vmatprep.subr.mxu0 0.0
        %9094 = vmatpush1.msra.mxu0 0.0
        %9095 = vmatprep.subr.mxu0 0.0
        %9096 = vmatpush1.msra.mxu0 0.0
        %9097 = vmatprep.subr.mxu0 0.0
        %9098 = vmatpush1.msra.mxu0 0.0
        %9099 = vmatprep.subr.mxu0 0.0
        %9100 = vmatpush1.msra.mxu0 0.0
        %9101 = vmatprep.subr.mxu0 0.0
        %9102 = vmatpush1.msra.mxu0 0.0
        %9103 = vmatprep.subr.mxu0 0.0
        %9104 = vmatpush1.msra.mxu0 0.0
        %9105 = vmatprep.subr.mxu0 0.0
        %9106 = vmatpush1.msra.mxu0 0.0
        %9107 = vmatprep.subr.mxu0 0.0
        %9108 = vmatpush1.msra.mxu0 0.0
        %9109 = vmatprep.subr.mxu0 0.0
        %9110 = vmatpush1.msra.mxu0 0.0
        %9111 = vmatprep.subr.mxu0 0.0
        %9112 = vmatpush1.msra.mxu0 0.0
        %9113 = vmatprep.subr.mxu0 0.0
        %9114 = vmatpush1.msra.mxu0 0.0
        %9115 = vmatprep.subr.mxu0 0.0
        %9116 = vmatpush1.msra.mxu0 0.0
        %9117 = vmatprep.subr.mxu0 0.0
        %9118 = vmatpush1.msra.mxu0 0.0
        %9119 = vmatprep.subr.mxu0 0.0
        %9120 = vmatpush1.msra.mxu0 0.0
        %9121 = vmatprep.subr.mxu0 0.0
        %9122 = vmatpush1.msra.mxu0 0.0
        %9123 = vmatprep.subr.mxu0 0.0
        %9124 = vmatpush1.msra.mxu0 0.0
        %9125 = vmatprep.subr.mxu0 0.0
        %9126 = vmatpush1.msra.mxu0 0.0
        %9127 = vmatprep.subr.mxu0 0.0
        %9128 = vmatpush1.msra.mxu0 0.0
        %9129 = vmatprep.subr.mxu0 0.0
        %9130 = vmatpush1.msra.mxu0 0.0
        %9131 = vmatprep.subr.mxu0 0.0
        %9132 = vmatpush1.msra.mxu0 0.0
        %9133 = vmatprep.subr.mxu0 0.0
        %9134 = vmatpush1.msra.mxu0 0.0
        %9135 = vmatprep.subr.mxu0 0.0
        %9136 = vmatpush1.msra.mxu0 0.0
        %9137 = vmatprep.mubr.f32.mxu0 0.0
        %9138 = vmatmul.mubr.f32.gmra.mrb[0].mxu0 %v9071
        %v9139 = vpop.f32.mrb[0].mxu0
        %v9140 = vadd.f32 0.0, %v9139
        %v9141 = vpop.f32.mrb[0].mxu0
        %9142 = vdwg.mxu0
        %v9143 = vadd.f32 %v9066, %v9140
        %s9144 = scalar_lea.vmem %s7, 48
        %v9145 = vld [vmem:[%s9144] sm:$0xff]
        %v9146 = vld [vmem:[%s9144 + $0x8] sm:$0xff]
        %v9147 = vrot.slane %v8912, 3
        %v9148 = vsel %vm546, %v9147, 0
        %9150 = vmatprep.subr.mxu0 0.0
        %9151 = vmatpush1.msra.mxu0 %v9145
        %9152 = vmatprep.subr.mxu0 0.0
        %9153 = vmatpush1.msra.mxu0 %v9146
        %9154 = vmatprep.subr.mxu0 0.0
        %9155 = vmatpush1.msra.mxu0 0.0
        %9156 = vmatprep.subr.mxu0 0.0
        %9157 = vmatpush1.msra.mxu0 0.0
        %9158 = vmatprep.subr.mxu0 0.0
        %9159 = vmatpush1.msra.mxu0 0.0
        %9160 = vmatprep.subr.mxu0 0.0
        %9161 = vmatpush1.msra.mxu0 0.0
        %9162 = vmatprep.subr.mxu0 0.0
        %9163 = vmatpush1.msra.mxu0 0.0
        %9164 = vmatprep.subr.mxu0 0.0
        %9165 = vmatpush1.msra.mxu0 0.0
        %9166 = vmatprep.subr.mxu0 0.0
        %9167 = vmatpush1.msra.mxu0 0.0
        %9168 = vmatprep.subr.mxu0 0.0
        %9169 = vmatpush1.msra.mxu0 0.0
        %9170 = vmatprep.subr.mxu0 0.0
        %9171 = vmatpush1.msra.mxu0 0.0
        %9172 = vmatprep.subr.mxu0 0.0
        %9173 = vmatpush1.msra.mxu0 0.0
        %9174 = vmatprep.subr.mxu0 0.0
        %9175 = vmatpush1.msra.mxu0 0.0
        %9176 = vmatprep.subr.mxu0 0.0
        %9177 = vmatpush1.msra.mxu0 0.0
        %9178 = vmatprep.subr.mxu0 0.0
        %9179 = vmatpush1.msra.mxu0 0.0
        %9180 = vmatprep.subr.mxu0 0.0
        %9181 = vmatpush1.msra.mxu0 0.0
        %9182 = vmatprep.subr.mxu0 0.0
        %9183 = vmatpush1.msra.mxu0 0.0
        %9184 = vmatprep.subr.mxu0 0.0
        %9185 = vmatpush1.msra.mxu0 0.0
        %9186 = vmatprep.subr.mxu0 0.0
        %9187 = vmatpush1.msra.mxu0 0.0
        %9188 = vmatprep.subr.mxu0 0.0
        %9189 = vmatpush1.msra.mxu0 0.0
        %9190 = vmatprep.subr.mxu0 0.0
        %9191 = vmatpush1.msra.mxu0 0.0
        %9192 = vmatprep.subr.mxu0 0.0
        %9193 = vmatpush1.msra.mxu0 0.0
        %9194 = vmatprep.subr.mxu0 0.0
        %9195 = vmatpush1.msra.mxu0 0.0
        %9196 = vmatprep.subr.mxu0 0.0
        %9197 = vmatpush1.msra.mxu0 0.0
        %9198 = vmatprep.subr.mxu0 0.0
        %9199 = vmatpush1.msra.mxu0 0.0
        %9200 = vmatprep.subr.mxu0 0.0
        %9201 = vmatpush1.msra.mxu0 0.0
        %9202 = vmatprep.subr.mxu0 0.0
        %9203 = vmatpush1.msra.mxu0 0.0
        %9204 = vmatprep.subr.mxu0 0.0
        %9205 = vmatpush1.msra.mxu0 0.0
        %9206 = vmatprep.subr.mxu0 0.0
        %9207 = vmatpush1.msra.mxu0 0.0
        %9208 = vmatprep.subr.mxu0 0.0
        %9209 = vmatpush1.msra.mxu0 0.0
        %9210 = vmatprep.subr.mxu0 0.0
        %9211 = vmatpush1.msra.mxu0 0.0
        %9212 = vmatprep.subr.mxu0 0.0
        %9213 = vmatpush1.msra.mxu0 0.0
        %9214 = vmatprep.mubr.f32.mxu0 0.0
        %9215 = vmatmul.mubr.f32.gmra.mrb[0].mxu0 %v9148
        %v9216 = vpop.f32.mrb[0].mxu0
        %v9217 = vadd.f32 0.0, %v9216
        %v9218 = vpop.f32.mrb[0].mxu0
        %9219 = vdwg.mxu0
        %v9220 = vadd.f32 %v9143, %v9217
        %v9221 = vmax.f32 %v9220, 0.0
        %v9222 = vld [vmem:[%s9] sm:$0xff]
        %v9223 = vld [vmem:[%s9 + $0x8] sm:$0xff]
        %v9224 = vld [vmem:[%s9 + $0x10] sm:$0xff]
        %v9225 = vld [vmem:[%s9 + $0x18] sm:$0xff]
        %v9226 = vld [vmem:[%s10] sm:$0x1]
        %v9228 = vsel %vm523, %v9221, 0
        %9230 = vmatprep.subr.mxu0 0.0
        %9231 = vmatpush1.msra.mxu0 %v9222
        %9232 = vmatprep.subr.mxu0 0.0
        %9233 = vmatpush1.msra.mxu0 %v9223
        %9234 = vmatprep.subr.mxu0 0.0
        %9235 = vmatpush1.msra.mxu0 %v9224
        %9236 = vmatprep.subr.mxu0 0.0
        %9237 = vmatpush1.msra.mxu0 %v9225
        %9238 = vmatprep.subr.mxu0 0.0
        %9239 = vmatpush1.msra.mxu0 0.0
        %9240 = vmatprep.subr.mxu0 0.0
        %9241 = vmatpush1.msra.mxu0 0.0
        %9242 = vmatprep.subr.mxu0 0.0
        %9243 = vmatpush1.msra.mxu0 0.0
        %9244 = vmatprep.subr.mxu0 0.0
        %9245 = vmatpush1.msra.mxu0 0.0
        %9246 = vmatprep.subr.mxu0 0.0
        %9247 = vmatpush1.msra.mxu0 0.0
        %9248 = vmatprep.subr.mxu0 0.0
        %9249 = vmatpush1.msra.mxu0 0.0
        %9250 = vmatprep.subr.mxu0 0.0
        %9251 = vmatpush1.msra.mxu0 0.0
        %9252 = vmatprep.subr.mxu0 0.0
        %9253 = vmatpush1.msra.mxu0 0.0
        %9254 = vmatprep.subr.mxu0 0.0
        %9255 = vmatpush1.msra.mxu0 0.0
        %9256 = vmatprep.subr.mxu0 0.0
        %9257 = vmatpush1.msra.mxu0 0.0
        %9258 = vmatprep.subr.mxu0 0.0
        %9259 = vmatpush1.msra.mxu0 0.0
        %9260 = vmatprep.subr.mxu0 0.0
        %9261 = vmatpush1.msra.mxu0 0.0
        %9262 = vmatprep.subr.mxu0 0.0
        %9263 = vmatpush1.msra.mxu0 0.0
        %9264 = vmatprep.subr.mxu0 0.0
        %9265 = vmatpush1.msra.mxu0 0.0
        %9266 = vmatprep.subr.mxu0 0.0
        %9267 = vmatpush1.msra.mxu0 0.0
        %9268 = vmatprep.subr.mxu0 0.0
        %9269 = vmatpush1.msra.mxu0 0.0
        %9270 = vmatprep.subr.mxu0 0.0
        %9271 = vmatpush1.msra.mxu0 0.0
        %9272 = vmatprep.subr.mxu0 0.0
        %9273 = vmatpush1.msra.mxu0 0.0
        %9274 = vmatprep.subr.mxu0 0.0
        %9275 = vmatpush1.msra.mxu0 0.0
        %9276 = vmatprep.subr.mxu0 0.0
        %9277 = vmatpush1.msra.mxu0 0.0
        %9278 = vmatprep.subr.mxu0 0.0
        %9279 = vmatpush1.msra.mxu0 0.0
        %9280 = vmatprep.subr.mxu0 0.0
        %9281 = vmatpush1.msra.mxu0 0.0
        %9282 = vmatprep.subr.mxu0 0.0
        %9283 = vmatpush1.msra.mxu0 0.0
        %9284 = vmatprep.subr.mxu0 0.0
        %9285 = vmatpush1.msra.mxu0 0.0
        %9286 = vmatprep.subr.mxu0 0.0
        %9287 = vmatpush1.msra.mxu0 0.0
        %9288 = vmatprep.subr.mxu0 0.0
        %9289 = vmatpush1.msra.mxu0 0.0
        %9290 = vmatprep.subr.mxu0 0.0
        %9291 = vmatpush1.msra.mxu0 0.0
        %9292 = vmatprep.subr.mxu0 0.0
        %9293 = vmatpush1.msra.mxu0 0.0
        %9294 = vmatprep.mubr.f32.mxu0 0.0
        %9295 = vmatmul.mubr.f32.gmra.mrb[0].mxu0 %v9228
        %v9296 = vpop.f32.mrb[0].mxu0
        %v9297 = vadd.f32 %v9226, %v9296
        %v9298 = vpop.f32.mrb[0].mxu0
        %9299 = vdwg.mxu0
        %vm9300 = vcmask 73728
        %9301 = vst.msk [vmem:[%s459] sm:$0x1] %vm9300, %v9297
        %s9302 = sand.u32 %s335, 1
        %s9303 = scalar_lea.sflag [#allocation6], %s9302
        %s9304 = sand.u32 %s335, 1
        %s9305 = scalar_lea.vmem [#allocation5], %s9304
        // Predicated region
        $region77: #{mynet_depth_forward.1} parent=75 // pred_check
          %p9306 = pneg %p345
        $region78: #{mynet_depth_forward.1} parent=75 // pred_check_branch
          %9308 = sbr.rel (%p9306) target = $region80
        $region79: #{mynet_depth_forward.1} parent=75 // pred_region
          %s9310 = ssub.s32 16, 16
          %9311 = vsyncadd %s9303, %s9310
          %s9312 = smul.addr %s28, 16
          %s9313 = scalar_lea.hbm %s14, %s9312
          %s9315 = sshll.u32 %s9305, 4
          %s9316 = int_to_ptr.vmem [resolvable:$true] %s9315
          %9318 = dma.vmem_to_hbm [thread:$0]  %s9316, 16, %s9313, %s9303
        $region80: #{mynet_depth_forward.1} parent=75 // pred_fallthru
          _
      $region76: #{mynet_depth_forward.1} parent=5 // pred_fallthru
        _
      %p9319 = scmp.le.s32.totalorder 2, %s23
      // Predicated region
      $region81: #{mynet_depth_forward.1} parent=5 // pred_check
        %p9320 = pneg %p9319
      $region82: #{mynet_depth_forward.1} parent=5 // pred_check_branch
        %9322 = sbr.rel (%p9320) target = $region84
      $region83: #{mynet_depth_forward.1} parent=5 // pred_region
        %s9323 = ssub.s32 %s23, 2
        // Predicated region
        $region85: #{mynet_depth_forward.1} parent=83 // pred_check
          %p9324 = pneg %p351
        $region86: #{mynet_depth_forward.1} parent=83 // pred_check_branch
          %9326 = sbr.rel (%p9324) target = $region88
        $region87: #{mynet_depth_forward.1} parent=83 // pred_region
          %s9327 = sand.u32 %s336, 1
          %s9328 = scalar_lea.sflag [#allocation6], %s9327
          %s9329 = sand.u32 %s336, 1
          %s9330 = scalar_lea.vmem [#allocation5], %s9329
          %9331 = dma.done %s9328, 16
        $region88: #{mynet_depth_forward.1} parent=83 // pred_fallthru
          _
      $region84: #{mynet_depth_forward.1} parent=5 // pred_fallthru
        _
    $region6: #{mynet_depth_forward.1} parent=1 // loop_footer
      %s27 = sadd.s32 1, %s23
    $region7: #{mynet_depth_forward.1} parent=1 // loop_footer_branch
      %22 = sbr.rel target = $region3
    $region8: #{mynet_depth_forward.1} parent=1 // loop_exit
      _
    %9332 = vsyncpa [#allocation6], 1
    %s9333 = scalar_lea.sflag [#allocation6], 1
    %9334 = vsyncpa %s9333, 1

</llo_original>
